<compile_context>
chip_gen: v7x
topology: tpu7x:2x2x1
jax: 0.10.0
libtpu: 0.0.40
codegen_flags: <defaults>
</compile_context>

<pallas_src>
import jax
import jax.numpy as jnp
from jax.experimental import pallas as pl
from jax.experimental.pallas import tpu as pltpu


def _banded_conv_weights(w, scale, width):
    """Builds BN-folded banded weights.

    w:     (3, 3, 3, Cin, Cout) conv weights (kD, kH, kW, Cin, Cout).
    scale: (Cout,) eval-mode BN scale folded into the weights.
    Returns (9, (width+2)*Cin, width*Cout); entry [kd*3+kh] maps a padded row of the
    flattened W*C axis to the conv output row for that (kd, kh) tap pair.
    """
    w = w * scale  # fold BN scale into the Cout axis
    mats = []
    for kd in range(3):
        for kh in range(3):
            blocks = []
            for kw in range(3):
                # sel[w + kw, w] = 1  ->  picks input column (w + kw) for output w.
                sel = jnp.eye(width + 2, width, k=-kw, dtype=w.dtype)
                blocks.append(jnp.kron(sel, w[kd, kh, kw]))
            mats.append(blocks[0] + blocks[1] + blocks[2])
    return jnp.stack(mats)


def _make_res_block_mid_kernel(D, H, W, C, act):
    WC = W * C
    # The Sequential always applies LeakyReLU(0.2); with act=True a second
    # LeakyReLU(0.2) follows, i.e. an effective negative slope of 0.2 * 0.2.
    neg_slope = 0.2 * 0.2 if act else 0.2

    def leaky(y):
        return jnp.where(y > 0, y, neg_slope * y)

    def kernel(x_ref, w1_ref, b1_ref, w2_ref, b2_ref, out_ref, xpad, hpad):
        # x_ref:  (1, D, H, W*C)          input volume of one batch element
        # w*_ref: (9, (W+2)*C, W*C)       BN-folded banded conv weights
        # b*_ref: (1, W*C)                BN-folded bias, tiled along W
        # out_ref:(1, D, H, W*C)
        # xpad/hpad: (D+2, H+2, (W+2)*C)  zero-padded halo scratch in VMEM

        # Zero the halos once per grid step; interiors are overwritten below.
        xpad[...] = jnp.zeros_like(xpad)
        hpad[...] = jnp.zeros_like(hpad)
        xpad[1:D + 1, 1:H + 1, C:C + WC] = x_ref[0]

        # conv1_block: Conv3d + folded BN + LeakyReLU (+ optional extra LeakyReLU).
        # Result stays in a padded VMEM scratch so conv2 never round-trips HBM.
        for d in range(D):
            acc = jnp.zeros((H, WC), jnp.float32)
            for kd in range(3):
                for kh in range(3):
                    acc = acc + jnp.dot(
                        xpad[d + kd, kh:kh + H, :],
                        w1_ref[kd * 3 + kh],
                        preferred_element_type=jnp.float32,
                    )
            hpad[d + 1, 1:H + 1, C:C + WC] = leaky(acc + b1_ref[...])

        # conv2_block + fused residual add: out = h1 + h2.
        for d in range(D):
            acc = jnp.zeros((H, WC), jnp.float32)
            for kd in range(3):
                for kh in range(3):
                    acc = acc + jnp.dot(
                        hpad[d + kd, kh:kh + H, :],
                        w2_ref[kd * 3 + kh],
                        preferred_element_type=jnp.float32,
                    )
            h2 = leaky(acc + b2_ref[...])
            out_ref[0, d] = (hpad[d + 1, 1:H + 1, C:C + WC] + h2).astype(out_ref.dtype)

    return kernel


def res_block_mid(x_ncdhw, params, act=True):
    """Forward pass matching ResBlockMid.forward. Input/output are NCDHW float32."""
    N, C, D, H, W = x_ncdhw.shape
    WC, WpC = W * C, (W + 2) * C

    # NCDHW -> NDHWC, then flatten (W, C) -> W*C so the kernel's lane axis is a
    # W*C-wide contiguous row (no per-tap reshapes inside the kernel).
    x = jnp.transpose(x_ncdhw, (0, 2, 3, 4, 1)).reshape(N, D, H, WC)

    def prep(p):
        s = p["gamma"] / jnp.sqrt(p["var"] + 1e-5)          # eval-mode BN scale
        bias = (p["b"] - p["mean"]) * s + p["beta"]         # folded conv bias + BN shift
        banded = _banded_conv_weights(p["w"], s, W)         # BN scale folded into weights
        bias_row = jnp.tile(bias, W).reshape(1, WC)         # bias_row[0, w*C + c] = bias[c]
        return banded, bias_row

    w1, b1 = prep(params["conv1"])
    w2, b2 = prep(params["conv2"])

    kernel = _make_res_block_mid_kernel(D, H, W, C, act)

    out = pl.pallas_call(
        kernel,
        out_shape=jax.ShapeDtypeStruct((N, D, H, WC), x.dtype),
        grid=(N,),
        in_specs=[
            pl.BlockSpec((1, D, H, WC), lambda n: (n, 0, 0, 0)),
            pl.BlockSpec((9, WpC, WC), lambda n: (0, 0, 0)),
            pl.BlockSpec((1, WC), lambda n: (0, 0)),
            pl.BlockSpec((9, WpC, WC), lambda n: (0, 0, 0)),
            pl.BlockSpec((1, WC), lambda n: (0, 0)),
        ],
        out_specs=pl.BlockSpec((1, D, H, WC), lambda n: (n, 0, 0, 0)),
        scratch_shapes=[
            pltpu.VMEM((D + 2, H + 2, WpC), jnp.float32),   # zero-padded input halo
            pltpu.VMEM((D + 2, H + 2, WpC), jnp.float32),   # zero-padded conv1 result
        ],
        compiler_params=pltpu.CompilerParams(
            dimension_semantics=("parallel",),              # megacore shards over batch
            vmem_limit_bytes=32 * 1024 * 1024,
        ),
    )(x, w1, b1, w2, b2)

    return jnp.transpose(out.reshape(N, D, H, W, C), (0, 4, 1, 2, 3))


def init_res_block_mid(key, filters_in, filters_out=None):
    """Deterministic synthetic parameters (shapes match the PyTorch module).

    Note: ResBlockMid ignores filters_out (both convs are filters_in -> filters_in).
    """
    def conv_params(k, cin, cout):
        kw_, kb, kg, kbt, km, kv = jax.random.split(k, 6)
        fan_in = cin * 27
        return dict(
            w=jax.random.normal(kw_, (3, 3, 3, cin, cout), jnp.float32)
              / jnp.sqrt(float(fan_in)),
            b=0.05 * jax.random.normal(kb, (cout,), jnp.float32),
            gamma=1.0 + 0.1 * jax.random.normal(kg, (cout,), jnp.float32),
            beta=0.1 * jax.random.normal(kbt, (cout,), jnp.float32),
            mean=0.1 * jax.random.normal(km, (cout,), jnp.float32),
            var=0.5 + jax.random.uniform(kv, (cout,), jnp.float32),
        )

    k1, k2 = jax.random.split(key, 2)
    C = filters_in
    return dict(conv1=conv_params(k1, C, C), conv2=conv_params(k2, C, C))


def _res_block_mid_ref(x_ncdhw, params, act=True):
    """Pure-JAX reference (lax.conv_general_dilated) for correctness checking."""
    def block(inp, p):
        w_oidhw = jnp.transpose(p["w"], (4, 3, 0, 1, 2))    # -> (Cout, Cin, kD, kH, kW)
        y = jax.lax.conv_general_dilated(
            inp, w_oidhw, window_strides=(1, 1, 1),
            padding=((1, 1), (1, 1), (1, 1)),
            dimension_numbers=("NCDHW", "OIDHW", "NCDHW"),
            precision=jax.lax.Precision.HIGHEST)
        c = lambda v: v.reshape(1, -1, 1, 1, 1)
        s = p["gamma"] / jnp.sqrt(p["var"] + 1e-5)
        y = (y + c(p["b"]) - c(p["mean"])) * c(s) + c(p["beta"])
        y = jnp.where(y > 0, y, 0.2 * y)
        if act:
            y = jnp.where(y > 0, y, 0.2 * y)
        return y

    h1 = block(x_ncdhw, params["conv1"])
    h2 = block(h1, params["conv2"])
    return h1 + h2


if __name__ == "__main__":
    key = jax.random.PRNGKey(0)
    kx, kp = jax.random.split(key)

    # Small shapes consistent with the module: batch=2, filters_in=4, D=4, H=W=16.
    N, C, D, H, W = 2, 4, 4, 16, 16
    x = jax.random.normal(kx, (N, C, D, H, W), jnp.float32)   # PyTorch NCDHW layout
    params = init_res_block_mid(kp, C, C)

    y = jax.jit(lambda v: res_block_mid(v, params, act=True))(x)
    y = jax.block_until_ready(y)

    assert y.shape == (N, C, D, H, W), y.shape
    assert bool(jnp.all(jnp.isfinite(y)))

    y_ref = _res_block_mid_ref(x, params, act=True)
    err = float(jnp.max(jnp.abs(y - y_ref)))
    assert err < 2e-2, f"max abs err vs reference: {err}"

    print("KERNEL_OK")
</pallas_src>

<mosaic_0001>
module attributes {stable_mosaic.version = 11 : i64} {
  func.func @kernel(%arg0: i32, %arg1: memref<1x4x16x64xf32, #tpu.memory_space<vmem>>, %arg2: memref<9x72x64xf32, #tpu.memory_space<vmem>>, %arg3: memref<1x64xf32, #tpu.memory_space<vmem>>, %arg4: memref<9x72x64xf32, #tpu.memory_space<vmem>>, %arg5: memref<1x64xf32, #tpu.memory_space<vmem>>, %arg6: memref<1x4x16x64xf32, #tpu.memory_space<vmem>>, %arg7: memref<6x18x72xf32, #tpu.memory_space<vmem>>, %arg8: memref<6x18x72xf32, #tpu.memory_space<vmem>>) attributes {dimension_semantics = [#tpu.dimension_semantics<parallel>], iteration_bounds = array<i64: 2>, scalar_prefetch = 0 : i64, scratch_operands = 2 : i64, tpu.core_type = #tpu.core_type<tc>, window_params = [{transform_indices = @transform_0, window_bounds = array<i64: 1, 4, 16, 64>}, {pipeline_mode = #tpu.pipeline_mode<synchronous>, transform_indices = @transform_1, window_bounds = array<i64: 9, 72, 64>}, {pipeline_mode = #tpu.pipeline_mode<synchronous>, transform_indices = @transform_2, window_bounds = array<i64: 1, 64>}, {pipeline_mode = #tpu.pipeline_mode<synchronous>, transform_indices = @transform_3, window_bounds = array<i64: 9, 72, 64>}, {pipeline_mode = #tpu.pipeline_mode<synchronous>, transform_indices = @transform_4, window_bounds = array<i64: 1, 64>}, {transform_indices = @transform_5, window_bounds = array<i64: 1, 4, 16, 64>}]} {
    %cst = arith.constant 0.000000e+00 : f32
    %0 = vector.broadcast %cst : f32 to vector<6x18x72xf32>
    %c0 = arith.constant 0 : index
    %c0_0 = arith.constant 0 : index
    %c0_1 = arith.constant 0 : index
    %1 = vector.load %arg7[%c0, %c0_0, %c0_1] : memref<6x18x72xf32, #tpu.memory_space<vmem>>, vector<6x18x72xf32>
    tpu.vector_store %arg7[%c0, %c0_0, %c0_1], %0 {strides = array<i32>} : memref<6x18x72xf32, #tpu.memory_space<vmem>>, vector<6x18x72xf32>,
    %cst_2 = arith.constant 0.000000e+00 : f32
    %2 = vector.broadcast %cst_2 : f32 to vector<6x18x72xf32>
    %c0_3 = arith.constant 0 : index
    %c0_4 = arith.constant 0 : index
    %c0_5 = arith.constant 0 : index
    %3 = vector.load %arg8[%c0_3, %c0_4, %c0_5] : memref<6x18x72xf32, #tpu.memory_space<vmem>>, vector<6x18x72xf32>
    tpu.vector_store %arg8[%c0_3, %c0_4, %c0_5], %2 {strides = array<i32>} : memref<6x18x72xf32, #tpu.memory_space<vmem>>, vector<6x18x72xf32>,
    %c0_6 = arith.constant 0 : index
    %c0_7 = arith.constant 0 : index
    %c0_8 = arith.constant 0 : index
    %c0_9 = arith.constant 0 : index
    %4 = vector.load %arg1[%c0_6, %c0_7, %c0_8, %c0_9] : memref<1x4x16x64xf32, #tpu.memory_space<vmem>>, vector<1x4x16x64xf32>
    %5 = vector.shape_cast %4 : vector<1x4x16x64xf32> to vector<4x16x64xf32>
    %c1 = arith.constant 1 : index
    %c1_10 = arith.constant 1 : index
    %c4 = arith.constant 4 : index
    %6 = vector.load %arg7[%c1, %c1_10, %c4] : memref<6x18x72xf32, #tpu.memory_space<vmem>>, vector<4x16x64xf32>
    tpu.vector_store %arg7[%c1, %c1_10, %c4], %5 {strides = array<i32>} : memref<6x18x72xf32, #tpu.memory_space<vmem>>, vector<4x16x64xf32>,
    %cst_11 = arith.constant 0.000000e+00 : f32
    %7 = vector.broadcast %cst_11 : f32 to vector<16x64xf32>
    %c0_12 = arith.constant 0 : index
    %c0_13 = arith.constant 0 : index
    %c0_14 = arith.constant 0 : index
    %8 = vector.load %arg7[%c0_12, %c0_13, %c0_14] : memref<6x18x72xf32, #tpu.memory_space<vmem>>, vector<1x16x72xf32>
    %9 = vector.shape_cast %8 : vector<1x16x72xf32> to vector<16x72xf32>
    %c0_15 = arith.constant 0 : index
    %c0_16 = arith.constant 0 : index
    %c0_17 = arith.constant 0 : index
    %10 = vector.load %arg2[%c0_15, %c0_16, %c0_17] : memref<9x72x64xf32, #tpu.memory_space<vmem>>, vector<1x72x64xf32>
    %11 = vector.shape_cast %10 : vector<1x72x64xf32> to vector<72x64xf32>
    %cst_18 = arith.constant dense<0.000000e+00> : vector<16x64xf32>
    %12 = tpu.matmul %9, %11, %cst_18 {dimension_numbers = #tpu.dot_dimension_numbers<[1], [0], [0], [1], [0, 0, 1, 1], [], []>} : vector<16x72xf32>, vector<72x64xf32>, vector<16x64xf32> -> vector<16x64xf32>
    %13 = arith.addf %7, %12 : vector<16x64xf32>
    %c0_19 = arith.constant 0 : index
    %c1_20 = arith.constant 1 : index
    %c0_21 = arith.constant 0 : index
    %14 = vector.load %arg7[%c0_19, %c1_20, %c0_21] : memref<6x18x72xf32, #tpu.memory_space<vmem>>, vector<1x16x72xf32>
    %15 = vector.shape_cast %14 : vector<1x16x72xf32> to vector<16x72xf32>
    %c1_22 = arith.constant 1 : index
    %c0_23 = arith.constant 0 : index
    %c0_24 = arith.constant 0 : index
    %16 = vector.load %arg2[%c1_22, %c0_23, %c0_24] : memref<9x72x64xf32, #tpu.memory_space<vmem>>, vector<1x72x64xf32>
    %17 = vector.shape_cast %16 : vector<1x72x64xf32> to vector<72x64xf32>
    %cst_25 = arith.constant dense<0.000000e+00> : vector<16x64xf32>
    %18 = tpu.matmul %15, %17, %cst_25 {dimension_numbers = #tpu.dot_dimension_numbers<[1], [0], [0], [1], [0, 0, 1, 1], [], []>} : vector<16x72xf32>, vector<72x64xf32>, vector<16x64xf32> -> vector<16x64xf32>
    %19 = arith.addf %13, %18 : vector<16x64xf32>
    %c0_26 = arith.constant 0 : index
    %c2 = arith.constant 2 : index
    %c0_27 = arith.constant 0 : index
    %20 = vector.load %arg7[%c0_26, %c2, %c0_27] : memref<6x18x72xf32, #tpu.memory_space<vmem>>, vector<1x16x72xf32>
    %21 = vector.shape_cast %20 : vector<1x16x72xf32> to vector<16x72xf32>
    %c2_28 = arith.constant 2 : index
    %c0_29 = arith.constant 0 : index
    %c0_30 = arith.constant 0 : index
    %22 = vector.load %arg2[%c2_28, %c0_29, %c0_30] : memref<9x72x64xf32, #tpu.memory_space<vmem>>, vector<1x72x64xf32>
    %23 = vector.shape_cast %22 : vector<1x72x64xf32> to vector<72x64xf32>
    %cst_31 = arith.constant dense<0.000000e+00> : vector<16x64xf32>
    %24 = tpu.matmul %21, %23, %cst_31 {dimension_numbers = #tpu.dot_dimension_numbers<[1], [0], [0], [1], [0, 0, 1, 1], [], []>} : vector<16x72xf32>, vector<72x64xf32>, vector<16x64xf32> -> vector<16x64xf32>
    %25 = arith.addf %19, %24 : vector<16x64xf32>
    %c1_32 = arith.constant 1 : index
    %c0_33 = arith.constant 0 : index
    %c0_34 = arith.constant 0 : index
    %26 = vector.load %arg7[%c1_32, %c0_33, %c0_34] : memref<6x18x72xf32, #tpu.memory_space<vmem>>, vector<1x16x72xf32>
    %27 = vector.shape_cast %26 : vector<1x16x72xf32> to vector<16x72xf32>
    %c3 = arith.constant 3 : index
    %c0_35 = arith.constant 0 : index
    %c0_36 = arith.constant 0 : index
    %28 = vector.load %arg2[%c3, %c0_35, %c0_36] : memref<9x72x64xf32, #tpu.memory_space<vmem>>, vector<1x72x64xf32>
    %29 = vector.shape_cast %28 : vector<1x72x64xf32> to vector<72x64xf32>
    %cst_37 = arith.constant dense<0.000000e+00> : vector<16x64xf32>
    %30 = tpu.matmul %27, %29, %cst_37 {dimension_numbers = #tpu.dot_dimension_numbers<[1], [0], [0], [1], [0, 0, 1, 1], [], []>} : vector<16x72xf32>, vector<72x64xf32>, vector<16x64xf32> -> vector<16x64xf32>
    %31 = arith.addf %25, %30 : vector<16x64xf32>
    %c1_38 = arith.constant 1 : index
    %c1_39 = arith.constant 1 : index
    %c0_40 = arith.constant 0 : index
    %32 = vector.load %arg7[%c1_38, %c1_39, %c0_40] : memref<6x18x72xf32, #tpu.memory_space<vmem>>, vector<1x16x72xf32>
    %33 = vector.shape_cast %32 : vector<1x16x72xf32> to vector<16x72xf32>
    %c4_41 = arith.constant 4 : index
    %c0_42 = arith.constant 0 : index
    %c0_43 = arith.constant 0 : index
    %34 = vector.load %arg2[%c4_41, %c0_42, %c0_43] : memref<9x72x64xf32, #tpu.memory_space<vmem>>, vector<1x72x64xf32>
    %35 = vector.shape_cast %34 : vector<1x72x64xf32> to vector<72x64xf32>
    %cst_44 = arith.constant dense<0.000000e+00> : vector<16x64xf32>
    %36 = tpu.matmul %33, %35, %cst_44 {dimension_numbers = #tpu.dot_dimension_numbers<[1], [0], [0], [1], [0, 0, 1, 1], [], []>} : vector<16x72xf32>, vector<72x64xf32>, vector<16x64xf32> -> vector<16x64xf32>
    %37 = arith.addf %31, %36 : vector<16x64xf32>
    %c1_45 = arith.constant 1 : index
    %c2_46 = arith.constant 2 : index
    %c0_47 = arith.constant 0 : index
    %38 = vector.load %arg7[%c1_45, %c2_46, %c0_47] : memref<6x18x72xf32, #tpu.memory_space<vmem>>, vector<1x16x72xf32>
    %39 = vector.shape_cast %38 : vector<1x16x72xf32> to vector<16x72xf32>
    %c5 = arith.constant 5 : index
    %c0_48 = arith.constant 0 : index
    %c0_49 = arith.constant 0 : index
    %40 = vector.load %arg2[%c5, %c0_48, %c0_49] : memref<9x72x64xf32, #tpu.memory_space<vmem>>, vector<1x72x64xf32>
    %41 = vector.shape_cast %40 : vector<1x72x64xf32> to vector<72x64xf32>
    %cst_50 = arith.constant dense<0.000000e+00> : vector<16x64xf32>
    %42 = tpu.matmul %39, %41, %cst_50 {dimension_numbers = #tpu.dot_dimension_numbers<[1], [0], [0], [1], [0, 0, 1, 1], [], []>} : vector<16x72xf32>, vector<72x64xf32>, vector<16x64xf32> -> vector<16x64xf32>
    %43 = arith.addf %37, %42 : vector<16x64xf32>
    %c2_51 = arith.constant 2 : index
    %c0_52 = arith.constant 0 : index
    %c0_53 = arith.constant 0 : index
    %44 = vector.load %arg7[%c2_51, %c0_52, %c0_53] : memref<6x18x72xf32, #tpu.memory_space<vmem>>, vector<1x16x72xf32>
    %45 = vector.shape_cast %44 : vector<1x16x72xf32> to vector<16x72xf32>
    %c6 = arith.constant 6 : index
    %c0_54 = arith.constant 0 : index
    %c0_55 = arith.constant 0 : index
    %46 = vector.load %arg2[%c6, %c0_54, %c0_55] : memref<9x72x64xf32, #tpu.memory_space<vmem>>, vector<1x72x64xf32>
    %47 = vector.shape_cast %46 : vector<1x72x64xf32> to vector<72x64xf32>
    %cst_56 = arith.constant dense<0.000000e+00> : vector<16x64xf32>
    %48 = tpu.matmul %45, %47, %cst_56 {dimension_numbers = #tpu.dot_dimension_numbers<[1], [0], [0], [1], [0, 0, 1, 1], [], []>} : vector<16x72xf32>, vector<72x64xf32>, vector<16x64xf32> -> vector<16x64xf32>
    %49 = arith.addf %43, %48 : vector<16x64xf32>
    %c2_57 = arith.constant 2 : index
    %c1_58 = arith.constant 1 : index
    %c0_59 = arith.constant 0 : index
    %50 = vector.load %arg7[%c2_57, %c1_58, %c0_59] : memref<6x18x72xf32, #tpu.memory_space<vmem>>, vector<1x16x72xf32>
    %51 = vector.shape_cast %50 : vector<1x16x72xf32> to vector<16x72xf32>
    %c7 = arith.constant 7 : index
    %c0_60 = arith.constant 0 : index
    %c0_61 = arith.constant 0 : index
    %52 = vector.load %arg2[%c7, %c0_60, %c0_61] : memref<9x72x64xf32, #tpu.memory_space<vmem>>, vector<1x72x64xf32>
    %53 = vector.shape_cast %52 : vector<1x72x64xf32> to vector<72x64xf32>
    %cst_62 = arith.constant dense<0.000000e+00> : vector<16x64xf32>
    %54 = tpu.matmul %51, %53, %cst_62 {dimension_numbers = #tpu.dot_dimension_numbers<[1], [0], [0], [1], [0, 0, 1, 1], [], []>} : vector<16x72xf32>, vector<72x64xf32>, vector<16x64xf32> -> vector<16x64xf32>
    %55 = arith.addf %49, %54 : vector<16x64xf32>
    %c2_63 = arith.constant 2 : index
    %c2_64 = arith.constant 2 : index
    %c0_65 = arith.constant 0 : index
    %56 = vector.load %arg7[%c2_63, %c2_64, %c0_65] : memref<6x18x72xf32, #tpu.memory_space<vmem>>, vector<1x16x72xf32>
    %57 = vector.shape_cast %56 : vector<1x16x72xf32> to vector<16x72xf32>
    %c8 = arith.constant 8 : index
    %c0_66 = arith.constant 0 : index
    %c0_67 = arith.constant 0 : index
    %58 = vector.load %arg2[%c8, %c0_66, %c0_67] : memref<9x72x64xf32, #tpu.memory_space<vmem>>, vector<1x72x64xf32>
    %59 = vector.shape_cast %58 : vector<1x72x64xf32> to vector<72x64xf32>
    %cst_68 = arith.constant dense<0.000000e+00> : vector<16x64xf32>
    %60 = tpu.matmul %57, %59, %cst_68 {dimension_numbers = #tpu.dot_dimension_numbers<[1], [0], [0], [1], [0, 0, 1, 1], [], []>} : vector<16x72xf32>, vector<72x64xf32>, vector<16x64xf32> -> vector<16x64xf32>
    %61 = arith.addf %55, %60 : vector<16x64xf32>
    %c0_69 = arith.constant 0 : index
    %c0_70 = arith.constant 0 : index
    %62 = vector.load %arg3[%c0_69, %c0_70] : memref<1x64xf32, #tpu.memory_space<vmem>>, vector<1x64xf32>
    %63 = vector.broadcast %62 : vector<1x64xf32> to vector<16x64xf32>
    %64 = arith.addf %61, %63 : vector<16x64xf32>
    %cst_71 = arith.constant 0.000000e+00 : f32
    %65 = vector.broadcast %cst_71 : f32 to vector<16x64xf32>
    %66 = arith.cmpf ogt, %64, %65 : vector<16x64xf32>
    %cst_72 = arith.constant 4.000000e-02 : f32
    %67 = vector.broadcast %cst_72 : f32 to vector<16x64xf32>
    %68 = arith.mulf %67, %64 : vector<16x64xf32>
    %69 = arith.select %66, %64, %68 : vector<16x64xi1>, vector<16x64xf32>
    %c1_73 = arith.constant 1 : index
    %c1_74 = arith.constant 1 : index
    %c4_75 = arith.constant 4 : index
    %70 = vector.load %arg8[%c1_73, %c1_74, %c4_75] : memref<6x18x72xf32, #tpu.memory_space<vmem>>, vector<1x16x64xf32>
    %71 = vector.shape_cast %70 : vector<1x16x64xf32> to vector<16x64xf32>
    %72 = vector.shape_cast %69 : vector<16x64xf32> to vector<1x16x64xf32>
    tpu.vector_store %arg8[%c1_73, %c1_74, %c4_75], %72 {strides = array<i32>} : memref<6x18x72xf32, #tpu.memory_space<vmem>>, vector<1x16x64xf32>,
    %cst_76 = arith.constant 0.000000e+00 : f32
    %73 = vector.broadcast %cst_76 : f32 to vector<16x64xf32>
    %c1_77 = arith.constant 1 : index
    %c0_78 = arith.constant 0 : index
    %c0_79 = arith.constant 0 : index
    %74 = vector.load %arg7[%c1_77, %c0_78, %c0_79] : memref<6x18x72xf32, #tpu.memory_space<vmem>>, vector<1x16x72xf32>
    %75 = vector.shape_cast %74 : vector<1x16x72xf32> to vector<16x72xf32>
    %c0_80 = arith.constant 0 : index
    %c0_81 = arith.constant 0 : index
    %c0_82 = arith.constant 0 : index
    %76 = vector.load %arg2[%c0_80, %c0_81, %c0_82] : memref<9x72x64xf32, #tpu.memory_space<vmem>>, vector<1x72x64xf32>
    %77 = vector.shape_cast %76 : vector<1x72x64xf32> to vector<72x64xf32>
    %cst_83 = arith.constant dense<0.000000e+00> : vector<16x64xf32>
    %78 = tpu.matmul %75, %77, %cst_83 {dimension_numbers = #tpu.dot_dimension_numbers<[1], [0], [0], [1], [0, 0, 1, 1], [], []>} : vector<16x72xf32>, vector<72x64xf32>, vector<16x64xf32> -> vector<16x64xf32>
    %79 = arith.addf %73, %78 : vector<16x64xf32>
    %c1_84 = arith.constant 1 : index
    %c1_85 = arith.constant 1 : index
    %c0_86 = arith.constant 0 : index
    %80 = vector.load %arg7[%c1_84, %c1_85, %c0_86] : memref<6x18x72xf32, #tpu.memory_space<vmem>>, vector<1x16x72xf32>
    %81 = vector.shape_cast %80 : vector<1x16x72xf32> to vector<16x72xf32>
    %c1_87 = arith.constant 1 : index
    %c0_88 = arith.constant 0 : index
    %c0_89 = arith.constant 0 : index
    %82 = vector.load %arg2[%c1_87, %c0_88, %c0_89] : memref<9x72x64xf32, #tpu.memory_space<vmem>>, vector<1x72x64xf32>
    %83 = vector.shape_cast %82 : vector<1x72x64xf32> to vector<72x64xf32>
    %cst_90 = arith.constant dense<0.000000e+00> : vector<16x64xf32>
    %84 = tpu.matmul %81, %83, %cst_90 {dimension_numbers = #tpu.dot_dimension_numbers<[1], [0], [0], [1], [0, 0, 1, 1], [], []>} : vector<16x72xf32>, vector<72x64xf32>, vector<16x64xf32> -> vector<16x64xf32>
    %85 = arith.addf %79, %84 : vector<16x64xf32>
    %c1_91 = arith.constant 1 : index
    %c2_92 = arith.constant 2 : index
    %c0_93 = arith.constant 0 : index
    %86 = vector.load %arg7[%c1_91, %c2_92, %c0_93] : memref<6x18x72xf32, #tpu.memory_space<vmem>>, vector<1x16x72xf32>
    %87 = vector.shape_cast %86 : vector<1x16x72xf32> to vector<16x72xf32>
    %c2_94 = arith.constant 2 : index
    %c0_95 = arith.constant 0 : index
    %c0_96 = arith.constant 0 : index
    %88 = vector.load %arg2[%c2_94, %c0_95, %c0_96] : memref<9x72x64xf32, #tpu.memory_space<vmem>>, vector<1x72x64xf32>
    %89 = vector.shape_cast %88 : vector<1x72x64xf32> to vector<72x64xf32>
    %cst_97 = arith.constant dense<0.000000e+00> : vector<16x64xf32>
    %90 = tpu.matmul %87, %89, %cst_97 {dimension_numbers = #tpu.dot_dimension_numbers<[1], [0], [0], [1], [0, 0, 1, 1], [], []>} : vector<16x72xf32>, vector<72x64xf32>, vector<16x64xf32> -> vector<16x64xf32>
    %91 = arith.addf %85, %90 : vector<16x64xf32>
    %c2_98 = arith.constant 2 : index
    %c0_99 = arith.constant 0 : index
    %c0_100 = arith.constant 0 : index
    %92 = vector.load %arg7[%c2_98, %c0_99, %c0_100] : memref<6x18x72xf32, #tpu.memory_space<vmem>>, vector<1x16x72xf32>
    %93 = vector.shape_cast %92 : vector<1x16x72xf32> to vector<16x72xf32>
    %c3_101 = arith.constant 3 : index
    %c0_102 = arith.constant 0 : index
    %c0_103 = arith.constant 0 : index
    %94 = vector.load %arg2[%c3_101, %c0_102, %c0_103] : memref<9x72x64xf32, #tpu.memory_space<vmem>>, vector<1x72x64xf32>
    %95 = vector.shape_cast %94 : vector<1x72x64xf32> to vector<72x64xf32>
    %cst_104 = arith.constant dense<0.000000e+00> : vector<16x64xf32>
    %96 = tpu.matmul %93, %95, %cst_104 {dimension_numbers = #tpu.dot_dimension_numbers<[1], [0], [0], [1], [0, 0, 1, 1], [], []>} : vector<16x72xf32>, vector<72x64xf32>, vector<16x64xf32> -> vector<16x64xf32>
    %97 = arith.addf %91, %96 : vector<16x64xf32>
    %c2_105 = arith.constant 2 : index
    %c1_106 = arith.constant 1 : index
    %c0_107 = arith.constant 0 : index
    %98 = vector.load %arg7[%c2_105, %c1_106, %c0_107] : memref<6x18x72xf32, #tpu.memory_space<vmem>>, vector<1x16x72xf32>
    %99 = vector.shape_cast %98 : vector<1x16x72xf32> to vector<16x72xf32>
    %c4_108 = arith.constant 4 : index
    %c0_109 = arith.constant 0 : index
    %c0_110 = arith.constant 0 : index
    %100 = vector.load %arg2[%c4_108, %c0_109, %c0_110] : memref<9x72x64xf32, #tpu.memory_space<vmem>>, vector<1x72x64xf32>
    %101 = vector.shape_cast %100 : vector<1x72x64xf32> to vector<72x64xf32>
    %cst_111 = arith.constant dense<0.000000e+00> : vector<16x64xf32>
    %102 = tpu.matmul %99, %101, %cst_111 {dimension_numbers = #tpu.dot_dimension_numbers<[1], [0], [0], [1], [0, 0, 1, 1], [], []>} : vector<16x72xf32>, vector<72x64xf32>, vector<16x64xf32> -> vector<16x64xf32>
    %103 = arith.addf %97, %102 : vector<16x64xf32>
    %c2_112 = arith.constant 2 : index
    %c2_113 = arith.constant 2 : index
    %c0_114 = arith.constant 0 : index
    %104 = vector.load %arg7[%c2_112, %c2_113, %c0_114] : memref<6x18x72xf32, #tpu.memory_space<vmem>>, vector<1x16x72xf32>
    %105 = vector.shape_cast %104 : vector<1x16x72xf32> to vector<16x72xf32>
    %c5_115 = arith.constant 5 : index
    %c0_116 = arith.constant 0 : index
    %c0_117 = arith.constant 0 : index
    %106 = vector.load %arg2[%c5_115, %c0_116, %c0_117] : memref<9x72x64xf32, #tpu.memory_space<vmem>>, vector<1x72x64xf32>
    %107 = vector.shape_cast %106 : vector<1x72x64xf32> to vector<72x64xf32>
    %cst_118 = arith.constant dense<0.000000e+00> : vector<16x64xf32>
    %108 = tpu.matmul %105, %107, %cst_118 {dimension_numbers = #tpu.dot_dimension_numbers<[1], [0], [0], [1], [0, 0, 1, 1], [], []>} : vector<16x72xf32>, vector<72x64xf32>, vector<16x64xf32> -> vector<16x64xf32>
    %109 = arith.addf %103, %108 : vector<16x64xf32>
    %c3_119 = arith.constant 3 : index
    %c0_120 = arith.constant 0 : index
    %c0_121 = arith.constant 0 : index
    %110 = vector.load %arg7[%c3_119, %c0_120, %c0_121] : memref<6x18x72xf32, #tpu.memory_space<vmem>>, vector<1x16x72xf32>
    %111 = vector.shape_cast %110 : vector<1x16x72xf32> to vector<16x72xf32>
    %c6_122 = arith.constant 6 : index
    %c0_123 = arith.constant 0 : index
    %c0_124 = arith.constant 0 : index
    %112 = vector.load %arg2[%c6_122, %c0_123, %c0_124] : memref<9x72x64xf32, #tpu.memory_space<vmem>>, vector<1x72x64xf32>
    %113 = vector.shape_cast %112 : vector<1x72x64xf32> to vector<72x64xf32>
    %cst_125 = arith.constant dense<0.000000e+00> : vector<16x64xf32>
    %114 = tpu.matmul %111, %113, %cst_125 {dimension_numbers = #tpu.dot_dimension_numbers<[1], [0], [0], [1], [0, 0, 1, 1], [], []>} : vector<16x72xf32>, vector<72x64xf32>, vector<16x64xf32> -> vector<16x64xf32>
    %115 = arith.addf %109, %114 : vector<16x64xf32>
    %c3_126 = arith.constant 3 : index
    %c1_127 = arith.constant 1 : index
    %c0_128 = arith.constant 0 : index
    %116 = vector.load %arg7[%c3_126, %c1_127, %c0_128] : memref<6x18x72xf32, #tpu.memory_space<vmem>>, vector<1x16x72xf32>
    %117 = vector.shape_cast %116 : vector<1x16x72xf32> to vector<16x72xf32>
    %c7_129 = arith.constant 7 : index
    %c0_130 = arith.constant 0 : index
    %c0_131 = arith.constant 0 : index
    %118 = vector.load %arg2[%c7_129, %c0_130, %c0_131] : memref<9x72x64xf32, #tpu.memory_space<vmem>>, vector<1x72x64xf32>
    %119 = vector.shape_cast %118 : vector<1x72x64xf32> to vector<72x64xf32>
    %cst_132 = arith.constant dense<0.000000e+00> : vector<16x64xf32>
    %120 = tpu.matmul %117, %119, %cst_132 {dimension_numbers = #tpu.dot_dimension_numbers<[1], [0], [0], [1], [0, 0, 1, 1], [], []>} : vector<16x72xf32>, vector<72x64xf32>, vector<16x64xf32> -> vector<16x64xf32>
    %121 = arith.addf %115, %120 : vector<16x64xf32>
    %c3_133 = arith.constant 3 : index
    %c2_134 = arith.constant 2 : index
    %c0_135 = arith.constant 0 : index
    %122 = vector.load %arg7[%c3_133, %c2_134, %c0_135] : memref<6x18x72xf32, #tpu.memory_space<vmem>>, vector<1x16x72xf32>
    %123 = vector.shape_cast %122 : vector<1x16x72xf32> to vector<16x72xf32>
    %c8_136 = arith.constant 8 : index
    %c0_137 = arith.constant 0 : index
    %c0_138 = arith.constant 0 : index
    %124 = vector.load %arg2[%c8_136, %c0_137, %c0_138] : memref<9x72x64xf32, #tpu.memory_space<vmem>>, vector<1x72x64xf32>
    %125 = vector.shape_cast %124 : vector<1x72x64xf32> to vector<72x64xf32>
    %cst_139 = arith.constant dense<0.000000e+00> : vector<16x64xf32>
    %126 = tpu.matmul %123, %125, %cst_139 {dimension_numbers = #tpu.dot_dimension_numbers<[1], [0], [0], [1], [0, 0, 1, 1], [], []>} : vector<16x72xf32>, vector<72x64xf32>, vector<16x64xf32> -> vector<16x64xf32>
    %127 = arith.addf %121, %126 : vector<16x64xf32>
    %c0_140 = arith.constant 0 : index
    %c0_141 = arith.constant 0 : index
    %128 = vector.load %arg3[%c0_140, %c0_141] : memref<1x64xf32, #tpu.memory_space<vmem>>, vector<1x64xf32>
    %129 = vector.broadcast %128 : vector<1x64xf32> to vector<16x64xf32>
    %130 = arith.addf %127, %129 : vector<16x64xf32>
    %cst_142 = arith.constant 0.000000e+00 : f32
    %131 = vector.broadcast %cst_142 : f32 to vector<16x64xf32>
    %132 = arith.cmpf ogt, %130, %131 : vector<16x64xf32>
    %cst_143 = arith.constant 4.000000e-02 : f32
    %133 = vector.broadcast %cst_143 : f32 to vector<16x64xf32>
    %134 = arith.mulf %133, %130 : vector<16x64xf32>
    %135 = arith.select %132, %130, %134 : vector<16x64xi1>, vector<16x64xf32>
    %c2_144 = arith.constant 2 : index
    %c1_145 = arith.constant 1 : index
    %c4_146 = arith.constant 4 : index
    %136 = vector.load %arg8[%c2_144, %c1_145, %c4_146] : memref<6x18x72xf32, #tpu.memory_space<vmem>>, vector<1x16x64xf32>
    %137 = vector.shape_cast %136 : vector<1x16x64xf32> to vector<16x64xf32>
    %138 = vector.shape_cast %135 : vector<16x64xf32> to vector<1x16x64xf32>
    tpu.vector_store %arg8[%c2_144, %c1_145, %c4_146], %138 {strides = array<i32>} : memref<6x18x72xf32, #tpu.memory_space<vmem>>, vector<1x16x64xf32>,
    %cst_147 = arith.constant 0.000000e+00 : f32
    %139 = vector.broadcast %cst_147 : f32 to vector<16x64xf32>
    %c2_148 = arith.constant 2 : index
    %c0_149 = arith.constant 0 : index
    %c0_150 = arith.constant 0 : index
    %140 = vector.load %arg7[%c2_148, %c0_149, %c0_150] : memref<6x18x72xf32, #tpu.memory_space<vmem>>, vector<1x16x72xf32>
    %141 = vector.shape_cast %140 : vector<1x16x72xf32> to vector<16x72xf32>
    %c0_151 = arith.constant 0 : index
    %c0_152 = arith.constant 0 : index
    %c0_153 = arith.constant 0 : index
    %142 = vector.load %arg2[%c0_151, %c0_152, %c0_153] : memref<9x72x64xf32, #tpu.memory_space<vmem>>, vector<1x72x64xf32>
    %143 = vector.shape_cast %142 : vector<1x72x64xf32> to vector<72x64xf32>
    %cst_154 = arith.constant dense<0.000000e+00> : vector<16x64xf32>
    %144 = tpu.matmul %141, %143, %cst_154 {dimension_numbers = #tpu.dot_dimension_numbers<[1], [0], [0], [1], [0, 0, 1, 1], [], []>} : vector<16x72xf32>, vector<72x64xf32>, vector<16x64xf32> -> vector<16x64xf32>
    %145 = arith.addf %139, %144 : vector<16x64xf32>
    %c2_155 = arith.constant 2 : index
    %c1_156 = arith.constant 1 : index
    %c0_157 = arith.constant 0 : index
    %146 = vector.load %arg7[%c2_155, %c1_156, %c0_157] : memref<6x18x72xf32, #tpu.memory_space<vmem>>, vector<1x16x72xf32>
    %147 = vector.shape_cast %146 : vector<1x16x72xf32> to vector<16x72xf32>
    %c1_158 = arith.constant 1 : index
    %c0_159 = arith.constant 0 : index
    %c0_160 = arith.constant 0 : index
    %148 = vector.load %arg2[%c1_158, %c0_159, %c0_160] : memref<9x72x64xf32, #tpu.memory_space<vmem>>, vector<1x72x64xf32>
    %149 = vector.shape_cast %148 : vector<1x72x64xf32> to vector<72x64xf32>
    %cst_161 = arith.constant dense<0.000000e+00> : vector<16x64xf32>
    %150 = tpu.matmul %147, %149, %cst_161 {dimension_numbers = #tpu.dot_dimension_numbers<[1], [0], [0], [1], [0, 0, 1, 1], [], []>} : vector<16x72xf32>, vector<72x64xf32>, vector<16x64xf32> -> vector<16x64xf32>
    %151 = arith.addf %145, %150 : vector<16x64xf32>
    %c2_162 = arith.constant 2 : index
    %c2_163 = arith.constant 2 : index
    %c0_164 = arith.constant 0 : index
    %152 = vector.load %arg7[%c2_162, %c2_163, %c0_164] : memref<6x18x72xf32, #tpu.memory_space<vmem>>, vector<1x16x72xf32>
    %153 = vector.shape_cast %152 : vector<1x16x72xf32> to vector<16x72xf32>
    %c2_165 = arith.constant 2 : index
    %c0_166 = arith.constant 0 : index
    %c0_167 = arith.constant 0 : index
    %154 = vector.load %arg2[%c2_165, %c0_166, %c0_167] : memref<9x72x64xf32, #tpu.memory_space<vmem>>, vector<1x72x64xf32>
    %155 = vector.shape_cast %154 : vector<1x72x64xf32> to vector<72x64xf32>
    %cst_168 = arith.constant dense<0.000000e+00> : vector<16x64xf32>
    %156 = tpu.matmul %153, %155, %cst_168 {dimension_numbers = #tpu.dot_dimension_numbers<[1], [0], [0], [1], [0, 0, 1, 1], [], []>} : vector<16x72xf32>, vector<72x64xf32>, vector<16x64xf32> -> vector<16x64xf32>
    %157 = arith.addf %151, %156 : vector<16x64xf32>
    %c3_169 = arith.constant 3 : index
    %c0_170 = arith.constant 0 : index
    %c0_171 = arith.constant 0 : index
    %158 = vector.load %arg7[%c3_169, %c0_170, %c0_171] : memref<6x18x72xf32, #tpu.memory_space<vmem>>, vector<1x16x72xf32>
    %159 = vector.shape_cast %158 : vector<1x16x72xf32> to vector<16x72xf32>
    %c3_172 = arith.constant 3 : index
    %c0_173 = arith.constant 0 : index
    %c0_174 = arith.constant 0 : index
    %160 = vector.load %arg2[%c3_172, %c0_173, %c0_174] : memref<9x72x64xf32, #tpu.memory_space<vmem>>, vector<1x72x64xf32>
    %161 = vector.shape_cast %160 : vector<1x72x64xf32> to vector<72x64xf32>
    %cst_175 = arith.constant dense<0.000000e+00> : vector<16x64xf32>
    %162 = tpu.matmul %159, %161, %cst_175 {dimension_numbers = #tpu.dot_dimension_numbers<[1], [0], [0], [1], [0, 0, 1, 1], [], []>} : vector<16x72xf32>, vector<72x64xf32>, vector<16x64xf32> -> vector<16x64xf32>
    %163 = arith.addf %157, %162 : vector<16x64xf32>
    %c3_176 = arith.constant 3 : index
    %c1_177 = arith.constant 1 : index
    %c0_178 = arith.constant 0 : index
    %164 = vector.load %arg7[%c3_176, %c1_177, %c0_178] : memref<6x18x72xf32, #tpu.memory_space<vmem>>, vector<1x16x72xf32>
    %165 = vector.shape_cast %164 : vector<1x16x72xf32> to vector<16x72xf32>
    %c4_179 = arith.constant 4 : index
    %c0_180 = arith.constant 0 : index
    %c0_181 = arith.constant 0 : index
    %166 = vector.load %arg2[%c4_179, %c0_180, %c0_181] : memref<9x72x64xf32, #tpu.memory_space<vmem>>, vector<1x72x64xf32>
    %167 = vector.shape_cast %166 : vector<1x72x64xf32> to vector<72x64xf32>
    %cst_182 = arith.constant dense<0.000000e+00> : vector<16x64xf32>
    %168 = tpu.matmul %165, %167, %cst_182 {dimension_numbers = #tpu.dot_dimension_numbers<[1], [0], [0], [1], [0, 0, 1, 1], [], []>} : vector<16x72xf32>, vector<72x64xf32>, vector<16x64xf32> -> vector<16x64xf32>
    %169 = arith.addf %163, %168 : vector<16x64xf32>
    %c3_183 = arith.constant 3 : index
    %c2_184 = arith.constant 2 : index
    %c0_185 = arith.constant 0 : index
    %170 = vector.load %arg7[%c3_183, %c2_184, %c0_185] : memref<6x18x72xf32, #tpu.memory_space<vmem>>, vector<1x16x72xf32>
    %171 = vector.shape_cast %170 : vector<1x16x72xf32> to vector<16x72xf32>
    %c5_186 = arith.constant 5 : index
    %c0_187 = arith.constant 0 : index
    %c0_188 = arith.constant 0 : index
    %172 = vector.load %arg2[%c5_186, %c0_187, %c0_188] : memref<9x72x64xf32, #tpu.memory_space<vmem>>, vector<1x72x64xf32>
    %173 = vector.shape_cast %172 : vector<1x72x64xf32> to vector<72x64xf32>
    %cst_189 = arith.constant dense<0.000000e+00> : vector<16x64xf32>
    %174 = tpu.matmul %171, %173, %cst_189 {dimension_numbers = #tpu.dot_dimension_numbers<[1], [0], [0], [1], [0, 0, 1, 1], [], []>} : vector<16x72xf32>, vector<72x64xf32>, vector<16x64xf32> -> vector<16x64xf32>
    %175 = arith.addf %169, %174 : vector<16x64xf32>
    %c4_190 = arith.constant 4 : index
    %c0_191 = arith.constant 0 : index
    %c0_192 = arith.constant 0 : index
    %176 = vector.load %arg7[%c4_190, %c0_191, %c0_192] : memref<6x18x72xf32, #tpu.memory_space<vmem>>, vector<1x16x72xf32>
    %177 = vector.shape_cast %176 : vector<1x16x72xf32> to vector<16x72xf32>
    %c6_193 = arith.constant 6 : index
    %c0_194 = arith.constant 0 : index
    %c0_195 = arith.constant 0 : index
    %178 = vector.load %arg2[%c6_193, %c0_194, %c0_195] : memref<9x72x64xf32, #tpu.memory_space<vmem>>, vector<1x72x64xf32>
    %179 = vector.shape_cast %178 : vector<1x72x64xf32> to vector<72x64xf32>
    %cst_196 = arith.constant dense<0.000000e+00> : vector<16x64xf32>
    %180 = tpu.matmul %177, %179, %cst_196 {dimension_numbers = #tpu.dot_dimension_numbers<[1], [0], [0], [1], [0, 0, 1, 1], [], []>} : vector<16x72xf32>, vector<72x64xf32>, vector<16x64xf32> -> vector<16x64xf32>
    %181 = arith.addf %175, %180 : vector<16x64xf32>
    %c4_197 = arith.constant 4 : index
    %c1_198 = arith.constant 1 : index
    %c0_199 = arith.constant 0 : index
    %182 = vector.load %arg7[%c4_197, %c1_198, %c0_199] : memref<6x18x72xf32, #tpu.memory_space<vmem>>, vector<1x16x72xf32>
    %183 = vector.shape_cast %182 : vector<1x16x72xf32> to vector<16x72xf32>
    %c7_200 = arith.constant 7 : index
    %c0_201 = arith.constant 0 : index
    %c0_202 = arith.constant 0 : index
    %184 = vector.load %arg2[%c7_200, %c0_201, %c0_202] : memref<9x72x64xf32, #tpu.memory_space<vmem>>, vector<1x72x64xf32>
    %185 = vector.shape_cast %184 : vector<1x72x64xf32> to vector<72x64xf32>
    %cst_203 = arith.constant dense<0.000000e+00> : vector<16x64xf32>
    %186 = tpu.matmul %183, %185, %cst_203 {dimension_numbers = #tpu.dot_dimension_numbers<[1], [0], [0], [1], [0, 0, 1, 1], [], []>} : vector<16x72xf32>, vector<72x64xf32>, vector<16x64xf32> -> vector<16x64xf32>
    %187 = arith.addf %181, %186 : vector<16x64xf32>
    %c4_204 = arith.constant 4 : index
    %c2_205 = arith.constant 2 : index
    %c0_206 = arith.constant 0 : index
    %188 = vector.load %arg7[%c4_204, %c2_205, %c0_206] : memref<6x18x72xf32, #tpu.memory_space<vmem>>, vector<1x16x72xf32>
    %189 = vector.shape_cast %188 : vector<1x16x72xf32> to vector<16x72xf32>
    %c8_207 = arith.constant 8 : index
    %c0_208 = arith.constant 0 : index
    %c0_209 = arith.constant 0 : index
    %190 = vector.load %arg2[%c8_207, %c0_208, %c0_209] : memref<9x72x64xf32, #tpu.memory_space<vmem>>, vector<1x72x64xf32>
    %191 = vector.shape_cast %190 : vector<1x72x64xf32> to vector<72x64xf32>
    %cst_210 = arith.constant dense<0.000000e+00> : vector<16x64xf32>
    %192 = tpu.matmul %189, %191, %cst_210 {dimension_numbers = #tpu.dot_dimension_numbers<[1], [0], [0], [1], [0, 0, 1, 1], [], []>} : vector<16x72xf32>, vector<72x64xf32>, vector<16x64xf32> -> vector<16x64xf32>
    %193 = arith.addf %187, %192 : vector<16x64xf32>
    %c0_211 = arith.constant 0 : index
    %c0_212 = arith.constant 0 : index
    %194 = vector.load %arg3[%c0_211, %c0_212] : memref<1x64xf32, #tpu.memory_space<vmem>>, vector<1x64xf32>
    %195 = vector.broadcast %194 : vector<1x64xf32> to vector<16x64xf32>
    %196 = arith.addf %193, %195 : vector<16x64xf32>
    %cst_213 = arith.constant 0.000000e+00 : f32
    %197 = vector.broadcast %cst_213 : f32 to vector<16x64xf32>
    %198 = arith.cmpf ogt, %196, %197 : vector<16x64xf32>
    %cst_214 = arith.constant 4.000000e-02 : f32
    %199 = vector.broadcast %cst_214 : f32 to vector<16x64xf32>
    %200 = arith.mulf %199, %196 : vector<16x64xf32>
    %201 = arith.select %198, %196, %200 : vector<16x64xi1>, vector<16x64xf32>
    %c3_215 = arith.constant 3 : index
    %c1_216 = arith.constant 1 : index
    %c4_217 = arith.constant 4 : index
    %202 = vector.load %arg8[%c3_215, %c1_216, %c4_217] : memref<6x18x72xf32, #tpu.memory_space<vmem>>, vector<1x16x64xf32>
    %203 = vector.shape_cast %202 : vector<1x16x64xf32> to vector<16x64xf32>
    %204 = vector.shape_cast %201 : vector<16x64xf32> to vector<1x16x64xf32>
    tpu.vector_store %arg8[%c3_215, %c1_216, %c4_217], %204 {strides = array<i32>} : memref<6x18x72xf32, #tpu.memory_space<vmem>>, vector<1x16x64xf32>,
    %cst_218 = arith.constant 0.000000e+00 : f32
    %205 = vector.broadcast %cst_218 : f32 to vector<16x64xf32>
    %c3_219 = arith.constant 3 : index
    %c0_220 = arith.constant 0 : index
    %c0_221 = arith.constant 0 : index
    %206 = vector.load %arg7[%c3_219, %c0_220, %c0_221] : memref<6x18x72xf32, #tpu.memory_space<vmem>>, vector<1x16x72xf32>
    %207 = vector.shape_cast %206 : vector<1x16x72xf32> to vector<16x72xf32>
    %c0_222 = arith.constant 0 : index
    %c0_223 = arith.constant 0 : index
    %c0_224 = arith.constant 0 : index
    %208 = vector.load %arg2[%c0_222, %c0_223, %c0_224] : memref<9x72x64xf32, #tpu.memory_space<vmem>>, vector<1x72x64xf32>
    %209 = vector.shape_cast %208 : vector<1x72x64xf32> to vector<72x64xf32>
    %cst_225 = arith.constant dense<0.000000e+00> : vector<16x64xf32>
    %210 = tpu.matmul %207, %209, %cst_225 {dimension_numbers = #tpu.dot_dimension_numbers<[1], [0], [0], [1], [0, 0, 1, 1], [], []>} : vector<16x72xf32>, vector<72x64xf32>, vector<16x64xf32> -> vector<16x64xf32>
    %211 = arith.addf %205, %210 : vector<16x64xf32>
    %c3_226 = arith.constant 3 : index
    %c1_227 = arith.constant 1 : index
    %c0_228 = arith.constant 0 : index
    %212 = vector.load %arg7[%c3_226, %c1_227, %c0_228] : memref<6x18x72xf32, #tpu.memory_space<vmem>>, vector<1x16x72xf32>
    %213 = vector.shape_cast %212 : vector<1x16x72xf32> to vector<16x72xf32>
    %c1_229 = arith.constant 1 : index
    %c0_230 = arith.constant 0 : index
    %c0_231 = arith.constant 0 : index
    %214 = vector.load %arg2[%c1_229, %c0_230, %c0_231] : memref<9x72x64xf32, #tpu.memory_space<vmem>>, vector<1x72x64xf32>
    %215 = vector.shape_cast %214 : vector<1x72x64xf32> to vector<72x64xf32>
    %cst_232 = arith.constant dense<0.000000e+00> : vector<16x64xf32>
    %216 = tpu.matmul %213, %215, %cst_232 {dimension_numbers = #tpu.dot_dimension_numbers<[1], [0], [0], [1], [0, 0, 1, 1], [], []>} : vector<16x72xf32>, vector<72x64xf32>, vector<16x64xf32> -> vector<16x64xf32>
    %217 = arith.addf %211, %216 : vector<16x64xf32>
    %c3_233 = arith.constant 3 : index
    %c2_234 = arith.constant 2 : index
    %c0_235 = arith.constant 0 : index
    %218 = vector.load %arg7[%c3_233, %c2_234, %c0_235] : memref<6x18x72xf32, #tpu.memory_space<vmem>>, vector<1x16x72xf32>
    %219 = vector.shape_cast %218 : vector<1x16x72xf32> to vector<16x72xf32>
    %c2_236 = arith.constant 2 : index
    %c0_237 = arith.constant 0 : index
    %c0_238 = arith.constant 0 : index
    %220 = vector.load %arg2[%c2_236, %c0_237, %c0_238] : memref<9x72x64xf32, #tpu.memory_space<vmem>>, vector<1x72x64xf32>
    %221 = vector.shape_cast %220 : vector<1x72x64xf32> to vector<72x64xf32>
    %cst_239 = arith.constant dense<0.000000e+00> : vector<16x64xf32>
    %222 = tpu.matmul %219, %221, %cst_239 {dimension_numbers = #tpu.dot_dimension_numbers<[1], [0], [0], [1], [0, 0, 1, 1], [], []>} : vector<16x72xf32>, vector<72x64xf32>, vector<16x64xf32> -> vector<16x64xf32>
    %223 = arith.addf %217, %222 : vector<16x64xf32>
    %c4_240 = arith.constant 4 : index
    %c0_241 = arith.constant 0 : index
    %c0_242 = arith.constant 0 : index
    %224 = vector.load %arg7[%c4_240, %c0_241, %c0_242] : memref<6x18x72xf32, #tpu.memory_space<vmem>>, vector<1x16x72xf32>
    %225 = vector.shape_cast %224 : vector<1x16x72xf32> to vector<16x72xf32>
    %c3_243 = arith.constant 3 : index
    %c0_244 = arith.constant 0 : index
    %c0_245 = arith.constant 0 : index
    %226 = vector.load %arg2[%c3_243, %c0_244, %c0_245] : memref<9x72x64xf32, #tpu.memory_space<vmem>>, vector<1x72x64xf32>
    %227 = vector.shape_cast %226 : vector<1x72x64xf32> to vector<72x64xf32>
    %cst_246 = arith.constant dense<0.000000e+00> : vector<16x64xf32>
    %228 = tpu.matmul %225, %227, %cst_246 {dimension_numbers = #tpu.dot_dimension_numbers<[1], [0], [0], [1], [0, 0, 1, 1], [], []>} : vector<16x72xf32>, vector<72x64xf32>, vector<16x64xf32> -> vector<16x64xf32>
    %229 = arith.addf %223, %228 : vector<16x64xf32>
    %c4_247 = arith.constant 4 : index
    %c1_248 = arith.constant 1 : index
    %c0_249 = arith.constant 0 : index
    %230 = vector.load %arg7[%c4_247, %c1_248, %c0_249] : memref<6x18x72xf32, #tpu.memory_space<vmem>>, vector<1x16x72xf32>
    %231 = vector.shape_cast %230 : vector<1x16x72xf32> to vector<16x72xf32>
    %c4_250 = arith.constant 4 : index
    %c0_251 = arith.constant 0 : index
    %c0_252 = arith.constant 0 : index
    %232 = vector.load %arg2[%c4_250, %c0_251, %c0_252] : memref<9x72x64xf32, #tpu.memory_space<vmem>>, vector<1x72x64xf32>
    %233 = vector.shape_cast %232 : vector<1x72x64xf32> to vector<72x64xf32>
    %cst_253 = arith.constant dense<0.000000e+00> : vector<16x64xf32>
    %234 = tpu.matmul %231, %233, %cst_253 {dimension_numbers = #tpu.dot_dimension_numbers<[1], [0], [0], [1], [0, 0, 1, 1], [], []>} : vector<16x72xf32>, vector<72x64xf32>, vector<16x64xf32> -> vector<16x64xf32>
    %235 = arith.addf %229, %234 : vector<16x64xf32>
    %c4_254 = arith.constant 4 : index
    %c2_255 = arith.constant 2 : index
    %c0_256 = arith.constant 0 : index
    %236 = vector.load %arg7[%c4_254, %c2_255, %c0_256] : memref<6x18x72xf32, #tpu.memory_space<vmem>>, vector<1x16x72xf32>
    %237 = vector.shape_cast %236 : vector<1x16x72xf32> to vector<16x72xf32>
    %c5_257 = arith.constant 5 : index
    %c0_258 = arith.constant 0 : index
    %c0_259 = arith.constant 0 : index
    %238 = vector.load %arg2[%c5_257, %c0_258, %c0_259] : memref<9x72x64xf32, #tpu.memory_space<vmem>>, vector<1x72x64xf32>
    %239 = vector.shape_cast %238 : vector<1x72x64xf32> to vector<72x64xf32>
    %cst_260 = arith.constant dense<0.000000e+00> : vector<16x64xf32>
    %240 = tpu.matmul %237, %239, %cst_260 {dimension_numbers = #tpu.dot_dimension_numbers<[1], [0], [0], [1], [0, 0, 1, 1], [], []>} : vector<16x72xf32>, vector<72x64xf32>, vector<16x64xf32> -> vector<16x64xf32>
    %241 = arith.addf %235, %240 : vector<16x64xf32>
    %c5_261 = arith.constant 5 : index
    %c0_262 = arith.constant 0 : index
    %c0_263 = arith.constant 0 : index
    %242 = vector.load %arg7[%c5_261, %c0_262, %c0_263] : memref<6x18x72xf32, #tpu.memory_space<vmem>>, vector<1x16x72xf32>
    %243 = vector.shape_cast %242 : vector<1x16x72xf32> to vector<16x72xf32>
    %c6_264 = arith.constant 6 : index
    %c0_265 = arith.constant 0 : index
    %c0_266 = arith.constant 0 : index
    %244 = vector.load %arg2[%c6_264, %c0_265, %c0_266] : memref<9x72x64xf32, #tpu.memory_space<vmem>>, vector<1x72x64xf32>
    %245 = vector.shape_cast %244 : vector<1x72x64xf32> to vector<72x64xf32>
    %cst_267 = arith.constant dense<0.000000e+00> : vector<16x64xf32>
    %246 = tpu.matmul %243, %245, %cst_267 {dimension_numbers = #tpu.dot_dimension_numbers<[1], [0], [0], [1], [0, 0, 1, 1], [], []>} : vector<16x72xf32>, vector<72x64xf32>, vector<16x64xf32> -> vector<16x64xf32>
    %247 = arith.addf %241, %246 : vector<16x64xf32>
    %c5_268 = arith.constant 5 : index
    %c1_269 = arith.constant 1 : index
    %c0_270 = arith.constant 0 : index
    %248 = vector.load %arg7[%c5_268, %c1_269, %c0_270] : memref<6x18x72xf32, #tpu.memory_space<vmem>>, vector<1x16x72xf32>
    %249 = vector.shape_cast %248 : vector<1x16x72xf32> to vector<16x72xf32>
    %c7_271 = arith.constant 7 : index
    %c0_272 = arith.constant 0 : index
    %c0_273 = arith.constant 0 : index
    %250 = vector.load %arg2[%c7_271, %c0_272, %c0_273] : memref<9x72x64xf32, #tpu.memory_space<vmem>>, vector<1x72x64xf32>
    %251 = vector.shape_cast %250 : vector<1x72x64xf32> to vector<72x64xf32>
    %cst_274 = arith.constant dense<0.000000e+00> : vector<16x64xf32>
    %252 = tpu.matmul %249, %251, %cst_274 {dimension_numbers = #tpu.dot_dimension_numbers<[1], [0], [0], [1], [0, 0, 1, 1], [], []>} : vector<16x72xf32>, vector<72x64xf32>, vector<16x64xf32> -> vector<16x64xf32>
    %253 = arith.addf %247, %252 : vector<16x64xf32>
    %c5_275 = arith.constant 5 : index
    %c2_276 = arith.constant 2 : index
    %c0_277 = arith.constant 0 : index
    %254 = vector.load %arg7[%c5_275, %c2_276, %c0_277] : memref<6x18x72xf32, #tpu.memory_space<vmem>>, vector<1x16x72xf32>
    %255 = vector.shape_cast %254 : vector<1x16x72xf32> to vector<16x72xf32>
    %c8_278 = arith.constant 8 : index
    %c0_279 = arith.constant 0 : index
    %c0_280 = arith.constant 0 : index
    %256 = vector.load %arg2[%c8_278, %c0_279, %c0_280] : memref<9x72x64xf32, #tpu.memory_space<vmem>>, vector<1x72x64xf32>
    %257 = vector.shape_cast %256 : vector<1x72x64xf32> to vector<72x64xf32>
    %cst_281 = arith.constant dense<0.000000e+00> : vector<16x64xf32>
    %258 = tpu.matmul %255, %257, %cst_281 {dimension_numbers = #tpu.dot_dimension_numbers<[1], [0], [0], [1], [0, 0, 1, 1], [], []>} : vector<16x72xf32>, vector<72x64xf32>, vector<16x64xf32> -> vector<16x64xf32>
    %259 = arith.addf %253, %258 : vector<16x64xf32>
    %c0_282 = arith.constant 0 : index
    %c0_283 = arith.constant 0 : index
    %260 = vector.load %arg3[%c0_282, %c0_283] : memref<1x64xf32, #tpu.memory_space<vmem>>, vector<1x64xf32>
    %261 = vector.broadcast %260 : vector<1x64xf32> to vector<16x64xf32>
    %262 = arith.addf %259, %261 : vector<16x64xf32>
    %cst_284 = arith.constant 0.000000e+00 : f32
    %263 = vector.broadcast %cst_284 : f32 to vector<16x64xf32>
    %264 = arith.cmpf ogt, %262, %263 : vector<16x64xf32>
    %cst_285 = arith.constant 4.000000e-02 : f32
    %265 = vector.broadcast %cst_285 : f32 to vector<16x64xf32>
    %266 = arith.mulf %265, %262 : vector<16x64xf32>
    %267 = arith.select %264, %262, %266 : vector<16x64xi1>, vector<16x64xf32>
    %c4_286 = arith.constant 4 : index
    %c1_287 = arith.constant 1 : index
    %c4_288 = arith.constant 4 : index
    %268 = vector.load %arg8[%c4_286, %c1_287, %c4_288] : memref<6x18x72xf32, #tpu.memory_space<vmem>>, vector<1x16x64xf32>
    %269 = vector.shape_cast %268 : vector<1x16x64xf32> to vector<16x64xf32>
    %270 = vector.shape_cast %267 : vector<16x64xf32> to vector<1x16x64xf32>
    tpu.vector_store %arg8[%c4_286, %c1_287, %c4_288], %270 {strides = array<i32>} : memref<6x18x72xf32, #tpu.memory_space<vmem>>, vector<1x16x64xf32>,
    %cst_289 = arith.constant 0.000000e+00 : f32
    %271 = vector.broadcast %cst_289 : f32 to vector<16x64xf32>
    %c0_290 = arith.constant 0 : index
    %c0_291 = arith.constant 0 : index
    %c0_292 = arith.constant 0 : index
    %272 = vector.load %arg8[%c0_290, %c0_291, %c0_292] : memref<6x18x72xf32, #tpu.memory_space<vmem>>, vector<1x16x72xf32>
    %273 = vector.shape_cast %272 : vector<1x16x72xf32> to vector<16x72xf32>
    %c0_293 = arith.constant 0 : index
    %c0_294 = arith.constant 0 : index
    %c0_295 = arith.constant 0 : index
    %274 = vector.load %arg4[%c0_293, %c0_294, %c0_295] : memref<9x72x64xf32, #tpu.memory_space<vmem>>, vector<1x72x64xf32>
    %275 = vector.shape_cast %274 : vector<1x72x64xf32> to vector<72x64xf32>
    %cst_296 = arith.constant dense<0.000000e+00> : vector<16x64xf32>
    %276 = tpu.matmul %273, %275, %cst_296 {dimension_numbers = #tpu.dot_dimension_numbers<[1], [0], [0], [1], [0, 0, 1, 1], [], []>} : vector<16x72xf32>, vector<72x64xf32>, vector<16x64xf32> -> vector<16x64xf32>
    %277 = arith.addf %271, %276 : vector<16x64xf32>
    %c0_297 = arith.constant 0 : index
    %c1_298 = arith.constant 1 : index
    %c0_299 = arith.constant 0 : index
    %278 = vector.load %arg8[%c0_297, %c1_298, %c0_299] : memref<6x18x72xf32, #tpu.memory_space<vmem>>, vector<1x16x72xf32>
    %279 = vector.shape_cast %278 : vector<1x16x72xf32> to vector<16x72xf32>
    %c1_300 = arith.constant 1 : index
    %c0_301 = arith.constant 0 : index
    %c0_302 = arith.constant 0 : index
    %280 = vector.load %arg4[%c1_300, %c0_301, %c0_302] : memref<9x72x64xf32, #tpu.memory_space<vmem>>, vector<1x72x64xf32>
    %281 = vector.shape_cast %280 : vector<1x72x64xf32> to vector<72x64xf32>
    %cst_303 = arith.constant dense<0.000000e+00> : vector<16x64xf32>
    %282 = tpu.matmul %279, %281, %cst_303 {dimension_numbers = #tpu.dot_dimension_numbers<[1], [0], [0], [1], [0, 0, 1, 1], [], []>} : vector<16x72xf32>, vector<72x64xf32>, vector<16x64xf32> -> vector<16x64xf32>
    %283 = arith.addf %277, %282 : vector<16x64xf32>
    %c0_304 = arith.constant 0 : index
    %c2_305 = arith.constant 2 : index
    %c0_306 = arith.constant 0 : index
    %284 = vector.load %arg8[%c0_304, %c2_305, %c0_306] : memref<6x18x72xf32, #tpu.memory_space<vmem>>, vector<1x16x72xf32>
    %285 = vector.shape_cast %284 : vector<1x16x72xf32> to vector<16x72xf32>
    %c2_307 = arith.constant 2 : index
    %c0_308 = arith.constant 0 : index
    %c0_309 = arith.constant 0 : index
    %286 = vector.load %arg4[%c2_307, %c0_308, %c0_309] : memref<9x72x64xf32, #tpu.memory_space<vmem>>, vector<1x72x64xf32>
    %287 = vector.shape_cast %286 : vector<1x72x64xf32> to vector<72x64xf32>
    %cst_310 = arith.constant dense<0.000000e+00> : vector<16x64xf32>
    %288 = tpu.matmul %285, %287, %cst_310 {dimension_numbers = #tpu.dot_dimension_numbers<[1], [0], [0], [1], [0, 0, 1, 1], [], []>} : vector<16x72xf32>, vector<72x64xf32>, vector<16x64xf32> -> vector<16x64xf32>
    %289 = arith.addf %283, %288 : vector<16x64xf32>
    %c1_311 = arith.constant 1 : index
    %c0_312 = arith.constant 0 : index
    %c0_313 = arith.constant 0 : index
    %290 = vector.load %arg8[%c1_311, %c0_312, %c0_313] : memref<6x18x72xf32, #tpu.memory_space<vmem>>, vector<1x16x72xf32>
    %291 = vector.shape_cast %290 : vector<1x16x72xf32> to vector<16x72xf32>
    %c3_314 = arith.constant 3 : index
    %c0_315 = arith.constant 0 : index
    %c0_316 = arith.constant 0 : index
    %292 = vector.load %arg4[%c3_314, %c0_315, %c0_316] : memref<9x72x64xf32, #tpu.memory_space<vmem>>, vector<1x72x64xf32>
    %293 = vector.shape_cast %292 : vector<1x72x64xf32> to vector<72x64xf32>
    %cst_317 = arith.constant dense<0.000000e+00> : vector<16x64xf32>
    %294 = tpu.matmul %291, %293, %cst_317 {dimension_numbers = #tpu.dot_dimension_numbers<[1], [0], [0], [1], [0, 0, 1, 1], [], []>} : vector<16x72xf32>, vector<72x64xf32>, vector<16x64xf32> -> vector<16x64xf32>
    %295 = arith.addf %289, %294 : vector<16x64xf32>
    %c1_318 = arith.constant 1 : index
    %c1_319 = arith.constant 1 : index
    %c0_320 = arith.constant 0 : index
    %296 = vector.load %arg8[%c1_318, %c1_319, %c0_320] : memref<6x18x72xf32, #tpu.memory_space<vmem>>, vector<1x16x72xf32>
    %297 = vector.shape_cast %296 : vector<1x16x72xf32> to vector<16x72xf32>
    %c4_321 = arith.constant 4 : index
    %c0_322 = arith.constant 0 : index
    %c0_323 = arith.constant 0 : index
    %298 = vector.load %arg4[%c4_321, %c0_322, %c0_323] : memref<9x72x64xf32, #tpu.memory_space<vmem>>, vector<1x72x64xf32>
    %299 = vector.shape_cast %298 : vector<1x72x64xf32> to vector<72x64xf32>
    %cst_324 = arith.constant dense<0.000000e+00> : vector<16x64xf32>
    %300 = tpu.matmul %297, %299, %cst_324 {dimension_numbers = #tpu.dot_dimension_numbers<[1], [0], [0], [1], [0, 0, 1, 1], [], []>} : vector<16x72xf32>, vector<72x64xf32>, vector<16x64xf32> -> vector<16x64xf32>
    %301 = arith.addf %295, %300 : vector<16x64xf32>
    %c1_325 = arith.constant 1 : index
    %c2_326 = arith.constant 2 : index
    %c0_327 = arith.constant 0 : index
    %302 = vector.load %arg8[%c1_325, %c2_326, %c0_327] : memref<6x18x72xf32, #tpu.memory_space<vmem>>, vector<1x16x72xf32>
    %303 = vector.shape_cast %302 : vector<1x16x72xf32> to vector<16x72xf32>
    %c5_328 = arith.constant 5 : index
    %c0_329 = arith.constant 0 : index
    %c0_330 = arith.constant 0 : index
    %304 = vector.load %arg4[%c5_328, %c0_329, %c0_330] : memref<9x72x64xf32, #tpu.memory_space<vmem>>, vector<1x72x64xf32>
    %305 = vector.shape_cast %304 : vector<1x72x64xf32> to vector<72x64xf32>
    %cst_331 = arith.constant dense<0.000000e+00> : vector<16x64xf32>
    %306 = tpu.matmul %303, %305, %cst_331 {dimension_numbers = #tpu.dot_dimension_numbers<[1], [0], [0], [1], [0, 0, 1, 1], [], []>} : vector<16x72xf32>, vector<72x64xf32>, vector<16x64xf32> -> vector<16x64xf32>
    %307 = arith.addf %301, %306 : vector<16x64xf32>
    %c2_332 = arith.constant 2 : index
    %c0_333 = arith.constant 0 : index
    %c0_334 = arith.constant 0 : index
    %308 = vector.load %arg8[%c2_332, %c0_333, %c0_334] : memref<6x18x72xf32, #tpu.memory_space<vmem>>, vector<1x16x72xf32>
    %309 = vector.shape_cast %308 : vector<1x16x72xf32> to vector<16x72xf32>
    %c6_335 = arith.constant 6 : index
    %c0_336 = arith.constant 0 : index
    %c0_337 = arith.constant 0 : index
    %310 = vector.load %arg4[%c6_335, %c0_336, %c0_337] : memref<9x72x64xf32, #tpu.memory_space<vmem>>, vector<1x72x64xf32>
    %311 = vector.shape_cast %310 : vector<1x72x64xf32> to vector<72x64xf32>
    %cst_338 = arith.constant dense<0.000000e+00> : vector<16x64xf32>
    %312 = tpu.matmul %309, %311, %cst_338 {dimension_numbers = #tpu.dot_dimension_numbers<[1], [0], [0], [1], [0, 0, 1, 1], [], []>} : vector<16x72xf32>, vector<72x64xf32>, vector<16x64xf32> -> vector<16x64xf32>
    %313 = arith.addf %307, %312 : vector<16x64xf32>
    %c2_339 = arith.constant 2 : index
    %c1_340 = arith.constant 1 : index
    %c0_341 = arith.constant 0 : index
    %314 = vector.load %arg8[%c2_339, %c1_340, %c0_341] : memref<6x18x72xf32, #tpu.memory_space<vmem>>, vector<1x16x72xf32>
    %315 = vector.shape_cast %314 : vector<1x16x72xf32> to vector<16x72xf32>
    %c7_342 = arith.constant 7 : index
    %c0_343 = arith.constant 0 : index
    %c0_344 = arith.constant 0 : index
    %316 = vector.load %arg4[%c7_342, %c0_343, %c0_344] : memref<9x72x64xf32, #tpu.memory_space<vmem>>, vector<1x72x64xf32>
    %317 = vector.shape_cast %316 : vector<1x72x64xf32> to vector<72x64xf32>
    %cst_345 = arith.constant dense<0.000000e+00> : vector<16x64xf32>
    %318 = tpu.matmul %315, %317, %cst_345 {dimension_numbers = #tpu.dot_dimension_numbers<[1], [0], [0], [1], [0, 0, 1, 1], [], []>} : vector<16x72xf32>, vector<72x64xf32>, vector<16x64xf32> -> vector<16x64xf32>
    %319 = arith.addf %313, %318 : vector<16x64xf32>
    %c2_346 = arith.constant 2 : index
    %c2_347 = arith.constant 2 : index
    %c0_348 = arith.constant 0 : index
    %320 = vector.load %arg8[%c2_346, %c2_347, %c0_348] : memref<6x18x72xf32, #tpu.memory_space<vmem>>, vector<1x16x72xf32>
    %321 = vector.shape_cast %320 : vector<1x16x72xf32> to vector<16x72xf32>
    %c8_349 = arith.constant 8 : index
    %c0_350 = arith.constant 0 : index
    %c0_351 = arith.constant 0 : index
    %322 = vector.load %arg4[%c8_349, %c0_350, %c0_351] : memref<9x72x64xf32, #tpu.memory_space<vmem>>, vector<1x72x64xf32>
    %323 = vector.shape_cast %322 : vector<1x72x64xf32> to vector<72x64xf32>
    %cst_352 = arith.constant dense<0.000000e+00> : vector<16x64xf32>
    %324 = tpu.matmul %321, %323, %cst_352 {dimension_numbers = #tpu.dot_dimension_numbers<[1], [0], [0], [1], [0, 0, 1, 1], [], []>} : vector<16x72xf32>, vector<72x64xf32>, vector<16x64xf32> -> vector<16x64xf32>
    %325 = arith.addf %319, %324 : vector<16x64xf32>
    %c0_353 = arith.constant 0 : index
    %c0_354 = arith.constant 0 : index
    %326 = vector.load %arg5[%c0_353, %c0_354] : memref<1x64xf32, #tpu.memory_space<vmem>>, vector<1x64xf32>
    %327 = vector.broadcast %326 : vector<1x64xf32> to vector<16x64xf32>
    %328 = arith.addf %325, %327 : vector<16x64xf32>
    %cst_355 = arith.constant 0.000000e+00 : f32
    %329 = vector.broadcast %cst_355 : f32 to vector<16x64xf32>
    %330 = arith.cmpf ogt, %328, %329 : vector<16x64xf32>
    %cst_356 = arith.constant 4.000000e-02 : f32
    %331 = vector.broadcast %cst_356 : f32 to vector<16x64xf32>
    %332 = arith.mulf %331, %328 : vector<16x64xf32>
    %333 = arith.select %330, %328, %332 : vector<16x64xi1>, vector<16x64xf32>
    %c1_357 = arith.constant 1 : index
    %c1_358 = arith.constant 1 : index
    %c4_359 = arith.constant 4 : index
    %334 = vector.load %arg8[%c1_357, %c1_358, %c4_359] : memref<6x18x72xf32, #tpu.memory_space<vmem>>, vector<1x16x64xf32>
    %335 = vector.shape_cast %334 : vector<1x16x64xf32> to vector<16x64xf32>
    %336 = arith.addf %335, %333 : vector<16x64xf32>
    %c0_360 = arith.constant 0 : index
    %c0_361 = arith.constant 0 : index
    %c0_362 = arith.constant 0 : index
    %c0_363 = arith.constant 0 : index
    %337 = vector.load %arg6[%c0_360, %c0_361, %c0_362, %c0_363] : memref<1x4x16x64xf32, #tpu.memory_space<vmem>>, vector<1x1x16x64xf32>
    %338 = vector.shape_cast %337 : vector<1x1x16x64xf32> to vector<16x64xf32>
    %339 = vector.shape_cast %336 : vector<16x64xf32> to vector<1x1x16x64xf32>
    tpu.vector_store %arg6[%c0_360, %c0_361, %c0_362, %c0_363], %339 {strides = array<i32>} : memref<1x4x16x64xf32, #tpu.memory_space<vmem>>, vector<1x1x16x64xf32>,
    %cst_364 = arith.constant 0.000000e+00 : f32
    %340 = vector.broadcast %cst_364 : f32 to vector<16x64xf32>
    %c1_365 = arith.constant 1 : index
    %c0_366 = arith.constant 0 : index
    %c0_367 = arith.constant 0 : index
    %341 = vector.load %arg8[%c1_365, %c0_366, %c0_367] : memref<6x18x72xf32, #tpu.memory_space<vmem>>, vector<1x16x72xf32>
    %342 = vector.shape_cast %341 : vector<1x16x72xf32> to vector<16x72xf32>
    %c0_368 = arith.constant 0 : index
    %c0_369 = arith.constant 0 : index
    %c0_370 = arith.constant 0 : index
    %343 = vector.load %arg4[%c0_368, %c0_369, %c0_370] : memref<9x72x64xf32, #tpu.memory_space<vmem>>, vector<1x72x64xf32>
    %344 = vector.shape_cast %343 : vector<1x72x64xf32> to vector<72x64xf32>
    %cst_371 = arith.constant dense<0.000000e+00> : vector<16x64xf32>
    %345 = tpu.matmul %342, %344, %cst_371 {dimension_numbers = #tpu.dot_dimension_numbers<[1], [0], [0], [1], [0, 0, 1, 1], [], []>} : vector<16x72xf32>, vector<72x64xf32>, vector<16x64xf32> -> vector<16x64xf32>
    %346 = arith.addf %340, %345 : vector<16x64xf32>
    %c1_372 = arith.constant 1 : index
    %c1_373 = arith.constant 1 : index
    %c0_374 = arith.constant 0 : index
    %347 = vector.load %arg8[%c1_372, %c1_373, %c0_374] : memref<6x18x72xf32, #tpu.memory_space<vmem>>, vector<1x16x72xf32>
    %348 = vector.shape_cast %347 : vector<1x16x72xf32> to vector<16x72xf32>
    %c1_375 = arith.constant 1 : index
    %c0_376 = arith.constant 0 : index
    %c0_377 = arith.constant 0 : index
    %349 = vector.load %arg4[%c1_375, %c0_376, %c0_377] : memref<9x72x64xf32, #tpu.memory_space<vmem>>, vector<1x72x64xf32>
    %350 = vector.shape_cast %349 : vector<1x72x64xf32> to vector<72x64xf32>
    %cst_378 = arith.constant dense<0.000000e+00> : vector<16x64xf32>
    %351 = tpu.matmul %348, %350, %cst_378 {dimension_numbers = #tpu.dot_dimension_numbers<[1], [0], [0], [1], [0, 0, 1, 1], [], []>} : vector<16x72xf32>, vector<72x64xf32>, vector<16x64xf32> -> vector<16x64xf32>
    %352 = arith.addf %346, %351 : vector<16x64xf32>
    %c1_379 = arith.constant 1 : index
    %c2_380 = arith.constant 2 : index
    %c0_381 = arith.constant 0 : index
    %353 = vector.load %arg8[%c1_379, %c2_380, %c0_381] : memref<6x18x72xf32, #tpu.memory_space<vmem>>, vector<1x16x72xf32>
    %354 = vector.shape_cast %353 : vector<1x16x72xf32> to vector<16x72xf32>
    %c2_382 = arith.constant 2 : index
    %c0_383 = arith.constant 0 : index
    %c0_384 = arith.constant 0 : index
    %355 = vector.load %arg4[%c2_382, %c0_383, %c0_384] : memref<9x72x64xf32, #tpu.memory_space<vmem>>, vector<1x72x64xf32>
    %356 = vector.shape_cast %355 : vector<1x72x64xf32> to vector<72x64xf32>
    %cst_385 = arith.constant dense<0.000000e+00> : vector<16x64xf32>
    %357 = tpu.matmul %354, %356, %cst_385 {dimension_numbers = #tpu.dot_dimension_numbers<[1], [0], [0], [1], [0, 0, 1, 1], [], []>} : vector<16x72xf32>, vector<72x64xf32>, vector<16x64xf32> -> vector<16x64xf32>
    %358 = arith.addf %352, %357 : vector<16x64xf32>
    %c2_386 = arith.constant 2 : index
    %c0_387 = arith.constant 0 : index
    %c0_388 = arith.constant 0 : index
    %359 = vector.load %arg8[%c2_386, %c0_387, %c0_388] : memref<6x18x72xf32, #tpu.memory_space<vmem>>, vector<1x16x72xf32>
    %360 = vector.shape_cast %359 : vector<1x16x72xf32> to vector<16x72xf32>
    %c3_389 = arith.constant 3 : index
    %c0_390 = arith.constant 0 : index
    %c0_391 = arith.constant 0 : index
    %361 = vector.load %arg4[%c3_389, %c0_390, %c0_391] : memref<9x72x64xf32, #tpu.memory_space<vmem>>, vector<1x72x64xf32>
    %362 = vector.shape_cast %361 : vector<1x72x64xf32> to vector<72x64xf32>
    %cst_392 = arith.constant dense<0.000000e+00> : vector<16x64xf32>
    %363 = tpu.matmul %360, %362, %cst_392 {dimension_numbers = #tpu.dot_dimension_numbers<[1], [0], [0], [1], [0, 0, 1, 1], [], []>} : vector<16x72xf32>, vector<72x64xf32>, vector<16x64xf32> -> vector<16x64xf32>
    %364 = arith.addf %358, %363 : vector<16x64xf32>
    %c2_393 = arith.constant 2 : index
    %c1_394 = arith.constant 1 : index
    %c0_395 = arith.constant 0 : index
    %365 = vector.load %arg8[%c2_393, %c1_394, %c0_395] : memref<6x18x72xf32, #tpu.memory_space<vmem>>, vector<1x16x72xf32>
    %366 = vector.shape_cast %365 : vector<1x16x72xf32> to vector<16x72xf32>
    %c4_396 = arith.constant 4 : index
    %c0_397 = arith.constant 0 : index
    %c0_398 = arith.constant 0 : index
    %367 = vector.load %arg4[%c4_396, %c0_397, %c0_398] : memref<9x72x64xf32, #tpu.memory_space<vmem>>, vector<1x72x64xf32>
    %368 = vector.shape_cast %367 : vector<1x72x64xf32> to vector<72x64xf32>
    %cst_399 = arith.constant dense<0.000000e+00> : vector<16x64xf32>
    %369 = tpu.matmul %366, %368, %cst_399 {dimension_numbers = #tpu.dot_dimension_numbers<[1], [0], [0], [1], [0, 0, 1, 1], [], []>} : vector<16x72xf32>, vector<72x64xf32>, vector<16x64xf32> -> vector<16x64xf32>
    %370 = arith.addf %364, %369 : vector<16x64xf32>
    %c2_400 = arith.constant 2 : index
    %c2_401 = arith.constant 2 : index
    %c0_402 = arith.constant 0 : index
    %371 = vector.load %arg8[%c2_400, %c2_401, %c0_402] : memref<6x18x72xf32, #tpu.memory_space<vmem>>, vector<1x16x72xf32>
    %372 = vector.shape_cast %371 : vector<1x16x72xf32> to vector<16x72xf32>
    %c5_403 = arith.constant 5 : index
    %c0_404 = arith.constant 0 : index
    %c0_405 = arith.constant 0 : index
    %373 = vector.load %arg4[%c5_403, %c0_404, %c0_405] : memref<9x72x64xf32, #tpu.memory_space<vmem>>, vector<1x72x64xf32>
    %374 = vector.shape_cast %373 : vector<1x72x64xf32> to vector<72x64xf32>
    %cst_406 = arith.constant dense<0.000000e+00> : vector<16x64xf32>
    %375 = tpu.matmul %372, %374, %cst_406 {dimension_numbers = #tpu.dot_dimension_numbers<[1], [0], [0], [1], [0, 0, 1, 1], [], []>} : vector<16x72xf32>, vector<72x64xf32>, vector<16x64xf32> -> vector<16x64xf32>
    %376 = arith.addf %370, %375 : vector<16x64xf32>
    %c3_407 = arith.constant 3 : index
    %c0_408 = arith.constant 0 : index
    %c0_409 = arith.constant 0 : index
    %377 = vector.load %arg8[%c3_407, %c0_408, %c0_409] : memref<6x18x72xf32, #tpu.memory_space<vmem>>, vector<1x16x72xf32>
    %378 = vector.shape_cast %377 : vector<1x16x72xf32> to vector<16x72xf32>
    %c6_410 = arith.constant 6 : index
    %c0_411 = arith.constant 0 : index
    %c0_412 = arith.constant 0 : index
    %379 = vector.load %arg4[%c6_410, %c0_411, %c0_412] : memref<9x72x64xf32, #tpu.memory_space<vmem>>, vector<1x72x64xf32>
    %380 = vector.shape_cast %379 : vector<1x72x64xf32> to vector<72x64xf32>
    %cst_413 = arith.constant dense<0.000000e+00> : vector<16x64xf32>
    %381 = tpu.matmul %378, %380, %cst_413 {dimension_numbers = #tpu.dot_dimension_numbers<[1], [0], [0], [1], [0, 0, 1, 1], [], []>} : vector<16x72xf32>, vector<72x64xf32>, vector<16x64xf32> -> vector<16x64xf32>
    %382 = arith.addf %376, %381 : vector<16x64xf32>
    %c3_414 = arith.constant 3 : index
    %c1_415 = arith.constant 1 : index
    %c0_416 = arith.constant 0 : index
    %383 = vector.load %arg8[%c3_414, %c1_415, %c0_416] : memref<6x18x72xf32, #tpu.memory_space<vmem>>, vector<1x16x72xf32>
    %384 = vector.shape_cast %383 : vector<1x16x72xf32> to vector<16x72xf32>
    %c7_417 = arith.constant 7 : index
    %c0_418 = arith.constant 0 : index
    %c0_419 = arith.constant 0 : index
    %385 = vector.load %arg4[%c7_417, %c0_418, %c0_419] : memref<9x72x64xf32, #tpu.memory_space<vmem>>, vector<1x72x64xf32>
    %386 = vector.shape_cast %385 : vector<1x72x64xf32> to vector<72x64xf32>
    %cst_420 = arith.constant dense<0.000000e+00> : vector<16x64xf32>
    %387 = tpu.matmul %384, %386, %cst_420 {dimension_numbers = #tpu.dot_dimension_numbers<[1], [0], [0], [1], [0, 0, 1, 1], [], []>} : vector<16x72xf32>, vector<72x64xf32>, vector<16x64xf32> -> vector<16x64xf32>
    %388 = arith.addf %382, %387 : vector<16x64xf32>
    %c3_421 = arith.constant 3 : index
    %c2_422 = arith.constant 2 : index
    %c0_423 = arith.constant 0 : index
    %389 = vector.load %arg8[%c3_421, %c2_422, %c0_423] : memref<6x18x72xf32, #tpu.memory_space<vmem>>, vector<1x16x72xf32>
    %390 = vector.shape_cast %389 : vector<1x16x72xf32> to vector<16x72xf32>
    %c8_424 = arith.constant 8 : index
    %c0_425 = arith.constant 0 : index
    %c0_426 = arith.constant 0 : index
    %391 = vector.load %arg4[%c8_424, %c0_425, %c0_426] : memref<9x72x64xf32, #tpu.memory_space<vmem>>, vector<1x72x64xf32>
    %392 = vector.shape_cast %391 : vector<1x72x64xf32> to vector<72x64xf32>
    %cst_427 = arith.constant dense<0.000000e+00> : vector<16x64xf32>
    %393 = tpu.matmul %390, %392, %cst_427 {dimension_numbers = #tpu.dot_dimension_numbers<[1], [0], [0], [1], [0, 0, 1, 1], [], []>} : vector<16x72xf32>, vector<72x64xf32>, vector<16x64xf32> -> vector<16x64xf32>
    %394 = arith.addf %388, %393 : vector<16x64xf32>
    %c0_428 = arith.constant 0 : index
    %c0_429 = arith.constant 0 : index
    %395 = vector.load %arg5[%c0_428, %c0_429] : memref<1x64xf32, #tpu.memory_space<vmem>>, vector<1x64xf32>
    %396 = vector.broadcast %395 : vector<1x64xf32> to vector<16x64xf32>
    %397 = arith.addf %394, %396 : vector<16x64xf32>
    %cst_430 = arith.constant 0.000000e+00 : f32
    %398 = vector.broadcast %cst_430 : f32 to vector<16x64xf32>
    %399 = arith.cmpf ogt, %397, %398 : vector<16x64xf32>
    %cst_431 = arith.constant 4.000000e-02 : f32
    %400 = vector.broadcast %cst_431 : f32 to vector<16x64xf32>
    %401 = arith.mulf %400, %397 : vector<16x64xf32>
    %402 = arith.select %399, %397, %401 : vector<16x64xi1>, vector<16x64xf32>
    %c2_432 = arith.constant 2 : index
    %c1_433 = arith.constant 1 : index
    %c4_434 = arith.constant 4 : index
    %403 = vector.load %arg8[%c2_432, %c1_433, %c4_434] : memref<6x18x72xf32, #tpu.memory_space<vmem>>, vector<1x16x64xf32>
    %404 = vector.shape_cast %403 : vector<1x16x64xf32> to vector<16x64xf32>
    %405 = arith.addf %404, %402 : vector<16x64xf32>
    %c0_435 = arith.constant 0 : index
    %c1_436 = arith.constant 1 : index
    %c0_437 = arith.constant 0 : index
    %c0_438 = arith.constant 0 : index
    %406 = vector.load %arg6[%c0_435, %c1_436, %c0_437, %c0_438] : memref<1x4x16x64xf32, #tpu.memory_space<vmem>>, vector<1x1x16x64xf32>
    %407 = vector.shape_cast %406 : vector<1x1x16x64xf32> to vector<16x64xf32>
    %408 = vector.shape_cast %405 : vector<16x64xf32> to vector<1x1x16x64xf32>
    tpu.vector_store %arg6[%c0_435, %c1_436, %c0_437, %c0_438], %408 {strides = array<i32>} : memref<1x4x16x64xf32, #tpu.memory_space<vmem>>, vector<1x1x16x64xf32>,
    %cst_439 = arith.constant 0.000000e+00 : f32
    %409 = vector.broadcast %cst_439 : f32 to vector<16x64xf32>
    %c2_440 = arith.constant 2 : index
    %c0_441 = arith.constant 0 : index
    %c0_442 = arith.constant 0 : index
    %410 = vector.load %arg8[%c2_440, %c0_441, %c0_442] : memref<6x18x72xf32, #tpu.memory_space<vmem>>, vector<1x16x72xf32>
    %411 = vector.shape_cast %410 : vector<1x16x72xf32> to vector<16x72xf32>
    %c0_443 = arith.constant 0 : index
    %c0_444 = arith.constant 0 : index
    %c0_445 = arith.constant 0 : index
    %412 = vector.load %arg4[%c0_443, %c0_444, %c0_445] : memref<9x72x64xf32, #tpu.memory_space<vmem>>, vector<1x72x64xf32>
    %413 = vector.shape_cast %412 : vector<1x72x64xf32> to vector<72x64xf32>
    %cst_446 = arith.constant dense<0.000000e+00> : vector<16x64xf32>
    %414 = tpu.matmul %411, %413, %cst_446 {dimension_numbers = #tpu.dot_dimension_numbers<[1], [0], [0], [1], [0, 0, 1, 1], [], []>} : vector<16x72xf32>, vector<72x64xf32>, vector<16x64xf32> -> vector<16x64xf32>
    %415 = arith.addf %409, %414 : vector<16x64xf32>
    %c2_447 = arith.constant 2 : index
    %c1_448 = arith.constant 1 : index
    %c0_449 = arith.constant 0 : index
    %416 = vector.load %arg8[%c2_447, %c1_448, %c0_449] : memref<6x18x72xf32, #tpu.memory_space<vmem>>, vector<1x16x72xf32>
    %417 = vector.shape_cast %416 : vector<1x16x72xf32> to vector<16x72xf32>
    %c1_450 = arith.constant 1 : index
    %c0_451 = arith.constant 0 : index
    %c0_452 = arith.constant 0 : index
    %418 = vector.load %arg4[%c1_450, %c0_451, %c0_452] : memref<9x72x64xf32, #tpu.memory_space<vmem>>, vector<1x72x64xf32>
    %419 = vector.shape_cast %418 : vector<1x72x64xf32> to vector<72x64xf32>
    %cst_453 = arith.constant dense<0.000000e+00> : vector<16x64xf32>
    %420 = tpu.matmul %417, %419, %cst_453 {dimension_numbers = #tpu.dot_dimension_numbers<[1], [0], [0], [1], [0, 0, 1, 1], [], []>} : vector<16x72xf32>, vector<72x64xf32>, vector<16x64xf32> -> vector<16x64xf32>
    %421 = arith.addf %415, %420 : vector<16x64xf32>
    %c2_454 = arith.constant 2 : index
    %c2_455 = arith.constant 2 : index
    %c0_456 = arith.constant 0 : index
    %422 = vector.load %arg8[%c2_454, %c2_455, %c0_456] : memref<6x18x72xf32, #tpu.memory_space<vmem>>, vector<1x16x72xf32>
    %423 = vector.shape_cast %422 : vector<1x16x72xf32> to vector<16x72xf32>
    %c2_457 = arith.constant 2 : index
    %c0_458 = arith.constant 0 : index
    %c0_459 = arith.constant 0 : index
    %424 = vector.load %arg4[%c2_457, %c0_458, %c0_459] : memref<9x72x64xf32, #tpu.memory_space<vmem>>, vector<1x72x64xf32>
    %425 = vector.shape_cast %424 : vector<1x72x64xf32> to vector<72x64xf32>
    %cst_460 = arith.constant dense<0.000000e+00> : vector<16x64xf32>
    %426 = tpu.matmul %423, %425, %cst_460 {dimension_numbers = #tpu.dot_dimension_numbers<[1], [0], [0], [1], [0, 0, 1, 1], [], []>} : vector<16x72xf32>, vector<72x64xf32>, vector<16x64xf32> -> vector<16x64xf32>
    %427 = arith.addf %421, %426 : vector<16x64xf32>
    %c3_461 = arith.constant 3 : index
    %c0_462 = arith.constant 0 : index
    %c0_463 = arith.constant 0 : index
    %428 = vector.load %arg8[%c3_461, %c0_462, %c0_463] : memref<6x18x72xf32, #tpu.memory_space<vmem>>, vector<1x16x72xf32>
    %429 = vector.shape_cast %428 : vector<1x16x72xf32> to vector<16x72xf32>
    %c3_464 = arith.constant 3 : index
    %c0_465 = arith.constant 0 : index
    %c0_466 = arith.constant 0 : index
    %430 = vector.load %arg4[%c3_464, %c0_465, %c0_466] : memref<9x72x64xf32, #tpu.memory_space<vmem>>, vector<1x72x64xf32>
    %431 = vector.shape_cast %430 : vector<1x72x64xf32> to vector<72x64xf32>
    %cst_467 = arith.constant dense<0.000000e+00> : vector<16x64xf32>
    %432 = tpu.matmul %429, %431, %cst_467 {dimension_numbers = #tpu.dot_dimension_numbers<[1], [0], [0], [1], [0, 0, 1, 1], [], []>} : vector<16x72xf32>, vector<72x64xf32>, vector<16x64xf32> -> vector<16x64xf32>
    %433 = arith.addf %427, %432 : vector<16x64xf32>
    %c3_468 = arith.constant 3 : index
    %c1_469 = arith.constant 1 : index
    %c0_470 = arith.constant 0 : index
    %434 = vector.load %arg8[%c3_468, %c1_469, %c0_470] : memref<6x18x72xf32, #tpu.memory_space<vmem>>, vector<1x16x72xf32>
    %435 = vector.shape_cast %434 : vector<1x16x72xf32> to vector<16x72xf32>
    %c4_471 = arith.constant 4 : index
    %c0_472 = arith.constant 0 : index
    %c0_473 = arith.constant 0 : index
    %436 = vector.load %arg4[%c4_471, %c0_472, %c0_473] : memref<9x72x64xf32, #tpu.memory_space<vmem>>, vector<1x72x64xf32>
    %437 = vector.shape_cast %436 : vector<1x72x64xf32> to vector<72x64xf32>
    %cst_474 = arith.constant dense<0.000000e+00> : vector<16x64xf32>
    %438 = tpu.matmul %435, %437, %cst_474 {dimension_numbers = #tpu.dot_dimension_numbers<[1], [0], [0], [1], [0, 0, 1, 1], [], []>} : vector<16x72xf32>, vector<72x64xf32>, vector<16x64xf32> -> vector<16x64xf32>
    %439 = arith.addf %433, %438 : vector<16x64xf32>
    %c3_475 = arith.constant 3 : index
    %c2_476 = arith.constant 2 : index
    %c0_477 = arith.constant 0 : index
    %440 = vector.load %arg8[%c3_475, %c2_476, %c0_477] : memref<6x18x72xf32, #tpu.memory_space<vmem>>, vector<1x16x72xf32>
    %441 = vector.shape_cast %440 : vector<1x16x72xf32> to vector<16x72xf32>
    %c5_478 = arith.constant 5 : index
    %c0_479 = arith.constant 0 : index
    %c0_480 = arith.constant 0 : index
    %442 = vector.load %arg4[%c5_478, %c0_479, %c0_480] : memref<9x72x64xf32, #tpu.memory_space<vmem>>, vector<1x72x64xf32>
    %443 = vector.shape_cast %442 : vector<1x72x64xf32> to vector<72x64xf32>
    %cst_481 = arith.constant dense<0.000000e+00> : vector<16x64xf32>
    %444 = tpu.matmul %441, %443, %cst_481 {dimension_numbers = #tpu.dot_dimension_numbers<[1], [0], [0], [1], [0, 0, 1, 1], [], []>} : vector<16x72xf32>, vector<72x64xf32>, vector<16x64xf32> -> vector<16x64xf32>
    %445 = arith.addf %439, %444 : vector<16x64xf32>
    %c4_482 = arith.constant 4 : index
    %c0_483 = arith.constant 0 : index
    %c0_484 = arith.constant 0 : index
    %446 = vector.load %arg8[%c4_482, %c0_483, %c0_484] : memref<6x18x72xf32, #tpu.memory_space<vmem>>, vector<1x16x72xf32>
    %447 = vector.shape_cast %446 : vector<1x16x72xf32> to vector<16x72xf32>
    %c6_485 = arith.constant 6 : index
    %c0_486 = arith.constant 0 : index
    %c0_487 = arith.constant 0 : index
    %448 = vector.load %arg4[%c6_485, %c0_486, %c0_487] : memref<9x72x64xf32, #tpu.memory_space<vmem>>, vector<1x72x64xf32>
    %449 = vector.shape_cast %448 : vector<1x72x64xf32> to vector<72x64xf32>
    %cst_488 = arith.constant dense<0.000000e+00> : vector<16x64xf32>
    %450 = tpu.matmul %447, %449, %cst_488 {dimension_numbers = #tpu.dot_dimension_numbers<[1], [0], [0], [1], [0, 0, 1, 1], [], []>} : vector<16x72xf32>, vector<72x64xf32>, vector<16x64xf32> -> vector<16x64xf32>
    %451 = arith.addf %445, %450 : vector<16x64xf32>
    %c4_489 = arith.constant 4 : index
    %c1_490 = arith.constant 1 : index
    %c0_491 = arith.constant 0 : index
    %452 = vector.load %arg8[%c4_489, %c1_490, %c0_491] : memref<6x18x72xf32, #tpu.memory_space<vmem>>, vector<1x16x72xf32>
    %453 = vector.shape_cast %452 : vector<1x16x72xf32> to vector<16x72xf32>
    %c7_492 = arith.constant 7 : index
    %c0_493 = arith.constant 0 : index
    %c0_494 = arith.constant 0 : index
    %454 = vector.load %arg4[%c7_492, %c0_493, %c0_494] : memref<9x72x64xf32, #tpu.memory_space<vmem>>, vector<1x72x64xf32>
    %455 = vector.shape_cast %454 : vector<1x72x64xf32> to vector<72x64xf32>
    %cst_495 = arith.constant dense<0.000000e+00> : vector<16x64xf32>
    %456 = tpu.matmul %453, %455, %cst_495 {dimension_numbers = #tpu.dot_dimension_numbers<[1], [0], [0], [1], [0, 0, 1, 1], [], []>} : vector<16x72xf32>, vector<72x64xf32>, vector<16x64xf32> -> vector<16x64xf32>
    %457 = arith.addf %451, %456 : vector<16x64xf32>
    %c4_496 = arith.constant 4 : index
    %c2_497 = arith.constant 2 : index
    %c0_498 = arith.constant 0 : index
    %458 = vector.load %arg8[%c4_496, %c2_497, %c0_498] : memref<6x18x72xf32, #tpu.memory_space<vmem>>, vector<1x16x72xf32>
    %459 = vector.shape_cast %458 : vector<1x16x72xf32> to vector<16x72xf32>
    %c8_499 = arith.constant 8 : index
    %c0_500 = arith.constant 0 : index
    %c0_501 = arith.constant 0 : index
    %460 = vector.load %arg4[%c8_499, %c0_500, %c0_501] : memref<9x72x64xf32, #tpu.memory_space<vmem>>, vector<1x72x64xf32>
    %461 = vector.shape_cast %460 : vector<1x72x64xf32> to vector<72x64xf32>
    %cst_502 = arith.constant dense<0.000000e+00> : vector<16x64xf32>
    %462 = tpu.matmul %459, %461, %cst_502 {dimension_numbers = #tpu.dot_dimension_numbers<[1], [0], [0], [1], [0, 0, 1, 1], [], []>} : vector<16x72xf32>, vector<72x64xf32>, vector<16x64xf32> -> vector<16x64xf32>
    %463 = arith.addf %457, %462 : vector<16x64xf32>
    %c0_503 = arith.constant 0 : index
    %c0_504 = arith.constant 0 : index
    %464 = vector.load %arg5[%c0_503, %c0_504] : memref<1x64xf32, #tpu.memory_space<vmem>>, vector<1x64xf32>
    %465 = vector.broadcast %464 : vector<1x64xf32> to vector<16x64xf32>
    %466 = arith.addf %463, %465 : vector<16x64xf32>
    %cst_505 = arith.constant 0.000000e+00 : f32
    %467 = vector.broadcast %cst_505 : f32 to vector<16x64xf32>
    %468 = arith.cmpf ogt, %466, %467 : vector<16x64xf32>
    %cst_506 = arith.constant 4.000000e-02 : f32
    %469 = vector.broadcast %cst_506 : f32 to vector<16x64xf32>
    %470 = arith.mulf %469, %466 : vector<16x64xf32>
    %471 = arith.select %468, %466, %470 : vector<16x64xi1>, vector<16x64xf32>
    %c3_507 = arith.constant 3 : index
    %c1_508 = arith.constant 1 : index
    %c4_509 = arith.constant 4 : index
    %472 = vector.load %arg8[%c3_507, %c1_508, %c4_509] : memref<6x18x72xf32, #tpu.memory_space<vmem>>, vector<1x16x64xf32>
    %473 = vector.shape_cast %472 : vector<1x16x64xf32> to vector<16x64xf32>
    %474 = arith.addf %473, %471 : vector<16x64xf32>
    %c0_510 = arith.constant 0 : index
    %c2_511 = arith.constant 2 : index
    %c0_512 = arith.constant 0 : index
    %c0_513 = arith.constant 0 : index
    %475 = vector.load %arg6[%c0_510, %c2_511, %c0_512, %c0_513] : memref<1x4x16x64xf32, #tpu.memory_space<vmem>>, vector<1x1x16x64xf32>
    %476 = vector.shape_cast %475 : vector<1x1x16x64xf32> to vector<16x64xf32>
    %477 = vector.shape_cast %474 : vector<16x64xf32> to vector<1x1x16x64xf32>
    tpu.vector_store %arg6[%c0_510, %c2_511, %c0_512, %c0_513], %477 {strides = array<i32>} : memref<1x4x16x64xf32, #tpu.memory_space<vmem>>, vector<1x1x16x64xf32>,
    %cst_514 = arith.constant 0.000000e+00 : f32
    %478 = vector.broadcast %cst_514 : f32 to vector<16x64xf32>
    %c3_515 = arith.constant 3 : index
    %c0_516 = arith.constant 0 : index
    %c0_517 = arith.constant 0 : index
    %479 = vector.load %arg8[%c3_515, %c0_516, %c0_517] : memref<6x18x72xf32, #tpu.memory_space<vmem>>, vector<1x16x72xf32>
    %480 = vector.shape_cast %479 : vector<1x16x72xf32> to vector<16x72xf32>
    %c0_518 = arith.constant 0 : index
    %c0_519 = arith.constant 0 : index
    %c0_520 = arith.constant 0 : index
    %481 = vector.load %arg4[%c0_518, %c0_519, %c0_520] : memref<9x72x64xf32, #tpu.memory_space<vmem>>, vector<1x72x64xf32>
    %482 = vector.shape_cast %481 : vector<1x72x64xf32> to vector<72x64xf32>
    %cst_521 = arith.constant dense<0.000000e+00> : vector<16x64xf32>
    %483 = tpu.matmul %480, %482, %cst_521 {dimension_numbers = #tpu.dot_dimension_numbers<[1], [0], [0], [1], [0, 0, 1, 1], [], []>} : vector<16x72xf32>, vector<72x64xf32>, vector<16x64xf32> -> vector<16x64xf32>
    %484 = arith.addf %478, %483 : vector<16x64xf32>
    %c3_522 = arith.constant 3 : index
    %c1_523 = arith.constant 1 : index
    %c0_524 = arith.constant 0 : index
    %485 = vector.load %arg8[%c3_522, %c1_523, %c0_524] : memref<6x18x72xf32, #tpu.memory_space<vmem>>, vector<1x16x72xf32>
    %486 = vector.shape_cast %485 : vector<1x16x72xf32> to vector<16x72xf32>
    %c1_525 = arith.constant 1 : index
    %c0_526 = arith.constant 0 : index
    %c0_527 = arith.constant 0 : index
    %487 = vector.load %arg4[%c1_525, %c0_526, %c0_527] : memref<9x72x64xf32, #tpu.memory_space<vmem>>, vector<1x72x64xf32>
    %488 = vector.shape_cast %487 : vector<1x72x64xf32> to vector<72x64xf32>
    %cst_528 = arith.constant dense<0.000000e+00> : vector<16x64xf32>
    %489 = tpu.matmul %486, %488, %cst_528 {dimension_numbers = #tpu.dot_dimension_numbers<[1], [0], [0], [1], [0, 0, 1, 1], [], []>} : vector<16x72xf32>, vector<72x64xf32>, vector<16x64xf32> -> vector<16x64xf32>
    %490 = arith.addf %484, %489 : vector<16x64xf32>
    %c3_529 = arith.constant 3 : index
    %c2_530 = arith.constant 2 : index
    %c0_531 = arith.constant 0 : index
    %491 = vector.load %arg8[%c3_529, %c2_530, %c0_531] : memref<6x18x72xf32, #tpu.memory_space<vmem>>, vector<1x16x72xf32>
    %492 = vector.shape_cast %491 : vector<1x16x72xf32> to vector<16x72xf32>
    %c2_532 = arith.constant 2 : index
    %c0_533 = arith.constant 0 : index
    %c0_534 = arith.constant 0 : index
    %493 = vector.load %arg4[%c2_532, %c0_533, %c0_534] : memref<9x72x64xf32, #tpu.memory_space<vmem>>, vector<1x72x64xf32>
    %494 = vector.shape_cast %493 : vector<1x72x64xf32> to vector<72x64xf32>
    %cst_535 = arith.constant dense<0.000000e+00> : vector<16x64xf32>
    %495 = tpu.matmul %492, %494, %cst_535 {dimension_numbers = #tpu.dot_dimension_numbers<[1], [0], [0], [1], [0, 0, 1, 1], [], []>} : vector<16x72xf32>, vector<72x64xf32>, vector<16x64xf32> -> vector<16x64xf32>
    %496 = arith.addf %490, %495 : vector<16x64xf32>
    %c4_536 = arith.constant 4 : index
    %c0_537 = arith.constant 0 : index
    %c0_538 = arith.constant 0 : index
    %497 = vector.load %arg8[%c4_536, %c0_537, %c0_538] : memref<6x18x72xf32, #tpu.memory_space<vmem>>, vector<1x16x72xf32>
    %498 = vector.shape_cast %497 : vector<1x16x72xf32> to vector<16x72xf32>
    %c3_539 = arith.constant 3 : index
    %c0_540 = arith.constant 0 : index
    %c0_541 = arith.constant 0 : index
    %499 = vector.load %arg4[%c3_539, %c0_540, %c0_541] : memref<9x72x64xf32, #tpu.memory_space<vmem>>, vector<1x72x64xf32>
    %500 = vector.shape_cast %499 : vector<1x72x64xf32> to vector<72x64xf32>
    %cst_542 = arith.constant dense<0.000000e+00> : vector<16x64xf32>
    %501 = tpu.matmul %498, %500, %cst_542 {dimension_numbers = #tpu.dot_dimension_numbers<[1], [0], [0], [1], [0, 0, 1, 1], [], []>} : vector<16x72xf32>, vector<72x64xf32>, vector<16x64xf32> -> vector<16x64xf32>
    %502 = arith.addf %496, %501 : vector<16x64xf32>
    %c4_543 = arith.constant 4 : index
    %c1_544 = arith.constant 1 : index
    %c0_545 = arith.constant 0 : index
    %503 = vector.load %arg8[%c4_543, %c1_544, %c0_545] : memref<6x18x72xf32, #tpu.memory_space<vmem>>, vector<1x16x72xf32>
    %504 = vector.shape_cast %503 : vector<1x16x72xf32> to vector<16x72xf32>
    %c4_546 = arith.constant 4 : index
    %c0_547 = arith.constant 0 : index
    %c0_548 = arith.constant 0 : index
    %505 = vector.load %arg4[%c4_546, %c0_547, %c0_548] : memref<9x72x64xf32, #tpu.memory_space<vmem>>, vector<1x72x64xf32>
    %506 = vector.shape_cast %505 : vector<1x72x64xf32> to vector<72x64xf32>
    %cst_549 = arith.constant dense<0.000000e+00> : vector<16x64xf32>
    %507 = tpu.matmul %504, %506, %cst_549 {dimension_numbers = #tpu.dot_dimension_numbers<[1], [0], [0], [1], [0, 0, 1, 1], [], []>} : vector<16x72xf32>, vector<72x64xf32>, vector<16x64xf32> -> vector<16x64xf32>
    %508 = arith.addf %502, %507 : vector<16x64xf32>
    %c4_550 = arith.constant 4 : index
    %c2_551 = arith.constant 2 : index
    %c0_552 = arith.constant 0 : index
    %509 = vector.load %arg8[%c4_550, %c2_551, %c0_552] : memref<6x18x72xf32, #tpu.memory_space<vmem>>, vector<1x16x72xf32>
    %510 = vector.shape_cast %509 : vector<1x16x72xf32> to vector<16x72xf32>
    %c5_553 = arith.constant 5 : index
    %c0_554 = arith.constant 0 : index
    %c0_555 = arith.constant 0 : index
    %511 = vector.load %arg4[%c5_553, %c0_554, %c0_555] : memref<9x72x64xf32, #tpu.memory_space<vmem>>, vector<1x72x64xf32>
    %512 = vector.shape_cast %511 : vector<1x72x64xf32> to vector<72x64xf32>
    %cst_556 = arith.constant dense<0.000000e+00> : vector<16x64xf32>
    %513 = tpu.matmul %510, %512, %cst_556 {dimension_numbers = #tpu.dot_dimension_numbers<[1], [0], [0], [1], [0, 0, 1, 1], [], []>} : vector<16x72xf32>, vector<72x64xf32>, vector<16x64xf32> -> vector<16x64xf32>
    %514 = arith.addf %508, %513 : vector<16x64xf32>
    %c5_557 = arith.constant 5 : index
    %c0_558 = arith.constant 0 : index
    %c0_559 = arith.constant 0 : index
    %515 = vector.load %arg8[%c5_557, %c0_558, %c0_559] : memref<6x18x72xf32, #tpu.memory_space<vmem>>, vector<1x16x72xf32>
    %516 = vector.shape_cast %515 : vector<1x16x72xf32> to vector<16x72xf32>
    %c6_560 = arith.constant 6 : index
    %c0_561 = arith.constant 0 : index
    %c0_562 = arith.constant 0 : index
    %517 = vector.load %arg4[%c6_560, %c0_561, %c0_562] : memref<9x72x64xf32, #tpu.memory_space<vmem>>, vector<1x72x64xf32>
    %518 = vector.shape_cast %517 : vector<1x72x64xf32> to vector<72x64xf32>
    %cst_563 = arith.constant dense<0.000000e+00> : vector<16x64xf32>
    %519 = tpu.matmul %516, %518, %cst_563 {dimension_numbers = #tpu.dot_dimension_numbers<[1], [0], [0], [1], [0, 0, 1, 1], [], []>} : vector<16x72xf32>, vector<72x64xf32>, vector<16x64xf32> -> vector<16x64xf32>
    %520 = arith.addf %514, %519 : vector<16x64xf32>
    %c5_564 = arith.constant 5 : index
    %c1_565 = arith.constant 1 : index
    %c0_566 = arith.constant 0 : index
    %521 = vector.load %arg8[%c5_564, %c1_565, %c0_566] : memref<6x18x72xf32, #tpu.memory_space<vmem>>, vector<1x16x72xf32>
    %522 = vector.shape_cast %521 : vector<1x16x72xf32> to vector<16x72xf32>
    %c7_567 = arith.constant 7 : index
    %c0_568 = arith.constant 0 : index
    %c0_569 = arith.constant 0 : index
    %523 = vector.load %arg4[%c7_567, %c0_568, %c0_569] : memref<9x72x64xf32, #tpu.memory_space<vmem>>, vector<1x72x64xf32>
    %524 = vector.shape_cast %523 : vector<1x72x64xf32> to vector<72x64xf32>
    %cst_570 = arith.constant dense<0.000000e+00> : vector<16x64xf32>
    %525 = tpu.matmul %522, %524, %cst_570 {dimension_numbers = #tpu.dot_dimension_numbers<[1], [0], [0], [1], [0, 0, 1, 1], [], []>} : vector<16x72xf32>, vector<72x64xf32>, vector<16x64xf32> -> vector<16x64xf32>
    %526 = arith.addf %520, %525 : vector<16x64xf32>
    %c5_571 = arith.constant 5 : index
    %c2_572 = arith.constant 2 : index
    %c0_573 = arith.constant 0 : index
    %527 = vector.load %arg8[%c5_571, %c2_572, %c0_573] : memref<6x18x72xf32, #tpu.memory_space<vmem>>, vector<1x16x72xf32>
    %528 = vector.shape_cast %527 : vector<1x16x72xf32> to vector<16x72xf32>
    %c8_574 = arith.constant 8 : index
    %c0_575 = arith.constant 0 : index
    %c0_576 = arith.constant 0 : index
    %529 = vector.load %arg4[%c8_574, %c0_575, %c0_576] : memref<9x72x64xf32, #tpu.memory_space<vmem>>, vector<1x72x64xf32>
    %530 = vector.shape_cast %529 : vector<1x72x64xf32> to vector<72x64xf32>
    %cst_577 = arith.constant dense<0.000000e+00> : vector<16x64xf32>
    %531 = tpu.matmul %528, %530, %cst_577 {dimension_numbers = #tpu.dot_dimension_numbers<[1], [0], [0], [1], [0, 0, 1, 1], [], []>} : vector<16x72xf32>, vector<72x64xf32>, vector<16x64xf32> -> vector<16x64xf32>
    %532 = arith.addf %526, %531 : vector<16x64xf32>
    %c0_578 = arith.constant 0 : index
    %c0_579 = arith.constant 0 : index
    %533 = vector.load %arg5[%c0_578, %c0_579] : memref<1x64xf32, #tpu.memory_space<vmem>>, vector<1x64xf32>
    %534 = vector.broadcast %533 : vector<1x64xf32> to vector<16x64xf32>
    %535 = arith.addf %532, %534 : vector<16x64xf32>
    %cst_580 = arith.constant 0.000000e+00 : f32
    %536 = vector.broadcast %cst_580 : f32 to vector<16x64xf32>
    %537 = arith.cmpf ogt, %535, %536 : vector<16x64xf32>
    %cst_581 = arith.constant 4.000000e-02 : f32
    %538 = vector.broadcast %cst_581 : f32 to vector<16x64xf32>
    %539 = arith.mulf %538, %535 : vector<16x64xf32>
    %540 = arith.select %537, %535, %539 : vector<16x64xi1>, vector<16x64xf32>
    %c4_582 = arith.constant 4 : index
    %c1_583 = arith.constant 1 : index
    %c4_584 = arith.constant 4 : index
    %541 = vector.load %arg8[%c4_582, %c1_583, %c4_584] : memref<6x18x72xf32, #tpu.memory_space<vmem>>, vector<1x16x64xf32>
    %542 = vector.shape_cast %541 : vector<1x16x64xf32> to vector<16x64xf32>
    %543 = arith.addf %542, %540 : vector<16x64xf32>
    %c0_585 = arith.constant 0 : index
    %c3_586 = arith.constant 3 : index
    %c0_587 = arith.constant 0 : index
    %c0_588 = arith.constant 0 : index
    %544 = vector.load %arg6[%c0_585, %c3_586, %c0_587, %c0_588] : memref<1x4x16x64xf32, #tpu.memory_space<vmem>>, vector<1x1x16x64xf32>
    %545 = vector.shape_cast %544 : vector<1x1x16x64xf32> to vector<16x64xf32>
    %546 = vector.shape_cast %543 : vector<16x64xf32> to vector<1x1x16x64xf32>
    tpu.vector_store %arg6[%c0_585, %c3_586, %c0_587, %c0_588], %546 {strides = array<i32>} : memref<1x4x16x64xf32, #tpu.memory_space<vmem>>, vector<1x1x16x64xf32>,
    return
  }
  func.func @transform_0(%arg0: i32) -> (i32, i32, i32, i32) {
    %c0_i32 = arith.constant 0 : i32
    %c0_i32_0 = arith.constant 0 : i32
    %c0_i32_1 = arith.constant 0 : i32
    %c0_i32_2 = arith.constant 0 : i32
    return %arg0, %c0_i32, %c0_i32_0, %c0_i32_1 : i32, i32, i32, i32
  }
  func.func @transform_1(%arg0: i32) -> (i32, i32, i32) {
    %c0_i32 = arith.constant 0 : i32
    %c0_i32_0 = arith.constant 0 : i32
    %c0_i32_1 = arith.constant 0 : i32
    %c0_i32_2 = arith.constant 0 : i32
    return %c0_i32, %c0_i32_0, %c0_i32_1 : i32, i32, i32
  }
  func.func @transform_2(%arg0: i32) -> (i32, i32) {
    %c0_i32 = arith.constant 0 : i32
    %c0_i32_0 = arith.constant 0 : i32
    %c0_i32_1 = arith.constant 0 : i32
    return %c0_i32, %c0_i32_0 : i32, i32
  }
  func.func @transform_3(%arg0: i32) -> (i32, i32, i32) {
    %c0_i32 = arith.constant 0 : i32
    %c0_i32_0 = arith.constant 0 : i32
    %c0_i32_1 = arith.constant 0 : i32
    %c0_i32_2 = arith.constant 0 : i32
    return %c0_i32, %c0_i32_0, %c0_i32_1 : i32, i32, i32
  }
  func.func @transform_4(%arg0: i32) -> (i32, i32) {
    %c0_i32 = arith.constant 0 : i32
    %c0_i32_0 = arith.constant 0 : i32
    %c0_i32_1 = arith.constant 0 : i32
    return %c0_i32, %c0_i32_0 : i32, i32
  }
  func.func @transform_5(%arg0: i32) -> (i32, i32, i32, i32) {
    %c0_i32 = arith.constant 0 : i32
    %c0_i32_0 = arith.constant 0 : i32
    %c0_i32_1 = arith.constant 0 : i32
    %c0_i32_2 = arith.constant 0 : i32
    return %arg0, %c0_i32, %c0_i32_0, %c0_i32_1 : i32, i32, i32, i32
  }
}

</mosaic_0001>

<llo_original>
// kernel: tile.10
$region0: #{tile.10}
  #allocation0 [shape = 's32[1]{0}', space=sflag, size = 0x4, scoped, tag = 'scoped memory for tile.10']
  %s0 = inlined_call_operand.vmem [shape: f32[4], index: 0, kind: input, shape index: {}]
  %s1 = inlined_call_operand.vmem [shape: f32[16,4], index: 1, kind: output, shape index: {}]
  // Predicated region
  $region2: #{tile.10} parent=0 // pred_check
    _
  $region3: #{tile.10} parent=0 // pred_check_branch
    %3 = sbr.rel (0) target = $region5
  $region4: #{tile.10} parent=0 // pred_region
    _
  $region5: #{tile.10} parent=0 // pred_fallthru
    _
  %v4 = vld [vmem:[%s0] ss:$0 sm:$0xff]
  %5 = vst [vmem:[%s1] sm:$0xff] %v4
  %s6 = scalar_lea.vmem %s1, 8
  %7 = vst [vmem:[%s6] sm:$0xff] %v4

// kernel: tile.11
$region0: #{tile.11}
  %s0 = inlined_call_operand.vmem [shape: f32[16,4], index: 0, kind: input, shape index: {}]
  %s1 = inlined_call_operand.vmem [shape: f32[1,64], index: 1, kind: output, shape index: {}]
  $region1: #{tile.11} parent=0
    #allocation0 [shape = 'u8[4096]{0}', space=vmem, size = 0x1000, scoped, tag = 'scoped mem for output reshape']
    %v2 = vld [vmem:[%s0] sm:$0x1]
    %vm3 = vcmask 31744
    %4 = vst.msk [vmem:[#allocation0] sm:$0x1] %vm3, %v2
    %s5 = scalar_lea.vmem %s0, 15
    %v6 = vld [vmem:[%s5] sm:$0x1]
    %7 = vrot.lane.b32.xlu0 %v6, 60
    %v8 = vpop.permute.xlu0 %7
    %vm9 = vcmask 523744
    %10 = vst.msk [vmem:[#allocation0] sm:$0x1] %vm9, %v8
    %s11 = scalar_lea.vmem %s0, 14
    %v12 = vld [vmem:[%s11] sm:$0x1]
    %13 = vrot.lane.b32.xlu0 %v12, 56
    %v14 = vpop.permute.xlu0 %13
    %vm15 = vcmask 490944
    %16 = vst.msk [vmem:[#allocation0] sm:$0x1] %vm15, %v14
    %s17 = scalar_lea.vmem %s0, 13
    %v18 = vld [vmem:[%s17] sm:$0x1]
    %19 = vrot.lane.b32.xlu0 %v18, 52
    %v20 = vpop.permute.xlu0 %19
    %vm21 = vcmask 458144
    %22 = vst.msk [vmem:[#allocation0] sm:$0x1] %vm21, %v20
    %s23 = scalar_lea.vmem %s0, 12
    %v24 = vld [vmem:[%s23] sm:$0x1]
    %25 = vrot.lane.b32.xlu0 %v24, 48
    %v26 = vpop.permute.xlu0 %25
    %vm27 = vcmask 425344
    %28 = vst.msk [vmem:[#allocation0] sm:$0x1] %vm27, %v26
    %s29 = scalar_lea.vmem %s0, 11
    %v30 = vld [vmem:[%s29] sm:$0x1]
    %31 = vrot.lane.b32.xlu0 %v30, 44
    %v32 = vpop.permute.xlu0 %31
    %vm33 = vcmask 392544
    %34 = vst.msk [vmem:[#allocation0] sm:$0x1] %vm33, %v32
    %s35 = scalar_lea.vmem %s0, 10
    %v36 = vld [vmem:[%s35] sm:$0x1]
    %37 = vrot.lane.b32.xlu0 %v36, 40
    %v38 = vpop.permute.xlu0 %37
    %vm39 = vcmask 359744
    %40 = vst.msk [vmem:[#allocation0] sm:$0x1] %vm39, %v38
    %s41 = scalar_lea.vmem %s0, 9
    %v42 = vld [vmem:[%s41] sm:$0x1]
    %43 = vrot.lane.b32.xlu0 %v42, 36
    %v44 = vpop.permute.xlu0 %43
    %vm45 = vcmask 326944
    %46 = vst.msk [vmem:[#allocation0] sm:$0x1] %vm45, %v44
    %s47 = scalar_lea.vmem %s0, 8
    %v48 = vld [vmem:[%s47] sm:$0x1]
    %49 = vrot.lane.b32.xlu0 %v48, 32
    %v50 = vpop.permute.xlu0 %49
    %vm51 = vcmask 294144
    %52 = vst.msk [vmem:[#allocation0] sm:$0x1] %vm51, %v50
    %s53 = scalar_lea.vmem %s0, 7
    %v54 = vld [vmem:[%s53] sm:$0x1]
    %55 = vrot.lane.b32.xlu0 %v54, 28
    %v56 = vpop.permute.xlu0 %55
    %vm57 = vcmask 261344
    %58 = vst.msk [vmem:[#allocation0] sm:$0x1] %vm57, %v56
    %s59 = scalar_lea.vmem %s0, 6
    %v60 = vld [vmem:[%s59] sm:$0x1]
    %61 = vrot.lane.b32.xlu0 %v60, 24
    %v62 = vpop.permute.xlu0 %61
    %vm63 = vcmask 228544
    %64 = vst.msk [vmem:[#allocation0] sm:$0x1] %vm63, %v62
    %s65 = scalar_lea.vmem %s0, 5
    %v66 = vld [vmem:[%s65] sm:$0x1]
    %67 = vrot.lane.b32.xlu0 %v66, 20
    %v68 = vpop.permute.xlu0 %67
    %vm69 = vcmask 195744
    %70 = vst.msk [vmem:[#allocation0] sm:$0x1] %vm69, %v68
    %s71 = scalar_lea.vmem %s0, 4
    %v72 = vld [vmem:[%s71] sm:$0x1]
    %73 = vrot.lane.b32.xlu0 %v72, 16
    %v74 = vpop.permute.xlu0 %73
    %vm75 = vcmask 162944
    %76 = vst.msk [vmem:[#allocation0] sm:$0x1] %vm75, %v74
    %s77 = scalar_lea.vmem %s0, 3
    %v78 = vld [vmem:[%s77] sm:$0x1]
    %79 = vrot.lane.b32.xlu0 %v78, 12
    %v80 = vpop.permute.xlu0 %79
    %vm81 = vcmask 130144
    %82 = vst.msk [vmem:[#allocation0] sm:$0x1] %vm81, %v80
    %s83 = scalar_lea.vmem %s0, 2
    %v84 = vld [vmem:[%s83] sm:$0x1]
    %85 = vrot.lane.b32.xlu0 %v84, 8
    %v86 = vpop.permute.xlu0 %85
    %vm87 = vcmask 97344
    %88 = vst.msk [vmem:[#allocation0] sm:$0x1] %vm87, %v86
    %s89 = scalar_lea.vmem %s0, 1
    %v90 = vld [vmem:[%s89] sm:$0x1]
    %91 = vrot.lane.b32.xlu0 %v90, 4
    %v92 = vpop.permute.xlu0 %91
    %vm93 = vcmask 64544
    %94 = vst.msk [vmem:[#allocation0] sm:$0x1] %vm93, %v92
    %s96 = sshllo.u32 0, 1
    %v98 = vld [vmem:[#allocation0] sm:%s96]
    %s99 = sshllo.u32 0, 1
    %100 = vst [vmem:[%s1] sm:%s99] %v98

// kernel: _lambda_.1
$region0: #{_lambda_.1}
  #allocation0 [shape = 'u32[]', space=smem, size = 0x4, offset = 0x4, fixed_abs, tag = 'smem constant byte address 0x4 - core index']
  #allocation1 [shape = 'u32[144,128]{1,0:T(1,128)}', space=vmem, size = 0x12000, scoped, tag = 'internal scratch']
  #allocation2 [shape = 'f32[6,18,72]{2,1,0:T(8,128)}', space=vmem, size = 0x12000, scoped, tag = 'scratch operand']
  #allocation3 [shape = 'f32[6,18,72]{2,1,0:T(8,128)}', space=vmem, size = 0x12000, scoped, tag = 'scratch operand']
  %s0 = inlined_call_operand.vmem [shape: f32[2,4,16,64], index: 0, kind: input, shape index: {}]
  %s1 = inlined_call_operand.vmem [shape: f32[9,72,64], index: 1, kind: input, shape index: {}]
  %s2 = inlined_call_operand.vmem [shape: f32[1,64], index: 2, kind: input, shape index: {}]
  %s3 = inlined_call_operand.vmem [shape: f32[9,72,64], index: 3, kind: input, shape index: {}]
  %s4 = inlined_call_operand.vmem [shape: f32[1,64], index: 4, kind: input, shape index: {}]
  %s5 = inlined_call_operand.vmem [shape: f32[2,4,16,64], index: 5, kind: output, shape index: {}]
  %s6 = sld [smem:[#allocation0]]
  $region53: #{_lambda_.1} parent=0
    _
  %s8 = ssub.s32 1, %s6
  %s9 = scalar_select 0, %s8, %s6
  loop: start=0, step=1, limit=4
  $region2: #{_lambda_.1} parent=0 // loop_pre_header
    _
  $region3: #{_lambda_.1} parent=0 // loop_header
    %s11 = sphi 0, %s15
    %p12 = scmp.ge.s32.totalorder %s11, 4
    %s21 = sphi 0, %s23
    %s24 = sphi 0, %s21
    %s25 = sphi 0, %s24
    %s41 = sphi 0, %s25
    %s45 = sphi 0, %s45
    %s47 = sphi 0, %s45
    %s48 = sphi 0, %s47
    %s62 = sphi 0, %s48
    %s66 = sphi 0, %s66
    %s68 = sphi 0, %s66
    %s69 = sphi 0, %s68
    %s83 = sphi 0, %s69
    %s87 = sphi 0, %s87
    %s89 = sphi 0, %s87
    %s90 = sphi 0, %s89
    %s104 = sphi 0, %s90
    %s108 = sphi 0, %s108
    %s110 = sphi 0, %s108
    %s111 = sphi 0, %s110
    %s125 = sphi 0, %s111
    %s131 = sphi 0, %s133
    %s134 = sphi 0, %s131
    %s135 = sphi 0, %s134
    %s151 = sphi 0, %s135
  $region4: #{_lambda_.1} parent=0 // loop_header_branch
    %14 = sbr.rel (%p12) target = $region8
  $region5: #{_lambda_.1} parent=0 // loop_body
    %s16 = ssub.s32 %s11, 1
    %s17 = ssub.s32 %s11, 2
    %s18 = sadd.s32 %s11, 1
    %s19 = ssub.s32 %s11, %s18
    %p20 = scmp.eq.s32.totalorder %s19, 0
    %s22 = sadd.s32 %s21, 1
    %s23 = scalar_select %p20, %s21, %s22
    %p26 = pneg %p20
    %p27 = scmp.eq.s32.totalorder %s11, 1
    %p28 = por %p26, %p27
    %p29 = scmp.ne.s32.totalorder %s21, %s24
    %p30 = scmp.eq.s32.totalorder %s11, 0
    %p31 = por %p29, %p30
    %p32 = scmp.ne.s32.totalorder %s21, %s24
    %p33 = scmp.eq.s32.totalorder %s16, 1
    %p34 = por %p32, %p33
    %p35 = scmp.ne.s32.totalorder %s24, %s25
    %p36 = scmp.eq.s32.totalorder %s16, 0
    %p37 = por %p35, %p36
    %p38 = scmp.ne.s32.totalorder %s24, %s25
    %p39 = scmp.eq.s32.totalorder %s17, 1
    %p40 = por %p38, %p39
    %p42 = scmp.ne.s32.totalorder %s25, %s41
    %p43 = scmp.eq.s32.totalorder %s17, 0
    %p44 = por %p42, %p43
    %s46 = sadd.s32 %s45, 1
    %p49 = scmp.eq.s32.totalorder %s11, 1
    %p50 = scmp.ne.s32.totalorder %s45, %s47
    %p51 = scmp.eq.s32.totalorder %s11, 0
    %p52 = por %p50, %p51
    %p53 = scmp.ne.s32.totalorder %s45, %s47
    %p54 = scmp.eq.s32.totalorder %s16, 1
    %p55 = por %p53, %p54
    %p56 = scmp.ne.s32.totalorder %s47, %s48
    %p57 = scmp.eq.s32.totalorder %s16, 0
    %p58 = por %p56, %p57
    %p59 = scmp.ne.s32.totalorder %s47, %s48
    %p60 = scmp.eq.s32.totalorder %s17, 1
    %p61 = por %p59, %p60
    %p63 = scmp.ne.s32.totalorder %s48, %s62
    %p64 = scmp.eq.s32.totalorder %s17, 0
    %p65 = por %p63, %p64
    %s67 = sadd.s32 %s66, 1
    %p70 = scmp.eq.s32.totalorder %s11, 1
    %p71 = scmp.ne.s32.totalorder %s66, %s68
    %p72 = scmp.eq.s32.totalorder %s11, 0
    %p73 = por %p71, %p72
    %p74 = scmp.ne.s32.totalorder %s66, %s68
    %p75 = scmp.eq.s32.totalorder %s16, 1
    %p76 = por %p74, %p75
    %p77 = scmp.ne.s32.totalorder %s68, %s69
    %p78 = scmp.eq.s32.totalorder %s16, 0
    %p79 = por %p77, %p78
    %p80 = scmp.ne.s32.totalorder %s68, %s69
    %p81 = scmp.eq.s32.totalorder %s17, 1
    %p82 = por %p80, %p81
    %p84 = scmp.ne.s32.totalorder %s69, %s83
    %p85 = scmp.eq.s32.totalorder %s17, 0
    %p86 = por %p84, %p85
    %s88 = sadd.s32 %s87, 1
    %p91 = scmp.eq.s32.totalorder %s11, 1
    %p92 = scmp.ne.s32.totalorder %s87, %s89
    %p93 = scmp.eq.s32.totalorder %s11, 0
    %p94 = por %p92, %p93
    %p95 = scmp.ne.s32.totalorder %s87, %s89
    %p96 = scmp.eq.s32.totalorder %s16, 1
    %p97 = por %p95, %p96
    %p98 = scmp.ne.s32.totalorder %s89, %s90
    %p99 = scmp.eq.s32.totalorder %s16, 0
    %p100 = por %p98, %p99
    %p101 = scmp.ne.s32.totalorder %s89, %s90
    %p102 = scmp.eq.s32.totalorder %s17, 1
    %p103 = por %p101, %p102
    %p105 = scmp.ne.s32.totalorder %s90, %s104
    %p106 = scmp.eq.s32.totalorder %s17, 0
    %p107 = por %p105, %p106
    %s109 = sadd.s32 %s108, 1
    %p112 = scmp.eq.s32.totalorder %s11, 1
    %p113 = scmp.ne.s32.totalorder %s108, %s110
    %p114 = scmp.eq.s32.totalorder %s11, 0
    %p115 = por %p113, %p114
    %p116 = scmp.ne.s32.totalorder %s108, %s110
    %p117 = scmp.eq.s32.totalorder %s16, 1
    %p118 = por %p116, %p117
    %p119 = scmp.ne.s32.totalorder %s110, %s111
    %p120 = scmp.eq.s32.totalorder %s16, 0
    %p121 = por %p119, %p120
    %p122 = scmp.ne.s32.totalorder %s110, %s111
    %p123 = scmp.eq.s32.totalorder %s17, 1
    %p124 = por %p122, %p123
    %p126 = scmp.ne.s32.totalorder %s111, %s125
    %p127 = scmp.eq.s32.totalorder %s17, 0
    %p128 = por %p126, %p127
    %s129 = ssub.s32 %s11, %s18
    %p130 = scmp.eq.s32.totalorder %s129, 0
    %s132 = sadd.s32 %s131, 1
    %s133 = scalar_select %p130, %s131, %s132
    %p136 = pneg %p130
    %p137 = scmp.eq.s32.totalorder %s11, 1
    %p138 = por %p136, %p137
    %p139 = scmp.ne.s32.totalorder %s131, %s134
    %p140 = scmp.eq.s32.totalorder %s11, 0
    %p141 = por %p139, %p140
    %p142 = scmp.ne.s32.totalorder %s131, %s134
    %p143 = scmp.eq.s32.totalorder %s16, 1
    %p144 = por %p142, %p143
    %p145 = scmp.ne.s32.totalorder %s134, %s135
    %p146 = scmp.eq.s32.totalorder %s16, 0
    %p147 = por %p145, %p146
    %p148 = scmp.ne.s32.totalorder %s134, %s135
    %p149 = scmp.eq.s32.totalorder %s17, 1
    %p150 = por %p148, %p149
    %p152 = scmp.ne.s32.totalorder %s135, %s151
    %p153 = scmp.eq.s32.totalorder %s17, 0
    %p154 = por %p152, %p153
    %p155 = scmp.le.s32.totalorder 1, %s11
    %p156 = scmp.lt.s32.totalorder %s11, 3
    %p157 = pnand %p155, %p156
    %p158 = pneg %p157
    // Predicated region
    $region9: #{_lambda_.1} parent=5 // pred_check
      _
    $region10: #{_lambda_.1} parent=5 // pred_check_branch
      %160 = sbr.rel (%p157) target = $region12
    $region11: #{_lambda_.1} parent=5 // pred_region
      %s161 = ssub.s32 %s11, 1
      // Predicated region
      $region13: #{_lambda_.1} parent=11 // pred_check
        %p162 = pneg %p58
      $region14: #{_lambda_.1} parent=11 // pred_check_branch
        %164 = sbr.rel (%p162) target = $region16
      $region15: #{_lambda_.1} parent=11 // pred_region
        _
      $region16: #{_lambda_.1} parent=11 // pred_fallthru
        _
      // Predicated region
      $region17: #{_lambda_.1} parent=11 // pred_check
        %p165 = pneg %p79
      $region18: #{_lambda_.1} parent=11 // pred_check_branch
        %167 = sbr.rel (%p165) target = $region20
      $region19: #{_lambda_.1} parent=11 // pred_region
        _
      $region20: #{_lambda_.1} parent=11 // pred_fallthru
        _
      // Predicated region
      $region21: #{_lambda_.1} parent=11 // pred_check
        %p168 = pneg %p100
      $region22: #{_lambda_.1} parent=11 // pred_check_branch
        %170 = sbr.rel (%p168) target = $region24
      $region23: #{_lambda_.1} parent=11 // pred_region
        _
      $region24: #{_lambda_.1} parent=11 // pred_fallthru
        _
      // Predicated region
      $region25: #{_lambda_.1} parent=11 // pred_check
        %p171 = pneg %p121
      $region26: #{_lambda_.1} parent=11 // pred_check_branch
        %173 = sbr.rel (%p171) target = $region28
      $region27: #{_lambda_.1} parent=11 // pred_region
        _
      $region28: #{_lambda_.1} parent=11 // pred_fallthru
        _
    $region12: #{_lambda_.1} parent=5 // pred_fallthru
      _
    %p174 = scmp.lt.s32.totalorder %s11, 2
    // Predicated region
    $region29: #{_lambda_.1} parent=5 // pred_check
      %p175 = pneg %p174
    $region30: #{_lambda_.1} parent=5 // pred_check_branch
      %177 = sbr.rel (%p175) target = $region32
    $region31: #{_lambda_.1} parent=5 // pred_region
      // Predicated region
      $region33: #{_lambda_.1} parent=31 // pred_check
        %p178 = pneg %p31
      $region34: #{_lambda_.1} parent=31 // pred_check_branch
        %180 = sbr.rel (%p178) target = $region36
      $region35: #{_lambda_.1} parent=31 // pred_region
        %p181 = scmp.lt.s32.totalorder %s11, 1
        %s182 = scalar_select %p181, %s11, 1
        %s183 = smul.addr %s182, 8
        %s184 = smul.addr %s183, 8
        %s185 = scalar_lea.vmem %s0, %s184
      $region36: #{_lambda_.1} parent=31 // pred_fallthru
        _
    $region32: #{_lambda_.1} parent=5 // pred_fallthru
      _
    %p186 = scmp.le.s32.totalorder 1, %s11
    %p187 = scmp.lt.s32.totalorder %s11, 3
    %p188 = pnand %p186, %p187
    %p189 = pneg %p188
    // Predicated region
    $region37: #{_lambda_.1} parent=5 // pred_check
      _
    $region38: #{_lambda_.1} parent=5 // pred_check_branch
      %191 = sbr.rel (%p188) target = $region40
    $region39: #{_lambda_.1} parent=5 // pred_region
      %s192 = ssub.s32 %s11, 1
      %p193 = scmp.lt.s32.totalorder %s16, 1
      %s194 = scalar_select %p193, %s16, 1
      %s195 = smul.addr %s194, 8
      %s196 = smul.addr %s195, 8
      %s197 = scalar_lea.vmem %s0, %s196
      %p198 = pneg %p37
      %p199 = pneg %p34
      %p200 = pneg %p58
      %p201 = pneg %p55
      %p202 = pneg %p79
      %p203 = pneg %p76
      %p204 = pneg %p100
      %p205 = pneg %p97
      %p206 = pneg %p121
      %p207 = pneg %p118
      %p208 = pneg %p147
      %p209 = pneg %p144
      %p210 = scmp.lt.s32.totalorder %s16, 1
      %s211 = scalar_select %p210, %s16, 1
      %s212 = smul.addr %s211, 8
      %s213 = smul.addr %s212, 8
      %s214 = scalar_lea.vmem %s5, %s213
      %p215 = scmp.lt.s32.totalorder %s16, 1
      %s216 = scalar_select %p215, %s16, 1
      %s217 = smul.addr %s216, 8
      %s218 = smul.addr %s217, 8
      %s219 = scalar_lea.vmem %s0, %s218
      %p220 = scmp.lt.s32.totalorder %s16, 1
      %s221 = scalar_select %p220, %s16, 1
      %s222 = smul.addr %s221, 8
      %s223 = smul.addr %s222, 8
      %s224 = scalar_lea.vmem %s5, %s223
      %vm225 = vcmask 588800
      %226 = vst.msk [vmem:[#allocation2] sm:$0xff] %vm225, 0.0
      %227 = vst.msk [vmem:[#allocation2 + $0x8] sm:$0xff] %vm225, 0.0
      %vm228 = vcmask 582656
      %229 = vst.msk [vmem:[#allocation2 + $0x10] sm:$0x3] %vm228, 0.0
      %230 = vst.msk [vmem:[#allocation2 + $0x18] sm:$0xff] %vm225, 0.0
      %231 = vst.msk [vmem:[#allocation2 + $0x20] sm:$0xff] %vm225, 0.0
      %232 = vst.msk [vmem:[#allocation2 + $0x28] sm:$0x3] %vm228, 0.0
      %233 = vst.msk [vmem:[#allocation2 + $0x30] sm:$0xff] %vm225, 0.0
      %234 = vst.msk [vmem:[#allocation2 + $0x38] sm:$0xff] %vm225, 0.0
      %235 = vst.msk [vmem:[#allocation2 + $0x40] sm:$0x3] %vm228, 0.0
      %236 = vst.msk [vmem:[#allocation2 + $0x48] sm:$0xff] %vm225, 0.0
      %237 = vst.msk [vmem:[#allocation2 + $0x50] sm:$0xff] %vm225, 0.0
      %238 = vst.msk [vmem:[#allocation2 + $0x58] sm:$0x3] %vm228, 0.0
      %239 = vst.msk [vmem:[#allocation2 + $0x60] sm:$0xff] %vm225, 0.0
      %240 = vst.msk [vmem:[#allocation2 + $0x68] sm:$0xff] %vm225, 0.0
      %241 = vst.msk [vmem:[#allocation2 + $0x70] sm:$0x3] %vm228, 0.0
      %242 = vst.msk [vmem:[#allocation2 + $0x78] sm:$0xff] %vm225, 0.0
      %243 = vst.msk [vmem:[#allocation2 + $0x80] sm:$0xff] %vm225, 0.0
      %244 = vst.msk [vmem:[#allocation2 + $0x88] sm:$0x3] %vm228, 0.0
      %245 = vst.msk [vmem:[#allocation3] sm:$0xff] %vm225, 0.0
      %246 = vst.msk [vmem:[#allocation3 + $0x8] sm:$0xff] %vm225, 0.0
      %247 = vst.msk [vmem:[#allocation3 + $0x10] sm:$0x3] %vm228, 0.0
      %248 = vst.msk [vmem:[#allocation3 + $0x18] sm:$0xff] %vm225, 0.0
      %249 = vst.msk [vmem:[#allocation3 + $0x20] sm:$0xff] %vm225, 0.0
      %250 = vst.msk [vmem:[#allocation3 + $0x28] sm:$0x3] %vm228, 0.0
      %251 = vst.msk [vmem:[#allocation3 + $0x30] sm:$0xff] %vm225, 0.0
      %252 = vst.msk [vmem:[#allocation3 + $0x38] sm:$0xff] %vm225, 0.0
      %253 = vst.msk [vmem:[#allocation3 + $0x40] sm:$0x3] %vm228, 0.0
      %254 = vst.msk [vmem:[#allocation3 + $0x48] sm:$0xff] %vm225, 0.0
      %255 = vst.msk [vmem:[#allocation3 + $0x50] sm:$0xff] %vm225, 0.0
      %256 = vst.msk [vmem:[#allocation3 + $0x58] sm:$0x3] %vm228, 0.0
      %257 = vst.msk [vmem:[#allocation3 + $0x60] sm:$0xff] %vm225, 0.0
      %258 = vst.msk [vmem:[#allocation3 + $0x68] sm:$0xff] %vm225, 0.0
      %259 = vst.msk [vmem:[#allocation3 + $0x70] sm:$0x3] %vm228, 0.0
      %260 = vst.msk [vmem:[#allocation3 + $0x78] sm:$0xff] %vm225, 0.0
      %261 = vst.msk [vmem:[#allocation3 + $0x80] sm:$0xff] %vm225, 0.0
      %262 = vst.msk [vmem:[#allocation3 + $0x88] sm:$0x3] %vm228, 0.0
      %v263 = vld [vmem:[%s219] sm:$0xff]
      %v264 = vld [vmem:[%s219 + $0x8] sm:$0xff]
      %v265 = vld [vmem:[%s219 + $0x10] sm:$0xff]
      %v266 = vld [vmem:[%s219 + $0x18] sm:$0xff]
      %v267 = vld [vmem:[%s219 + $0x20] sm:$0xff]
      %v268 = vld [vmem:[%s219 + $0x28] sm:$0xff]
      %v269 = vld [vmem:[%s219 + $0x30] sm:$0xff]
      %v270 = vld [vmem:[%s219 + $0x38] sm:$0xff]
      %279 = vrot.lane.b32.xlu0 %v263, 4
      %v280 = vpop.permute.xlu0 %279
      %281 = vrot.lane.b32.xlu0 %v264, 4
      %v282 = vpop.permute.xlu0 %281
      %283 = vrot.lane.b32.xlu0 %v265, 4
      %v284 = vpop.permute.xlu0 %283
      %285 = vrot.lane.b32.xlu0 %v266, 4
      %v286 = vpop.permute.xlu0 %285
      %287 = vrot.lane.b32.xlu0 %v267, 4
      %v288 = vpop.permute.xlu0 %287
      %289 = vrot.lane.b32.xlu0 %v268, 4
      %v290 = vpop.permute.xlu0 %289
      %291 = vrot.lane.b32.xlu0 %v269, 4
      %v292 = vpop.permute.xlu0 %291
      %293 = vrot.lane.b32.xlu0 %v270, 4
      %v294 = vpop.permute.xlu0 %293
      %s303 = scalar_lea.vmem [#allocation2], 24
      %vm304 = vcmask 556064
      %305 = vst.msk [vmem:[%s303 + $0x1] sm:$0xff] %vm304, %v280
      %306 = vst.msk [vmem:[%s303 + $0x9] sm:$0xff] %vm304, %v282
      %307 = vst.msk [vmem:[%s303 + $0x19] sm:$0xff] %vm304, %v284
      %308 = vst.msk [vmem:[%s303 + $0x21] sm:$0xff] %vm304, %v286
      %309 = vst.msk [vmem:[%s303 + $0x31] sm:$0xff] %vm304, %v288
      %310 = vst.msk [vmem:[%s303 + $0x39] sm:$0xff] %vm304, %v290
      %311 = vst.msk [vmem:[%s303 + $0x49] sm:$0xff] %vm304, %v292
      %312 = vst.msk [vmem:[%s303 + $0x51] sm:$0xff] %vm304, %v294
      %v313 = vld [vmem:[#allocation2] sm:$0xff]
      %v314 = vld [vmem:[#allocation2 + $0x8] sm:$0xff]
      %v315 = vld [vmem:[%s1] sm:$0xff]
      %v316 = vld [vmem:[%s1 + $0x8] sm:$0xff]
      %v317 = vld [vmem:[%s1 + $0x10] sm:$0xff]
      %v318 = vld [vmem:[%s1 + $0x18] sm:$0xff]
      %v319 = vld [vmem:[%s1 + $0x20] sm:$0xff]
      %v320 = vld [vmem:[%s1 + $0x28] sm:$0xff]
      %v321 = vld [vmem:[%s1 + $0x30] sm:$0xff]
      %v322 = vld [vmem:[%s1 + $0x38] sm:$0xff]
      %v323 = vld [vmem:[%s1 + $0x40] sm:$0xff]
      %v324 = vld [vmem:[#allocation2 + $0x1] sm:$0xff]
      %v325 = vld [vmem:[#allocation2 + $0x9] sm:$0xff]
      %s326 = scalar_lea.vmem %s1, 72
      %v327 = vld [vmem:[%s326] sm:$0xff]
      %v328 = vld [vmem:[%s326 + $0x8] sm:$0xff]
      %v329 = vld [vmem:[%s326 + $0x10] sm:$0xff]
      %v330 = vld [vmem:[%s326 + $0x18] sm:$0xff]
      %v331 = vld [vmem:[%s326 + $0x20] sm:$0xff]
      %v332 = vld [vmem:[%s326 + $0x28] sm:$0xff]
      %v333 = vld [vmem:[%s326 + $0x30] sm:$0xff]
      %v334 = vld [vmem:[%s326 + $0x38] sm:$0xff]
      %v335 = vld [vmem:[%s326 + $0x40] sm:$0xff]
      %v337 = vsel %vm225, %v324, 0
      %v340 = vsel %vm225, %v325, 0
      %342 = vmatprep.subr.mxu0 0.0
      %343 = vmatpush1.msra.mxu0 %v327
      %344 = vmatprep.subr.mxu0 0.0
      %345 = vmatpush1.msra.mxu0 %v328
      %346 = vmatprep.subr.mxu0 0.0
      %347 = vmatpush1.msra.mxu0 %v329
      %348 = vmatprep.subr.mxu0 0.0
      %349 = vmatpush1.msra.mxu0 %v330
      %350 = vmatprep.subr.mxu0 0.0
      %351 = vmatpush1.msra.mxu0 %v331
      %352 = vmatprep.subr.mxu0 0.0
      %353 = vmatpush1.msra.mxu0 %v332
      %354 = vmatprep.subr.mxu0 0.0
      %355 = vmatpush1.msra.mxu0 %v333
      %356 = vmatprep.subr.mxu0 0.0
      %357 = vmatpush1.msra.mxu0 %v334
      %358 = vmatprep.subr.mxu0 0.0
      %359 = vmatpush1.msra.mxu0 %v335
      %360 = vmatprep.subr.mxu0 0.0
      %361 = vmatpush1.msra.mxu0 0.0
      %362 = vmatprep.subr.mxu0 0.0
      %363 = vmatpush1.msra.mxu0 0.0
      %364 = vmatprep.subr.mxu0 0.0
      %365 = vmatpush1.msra.mxu0 0.0
      %366 = vmatprep.subr.mxu0 0.0
      %367 = vmatpush1.msra.mxu0 0.0
      %368 = vmatprep.subr.mxu0 0.0
      %369 = vmatpush1.msra.mxu0 0.0
      %370 = vmatprep.subr.mxu0 0.0
      %371 = vmatpush1.msra.mxu0 0.0
      %372 = vmatprep.subr.mxu0 0.0
      %373 = vmatpush1.msra.mxu0 0.0
      %374 = vmatprep.subr.mxu0 0.0
      %375 = vmatpush1.msra.mxu0 0.0
      %376 = vmatprep.subr.mxu0 0.0
      %377 = vmatpush1.msra.mxu0 0.0
      %378 = vmatprep.subr.mxu0 0.0
      %379 = vmatpush1.msra.mxu0 0.0
      %380 = vmatprep.subr.mxu0 0.0
      %381 = vmatpush1.msra.mxu0 0.0
      %382 = vmatprep.subr.mxu0 0.0
      %383 = vmatpush1.msra.mxu0 0.0
      %384 = vmatprep.subr.mxu0 0.0
      %385 = vmatpush1.msra.mxu0 0.0
      %386 = vmatprep.subr.mxu0 0.0
      %387 = vmatpush1.msra.mxu0 0.0
      %388 = vmatprep.subr.mxu0 0.0
      %389 = vmatpush1.msra.mxu0 0.0
      %390 = vmatprep.subr.mxu0 0.0
      %391 = vmatpush1.msra.mxu0 0.0
      %392 = vmatprep.subr.mxu0 0.0
      %393 = vmatpush1.msra.mxu0 0.0
      %394 = vmatprep.subr.mxu0 0.0
      %395 = vmatpush1.msra.mxu0 0.0
      %396 = vmatprep.subr.mxu0 0.0
      %397 = vmatpush1.msra.mxu0 0.0
      %398 = vmatprep.subr.mxu0 0.0
      %399 = vmatpush1.msra.mxu0 0.0
      %400 = vmatprep.subr.mxu0 0.0
      %401 = vmatpush1.msra.mxu0 0.0
      %402 = vmatprep.subr.mxu0 0.0
      %403 = vmatpush1.msra.mxu0 0.0
      %404 = vmatprep.subr.mxu0 0.0
      %405 = vmatpush1.msra.mxu0 0.0
      %406 = vmatprep.mubr.f32.mxu0 0.0
      %407 = vmatmul.mubr.f32.gmra.mrb[0].mxu0 %v337
      %v408 = vpop.f32.mrb[0].mxu0
      %v409 = vadd.f32 0.0, %v408
      %v410 = vpop.f32.mrb[0].mxu0
      %411 = vmatprep.mubr.f32.mxu0 0.0
      %412 = vmatmul.mubr.f32.gmra.mrb[0].mxu0 %v340
      %v413 = vpop.f32.mrb[0].mxu0
      %v414 = vadd.f32 0.0, %v413
      %v415 = vpop.f32.mrb[0].mxu0
      %416 = vdwg.mxu0
      %v418 = vsel %vm225, %v313, 0
      %v421 = vsel %vm225, %v314, 0
      %423 = vmatprep.subr.mxu0 0.0
      %424 = vmatpush1.msra.mxu0 %v315
      %425 = vmatprep.subr.mxu0 0.0
      %426 = vmatpush1.msra.mxu0 %v316
      %427 = vmatprep.subr.mxu0 0.0
      %428 = vmatpush1.msra.mxu0 %v317
      %429 = vmatprep.subr.mxu0 0.0
      %430 = vmatpush1.msra.mxu0 %v318
      %431 = vmatprep.subr.mxu0 0.0
      %432 = vmatpush1.msra.mxu0 %v319
      %433 = vmatprep.subr.mxu0 0.0
      %434 = vmatpush1.msra.mxu0 %v320
      %435 = vmatprep.subr.mxu0 0.0
      %436 = vmatpush1.msra.mxu0 %v321
      %437 = vmatprep.subr.mxu0 0.0
      %438 = vmatpush1.msra.mxu0 %v322
      %439 = vmatprep.subr.mxu0 0.0
      %440 = vmatpush1.msra.mxu0 %v323
      %441 = vmatprep.subr.mxu0 0.0
      %442 = vmatpush1.msra.mxu0 0.0
      %443 = vmatprep.subr.mxu0 0.0
      %444 = vmatpush1.msra.mxu0 0.0
      %445 = vmatprep.subr.mxu0 0.0
      %446 = vmatpush1.msra.mxu0 0.0
      %447 = vmatprep.subr.mxu0 0.0
      %448 = vmatpush1.msra.mxu0 0.0
      %449 = vmatprep.subr.mxu0 0.0
      %450 = vmatpush1.msra.mxu0 0.0
      %451 = vmatprep.subr.mxu0 0.0
      %452 = vmatpush1.msra.mxu0 0.0
      %453 = vmatprep.subr.mxu0 0.0
      %454 = vmatpush1.msra.mxu0 0.0
      %455 = vmatprep.subr.mxu0 0.0
      %456 = vmatpush1.msra.mxu0 0.0
      %457 = vmatprep.subr.mxu0 0.0
      %458 = vmatpush1.msra.mxu0 0.0
      %459 = vmatprep.subr.mxu0 0.0
      %460 = vmatpush1.msra.mxu0 0.0
      %461 = vmatprep.subr.mxu0 0.0
      %462 = vmatpush1.msra.mxu0 0.0
      %463 = vmatprep.subr.mxu0 0.0
      %464 = vmatpush1.msra.mxu0 0.0
      %465 = vmatprep.subr.mxu0 0.0
      %466 = vmatpush1.msra.mxu0 0.0
      %467 = vmatprep.subr.mxu0 0.0
      %468 = vmatpush1.msra.mxu0 0.0
      %469 = vmatprep.subr.mxu0 0.0
      %470 = vmatpush1.msra.mxu0 0.0
      %471 = vmatprep.subr.mxu0 0.0
      %472 = vmatpush1.msra.mxu0 0.0
      %473 = vmatprep.subr.mxu0 0.0
      %474 = vmatpush1.msra.mxu0 0.0
      %475 = vmatprep.subr.mxu0 0.0
      %476 = vmatpush1.msra.mxu0 0.0
      %477 = vmatprep.subr.mxu0 0.0
      %478 = vmatpush1.msra.mxu0 0.0
      %479 = vmatprep.subr.mxu0 0.0
      %480 = vmatpush1.msra.mxu0 0.0
      %481 = vmatprep.subr.mxu0 0.0
      %482 = vmatpush1.msra.mxu0 0.0
      %483 = vmatprep.subr.mxu0 0.0
      %484 = vmatpush1.msra.mxu0 0.0
      %485 = vmatprep.subr.mxu0 0.0
      %486 = vmatpush1.msra.mxu0 0.0
      %487 = vmatprep.mubr.f32.mxu0 0.0
      %488 = vmatmul.mubr.f32.gmra.mrb[0].mxu0 %v418
      %v489 = vpop.f32.mrb[0].mxu0
      %v490 = vadd.f32 %v409, %v489
      %v491 = vpop.f32.mrb[0].mxu0
      %492 = vmatprep.mubr.f32.mxu0 0.0
      %493 = vmatmul.mubr.f32.gmra.mrb[0].mxu0 %v421
      %v494 = vpop.f32.mrb[0].mxu0
      %v495 = vadd.f32 %v414, %v494
      %v496 = vpop.f32.mrb[0].mxu0
      %497 = vdwg.mxu0
      %v498 = vld [vmem:[#allocation2 + $0x2] sm:$0xff]
      %v499 = vld [vmem:[#allocation2 + $0xa] sm:$0xff]
      %s500 = scalar_lea.vmem %s1, 144
      %v501 = vld [vmem:[%s500] sm:$0xff]
      %v502 = vld [vmem:[%s500 + $0x8] sm:$0xff]
      %v503 = vld [vmem:[%s500 + $0x10] sm:$0xff]
      %v504 = vld [vmem:[%s500 + $0x18] sm:$0xff]
      %v505 = vld [vmem:[%s500 + $0x20] sm:$0xff]
      %v506 = vld [vmem:[%s500 + $0x28] sm:$0xff]
      %v507 = vld [vmem:[%s500 + $0x30] sm:$0xff]
      %v508 = vld [vmem:[%s500 + $0x38] sm:$0xff]
      %v509 = vld [vmem:[%s500 + $0x40] sm:$0xff]
      %v511 = vsel %vm225, %v498, 0
      %v514 = vsel %vm225, %v499, 0
      %516 = vmatprep.subr.mxu0 0.0
      %517 = vmatpush1.msra.mxu0 %v501
      %518 = vmatprep.subr.mxu0 0.0
      %519 = vmatpush1.msra.mxu0 %v502
      %520 = vmatprep.subr.mxu0 0.0
      %521 = vmatpush1.msra.mxu0 %v503
      %522 = vmatprep.subr.mxu0 0.0
      %523 = vmatpush1.msra.mxu0 %v504
      %524 = vmatprep.subr.mxu0 0.0
      %525 = vmatpush1.msra.mxu0 %v505
      %526 = vmatprep.subr.mxu0 0.0
      %527 = vmatpush1.msra.mxu0 %v506
      %528 = vmatprep.subr.mxu0 0.0
      %529 = vmatpush1.msra.mxu0 %v507
      %530 = vmatprep.subr.mxu0 0.0
      %531 = vmatpush1.msra.mxu0 %v508
      %532 = vmatprep.subr.mxu0 0.0
      %533 = vmatpush1.msra.mxu0 %v509
      %534 = vmatprep.subr.mxu0 0.0
      %535 = vmatpush1.msra.mxu0 0.0
      %536 = vmatprep.subr.mxu0 0.0
      %537 = vmatpush1.msra.mxu0 0.0
      %538 = vmatprep.subr.mxu0 0.0
      %539 = vmatpush1.msra.mxu0 0.0
      %540 = vmatprep.subr.mxu0 0.0
      %541 = vmatpush1.msra.mxu0 0.0
      %542 = vmatprep.subr.mxu0 0.0
      %543 = vmatpush1.msra.mxu0 0.0
      %544 = vmatprep.subr.mxu0 0.0
      %545 = vmatpush1.msra.mxu0 0.0
      %546 = vmatprep.subr.mxu0 0.0
      %547 = vmatpush1.msra.mxu0 0.0
      %548 = vmatprep.subr.mxu0 0.0
      %549 = vmatpush1.msra.mxu0 0.0
      %550 = vmatprep.subr.mxu0 0.0
      %551 = vmatpush1.msra.mxu0 0.0
      %552 = vmatprep.subr.mxu0 0.0
      %553 = vmatpush1.msra.mxu0 0.0
      %554 = vmatprep.subr.mxu0 0.0
      %555 = vmatpush1.msra.mxu0 0.0
      %556 = vmatprep.subr.mxu0 0.0
      %557 = vmatpush1.msra.mxu0 0.0
      %558 = vmatprep.subr.mxu0 0.0
      %559 = vmatpush1.msra.mxu0 0.0
      %560 = vmatprep.subr.mxu0 0.0
      %561 = vmatpush1.msra.mxu0 0.0
      %562 = vmatprep.subr.mxu0 0.0
      %563 = vmatpush1.msra.mxu0 0.0
      %564 = vmatprep.subr.mxu0 0.0
      %565 = vmatpush1.msra.mxu0 0.0
      %566 = vmatprep.subr.mxu0 0.0
      %567 = vmatpush1.msra.mxu0 0.0
      %568 = vmatprep.subr.mxu0 0.0
      %569 = vmatpush1.msra.mxu0 0.0
      %570 = vmatprep.subr.mxu0 0.0
      %571 = vmatpush1.msra.mxu0 0.0
      %572 = vmatprep.subr.mxu0 0.0
      %573 = vmatpush1.msra.mxu0 0.0
      %574 = vmatprep.subr.mxu0 0.0
      %575 = vmatpush1.msra.mxu0 0.0
      %576 = vmatprep.subr.mxu0 0.0
      %577 = vmatpush1.msra.mxu0 0.0
      %578 = vmatprep.subr.mxu0 0.0
      %579 = vmatpush1.msra.mxu0 0.0
      %580 = vmatprep.mubr.f32.mxu0 0.0
      %581 = vmatmul.mubr.f32.gmra.mrb[0].mxu0 %v511
      %v582 = vpop.f32.mrb[0].mxu0
      %v583 = vadd.f32 0.0, %v582
      %v584 = vpop.f32.mrb[0].mxu0
      %585 = vmatprep.mubr.f32.mxu0 0.0
      %586 = vmatmul.mubr.f32.gmra.mrb[0].mxu0 %v514
      %v587 = vpop.f32.mrb[0].mxu0
      %v588 = vadd.f32 0.0, %v587
      %v589 = vpop.f32.mrb[0].mxu0
      %590 = vdwg.mxu0
      %v591 = vadd.f32 %v490, %v583
      %v592 = vadd.f32 %v495, %v588
      %v593 = vld [vmem:[%s303] sm:$0xff]
      %v594 = vld [vmem:[%s303 + $0x8] sm:$0xff]
      %s595 = scalar_lea.vmem %s1, 216
      %v596 = vld [vmem:[%s595] sm:$0xff]
      %v597 = vld [vmem:[%s595 + $0x8] sm:$0xff]
      %v598 = vld [vmem:[%s595 + $0x10] sm:$0xff]
      %v599 = vld [vmem:[%s595 + $0x18] sm:$0xff]
      %v600 = vld [vmem:[%s595 + $0x20] sm:$0xff]
      %v601 = vld [vmem:[%s595 + $0x28] sm:$0xff]
      %v602 = vld [vmem:[%s595 + $0x30] sm:$0xff]
      %v603 = vld [vmem:[%s595 + $0x38] sm:$0xff]
      %v604 = vld [vmem:[%s595 + $0x40] sm:$0xff]
      %v606 = vsel %vm225, %v593, 0
      %v609 = vsel %vm225, %v594, 0
      %611 = vmatprep.subr.mxu0 0.0
      %612 = vmatpush1.msra.mxu0 %v596
      %613 = vmatprep.subr.mxu0 0.0
      %614 = vmatpush1.msra.mxu0 %v597
      %615 = vmatprep.subr.mxu0 0.0
      %616 = vmatpush1.msra.mxu0 %v598
      %617 = vmatprep.subr.mxu0 0.0
      %618 = vmatpush1.msra.mxu0 %v599
      %619 = vmatprep.subr.mxu0 0.0
      %620 = vmatpush1.msra.mxu0 %v600
      %621 = vmatprep.subr.mxu0 0.0
      %622 = vmatpush1.msra.mxu0 %v601
      %623 = vmatprep.subr.mxu0 0.0
      %624 = vmatpush1.msra.mxu0 %v602
      %625 = vmatprep.subr.mxu0 0.0
      %626 = vmatpush1.msra.mxu0 %v603
      %627 = vmatprep.subr.mxu0 0.0
      %628 = vmatpush1.msra.mxu0 %v604
      %629 = vmatprep.subr.mxu0 0.0
      %630 = vmatpush1.msra.mxu0 0.0
      %631 = vmatprep.subr.mxu0 0.0
      %632 = vmatpush1.msra.mxu0 0.0
      %633 = vmatprep.subr.mxu0 0.0
      %634 = vmatpush1.msra.mxu0 0.0
      %635 = vmatprep.subr.mxu0 0.0
      %636 = vmatpush1.msra.mxu0 0.0
      %637 = vmatprep.subr.mxu0 0.0
      %638 = vmatpush1.msra.mxu0 0.0
      %639 = vmatprep.subr.mxu0 0.0
      %640 = vmatpush1.msra.mxu0 0.0
      %641 = vmatprep.subr.mxu0 0.0
      %642 = vmatpush1.msra.mxu0 0.0
      %643 = vmatprep.subr.mxu0 0.0
      %644 = vmatpush1.msra.mxu0 0.0
      %645 = vmatprep.subr.mxu0 0.0
      %646 = vmatpush1.msra.mxu0 0.0
      %647 = vmatprep.subr.mxu0 0.0
      %648 = vmatpush1.msra.mxu0 0.0
      %649 = vmatprep.subr.mxu0 0.0
      %650 = vmatpush1.msra.mxu0 0.0
      %651 = vmatprep.subr.mxu0 0.0
      %652 = vmatpush1.msra.mxu0 0.0
      %653 = vmatprep.subr.mxu0 0.0
      %654 = vmatpush1.msra.mxu0 0.0
      %655 = vmatprep.subr.mxu0 0.0
      %656 = vmatpush1.msra.mxu0 0.0
      %657 = vmatprep.subr.mxu0 0.0
      %658 = vmatpush1.msra.mxu0 0.0
      %659 = vmatprep.subr.mxu0 0.0
      %660 = vmatpush1.msra.mxu0 0.0
      %661 = vmatprep.subr.mxu0 0.0
      %662 = vmatpush1.msra.mxu0 0.0
      %663 = vmatprep.subr.mxu0 0.0
      %664 = vmatpush1.msra.mxu0 0.0
      %665 = vmatprep.subr.mxu0 0.0
      %666 = vmatpush1.msra.mxu0 0.0
      %667 = vmatprep.subr.mxu0 0.0
      %668 = vmatpush1.msra.mxu0 0.0
      %669 = vmatprep.subr.mxu0 0.0
      %670 = vmatpush1.msra.mxu0 0.0
      %671 = vmatprep.subr.mxu0 0.0
      %672 = vmatpush1.msra.mxu0 0.0
      %673 = vmatprep.subr.mxu0 0.0
      %674 = vmatpush1.msra.mxu0 0.0
      %675 = vmatprep.mubr.f32.mxu0 0.0
      %676 = vmatmul.mubr.f32.gmra.mrb[0].mxu0 %v606
      %v677 = vpop.f32.mrb[0].mxu0
      %v678 = vadd.f32 0.0, %v677
      %v679 = vpop.f32.mrb[0].mxu0
      %680 = vmatprep.mubr.f32.mxu0 0.0
      %681 = vmatmul.mubr.f32.gmra.mrb[0].mxu0 %v609
      %v682 = vpop.f32.mrb[0].mxu0
      %v683 = vadd.f32 0.0, %v682
      %v684 = vpop.f32.mrb[0].mxu0
      %685 = vdwg.mxu0
      %v686 = vadd.f32 %v591, %v678
      %v687 = vadd.f32 %v592, %v683
      %v688 = vld [vmem:[%s303 + $0x1] sm:$0xff]
      %v689 = vld [vmem:[%s303 + $0x9] sm:$0xff]
      %s690 = scalar_lea.vmem %s1, 288
      %v691 = vld [vmem:[%s690] sm:$0xff]
      %v692 = vld [vmem:[%s690 + $0x8] sm:$0xff]
      %v693 = vld [vmem:[%s690 + $0x10] sm:$0xff]
      %v694 = vld [vmem:[%s690 + $0x18] sm:$0xff]
      %v695 = vld [vmem:[%s690 + $0x20] sm:$0xff]
      %v696 = vld [vmem:[%s690 + $0x28] sm:$0xff]
      %v697 = vld [vmem:[%s690 + $0x30] sm:$0xff]
      %v698 = vld [vmem:[%s690 + $0x38] sm:$0xff]
      %v699 = vld [vmem:[%s690 + $0x40] sm:$0xff]
      %v701 = vsel %vm225, %v688, 0
      %v704 = vsel %vm225, %v689, 0
      %706 = vmatprep.subr.mxu0 0.0
      %707 = vmatpush1.msra.mxu0 %v691
      %708 = vmatprep.subr.mxu0 0.0
      %709 = vmatpush1.msra.mxu0 %v692
      %710 = vmatprep.subr.mxu0 0.0
      %711 = vmatpush1.msra.mxu0 %v693
      %712 = vmatprep.subr.mxu0 0.0
      %713 = vmatpush1.msra.mxu0 %v694
      %714 = vmatprep.subr.mxu0 0.0
      %715 = vmatpush1.msra.mxu0 %v695
      %716 = vmatprep.subr.mxu0 0.0
      %717 = vmatpush1.msra.mxu0 %v696
      %718 = vmatprep.subr.mxu0 0.0
      %719 = vmatpush1.msra.mxu0 %v697
      %720 = vmatprep.subr.mxu0 0.0
      %721 = vmatpush1.msra.mxu0 %v698
      %722 = vmatprep.subr.mxu0 0.0
      %723 = vmatpush1.msra.mxu0 %v699
      %724 = vmatprep.subr.mxu0 0.0
      %725 = vmatpush1.msra.mxu0 0.0
      %726 = vmatprep.subr.mxu0 0.0
      %727 = vmatpush1.msra.mxu0 0.0
      %728 = vmatprep.subr.mxu0 0.0
      %729 = vmatpush1.msra.mxu0 0.0
      %730 = vmatprep.subr.mxu0 0.0
      %731 = vmatpush1.msra.mxu0 0.0
      %732 = vmatprep.subr.mxu0 0.0
      %733 = vmatpush1.msra.mxu0 0.0
      %734 = vmatprep.subr.mxu0 0.0
      %735 = vmatpush1.msra.mxu0 0.0
      %736 = vmatprep.subr.mxu0 0.0
      %737 = vmatpush1.msra.mxu0 0.0
      %738 = vmatprep.subr.mxu0 0.0
      %739 = vmatpush1.msra.mxu0 0.0
      %740 = vmatprep.subr.mxu0 0.0
      %741 = vmatpush1.msra.mxu0 0.0
      %742 = vmatprep.subr.mxu0 0.0
      %743 = vmatpush1.msra.mxu0 0.0
      %744 = vmatprep.subr.mxu0 0.0
      %745 = vmatpush1.msra.mxu0 0.0
      %746 = vmatprep.subr.mxu0 0.0
      %747 = vmatpush1.msra.mxu0 0.0
      %748 = vmatprep.subr.mxu0 0.0
      %749 = vmatpush1.msra.mxu0 0.0
      %750 = vmatprep.subr.mxu0 0.0
      %751 = vmatpush1.msra.mxu0 0.0
      %752 = vmatprep.subr.mxu0 0.0
      %753 = vmatpush1.msra.mxu0 0.0
      %754 = vmatprep.subr.mxu0 0.0
      %755 = vmatpush1.msra.mxu0 0.0
      %756 = vmatprep.subr.mxu0 0.0
      %757 = vmatpush1.msra.mxu0 0.0
      %758 = vmatprep.subr.mxu0 0.0
      %759 = vmatpush1.msra.mxu0 0.0
      %760 = vmatprep.subr.mxu0 0.0
      %761 = vmatpush1.msra.mxu0 0.0
      %762 = vmatprep.subr.mxu0 0.0
      %763 = vmatpush1.msra.mxu0 0.0
      %764 = vmatprep.subr.mxu0 0.0
      %765 = vmatpush1.msra.mxu0 0.0
      %766 = vmatprep.subr.mxu0 0.0
      %767 = vmatpush1.msra.mxu0 0.0
      %768 = vmatprep.subr.mxu0 0.0
      %769 = vmatpush1.msra.mxu0 0.0
      %770 = vmatprep.mubr.f32.mxu0 0.0
      %771 = vmatmul.mubr.f32.gmra.mrb[0].mxu0 %v701
      %v772 = vpop.f32.mrb[0].mxu0
      %v773 = vadd.f32 0.0, %v772
      %v774 = vpop.f32.mrb[0].mxu0
      %775 = vmatprep.mubr.f32.mxu0 0.0
      %776 = vmatmul.mubr.f32.gmra.mrb[0].mxu0 %v704
      %v777 = vpop.f32.mrb[0].mxu0
      %v778 = vadd.f32 0.0, %v777
      %v779 = vpop.f32.mrb[0].mxu0
      %780 = vdwg.mxu0
      %v781 = vadd.f32 %v686, %v773
      %v782 = vadd.f32 %v687, %v778
      %v783 = vld [vmem:[%s303 + $0x2] sm:$0xff]
      %v784 = vld [vmem:[%s303 + $0xa] sm:$0xff]
      %s785 = scalar_lea.vmem %s1, 360
      %v786 = vld [vmem:[%s785] sm:$0xff]
      %v787 = vld [vmem:[%s785 + $0x8] sm:$0xff]
      %v788 = vld [vmem:[%s785 + $0x10] sm:$0xff]
      %v789 = vld [vmem:[%s785 + $0x18] sm:$0xff]
      %v790 = vld [vmem:[%s785 + $0x20] sm:$0xff]
      %v791 = vld [vmem:[%s785 + $0x28] sm:$0xff]
      %v792 = vld [vmem:[%s785 + $0x30] sm:$0xff]
      %v793 = vld [vmem:[%s785 + $0x38] sm:$0xff]
      %v794 = vld [vmem:[%s785 + $0x40] sm:$0xff]
      %v796 = vsel %vm225, %v783, 0
      %v799 = vsel %vm225, %v784, 0
      %801 = vmatprep.subr.mxu0 0.0
      %802 = vmatpush1.msra.mxu0 %v786
      %803 = vmatprep.subr.mxu0 0.0
      %804 = vmatpush1.msra.mxu0 %v787
      %805 = vmatprep.subr.mxu0 0.0
      %806 = vmatpush1.msra.mxu0 %v788
      %807 = vmatprep.subr.mxu0 0.0
      %808 = vmatpush1.msra.mxu0 %v789
      %809 = vmatprep.subr.mxu0 0.0
      %810 = vmatpush1.msra.mxu0 %v790
      %811 = vmatprep.subr.mxu0 0.0
      %812 = vmatpush1.msra.mxu0 %v791
      %813 = vmatprep.subr.mxu0 0.0
      %814 = vmatpush1.msra.mxu0 %v792
      %815 = vmatprep.subr.mxu0 0.0
      %816 = vmatpush1.msra.mxu0 %v793
      %817 = vmatprep.subr.mxu0 0.0
      %818 = vmatpush1.msra.mxu0 %v794
      %819 = vmatprep.subr.mxu0 0.0
      %820 = vmatpush1.msra.mxu0 0.0
      %821 = vmatprep.subr.mxu0 0.0
      %822 = vmatpush1.msra.mxu0 0.0
      %823 = vmatprep.subr.mxu0 0.0
      %824 = vmatpush1.msra.mxu0 0.0
      %825 = vmatprep.subr.mxu0 0.0
      %826 = vmatpush1.msra.mxu0 0.0
      %827 = vmatprep.subr.mxu0 0.0
      %828 = vmatpush1.msra.mxu0 0.0
      %829 = vmatprep.subr.mxu0 0.0
      %830 = vmatpush1.msra.mxu0 0.0
      %831 = vmatprep.subr.mxu0 0.0
      %832 = vmatpush1.msra.mxu0 0.0
      %833 = vmatprep.subr.mxu0 0.0
      %834 = vmatpush1.msra.mxu0 0.0
      %835 = vmatprep.subr.mxu0 0.0
      %836 = vmatpush1.msra.mxu0 0.0
      %837 = vmatprep.subr.mxu0 0.0
      %838 = vmatpush1.msra.mxu0 0.0
      %839 = vmatprep.subr.mxu0 0.0
      %840 = vmatpush1.msra.mxu0 0.0
      %841 = vmatprep.subr.mxu0 0.0
      %842 = vmatpush1.msra.mxu0 0.0
      %843 = vmatprep.subr.mxu0 0.0
      %844 = vmatpush1.msra.mxu0 0.0
      %845 = vmatprep.subr.mxu0 0.0
      %846 = vmatpush1.msra.mxu0 0.0
      %847 = vmatprep.subr.mxu0 0.0
      %848 = vmatpush1.msra.mxu0 0.0
      %849 = vmatprep.subr.mxu0 0.0
      %850 = vmatpush1.msra.mxu0 0.0
      %851 = vmatprep.subr.mxu0 0.0
      %852 = vmatpush1.msra.mxu0 0.0
      %853 = vmatprep.subr.mxu0 0.0
      %854 = vmatpush1.msra.mxu0 0.0
      %855 = vmatprep.subr.mxu0 0.0
      %856 = vmatpush1.msra.mxu0 0.0
      %857 = vmatprep.subr.mxu0 0.0
      %858 = vmatpush1.msra.mxu0 0.0
      %859 = vmatprep.subr.mxu0 0.0
      %860 = vmatpush1.msra.mxu0 0.0
      %861 = vmatprep.subr.mxu0 0.0
      %862 = vmatpush1.msra.mxu0 0.0
      %863 = vmatprep.subr.mxu0 0.0
      %864 = vmatpush1.msra.mxu0 0.0
      %865 = vmatprep.mubr.f32.mxu0 0.0
      %866 = vmatmul.mubr.f32.gmra.mrb[0].mxu0 %v796
      %v867 = vpop.f32.mrb[0].mxu0
      %v868 = vadd.f32 0.0, %v867
      %v869 = vpop.f32.mrb[0].mxu0
      %870 = vmatprep.mubr.f32.mxu0 0.0
      %871 = vmatmul.mubr.f32.gmra.mrb[0].mxu0 %v799
      %v872 = vpop.f32.mrb[0].mxu0
      %v873 = vadd.f32 0.0, %v872
      %v874 = vpop.f32.mrb[0].mxu0
      %875 = vdwg.mxu0
      %v876 = vadd.f32 %v781, %v868
      %v877 = vadd.f32 %v782, %v873
      %s878 = scalar_lea.vmem [#allocation2], 48
      %v879 = vld [vmem:[%s878] sm:$0xff]
      %v880 = vld [vmem:[%s878 + $0x8] sm:$0xff]
      %s881 = scalar_lea.vmem %s1, 432
      %v882 = vld [vmem:[%s881] sm:$0xff]
      %v883 = vld [vmem:[%s881 + $0x8] sm:$0xff]
      %v884 = vld [vmem:[%s881 + $0x10] sm:$0xff]
      %v885 = vld [vmem:[%s881 + $0x18] sm:$0xff]
      %v886 = vld [vmem:[%s881 + $0x20] sm:$0xff]
      %v887 = vld [vmem:[%s881 + $0x28] sm:$0xff]
      %v888 = vld [vmem:[%s881 + $0x30] sm:$0xff]
      %v889 = vld [vmem:[%s881 + $0x38] sm:$0xff]
      %v890 = vld [vmem:[%s881 + $0x40] sm:$0xff]
      %v892 = vsel %vm225, %v879, 0
      %v895 = vsel %vm225, %v880, 0
      %897 = vmatprep.subr.mxu0 0.0
      %898 = vmatpush1.msra.mxu0 %v882
      %899 = vmatprep.subr.mxu0 0.0
      %900 = vmatpush1.msra.mxu0 %v883
      %901 = vmatprep.subr.mxu0 0.0
      %902 = vmatpush1.msra.mxu0 %v884
      %903 = vmatprep.subr.mxu0 0.0
      %904 = vmatpush1.msra.mxu0 %v885
      %905 = vmatprep.subr.mxu0 0.0
      %906 = vmatpush1.msra.mxu0 %v886
      %907 = vmatprep.subr.mxu0 0.0
      %908 = vmatpush1.msra.mxu0 %v887
      %909 = vmatprep.subr.mxu0 0.0
      %910 = vmatpush1.msra.mxu0 %v888
      %911 = vmatprep.subr.mxu0 0.0
      %912 = vmatpush1.msra.mxu0 %v889
      %913 = vmatprep.subr.mxu0 0.0
      %914 = vmatpush1.msra.mxu0 %v890
      %915 = vmatprep.subr.mxu0 0.0
      %916 = vmatpush1.msra.mxu0 0.0
      %917 = vmatprep.subr.mxu0 0.0
      %918 = vmatpush1.msra.mxu0 0.0
      %919 = vmatprep.subr.mxu0 0.0
      %920 = vmatpush1.msra.mxu0 0.0
      %921 = vmatprep.subr.mxu0 0.0
      %922 = vmatpush1.msra.mxu0 0.0
      %923 = vmatprep.subr.mxu0 0.0
      %924 = vmatpush1.msra.mxu0 0.0
      %925 = vmatprep.subr.mxu0 0.0
      %926 = vmatpush1.msra.mxu0 0.0
      %927 = vmatprep.subr.mxu0 0.0
      %928 = vmatpush1.msra.mxu0 0.0
      %929 = vmatprep.subr.mxu0 0.0
      %930 = vmatpush1.msra.mxu0 0.0
      %931 = vmatprep.subr.mxu0 0.0
      %932 = vmatpush1.msra.mxu0 0.0
      %933 = vmatprep.subr.mxu0 0.0
      %934 = vmatpush1.msra.mxu0 0.0
      %935 = vmatprep.subr.mxu0 0.0
      %936 = vmatpush1.msra.mxu0 0.0
      %937 = vmatprep.subr.mxu0 0.0
      %938 = vmatpush1.msra.mxu0 0.0
      %939 = vmatprep.subr.mxu0 0.0
      %940 = vmatpush1.msra.mxu0 0.0
      %941 = vmatprep.subr.mxu0 0.0
      %942 = vmatpush1.msra.mxu0 0.0
      %943 = vmatprep.subr.mxu0 0.0
      %944 = vmatpush1.msra.mxu0 0.0
      %945 = vmatprep.subr.mxu0 0.0
      %946 = vmatpush1.msra.mxu0 0.0
      %947 = vmatprep.subr.mxu0 0.0
      %948 = vmatpush1.msra.mxu0 0.0
      %949 = vmatprep.subr.mxu0 0.0
      %950 = vmatpush1.msra.mxu0 0.0
      %951 = vmatprep.subr.mxu0 0.0
      %952 = vmatpush1.msra.mxu0 0.0
      %953 = vmatprep.subr.mxu0 0.0
      %954 = vmatpush1.msra.mxu0 0.0
      %955 = vmatprep.subr.mxu0 0.0
      %956 = vmatpush1.msra.mxu0 0.0
      %957 = vmatprep.subr.mxu0 0.0
      %958 = vmatpush1.msra.mxu0 0.0
      %959 = vmatprep.subr.mxu0 0.0
      %960 = vmatpush1.msra.mxu0 0.0
      %961 = vmatprep.mubr.f32.mxu0 0.0
      %962 = vmatmul.mubr.f32.gmra.mrb[0].mxu0 %v892
      %v963 = vpop.f32.mrb[0].mxu0
      %v964 = vadd.f32 0.0, %v963
      %v965 = vpop.f32.mrb[0].mxu0
      %966 = vmatprep.mubr.f32.mxu0 0.0
      %967 = vmatmul.mubr.f32.gmra.mrb[0].mxu0 %v895
      %v968 = vpop.f32.mrb[0].mxu0
      %v969 = vadd.f32 0.0, %v968
      %v970 = vpop.f32.mrb[0].mxu0
      %971 = vdwg.mxu0
      %v972 = vadd.f32 %v876, %v964
      %v973 = vadd.f32 %v877, %v969
      %v974 = vld [vmem:[%s878 + $0x1] sm:$0xff]
      %v975 = vld [vmem:[%s878 + $0x9] sm:$0xff]
      %s976 = scalar_lea.vmem %s1, 504
      %v977 = vld [vmem:[%s976] sm:$0xff]
      %v978 = vld [vmem:[%s976 + $0x8] sm:$0xff]
      %v979 = vld [vmem:[%s976 + $0x10] sm:$0xff]
      %v980 = vld [vmem:[%s976 + $0x18] sm:$0xff]
      %v981 = vld [vmem:[%s976 + $0x20] sm:$0xff]
      %v982 = vld [vmem:[%s976 + $0x28] sm:$0xff]
      %v983 = vld [vmem:[%s976 + $0x30] sm:$0xff]
      %v984 = vld [vmem:[%s976 + $0x38] sm:$0xff]
      %v985 = vld [vmem:[%s976 + $0x40] sm:$0xff]
      %v987 = vsel %vm225, %v974, 0
      %v990 = vsel %vm225, %v975, 0
      %992 = vmatprep.subr.mxu0 0.0
      %993 = vmatpush1.msra.mxu0 %v977
      %994 = vmatprep.subr.mxu0 0.0
      %995 = vmatpush1.msra.mxu0 %v978
      %996 = vmatprep.subr.mxu0 0.0
      %997 = vmatpush1.msra.mxu0 %v979
      %998 = vmatprep.subr.mxu0 0.0
      %999 = vmatpush1.msra.mxu0 %v980
      %1000 = vmatprep.subr.mxu0 0.0
      %1001 = vmatpush1.msra.mxu0 %v981
      %1002 = vmatprep.subr.mxu0 0.0
      %1003 = vmatpush1.msra.mxu0 %v982
      %1004 = vmatprep.subr.mxu0 0.0
      %1005 = vmatpush1.msra.mxu0 %v983
      %1006 = vmatprep.subr.mxu0 0.0
      %1007 = vmatpush1.msra.mxu0 %v984
      %1008 = vmatprep.subr.mxu0 0.0
      %1009 = vmatpush1.msra.mxu0 %v985
      %1010 = vmatprep.subr.mxu0 0.0
      %1011 = vmatpush1.msra.mxu0 0.0
      %1012 = vmatprep.subr.mxu0 0.0
      %1013 = vmatpush1.msra.mxu0 0.0
      %1014 = vmatprep.subr.mxu0 0.0
      %1015 = vmatpush1.msra.mxu0 0.0
      %1016 = vmatprep.subr.mxu0 0.0
      %1017 = vmatpush1.msra.mxu0 0.0
      %1018 = vmatprep.subr.mxu0 0.0
      %1019 = vmatpush1.msra.mxu0 0.0
      %1020 = vmatprep.subr.mxu0 0.0
      %1021 = vmatpush1.msra.mxu0 0.0
      %1022 = vmatprep.subr.mxu0 0.0
      %1023 = vmatpush1.msra.mxu0 0.0
      %1024 = vmatprep.subr.mxu0 0.0
      %1025 = vmatpush1.msra.mxu0 0.0
      %1026 = vmatprep.subr.mxu0 0.0
      %1027 = vmatpush1.msra.mxu0 0.0
      %1028 = vmatprep.subr.mxu0 0.0
      %1029 = vmatpush1.msra.mxu0 0.0
      %1030 = vmatprep.subr.mxu0 0.0
      %1031 = vmatpush1.msra.mxu0 0.0
      %1032 = vmatprep.subr.mxu0 0.0
      %1033 = vmatpush1.msra.mxu0 0.0
      %1034 = vmatprep.subr.mxu0 0.0
      %1035 = vmatpush1.msra.mxu0 0.0
      %1036 = vmatprep.subr.mxu0 0.0
      %1037 = vmatpush1.msra.mxu0 0.0
      %1038 = vmatprep.subr.mxu0 0.0
      %1039 = vmatpush1.msra.mxu0 0.0
      %1040 = vmatprep.subr.mxu0 0.0
      %1041 = vmatpush1.msra.mxu0 0.0
      %1042 = vmatprep.subr.mxu0 0.0
      %1043 = vmatpush1.msra.mxu0 0.0
      %1044 = vmatprep.subr.mxu0 0.0
      %1045 = vmatpush1.msra.mxu0 0.0
      %1046 = vmatprep.subr.mxu0 0.0
      %1047 = vmatpush1.msra.mxu0 0.0
      %1048 = vmatprep.subr.mxu0 0.0
      %1049 = vmatpush1.msra.mxu0 0.0
      %1050 = vmatprep.subr.mxu0 0.0
      %1051 = vmatpush1.msra.mxu0 0.0
      %1052 = vmatprep.subr.mxu0 0.0
      %1053 = vmatpush1.msra.mxu0 0.0
      %1054 = vmatprep.subr.mxu0 0.0
      %1055 = vmatpush1.msra.mxu0 0.0
      %1056 = vmatprep.mubr.f32.mxu0 0.0
      %1057 = vmatmul.mubr.f32.gmra.mrb[0].mxu0 %v987
      %v1058 = vpop.f32.mrb[0].mxu0
      %v1059 = vadd.f32 0.0, %v1058
      %v1060 = vpop.f32.mrb[0].mxu0
      %1061 = vmatprep.mubr.f32.mxu0 0.0
      %1062 = vmatmul.mubr.f32.gmra.mrb[0].mxu0 %v990
      %v1063 = vpop.f32.mrb[0].mxu0
      %v1064 = vadd.f32 0.0, %v1063
      %v1065 = vpop.f32.mrb[0].mxu0
      %1066 = vdwg.mxu0
      %v1067 = vadd.f32 %v972, %v1059
      %v1068 = vadd.f32 %v973, %v1064
      %v1069 = vld [vmem:[%s878 + $0x2] sm:$0xff]
      %v1070 = vld [vmem:[%s878 + $0xa] sm:$0xff]
      %s1071 = scalar_lea.vmem %s1, 576
      %v1072 = vld [vmem:[%s1071] sm:$0xff]
      %v1073 = vld [vmem:[%s1071 + $0x8] sm:$0xff]
      %v1074 = vld [vmem:[%s1071 + $0x10] sm:$0xff]
      %v1075 = vld [vmem:[%s1071 + $0x18] sm:$0xff]
      %v1076 = vld [vmem:[%s1071 + $0x20] sm:$0xff]
      %v1077 = vld [vmem:[%s1071 + $0x28] sm:$0xff]
      %v1078 = vld [vmem:[%s1071 + $0x30] sm:$0xff]
      %v1079 = vld [vmem:[%s1071 + $0x38] sm:$0xff]
      %v1080 = vld [vmem:[%s1071 + $0x40] sm:$0xff]
      %v1082 = vsel %vm225, %v1069, 0
      %v1085 = vsel %vm225, %v1070, 0
      %1087 = vmatprep.subr.mxu0 0.0
      %1088 = vmatpush1.msra.mxu0 %v1072
      %1089 = vmatprep.subr.mxu0 0.0
      %1090 = vmatpush1.msra.mxu0 %v1073
      %1091 = vmatprep.subr.mxu0 0.0
      %1092 = vmatpush1.msra.mxu0 %v1074
      %1093 = vmatprep.subr.mxu0 0.0
      %1094 = vmatpush1.msra.mxu0 %v1075
      %1095 = vmatprep.subr.mxu0 0.0
      %1096 = vmatpush1.msra.mxu0 %v1076
      %1097 = vmatprep.subr.mxu0 0.0
      %1098 = vmatpush1.msra.mxu0 %v1077
      %1099 = vmatprep.subr.mxu0 0.0
      %1100 = vmatpush1.msra.mxu0 %v1078
      %1101 = vmatprep.subr.mxu0 0.0
      %1102 = vmatpush1.msra.mxu0 %v1079
      %1103 = vmatprep.subr.mxu0 0.0
      %1104 = vmatpush1.msra.mxu0 %v1080
      %1105 = vmatprep.subr.mxu0 0.0
      %1106 = vmatpush1.msra.mxu0 0.0
      %1107 = vmatprep.subr.mxu0 0.0
      %1108 = vmatpush1.msra.mxu0 0.0
      %1109 = vmatprep.subr.mxu0 0.0
      %1110 = vmatpush1.msra.mxu0 0.0
      %1111 = vmatprep.subr.mxu0 0.0
      %1112 = vmatpush1.msra.mxu0 0.0
      %1113 = vmatprep.subr.mxu0 0.0
      %1114 = vmatpush1.msra.mxu0 0.0
      %1115 = vmatprep.subr.mxu0 0.0
      %1116 = vmatpush1.msra.mxu0 0.0
      %1117 = vmatprep.subr.mxu0 0.0
      %1118 = vmatpush1.msra.mxu0 0.0
      %1119 = vmatprep.subr.mxu0 0.0
      %1120 = vmatpush1.msra.mxu0 0.0
      %1121 = vmatprep.subr.mxu0 0.0
      %1122 = vmatpush1.msra.mxu0 0.0
      %1123 = vmatprep.subr.mxu0 0.0
      %1124 = vmatpush1.msra.mxu0 0.0
      %1125 = vmatprep.subr.mxu0 0.0
      %1126 = vmatpush1.msra.mxu0 0.0
      %1127 = vmatprep.subr.mxu0 0.0
      %1128 = vmatpush1.msra.mxu0 0.0
      %1129 = vmatprep.subr.mxu0 0.0
      %1130 = vmatpush1.msra.mxu0 0.0
      %1131 = vmatprep.subr.mxu0 0.0
      %1132 = vmatpush1.msra.mxu0 0.0
      %1133 = vmatprep.subr.mxu0 0.0
      %1134 = vmatpush1.msra.mxu0 0.0
      %1135 = vmatprep.subr.mxu0 0.0
      %1136 = vmatpush1.msra.mxu0 0.0
      %1137 = vmatprep.subr.mxu0 0.0
      %1138 = vmatpush1.msra.mxu0 0.0
      %1139 = vmatprep.subr.mxu0 0.0
      %1140 = vmatpush1.msra.mxu0 0.0
      %1141 = vmatprep.subr.mxu0 0.0
      %1142 = vmatpush1.msra.mxu0 0.0
      %1143 = vmatprep.subr.mxu0 0.0
      %1144 = vmatpush1.msra.mxu0 0.0
      %1145 = vmatprep.subr.mxu0 0.0
      %1146 = vmatpush1.msra.mxu0 0.0
      %1147 = vmatprep.subr.mxu0 0.0
      %1148 = vmatpush1.msra.mxu0 0.0
      %1149 = vmatprep.subr.mxu0 0.0
      %1150 = vmatpush1.msra.mxu0 0.0
      %1151 = vmatprep.mubr.f32.mxu0 0.0
      %1152 = vmatmul.mubr.f32.gmra.mrb[0].mxu0 %v1082
      %v1153 = vpop.f32.mrb[0].mxu0
      %v1154 = vadd.f32 0.0, %v1153
      %v1155 = vpop.f32.mrb[0].mxu0
      %1156 = vmatprep.mubr.f32.mxu0 0.0
      %1157 = vmatmul.mubr.f32.gmra.mrb[0].mxu0 %v1085
      %v1158 = vpop.f32.mrb[0].mxu0
      %v1159 = vadd.f32 0.0, %v1158
      %v1160 = vpop.f32.mrb[0].mxu0
      %1161 = vdwg.mxu0
      %v1162 = vadd.f32 %v1067, %v1154
      %v1163 = vadd.f32 %v1068, %v1159
      %v1164 = vld [vmem:[%s2] sm:$0x1]
      %v1166 = vlaneseq
      %v1167 = vshrl.u32 %v1166, 7
      %v1168 = vsub.s32 0, %v1167
      %v1169 = vrot.slane %v1164, %v1168
      %v1171 = vadd.f32 %v1162, %v1169
      %v1172 = vadd.f32 %v1163, %v1169
      %vm1173 = vcmp.gt.f32.partialorder %v1171, 0.0
      %vm1174 = vcmp.gt.f32.partialorder %v1172, 0.0
      %v1175 = vmul.f32 %v1171, 0.04
      %v1176 = vmul.f32 %v1172, 0.04
      %v1177 = vsel %vm1173, %v1171, %v1175
      %v1178 = vsel %vm1174, %v1172, %v1176
      %1181 = vrot.lane.b32.xlu0 %v1177, 4
      %v1182 = vpop.permute.xlu0 %1181
      %1183 = vrot.lane.b32.xlu0 %v1178, 4
      %v1184 = vpop.permute.xlu0 %1183
      %s1187 = scalar_lea.vmem [#allocation3], 24
      %1188 = vst.msk [vmem:[%s1187 + $0x1] sm:$0xff] %vm304, %v1182
      %1189 = vst.msk [vmem:[%s1187 + $0x9] sm:$0xff] %vm304, %v1184
      %v1190 = vld [vmem:[%s303] sm:$0xff]
      %v1191 = vld [vmem:[%s303 + $0x8] sm:$0xff]
      %v1192 = vld [vmem:[%s1] sm:$0xff]
      %v1193 = vld [vmem:[%s1 + $0x8] sm:$0xff]
      %v1194 = vld [vmem:[%s1 + $0x10] sm:$0xff]
      %v1195 = vld [vmem:[%s1 + $0x18] sm:$0xff]
      %v1196 = vld [vmem:[%s1 + $0x20] sm:$0xff]
      %v1197 = vld [vmem:[%s1 + $0x28] sm:$0xff]
      %v1198 = vld [vmem:[%s1 + $0x30] sm:$0xff]
      %v1199 = vld [vmem:[%s1 + $0x38] sm:$0xff]
      %v1200 = vld [vmem:[%s1 + $0x40] sm:$0xff]
      %v1201 = vld [vmem:[%s303 + $0x1] sm:$0xff]
      %v1202 = vld [vmem:[%s303 + $0x9] sm:$0xff]
      %v1203 = vld [vmem:[%s326] sm:$0xff]
      %v1204 = vld [vmem:[%s326 + $0x8] sm:$0xff]
      %v1205 = vld [vmem:[%s326 + $0x10] sm:$0xff]
      %v1206 = vld [vmem:[%s326 + $0x18] sm:$0xff]
      %v1207 = vld [vmem:[%s326 + $0x20] sm:$0xff]
      %v1208 = vld [vmem:[%s326 + $0x28] sm:$0xff]
      %v1209 = vld [vmem:[%s326 + $0x30] sm:$0xff]
      %v1210 = vld [vmem:[%s326 + $0x38] sm:$0xff]
      %v1211 = vld [vmem:[%s326 + $0x40] sm:$0xff]
      %v1213 = vsel %vm225, %v1201, 0
      %v1216 = vsel %vm225, %v1202, 0
      %1218 = vmatprep.subr.mxu0 0.0
      %1219 = vmatpush1.msra.mxu0 %v1203
      %1220 = vmatprep.subr.mxu0 0.0
      %1221 = vmatpush1.msra.mxu0 %v1204
      %1222 = vmatprep.subr.mxu0 0.0
      %1223 = vmatpush1.msra.mxu0 %v1205
      %1224 = vmatprep.subr.mxu0 0.0
      %1225 = vmatpush1.msra.mxu0 %v1206
      %1226 = vmatprep.subr.mxu0 0.0
      %1227 = vmatpush1.msra.mxu0 %v1207
      %1228 = vmatprep.subr.mxu0 0.0
      %1229 = vmatpush1.msra.mxu0 %v1208
      %1230 = vmatprep.subr.mxu0 0.0
      %1231 = vmatpush1.msra.mxu0 %v1209
      %1232 = vmatprep.subr.mxu0 0.0
      %1233 = vmatpush1.msra.mxu0 %v1210
      %1234 = vmatprep.subr.mxu0 0.0
      %1235 = vmatpush1.msra.mxu0 %v1211
      %1236 = vmatprep.subr.mxu0 0.0
      %1237 = vmatpush1.msra.mxu0 0.0
      %1238 = vmatprep.subr.mxu0 0.0
      %1239 = vmatpush1.msra.mxu0 0.0
      %1240 = vmatprep.subr.mxu0 0.0
      %1241 = vmatpush1.msra.mxu0 0.0
      %1242 = vmatprep.subr.mxu0 0.0
      %1243 = vmatpush1.msra.mxu0 0.0
      %1244 = vmatprep.subr.mxu0 0.0
      %1245 = vmatpush1.msra.mxu0 0.0
      %1246 = vmatprep.subr.mxu0 0.0
      %1247 = vmatpush1.msra.mxu0 0.0
      %1248 = vmatprep.subr.mxu0 0.0
      %1249 = vmatpush1.msra.mxu0 0.0
      %1250 = vmatprep.subr.mxu0 0.0
      %1251 = vmatpush1.msra.mxu0 0.0
      %1252 = vmatprep.subr.mxu0 0.0
      %1253 = vmatpush1.msra.mxu0 0.0
      %1254 = vmatprep.subr.mxu0 0.0
      %1255 = vmatpush1.msra.mxu0 0.0
      %1256 = vmatprep.subr.mxu0 0.0
      %1257 = vmatpush1.msra.mxu0 0.0
      %1258 = vmatprep.subr.mxu0 0.0
      %1259 = vmatpush1.msra.mxu0 0.0
      %1260 = vmatprep.subr.mxu0 0.0
      %1261 = vmatpush1.msra.mxu0 0.0
      %1262 = vmatprep.subr.mxu0 0.0
      %1263 = vmatpush1.msra.mxu0 0.0
      %1264 = vmatprep.subr.mxu0 0.0
      %1265 = vmatpush1.msra.mxu0 0.0
      %1266 = vmatprep.subr.mxu0 0.0
      %1267 = vmatpush1.msra.mxu0 0.0
      %1268 = vmatprep.subr.mxu0 0.0
      %1269 = vmatpush1.msra.mxu0 0.0
      %1270 = vmatprep.subr.mxu0 0.0
      %1271 = vmatpush1.msra.mxu0 0.0
      %1272 = vmatprep.subr.mxu0 0.0
      %1273 = vmatpush1.msra.mxu0 0.0
      %1274 = vmatprep.subr.mxu0 0.0
      %1275 = vmatpush1.msra.mxu0 0.0
      %1276 = vmatprep.subr.mxu0 0.0
      %1277 = vmatpush1.msra.mxu0 0.0
      %1278 = vmatprep.subr.mxu0 0.0
      %1279 = vmatpush1.msra.mxu0 0.0
      %1280 = vmatprep.subr.mxu0 0.0
      %1281 = vmatpush1.msra.mxu0 0.0
      %1282 = vmatprep.mubr.f32.mxu0 0.0
      %1283 = vmatmul.mubr.f32.gmra.mrb[0].mxu0 %v1213
      %v1284 = vpop.f32.mrb[0].mxu0
      %v1285 = vadd.f32 0.0, %v1284
      %v1286 = vpop.f32.mrb[0].mxu0
      %1287 = vmatprep.mubr.f32.mxu0 0.0
      %1288 = vmatmul.mubr.f32.gmra.mrb[0].mxu0 %v1216
      %v1289 = vpop.f32.mrb[0].mxu0
      %v1290 = vadd.f32 0.0, %v1289
      %v1291 = vpop.f32.mrb[0].mxu0
      %1292 = vdwg.mxu0
      %v1294 = vsel %vm225, %v1190, 0
      %v1297 = vsel %vm225, %v1191, 0
      %1299 = vmatprep.subr.mxu0 0.0
      %1300 = vmatpush1.msra.mxu0 %v1192
      %1301 = vmatprep.subr.mxu0 0.0
      %1302 = vmatpush1.msra.mxu0 %v1193
      %1303 = vmatprep.subr.mxu0 0.0
      %1304 = vmatpush1.msra.mxu0 %v1194
      %1305 = vmatprep.subr.mxu0 0.0
      %1306 = vmatpush1.msra.mxu0 %v1195
      %1307 = vmatprep.subr.mxu0 0.0
      %1308 = vmatpush1.msra.mxu0 %v1196
      %1309 = vmatprep.subr.mxu0 0.0
      %1310 = vmatpush1.msra.mxu0 %v1197
      %1311 = vmatprep.subr.mxu0 0.0
      %1312 = vmatpush1.msra.mxu0 %v1198
      %1313 = vmatprep.subr.mxu0 0.0
      %1314 = vmatpush1.msra.mxu0 %v1199
      %1315 = vmatprep.subr.mxu0 0.0
      %1316 = vmatpush1.msra.mxu0 %v1200
      %1317 = vmatprep.subr.mxu0 0.0
      %1318 = vmatpush1.msra.mxu0 0.0
      %1319 = vmatprep.subr.mxu0 0.0
      %1320 = vmatpush1.msra.mxu0 0.0
      %1321 = vmatprep.subr.mxu0 0.0
      %1322 = vmatpush1.msra.mxu0 0.0
      %1323 = vmatprep.subr.mxu0 0.0
      %1324 = vmatpush1.msra.mxu0 0.0
      %1325 = vmatprep.subr.mxu0 0.0
      %1326 = vmatpush1.msra.mxu0 0.0
      %1327 = vmatprep.subr.mxu0 0.0
      %1328 = vmatpush1.msra.mxu0 0.0
      %1329 = vmatprep.subr.mxu0 0.0
      %1330 = vmatpush1.msra.mxu0 0.0
      %1331 = vmatprep.subr.mxu0 0.0
      %1332 = vmatpush1.msra.mxu0 0.0
      %1333 = vmatprep.subr.mxu0 0.0
      %1334 = vmatpush1.msra.mxu0 0.0
      %1335 = vmatprep.subr.mxu0 0.0
      %1336 = vmatpush1.msra.mxu0 0.0
      %1337 = vmatprep.subr.mxu0 0.0
      %1338 = vmatpush1.msra.mxu0 0.0
      %1339 = vmatprep.subr.mxu0 0.0
      %1340 = vmatpush1.msra.mxu0 0.0
      %1341 = vmatprep.subr.mxu0 0.0
      %1342 = vmatpush1.msra.mxu0 0.0
      %1343 = vmatprep.subr.mxu0 0.0
      %1344 = vmatpush1.msra.mxu0 0.0
      %1345 = vmatprep.subr.mxu0 0.0
      %1346 = vmatpush1.msra.mxu0 0.0
      %1347 = vmatprep.subr.mxu0 0.0
      %1348 = vmatpush1.msra.mxu0 0.0
      %1349 = vmatprep.subr.mxu0 0.0
      %1350 = vmatpush1.msra.mxu0 0.0
      %1351 = vmatprep.subr.mxu0 0.0
      %1352 = vmatpush1.msra.mxu0 0.0
      %1353 = vmatprep.subr.mxu0 0.0
      %1354 = vmatpush1.msra.mxu0 0.0
      %1355 = vmatprep.subr.mxu0 0.0
      %1356 = vmatpush1.msra.mxu0 0.0
      %1357 = vmatprep.subr.mxu0 0.0
      %1358 = vmatpush1.msra.mxu0 0.0
      %1359 = vmatprep.subr.mxu0 0.0
      %1360 = vmatpush1.msra.mxu0 0.0
      %1361 = vmatprep.subr.mxu0 0.0
      %1362 = vmatpush1.msra.mxu0 0.0
      %1363 = vmatprep.mubr.f32.mxu0 0.0
      %1364 = vmatmul.mubr.f32.gmra.mrb[0].mxu0 %v1294
      %v1365 = vpop.f32.mrb[0].mxu0
      %v1366 = vadd.f32 %v1285, %v1365
      %v1367 = vpop.f32.mrb[0].mxu0
      %1368 = vmatprep.mubr.f32.mxu0 0.0
      %1369 = vmatmul.mubr.f32.gmra.mrb[0].mxu0 %v1297
      %v1370 = vpop.f32.mrb[0].mxu0
      %v1371 = vadd.f32 %v1290, %v1370
      %v1372 = vpop.f32.mrb[0].mxu0
      %1373 = vdwg.mxu0
      %v1374 = vld [vmem:[%s303 + $0x2] sm:$0xff]
      %v1375 = vld [vmem:[%s303 + $0xa] sm:$0xff]
      %v1376 = vld [vmem:[%s500] sm:$0xff]
      %v1377 = vld [vmem:[%s500 + $0x8] sm:$0xff]
      %v1378 = vld [vmem:[%s500 + $0x10] sm:$0xff]
      %v1379 = vld [vmem:[%s500 + $0x18] sm:$0xff]
      %v1380 = vld [vmem:[%s500 + $0x20] sm:$0xff]
      %v1381 = vld [vmem:[%s500 + $0x28] sm:$0xff]
      %v1382 = vld [vmem:[%s500 + $0x30] sm:$0xff]
      %v1383 = vld [vmem:[%s500 + $0x38] sm:$0xff]
      %v1384 = vld [vmem:[%s500 + $0x40] sm:$0xff]
      %v1386 = vsel %vm225, %v1374, 0
      %v1389 = vsel %vm225, %v1375, 0
      %1391 = vmatprep.subr.mxu0 0.0
      %1392 = vmatpush1.msra.mxu0 %v1376
      %1393 = vmatprep.subr.mxu0 0.0
      %1394 = vmatpush1.msra.mxu0 %v1377
      %1395 = vmatprep.subr.mxu0 0.0
      %1396 = vmatpush1.msra.mxu0 %v1378
      %1397 = vmatprep.subr.mxu0 0.0
      %1398 = vmatpush1.msra.mxu0 %v1379
      %1399 = vmatprep.subr.mxu0 0.0
      %1400 = vmatpush1.msra.mxu0 %v1380
      %1401 = vmatprep.subr.mxu0 0.0
      %1402 = vmatpush1.msra.mxu0 %v1381
      %1403 = vmatprep.subr.mxu0 0.0
      %1404 = vmatpush1.msra.mxu0 %v1382
      %1405 = vmatprep.subr.mxu0 0.0
      %1406 = vmatpush1.msra.mxu0 %v1383
      %1407 = vmatprep.subr.mxu0 0.0
      %1408 = vmatpush1.msra.mxu0 %v1384
      %1409 = vmatprep.subr.mxu0 0.0
      %1410 = vmatpush1.msra.mxu0 0.0
      %1411 = vmatprep.subr.mxu0 0.0
      %1412 = vmatpush1.msra.mxu0 0.0
      %1413 = vmatprep.subr.mxu0 0.0
      %1414 = vmatpush1.msra.mxu0 0.0
      %1415 = vmatprep.subr.mxu0 0.0
      %1416 = vmatpush1.msra.mxu0 0.0
      %1417 = vmatprep.subr.mxu0 0.0
      %1418 = vmatpush1.msra.mxu0 0.0
      %1419 = vmatprep.subr.mxu0 0.0
      %1420 = vmatpush1.msra.mxu0 0.0
      %1421 = vmatprep.subr.mxu0 0.0
      %1422 = vmatpush1.msra.mxu0 0.0
      %1423 = vmatprep.subr.mxu0 0.0
      %1424 = vmatpush1.msra.mxu0 0.0
      %1425 = vmatprep.subr.mxu0 0.0
      %1426 = vmatpush1.msra.mxu0 0.0
      %1427 = vmatprep.subr.mxu0 0.0
      %1428 = vmatpush1.msra.mxu0 0.0
      %1429 = vmatprep.subr.mxu0 0.0
      %1430 = vmatpush1.msra.mxu0 0.0
      %1431 = vmatprep.subr.mxu0 0.0
      %1432 = vmatpush1.msra.mxu0 0.0
      %1433 = vmatprep.subr.mxu0 0.0
      %1434 = vmatpush1.msra.mxu0 0.0
      %1435 = vmatprep.subr.mxu0 0.0
      %1436 = vmatpush1.msra.mxu0 0.0
      %1437 = vmatprep.subr.mxu0 0.0
      %1438 = vmatpush1.msra.mxu0 0.0
      %1439 = vmatprep.subr.mxu0 0.0
      %1440 = vmatpush1.msra.mxu0 0.0
      %1441 = vmatprep.subr.mxu0 0.0
      %1442 = vmatpush1.msra.mxu0 0.0
      %1443 = vmatprep.subr.mxu0 0.0
      %1444 = vmatpush1.msra.mxu0 0.0
      %1445 = vmatprep.subr.mxu0 0.0
      %1446 = vmatpush1.msra.mxu0 0.0
      %1447 = vmatprep.subr.mxu0 0.0
      %1448 = vmatpush1.msra.mxu0 0.0
      %1449 = vmatprep.subr.mxu0 0.0
      %1450 = vmatpush1.msra.mxu0 0.0
      %1451 = vmatprep.subr.mxu0 0.0
      %1452 = vmatpush1.msra.mxu0 0.0
      %1453 = vmatprep.subr.mxu0 0.0
      %1454 = vmatpush1.msra.mxu0 0.0
      %1455 = vmatprep.mubr.f32.mxu0 0.0
      %1456 = vmatmul.mubr.f32.gmra.mrb[0].mxu0 %v1386
      %v1457 = vpop.f32.mrb[0].mxu0
      %v1458 = vadd.f32 0.0, %v1457
      %v1459 = vpop.f32.mrb[0].mxu0
      %1460 = vmatprep.mubr.f32.mxu0 0.0
      %1461 = vmatmul.mubr.f32.gmra.mrb[0].mxu0 %v1389
      %v1462 = vpop.f32.mrb[0].mxu0
      %v1463 = vadd.f32 0.0, %v1462
      %v1464 = vpop.f32.mrb[0].mxu0
      %1465 = vdwg.mxu0
      %v1466 = vadd.f32 %v1366, %v1458
      %v1467 = vadd.f32 %v1371, %v1463
      %v1468 = vld [vmem:[%s878] sm:$0xff]
      %v1469 = vld [vmem:[%s878 + $0x8] sm:$0xff]
      %v1470 = vld [vmem:[%s595] sm:$0xff]
      %v1471 = vld [vmem:[%s595 + $0x8] sm:$0xff]
      %v1472 = vld [vmem:[%s595 + $0x10] sm:$0xff]
      %v1473 = vld [vmem:[%s595 + $0x18] sm:$0xff]
      %v1474 = vld [vmem:[%s595 + $0x20] sm:$0xff]
      %v1475 = vld [vmem:[%s595 + $0x28] sm:$0xff]
      %v1476 = vld [vmem:[%s595 + $0x30] sm:$0xff]
      %v1477 = vld [vmem:[%s595 + $0x38] sm:$0xff]
      %v1478 = vld [vmem:[%s595 + $0x40] sm:$0xff]
      %v1480 = vsel %vm225, %v1468, 0
      %v1483 = vsel %vm225, %v1469, 0
      %1485 = vmatprep.subr.mxu0 0.0
      %1486 = vmatpush1.msra.mxu0 %v1470
      %1487 = vmatprep.subr.mxu0 0.0
      %1488 = vmatpush1.msra.mxu0 %v1471
      %1489 = vmatprep.subr.mxu0 0.0
      %1490 = vmatpush1.msra.mxu0 %v1472
      %1491 = vmatprep.subr.mxu0 0.0
      %1492 = vmatpush1.msra.mxu0 %v1473
      %1493 = vmatprep.subr.mxu0 0.0
      %1494 = vmatpush1.msra.mxu0 %v1474
      %1495 = vmatprep.subr.mxu0 0.0
      %1496 = vmatpush1.msra.mxu0 %v1475
      %1497 = vmatprep.subr.mxu0 0.0
      %1498 = vmatpush1.msra.mxu0 %v1476
      %1499 = vmatprep.subr.mxu0 0.0
      %1500 = vmatpush1.msra.mxu0 %v1477
      %1501 = vmatprep.subr.mxu0 0.0
      %1502 = vmatpush1.msra.mxu0 %v1478
      %1503 = vmatprep.subr.mxu0 0.0
      %1504 = vmatpush1.msra.mxu0 0.0
      %1505 = vmatprep.subr.mxu0 0.0
      %1506 = vmatpush1.msra.mxu0 0.0
      %1507 = vmatprep.subr.mxu0 0.0
      %1508 = vmatpush1.msra.mxu0 0.0
      %1509 = vmatprep.subr.mxu0 0.0
      %1510 = vmatpush1.msra.mxu0 0.0
      %1511 = vmatprep.subr.mxu0 0.0
      %1512 = vmatpush1.msra.mxu0 0.0
      %1513 = vmatprep.subr.mxu0 0.0
      %1514 = vmatpush1.msra.mxu0 0.0
      %1515 = vmatprep.subr.mxu0 0.0
      %1516 = vmatpush1.msra.mxu0 0.0
      %1517 = vmatprep.subr.mxu0 0.0
      %1518 = vmatpush1.msra.mxu0 0.0
      %1519 = vmatprep.subr.mxu0 0.0
      %1520 = vmatpush1.msra.mxu0 0.0
      %1521 = vmatprep.subr.mxu0 0.0
      %1522 = vmatpush1.msra.mxu0 0.0
      %1523 = vmatprep.subr.mxu0 0.0
      %1524 = vmatpush1.msra.mxu0 0.0
      %1525 = vmatprep.subr.mxu0 0.0
      %1526 = vmatpush1.msra.mxu0 0.0
      %1527 = vmatprep.subr.mxu0 0.0
      %1528 = vmatpush1.msra.mxu0 0.0
      %1529 = vmatprep.subr.mxu0 0.0
      %1530 = vmatpush1.msra.mxu0 0.0
      %1531 = vmatprep.subr.mxu0 0.0
      %1532 = vmatpush1.msra.mxu0 0.0
      %1533 = vmatprep.subr.mxu0 0.0
      %1534 = vmatpush1.msra.mxu0 0.0
      %1535 = vmatprep.subr.mxu0 0.0
      %1536 = vmatpush1.msra.mxu0 0.0
      %1537 = vmatprep.subr.mxu0 0.0
      %1538 = vmatpush1.msra.mxu0 0.0
      %1539 = vmatprep.subr.mxu0 0.0
      %1540 = vmatpush1.msra.mxu0 0.0
      %1541 = vmatprep.subr.mxu0 0.0
      %1542 = vmatpush1.msra.mxu0 0.0
      %1543 = vmatprep.subr.mxu0 0.0
      %1544 = vmatpush1.msra.mxu0 0.0
      %1545 = vmatprep.subr.mxu0 0.0
      %1546 = vmatpush1.msra.mxu0 0.0
      %1547 = vmatprep.subr.mxu0 0.0
      %1548 = vmatpush1.msra.mxu0 0.0
      %1549 = vmatprep.mubr.f32.mxu0 0.0
      %1550 = vmatmul.mubr.f32.gmra.mrb[0].mxu0 %v1480
      %v1551 = vpop.f32.mrb[0].mxu0
      %v1552 = vadd.f32 0.0, %v1551
      %v1553 = vpop.f32.mrb[0].mxu0
      %1554 = vmatprep.mubr.f32.mxu0 0.0
      %1555 = vmatmul.mubr.f32.gmra.mrb[0].mxu0 %v1483
      %v1556 = vpop.f32.mrb[0].mxu0
      %v1557 = vadd.f32 0.0, %v1556
      %v1558 = vpop.f32.mrb[0].mxu0
      %1559 = vdwg.mxu0
      %v1560 = vadd.f32 %v1466, %v1552
      %v1561 = vadd.f32 %v1467, %v1557
      %v1562 = vld [vmem:[%s878 + $0x1] sm:$0xff]
      %v1563 = vld [vmem:[%s878 + $0x9] sm:$0xff]
      %v1564 = vld [vmem:[%s690] sm:$0xff]
      %v1565 = vld [vmem:[%s690 + $0x8] sm:$0xff]
      %v1566 = vld [vmem:[%s690 + $0x10] sm:$0xff]
      %v1567 = vld [vmem:[%s690 + $0x18] sm:$0xff]
      %v1568 = vld [vmem:[%s690 + $0x20] sm:$0xff]
      %v1569 = vld [vmem:[%s690 + $0x28] sm:$0xff]
      %v1570 = vld [vmem:[%s690 + $0x30] sm:$0xff]
      %v1571 = vld [vmem:[%s690 + $0x38] sm:$0xff]
      %v1572 = vld [vmem:[%s690 + $0x40] sm:$0xff]
      %v1574 = vsel %vm225, %v1562, 0
      %v1577 = vsel %vm225, %v1563, 0
      %1579 = vmatprep.subr.mxu0 0.0
      %1580 = vmatpush1.msra.mxu0 %v1564
      %1581 = vmatprep.subr.mxu0 0.0
      %1582 = vmatpush1.msra.mxu0 %v1565
      %1583 = vmatprep.subr.mxu0 0.0
      %1584 = vmatpush1.msra.mxu0 %v1566
      %1585 = vmatprep.subr.mxu0 0.0
      %1586 = vmatpush1.msra.mxu0 %v1567
      %1587 = vmatprep.subr.mxu0 0.0
      %1588 = vmatpush1.msra.mxu0 %v1568
      %1589 = vmatprep.subr.mxu0 0.0
      %1590 = vmatpush1.msra.mxu0 %v1569
      %1591 = vmatprep.subr.mxu0 0.0
      %1592 = vmatpush1.msra.mxu0 %v1570
      %1593 = vmatprep.subr.mxu0 0.0
      %1594 = vmatpush1.msra.mxu0 %v1571
      %1595 = vmatprep.subr.mxu0 0.0
      %1596 = vmatpush1.msra.mxu0 %v1572
      %1597 = vmatprep.subr.mxu0 0.0
      %1598 = vmatpush1.msra.mxu0 0.0
      %1599 = vmatprep.subr.mxu0 0.0
      %1600 = vmatpush1.msra.mxu0 0.0
      %1601 = vmatprep.subr.mxu0 0.0
      %1602 = vmatpush1.msra.mxu0 0.0
      %1603 = vmatprep.subr.mxu0 0.0
      %1604 = vmatpush1.msra.mxu0 0.0
      %1605 = vmatprep.subr.mxu0 0.0
      %1606 = vmatpush1.msra.mxu0 0.0
      %1607 = vmatprep.subr.mxu0 0.0
      %1608 = vmatpush1.msra.mxu0 0.0
      %1609 = vmatprep.subr.mxu0 0.0
      %1610 = vmatpush1.msra.mxu0 0.0
      %1611 = vmatprep.subr.mxu0 0.0
      %1612 = vmatpush1.msra.mxu0 0.0
      %1613 = vmatprep.subr.mxu0 0.0
      %1614 = vmatpush1.msra.mxu0 0.0
      %1615 = vmatprep.subr.mxu0 0.0
      %1616 = vmatpush1.msra.mxu0 0.0
      %1617 = vmatprep.subr.mxu0 0.0
      %1618 = vmatpush1.msra.mxu0 0.0
      %1619 = vmatprep.subr.mxu0 0.0
      %1620 = vmatpush1.msra.mxu0 0.0
      %1621 = vmatprep.subr.mxu0 0.0
      %1622 = vmatpush1.msra.mxu0 0.0
      %1623 = vmatprep.subr.mxu0 0.0
      %1624 = vmatpush1.msra.mxu0 0.0
      %1625 = vmatprep.subr.mxu0 0.0
      %1626 = vmatpush1.msra.mxu0 0.0
      %1627 = vmatprep.subr.mxu0 0.0
      %1628 = vmatpush1.msra.mxu0 0.0
      %1629 = vmatprep.subr.mxu0 0.0
      %1630 = vmatpush1.msra.mxu0 0.0
      %1631 = vmatprep.subr.mxu0 0.0
      %1632 = vmatpush1.msra.mxu0 0.0
      %1633 = vmatprep.subr.mxu0 0.0
      %1634 = vmatpush1.msra.mxu0 0.0
      %1635 = vmatprep.subr.mxu0 0.0
      %1636 = vmatpush1.msra.mxu0 0.0
      %1637 = vmatprep.subr.mxu0 0.0
      %1638 = vmatpush1.msra.mxu0 0.0
      %1639 = vmatprep.subr.mxu0 0.0
      %1640 = vmatpush1.msra.mxu0 0.0
      %1641 = vmatprep.subr.mxu0 0.0
      %1642 = vmatpush1.msra.mxu0 0.0
      %1643 = vmatprep.mubr.f32.mxu0 0.0
      %1644 = vmatmul.mubr.f32.gmra.mrb[0].mxu0 %v1574
      %v1645 = vpop.f32.mrb[0].mxu0
      %v1646 = vadd.f32 0.0, %v1645
      %v1647 = vpop.f32.mrb[0].mxu0
      %1648 = vmatprep.mubr.f32.mxu0 0.0
      %1649 = vmatmul.mubr.f32.gmra.mrb[0].mxu0 %v1577
      %v1650 = vpop.f32.mrb[0].mxu0
      %v1651 = vadd.f32 0.0, %v1650
      %v1652 = vpop.f32.mrb[0].mxu0
      %1653 = vdwg.mxu0
      %v1654 = vadd.f32 %v1560, %v1646
      %v1655 = vadd.f32 %v1561, %v1651
      %v1656 = vld [vmem:[%s878 + $0x2] sm:$0xff]
      %v1657 = vld [vmem:[%s878 + $0xa] sm:$0xff]
      %v1658 = vld [vmem:[%s785] sm:$0xff]
      %v1659 = vld [vmem:[%s785 + $0x8] sm:$0xff]
      %v1660 = vld [vmem:[%s785 + $0x10] sm:$0xff]
      %v1661 = vld [vmem:[%s785 + $0x18] sm:$0xff]
      %v1662 = vld [vmem:[%s785 + $0x20] sm:$0xff]
      %v1663 = vld [vmem:[%s785 + $0x28] sm:$0xff]
      %v1664 = vld [vmem:[%s785 + $0x30] sm:$0xff]
      %v1665 = vld [vmem:[%s785 + $0x38] sm:$0xff]
      %v1666 = vld [vmem:[%s785 + $0x40] sm:$0xff]
      %v1668 = vsel %vm225, %v1656, 0
      %v1671 = vsel %vm225, %v1657, 0
      %1673 = vmatprep.subr.mxu0 0.0
      %1674 = vmatpush1.msra.mxu0 %v1658
      %1675 = vmatprep.subr.mxu0 0.0
      %1676 = vmatpush1.msra.mxu0 %v1659
      %1677 = vmatprep.subr.mxu0 0.0
      %1678 = vmatpush1.msra.mxu0 %v1660
      %1679 = vmatprep.subr.mxu0 0.0
      %1680 = vmatpush1.msra.mxu0 %v1661
      %1681 = vmatprep.subr.mxu0 0.0
      %1682 = vmatpush1.msra.mxu0 %v1662
      %1683 = vmatprep.subr.mxu0 0.0
      %1684 = vmatpush1.msra.mxu0 %v1663
      %1685 = vmatprep.subr.mxu0 0.0
      %1686 = vmatpush1.msra.mxu0 %v1664
      %1687 = vmatprep.subr.mxu0 0.0
      %1688 = vmatpush1.msra.mxu0 %v1665
      %1689 = vmatprep.subr.mxu0 0.0
      %1690 = vmatpush1.msra.mxu0 %v1666
      %1691 = vmatprep.subr.mxu0 0.0
      %1692 = vmatpush1.msra.mxu0 0.0
      %1693 = vmatprep.subr.mxu0 0.0
      %1694 = vmatpush1.msra.mxu0 0.0
      %1695 = vmatprep.subr.mxu0 0.0
      %1696 = vmatpush1.msra.mxu0 0.0
      %1697 = vmatprep.subr.mxu0 0.0
      %1698 = vmatpush1.msra.mxu0 0.0
      %1699 = vmatprep.subr.mxu0 0.0
      %1700 = vmatpush1.msra.mxu0 0.0
      %1701 = vmatprep.subr.mxu0 0.0
      %1702 = vmatpush1.msra.mxu0 0.0
      %1703 = vmatprep.subr.mxu0 0.0
      %1704 = vmatpush1.msra.mxu0 0.0
      %1705 = vmatprep.subr.mxu0 0.0
      %1706 = vmatpush1.msra.mxu0 0.0
      %1707 = vmatprep.subr.mxu0 0.0
      %1708 = vmatpush1.msra.mxu0 0.0
      %1709 = vmatprep.subr.mxu0 0.0
      %1710 = vmatpush1.msra.mxu0 0.0
      %1711 = vmatprep.subr.mxu0 0.0
      %1712 = vmatpush1.msra.mxu0 0.0
      %1713 = vmatprep.subr.mxu0 0.0
      %1714 = vmatpush1.msra.mxu0 0.0
      %1715 = vmatprep.subr.mxu0 0.0
      %1716 = vmatpush1.msra.mxu0 0.0
      %1717 = vmatprep.subr.mxu0 0.0
      %1718 = vmatpush1.msra.mxu0 0.0
      %1719 = vmatprep.subr.mxu0 0.0
      %1720 = vmatpush1.msra.mxu0 0.0
      %1721 = vmatprep.subr.mxu0 0.0
      %1722 = vmatpush1.msra.mxu0 0.0
      %1723 = vmatprep.subr.mxu0 0.0
      %1724 = vmatpush1.msra.mxu0 0.0
      %1725 = vmatprep.subr.mxu0 0.0
      %1726 = vmatpush1.msra.mxu0 0.0
      %1727 = vmatprep.subr.mxu0 0.0
      %1728 = vmatpush1.msra.mxu0 0.0
      %1729 = vmatprep.subr.mxu0 0.0
      %1730 = vmatpush1.msra.mxu0 0.0
      %1731 = vmatprep.subr.mxu0 0.0
      %1732 = vmatpush1.msra.mxu0 0.0
      %1733 = vmatprep.subr.mxu0 0.0
      %1734 = vmatpush1.msra.mxu0 0.0
      %1735 = vmatprep.subr.mxu0 0.0
      %1736 = vmatpush1.msra.mxu0 0.0
      %1737 = vmatprep.mubr.f32.mxu0 0.0
      %1738 = vmatmul.mubr.f32.gmra.mrb[0].mxu0 %v1668
      %v1739 = vpop.f32.mrb[0].mxu0
      %v1740 = vadd.f32 0.0, %v1739
      %v1741 = vpop.f32.mrb[0].mxu0
      %1742 = vmatprep.mubr.f32.mxu0 0.0
      %1743 = vmatmul.mubr.f32.gmra.mrb[0].mxu0 %v1671
      %v1744 = vpop.f32.mrb[0].mxu0
      %v1745 = vadd.f32 0.0, %v1744
      %v1746 = vpop.f32.mrb[0].mxu0
      %1747 = vdwg.mxu0
      %v1748 = vadd.f32 %v1654, %v1740
      %v1749 = vadd.f32 %v1655, %v1745
      %s1750 = scalar_lea.vmem [#allocation2], 72
      %v1751 = vld [vmem:[%s1750] sm:$0xff]
      %v1752 = vld [vmem:[%s1750 + $0x8] sm:$0xff]
      %v1753 = vld [vmem:[%s881] sm:$0xff]
      %v1754 = vld [vmem:[%s881 + $0x8] sm:$0xff]
      %v1755 = vld [vmem:[%s881 + $0x10] sm:$0xff]
      %v1756 = vld [vmem:[%s881 + $0x18] sm:$0xff]
      %v1757 = vld [vmem:[%s881 + $0x20] sm:$0xff]
      %v1758 = vld [vmem:[%s881 + $0x28] sm:$0xff]
      %v1759 = vld [vmem:[%s881 + $0x30] sm:$0xff]
      %v1760 = vld [vmem:[%s881 + $0x38] sm:$0xff]
      %v1761 = vld [vmem:[%s881 + $0x40] sm:$0xff]
      %v1763 = vsel %vm225, %v1751, 0
      %v1766 = vsel %vm225, %v1752, 0
      %1768 = vmatprep.subr.mxu0 0.0
      %1769 = vmatpush1.msra.mxu0 %v1753
      %1770 = vmatprep.subr.mxu0 0.0
      %1771 = vmatpush1.msra.mxu0 %v1754
      %1772 = vmatprep.subr.mxu0 0.0
      %1773 = vmatpush1.msra.mxu0 %v1755
      %1774 = vmatprep.subr.mxu0 0.0
      %1775 = vmatpush1.msra.mxu0 %v1756
      %1776 = vmatprep.subr.mxu0 0.0
      %1777 = vmatpush1.msra.mxu0 %v1757
      %1778 = vmatprep.subr.mxu0 0.0
      %1779 = vmatpush1.msra.mxu0 %v1758
      %1780 = vmatprep.subr.mxu0 0.0
      %1781 = vmatpush1.msra.mxu0 %v1759
      %1782 = vmatprep.subr.mxu0 0.0
      %1783 = vmatpush1.msra.mxu0 %v1760
      %1784 = vmatprep.subr.mxu0 0.0
      %1785 = vmatpush1.msra.mxu0 %v1761
      %1786 = vmatprep.subr.mxu0 0.0
      %1787 = vmatpush1.msra.mxu0 0.0
      %1788 = vmatprep.subr.mxu0 0.0
      %1789 = vmatpush1.msra.mxu0 0.0
      %1790 = vmatprep.subr.mxu0 0.0
      %1791 = vmatpush1.msra.mxu0 0.0
      %1792 = vmatprep.subr.mxu0 0.0
      %1793 = vmatpush1.msra.mxu0 0.0
      %1794 = vmatprep.subr.mxu0 0.0
      %1795 = vmatpush1.msra.mxu0 0.0
      %1796 = vmatprep.subr.mxu0 0.0
      %1797 = vmatpush1.msra.mxu0 0.0
      %1798 = vmatprep.subr.mxu0 0.0
      %1799 = vmatpush1.msra.mxu0 0.0
      %1800 = vmatprep.subr.mxu0 0.0
      %1801 = vmatpush1.msra.mxu0 0.0
      %1802 = vmatprep.subr.mxu0 0.0
      %1803 = vmatpush1.msra.mxu0 0.0
      %1804 = vmatprep.subr.mxu0 0.0
      %1805 = vmatpush1.msra.mxu0 0.0
      %1806 = vmatprep.subr.mxu0 0.0
      %1807 = vmatpush1.msra.mxu0 0.0
      %1808 = vmatprep.subr.mxu0 0.0
      %1809 = vmatpush1.msra.mxu0 0.0
      %1810 = vmatprep.subr.mxu0 0.0
      %1811 = vmatpush1.msra.mxu0 0.0
      %1812 = vmatprep.subr.mxu0 0.0
      %1813 = vmatpush1.msra.mxu0 0.0
      %1814 = vmatprep.subr.mxu0 0.0
      %1815 = vmatpush1.msra.mxu0 0.0
      %1816 = vmatprep.subr.mxu0 0.0
      %1817 = vmatpush1.msra.mxu0 0.0
      %1818 = vmatprep.subr.mxu0 0.0
      %1819 = vmatpush1.msra.mxu0 0.0
      %1820 = vmatprep.subr.mxu0 0.0
      %1821 = vmatpush1.msra.mxu0 0.0
      %1822 = vmatprep.subr.mxu0 0.0
      %1823 = vmatpush1.msra.mxu0 0.0
      %1824 = vmatprep.subr.mxu0 0.0
      %1825 = vmatpush1.msra.mxu0 0.0
      %1826 = vmatprep.subr.mxu0 0.0
      %1827 = vmatpush1.msra.mxu0 0.0
      %1828 = vmatprep.subr.mxu0 0.0
      %1829 = vmatpush1.msra.mxu0 0.0
      %1830 = vmatprep.subr.mxu0 0.0
      %1831 = vmatpush1.msra.mxu0 0.0
      %1832 = vmatprep.mubr.f32.mxu0 0.0
      %1833 = vmatmul.mubr.f32.gmra.mrb[0].mxu0 %v1763
      %v1834 = vpop.f32.mrb[0].mxu0
      %v1835 = vadd.f32 0.0, %v1834
      %v1836 = vpop.f32.mrb[0].mxu0
      %1837 = vmatprep.mubr.f32.mxu0 0.0
      %1838 = vmatmul.mubr.f32.gmra.mrb[0].mxu0 %v1766
      %v1839 = vpop.f32.mrb[0].mxu0
      %v1840 = vadd.f32 0.0, %v1839
      %v1841 = vpop.f32.mrb[0].mxu0
      %1842 = vdwg.mxu0
      %v1843 = vadd.f32 %v1748, %v1835
      %v1844 = vadd.f32 %v1749, %v1840
      %v1845 = vld [vmem:[%s1750 + $0x1] sm:$0xff]
      %v1846 = vld [vmem:[%s1750 + $0x9] sm:$0xff]
      %v1847 = vld [vmem:[%s976] sm:$0xff]
      %v1848 = vld [vmem:[%s976 + $0x8] sm:$0xff]
      %v1849 = vld [vmem:[%s976 + $0x10] sm:$0xff]
      %v1850 = vld [vmem:[%s976 + $0x18] sm:$0xff]
      %v1851 = vld [vmem:[%s976 + $0x20] sm:$0xff]
      %v1852 = vld [vmem:[%s976 + $0x28] sm:$0xff]
      %v1853 = vld [vmem:[%s976 + $0x30] sm:$0xff]
      %v1854 = vld [vmem:[%s976 + $0x38] sm:$0xff]
      %v1855 = vld [vmem:[%s976 + $0x40] sm:$0xff]
      %v1857 = vsel %vm225, %v1845, 0
      %v1860 = vsel %vm225, %v1846, 0
      %1862 = vmatprep.subr.mxu0 0.0
      %1863 = vmatpush1.msra.mxu0 %v1847
      %1864 = vmatprep.subr.mxu0 0.0
      %1865 = vmatpush1.msra.mxu0 %v1848
      %1866 = vmatprep.subr.mxu0 0.0
      %1867 = vmatpush1.msra.mxu0 %v1849
      %1868 = vmatprep.subr.mxu0 0.0
      %1869 = vmatpush1.msra.mxu0 %v1850
      %1870 = vmatprep.subr.mxu0 0.0
      %1871 = vmatpush1.msra.mxu0 %v1851
      %1872 = vmatprep.subr.mxu0 0.0
      %1873 = vmatpush1.msra.mxu0 %v1852
      %1874 = vmatprep.subr.mxu0 0.0
      %1875 = vmatpush1.msra.mxu0 %v1853
      %1876 = vmatprep.subr.mxu0 0.0
      %1877 = vmatpush1.msra.mxu0 %v1854
      %1878 = vmatprep.subr.mxu0 0.0
      %1879 = vmatpush1.msra.mxu0 %v1855
      %1880 = vmatprep.subr.mxu0 0.0
      %1881 = vmatpush1.msra.mxu0 0.0
      %1882 = vmatprep.subr.mxu0 0.0
      %1883 = vmatpush1.msra.mxu0 0.0
      %1884 = vmatprep.subr.mxu0 0.0
      %1885 = vmatpush1.msra.mxu0 0.0
      %1886 = vmatprep.subr.mxu0 0.0
      %1887 = vmatpush1.msra.mxu0 0.0
      %1888 = vmatprep.subr.mxu0 0.0
      %1889 = vmatpush1.msra.mxu0 0.0
      %1890 = vmatprep.subr.mxu0 0.0
      %1891 = vmatpush1.msra.mxu0 0.0
      %1892 = vmatprep.subr.mxu0 0.0
      %1893 = vmatpush1.msra.mxu0 0.0
      %1894 = vmatprep.subr.mxu0 0.0
      %1895 = vmatpush1.msra.mxu0 0.0
      %1896 = vmatprep.subr.mxu0 0.0
      %1897 = vmatpush1.msra.mxu0 0.0
      %1898 = vmatprep.subr.mxu0 0.0
      %1899 = vmatpush1.msra.mxu0 0.0
      %1900 = vmatprep.subr.mxu0 0.0
      %1901 = vmatpush1.msra.mxu0 0.0
      %1902 = vmatprep.subr.mxu0 0.0
      %1903 = vmatpush1.msra.mxu0 0.0
      %1904 = vmatprep.subr.mxu0 0.0
      %1905 = vmatpush1.msra.mxu0 0.0
      %1906 = vmatprep.subr.mxu0 0.0
      %1907 = vmatpush1.msra.mxu0 0.0
      %1908 = vmatprep.subr.mxu0 0.0
      %1909 = vmatpush1.msra.mxu0 0.0
      %1910 = vmatprep.subr.mxu0 0.0
      %1911 = vmatpush1.msra.mxu0 0.0
      %1912 = vmatprep.subr.mxu0 0.0
      %1913 = vmatpush1.msra.mxu0 0.0
      %1914 = vmatprep.subr.mxu0 0.0
      %1915 = vmatpush1.msra.mxu0 0.0
      %1916 = vmatprep.subr.mxu0 0.0
      %1917 = vmatpush1.msra.mxu0 0.0
      %1918 = vmatprep.subr.mxu0 0.0
      %1919 = vmatpush1.msra.mxu0 0.0
      %1920 = vmatprep.subr.mxu0 0.0
      %1921 = vmatpush1.msra.mxu0 0.0
      %1922 = vmatprep.subr.mxu0 0.0
      %1923 = vmatpush1.msra.mxu0 0.0
      %1924 = vmatprep.subr.mxu0 0.0
      %1925 = vmatpush1.msra.mxu0 0.0
      %1926 = vmatprep.mubr.f32.mxu0 0.0
      %1927 = vmatmul.mubr.f32.gmra.mrb[0].mxu0 %v1857
      %v1928 = vpop.f32.mrb[0].mxu0
      %v1929 = vadd.f32 0.0, %v1928
      %v1930 = vpop.f32.mrb[0].mxu0
      %1931 = vmatprep.mubr.f32.mxu0 0.0
      %1932 = vmatmul.mubr.f32.gmra.mrb[0].mxu0 %v1860
      %v1933 = vpop.f32.mrb[0].mxu0
      %v1934 = vadd.f32 0.0, %v1933
      %v1935 = vpop.f32.mrb[0].mxu0
      %1936 = vdwg.mxu0
      %v1937 = vadd.f32 %v1843, %v1929
      %v1938 = vadd.f32 %v1844, %v1934
      %v1939 = vld [vmem:[%s1750 + $0x2] sm:$0xff]
      %v1940 = vld [vmem:[%s1750 + $0xa] sm:$0xff]
      %v1941 = vld [vmem:[%s1071] sm:$0xff]
      %v1942 = vld [vmem:[%s1071 + $0x8] sm:$0xff]
      %v1943 = vld [vmem:[%s1071 + $0x10] sm:$0xff]
      %v1944 = vld [vmem:[%s1071 + $0x18] sm:$0xff]
      %v1945 = vld [vmem:[%s1071 + $0x20] sm:$0xff]
      %v1946 = vld [vmem:[%s1071 + $0x28] sm:$0xff]
      %v1947 = vld [vmem:[%s1071 + $0x30] sm:$0xff]
      %v1948 = vld [vmem:[%s1071 + $0x38] sm:$0xff]
      %v1949 = vld [vmem:[%s1071 + $0x40] sm:$0xff]
      %v1951 = vsel %vm225, %v1939, 0
      %v1954 = vsel %vm225, %v1940, 0
      %1956 = vmatprep.subr.mxu0 0.0
      %1957 = vmatpush1.msra.mxu0 %v1941
      %1958 = vmatprep.subr.mxu0 0.0
      %1959 = vmatpush1.msra.mxu0 %v1942
      %1960 = vmatprep.subr.mxu0 0.0
      %1961 = vmatpush1.msra.mxu0 %v1943
      %1962 = vmatprep.subr.mxu0 0.0
      %1963 = vmatpush1.msra.mxu0 %v1944
      %1964 = vmatprep.subr.mxu0 0.0
      %1965 = vmatpush1.msra.mxu0 %v1945
      %1966 = vmatprep.subr.mxu0 0.0
      %1967 = vmatpush1.msra.mxu0 %v1946
      %1968 = vmatprep.subr.mxu0 0.0
      %1969 = vmatpush1.msra.mxu0 %v1947
      %1970 = vmatprep.subr.mxu0 0.0
      %1971 = vmatpush1.msra.mxu0 %v1948
      %1972 = vmatprep.subr.mxu0 0.0
      %1973 = vmatpush1.msra.mxu0 %v1949
      %1974 = vmatprep.subr.mxu0 0.0
      %1975 = vmatpush1.msra.mxu0 0.0
      %1976 = vmatprep.subr.mxu0 0.0
      %1977 = vmatpush1.msra.mxu0 0.0
      %1978 = vmatprep.subr.mxu0 0.0
      %1979 = vmatpush1.msra.mxu0 0.0
      %1980 = vmatprep.subr.mxu0 0.0
      %1981 = vmatpush1.msra.mxu0 0.0
      %1982 = vmatprep.subr.mxu0 0.0
      %1983 = vmatpush1.msra.mxu0 0.0
      %1984 = vmatprep.subr.mxu0 0.0
      %1985 = vmatpush1.msra.mxu0 0.0
      %1986 = vmatprep.subr.mxu0 0.0
      %1987 = vmatpush1.msra.mxu0 0.0
      %1988 = vmatprep.subr.mxu0 0.0
      %1989 = vmatpush1.msra.mxu0 0.0
      %1990 = vmatprep.subr.mxu0 0.0
      %1991 = vmatpush1.msra.mxu0 0.0
      %1992 = vmatprep.subr.mxu0 0.0
      %1993 = vmatpush1.msra.mxu0 0.0
      %1994 = vmatprep.subr.mxu0 0.0
      %1995 = vmatpush1.msra.mxu0 0.0
      %1996 = vmatprep.subr.mxu0 0.0
      %1997 = vmatpush1.msra.mxu0 0.0
      %1998 = vmatprep.subr.mxu0 0.0
      %1999 = vmatpush1.msra.mxu0 0.0
      %2000 = vmatprep.subr.mxu0 0.0
      %2001 = vmatpush1.msra.mxu0 0.0
      %2002 = vmatprep.subr.mxu0 0.0
      %2003 = vmatpush1.msra.mxu0 0.0
      %2004 = vmatprep.subr.mxu0 0.0
      %2005 = vmatpush1.msra.mxu0 0.0
      %2006 = vmatprep.subr.mxu0 0.0
      %2007 = vmatpush1.msra.mxu0 0.0
      %2008 = vmatprep.subr.mxu0 0.0
      %2009 = vmatpush1.msra.mxu0 0.0
      %2010 = vmatprep.subr.mxu0 0.0
      %2011 = vmatpush1.msra.mxu0 0.0
      %2012 = vmatprep.subr.mxu0 0.0
      %2013 = vmatpush1.msra.mxu0 0.0
      %2014 = vmatprep.subr.mxu0 0.0
      %2015 = vmatpush1.msra.mxu0 0.0
      %2016 = vmatprep.subr.mxu0 0.0
      %2017 = vmatpush1.msra.mxu0 0.0
      %2018 = vmatprep.subr.mxu0 0.0
      %2019 = vmatpush1.msra.mxu0 0.0
      %2020 = vmatprep.mubr.f32.mxu0 0.0
      %2021 = vmatmul.mubr.f32.gmra.mrb[0].mxu0 %v1951
      %v2022 = vpop.f32.mrb[0].mxu0
      %v2023 = vadd.f32 0.0, %v2022
      %v2024 = vpop.f32.mrb[0].mxu0
      %2025 = vmatprep.mubr.f32.mxu0 0.0
      %2026 = vmatmul.mubr.f32.gmra.mrb[0].mxu0 %v1954
      %v2027 = vpop.f32.mrb[0].mxu0
      %v2028 = vadd.f32 0.0, %v2027
      %v2029 = vpop.f32.mrb[0].mxu0
      %2030 = vdwg.mxu0
      %v2031 = vadd.f32 %v1937, %v2023
      %v2032 = vadd.f32 %v1938, %v2028
      %v2033 = vld [vmem:[%s2] sm:$0x1]
      %v2035 = vlaneseq
      %v2036 = vshrl.u32 %v2035, 7
      %v2037 = vsub.s32 0, %v2036
      %v2038 = vrot.slane %v2033, %v2037
      %v2040 = vadd.f32 %v2031, %v2038
      %v2041 = vadd.f32 %v2032, %v2038
      %vm2042 = vcmp.gt.f32.partialorder %v2040, 0.0
      %vm2043 = vcmp.gt.f32.partialorder %v2041, 0.0
      %v2044 = vmul.f32 %v2040, 0.04
      %v2045 = vmul.f32 %v2041, 0.04
      %v2046 = vsel %vm2042, %v2040, %v2044
      %v2047 = vsel %vm2043, %v2041, %v2045
      %2050 = vrot.lane.b32.xlu0 %v2046, 4
      %v2051 = vpop.permute.xlu0 %2050
      %2052 = vrot.lane.b32.xlu0 %v2047, 4
      %v2053 = vpop.permute.xlu0 %2052
      %s2056 = scalar_lea.vmem [#allocation3], 48
      %2057 = vst.msk [vmem:[%s2056 + $0x1] sm:$0xff] %vm304, %v2051
      %2058 = vst.msk [vmem:[%s2056 + $0x9] sm:$0xff] %vm304, %v2053
      %v2059 = vld [vmem:[%s878] sm:$0xff]
      %v2060 = vld [vmem:[%s878 + $0x8] sm:$0xff]
      %v2061 = vld [vmem:[%s1] sm:$0xff]
      %v2062 = vld [vmem:[%s1 + $0x8] sm:$0xff]
      %v2063 = vld [vmem:[%s1 + $0x10] sm:$0xff]
      %v2064 = vld [vmem:[%s1 + $0x18] sm:$0xff]
      %v2065 = vld [vmem:[%s1 + $0x20] sm:$0xff]
      %v2066 = vld [vmem:[%s1 + $0x28] sm:$0xff]
      %v2067 = vld [vmem:[%s1 + $0x30] sm:$0xff]
      %v2068 = vld [vmem:[%s1 + $0x38] sm:$0xff]
      %v2069 = vld [vmem:[%s1 + $0x40] sm:$0xff]
      %v2070 = vld [vmem:[%s878 + $0x1] sm:$0xff]
      %v2071 = vld [vmem:[%s878 + $0x9] sm:$0xff]
      %v2072 = vld [vmem:[%s326] sm:$0xff]
      %v2073 = vld [vmem:[%s326 + $0x8] sm:$0xff]
      %v2074 = vld [vmem:[%s326 + $0x10] sm:$0xff]
      %v2075 = vld [vmem:[%s326 + $0x18] sm:$0xff]
      %v2076 = vld [vmem:[%s326 + $0x20] sm:$0xff]
      %v2077 = vld [vmem:[%s326 + $0x28] sm:$0xff]
      %v2078 = vld [vmem:[%s326 + $0x30] sm:$0xff]
      %v2079 = vld [vmem:[%s326 + $0x38] sm:$0xff]
      %v2080 = vld [vmem:[%s326 + $0x40] sm:$0xff]
      %v2082 = vsel %vm225, %v2070, 0
      %v2085 = vsel %vm225, %v2071, 0
      %2087 = vmatprep.subr.mxu0 0.0
      %2088 = vmatpush1.msra.mxu0 %v2072
      %2089 = vmatprep.subr.mxu0 0.0
      %2090 = vmatpush1.msra.mxu0 %v2073
      %2091 = vmatprep.subr.mxu0 0.0
      %2092 = vmatpush1.msra.mxu0 %v2074
      %2093 = vmatprep.subr.mxu0 0.0
      %2094 = vmatpush1.msra.mxu0 %v2075
      %2095 = vmatprep.subr.mxu0 0.0
      %2096 = vmatpush1.msra.mxu0 %v2076
      %2097 = vmatprep.subr.mxu0 0.0
      %2098 = vmatpush1.msra.mxu0 %v2077
      %2099 = vmatprep.subr.mxu0 0.0
      %2100 = vmatpush1.msra.mxu0 %v2078
      %2101 = vmatprep.subr.mxu0 0.0
      %2102 = vmatpush1.msra.mxu0 %v2079
      %2103 = vmatprep.subr.mxu0 0.0
      %2104 = vmatpush1.msra.mxu0 %v2080
      %2105 = vmatprep.subr.mxu0 0.0
      %2106 = vmatpush1.msra.mxu0 0.0
      %2107 = vmatprep.subr.mxu0 0.0
      %2108 = vmatpush1.msra.mxu0 0.0
      %2109 = vmatprep.subr.mxu0 0.0
      %2110 = vmatpush1.msra.mxu0 0.0
      %2111 = vmatprep.subr.mxu0 0.0
      %2112 = vmatpush1.msra.mxu0 0.0
      %2113 = vmatprep.subr.mxu0 0.0
      %2114 = vmatpush1.msra.mxu0 0.0
      %2115 = vmatprep.subr.mxu0 0.0
      %2116 = vmatpush1.msra.mxu0 0.0
      %2117 = vmatprep.subr.mxu0 0.0
      %2118 = vmatpush1.msra.mxu0 0.0
      %2119 = vmatprep.subr.mxu0 0.0
      %2120 = vmatpush1.msra.mxu0 0.0
      %2121 = vmatprep.subr.mxu0 0.0
      %2122 = vmatpush1.msra.mxu0 0.0
      %2123 = vmatprep.subr.mxu0 0.0
      %2124 = vmatpush1.msra.mxu0 0.0
      %2125 = vmatprep.subr.mxu0 0.0
      %2126 = vmatpush1.msra.mxu0 0.0
      %2127 = vmatprep.subr.mxu0 0.0
      %2128 = vmatpush1.msra.mxu0 0.0
      %2129 = vmatprep.subr.mxu0 0.0
      %2130 = vmatpush1.msra.mxu0 0.0
      %2131 = vmatprep.subr.mxu0 0.0
      %2132 = vmatpush1.msra.mxu0 0.0
      %2133 = vmatprep.subr.mxu0 0.0
      %2134 = vmatpush1.msra.mxu0 0.0
      %2135 = vmatprep.subr.mxu0 0.0
      %2136 = vmatpush1.msra.mxu0 0.0
      %2137 = vmatprep.subr.mxu0 0.0
      %2138 = vmatpush1.msra.mxu0 0.0
      %2139 = vmatprep.subr.mxu0 0.0
      %2140 = vmatpush1.msra.mxu0 0.0
      %2141 = vmatprep.subr.mxu0 0.0
      %2142 = vmatpush1.msra.mxu0 0.0
      %2143 = vmatprep.subr.mxu0 0.0
      %2144 = vmatpush1.msra.mxu0 0.0
      %2145 = vmatprep.subr.mxu0 0.0
      %2146 = vmatpush1.msra.mxu0 0.0
      %2147 = vmatprep.subr.mxu0 0.0
      %2148 = vmatpush1.msra.mxu0 0.0
      %2149 = vmatprep.subr.mxu0 0.0
      %2150 = vmatpush1.msra.mxu0 0.0
      %2151 = vmatprep.mubr.f32.mxu0 0.0
      %2152 = vmatmul.mubr.f32.gmra.mrb[0].mxu0 %v2082
      %v2153 = vpop.f32.mrb[0].mxu0
      %v2154 = vadd.f32 0.0, %v2153
      %v2155 = vpop.f32.mrb[0].mxu0
      %2156 = vmatprep.mubr.f32.mxu0 0.0
      %2157 = vmatmul.mubr.f32.gmra.mrb[0].mxu0 %v2085
      %v2158 = vpop.f32.mrb[0].mxu0
      %v2159 = vadd.f32 0.0, %v2158
      %v2160 = vpop.f32.mrb[0].mxu0
      %2161 = vdwg.mxu0
      %v2163 = vsel %vm225, %v2059, 0
      %v2166 = vsel %vm225, %v2060, 0
      %2168 = vmatprep.subr.mxu0 0.0
      %2169 = vmatpush1.msra.mxu0 %v2061
      %2170 = vmatprep.subr.mxu0 0.0
      %2171 = vmatpush1.msra.mxu0 %v2062
      %2172 = vmatprep.subr.mxu0 0.0
      %2173 = vmatpush1.msra.mxu0 %v2063
      %2174 = vmatprep.subr.mxu0 0.0
      %2175 = vmatpush1.msra.mxu0 %v2064
      %2176 = vmatprep.subr.mxu0 0.0
      %2177 = vmatpush1.msra.mxu0 %v2065
      %2178 = vmatprep.subr.mxu0 0.0
      %2179 = vmatpush1.msra.mxu0 %v2066
      %2180 = vmatprep.subr.mxu0 0.0
      %2181 = vmatpush1.msra.mxu0 %v2067
      %2182 = vmatprep.subr.mxu0 0.0
      %2183 = vmatpush1.msra.mxu0 %v2068
      %2184 = vmatprep.subr.mxu0 0.0
      %2185 = vmatpush1.msra.mxu0 %v2069
      %2186 = vmatprep.subr.mxu0 0.0
      %2187 = vmatpush1.msra.mxu0 0.0
      %2188 = vmatprep.subr.mxu0 0.0
      %2189 = vmatpush1.msra.mxu0 0.0
      %2190 = vmatprep.subr.mxu0 0.0
      %2191 = vmatpush1.msra.mxu0 0.0
      %2192 = vmatprep.subr.mxu0 0.0
      %2193 = vmatpush1.msra.mxu0 0.0
      %2194 = vmatprep.subr.mxu0 0.0
      %2195 = vmatpush1.msra.mxu0 0.0
      %2196 = vmatprep.subr.mxu0 0.0
      %2197 = vmatpush1.msra.mxu0 0.0
      %2198 = vmatprep.subr.mxu0 0.0
      %2199 = vmatpush1.msra.mxu0 0.0
      %2200 = vmatprep.subr.mxu0 0.0
      %2201 = vmatpush1.msra.mxu0 0.0
      %2202 = vmatprep.subr.mxu0 0.0
      %2203 = vmatpush1.msra.mxu0 0.0
      %2204 = vmatprep.subr.mxu0 0.0
      %2205 = vmatpush1.msra.mxu0 0.0
      %2206 = vmatprep.subr.mxu0 0.0
      %2207 = vmatpush1.msra.mxu0 0.0
      %2208 = vmatprep.subr.mxu0 0.0
      %2209 = vmatpush1.msra.mxu0 0.0
      %2210 = vmatprep.subr.mxu0 0.0
      %2211 = vmatpush1.msra.mxu0 0.0
      %2212 = vmatprep.subr.mxu0 0.0
      %2213 = vmatpush1.msra.mxu0 0.0
      %2214 = vmatprep.subr.mxu0 0.0
      %2215 = vmatpush1.msra.mxu0 0.0
      %2216 = vmatprep.subr.mxu0 0.0
      %2217 = vmatpush1.msra.mxu0 0.0
      %2218 = vmatprep.subr.mxu0 0.0
      %2219 = vmatpush1.msra.mxu0 0.0
      %2220 = vmatprep.subr.mxu0 0.0
      %2221 = vmatpush1.msra.mxu0 0.0
      %2222 = vmatprep.subr.mxu0 0.0
      %2223 = vmatpush1.msra.mxu0 0.0
      %2224 = vmatprep.subr.mxu0 0.0
      %2225 = vmatpush1.msra.mxu0 0.0
      %2226 = vmatprep.subr.mxu0 0.0
      %2227 = vmatpush1.msra.mxu0 0.0
      %2228 = vmatprep.subr.mxu0 0.0
      %2229 = vmatpush1.msra.mxu0 0.0
      %2230 = vmatprep.subr.mxu0 0.0
      %2231 = vmatpush1.msra.mxu0 0.0
      %2232 = vmatprep.mubr.f32.mxu0 0.0
      %2233 = vmatmul.mubr.f32.gmra.mrb[0].mxu0 %v2163
      %v2234 = vpop.f32.mrb[0].mxu0
      %v2235 = vadd.f32 %v2154, %v2234
      %v2236 = vpop.f32.mrb[0].mxu0
      %2237 = vmatprep.mubr.f32.mxu0 0.0
      %2238 = vmatmul.mubr.f32.gmra.mrb[0].mxu0 %v2166
      %v2239 = vpop.f32.mrb[0].mxu0
      %v2240 = vadd.f32 %v2159, %v2239
      %v2241 = vpop.f32.mrb[0].mxu0
      %2242 = vdwg.mxu0
      %v2243 = vld [vmem:[%s878 + $0x2] sm:$0xff]
      %v2244 = vld [vmem:[%s878 + $0xa] sm:$0xff]
      %v2245 = vld [vmem:[%s500] sm:$0xff]
      %v2246 = vld [vmem:[%s500 + $0x8] sm:$0xff]
      %v2247 = vld [vmem:[%s500 + $0x10] sm:$0xff]
      %v2248 = vld [vmem:[%s500 + $0x18] sm:$0xff]
      %v2249 = vld [vmem:[%s500 + $0x20] sm:$0xff]
      %v2250 = vld [vmem:[%s500 + $0x28] sm:$0xff]
      %v2251 = vld [vmem:[%s500 + $0x30] sm:$0xff]
      %v2252 = vld [vmem:[%s500 + $0x38] sm:$0xff]
      %v2253 = vld [vmem:[%s500 + $0x40] sm:$0xff]
      %v2255 = vsel %vm225, %v2243, 0
      %v2258 = vsel %vm225, %v2244, 0
      %2260 = vmatprep.subr.mxu0 0.0
      %2261 = vmatpush1.msra.mxu0 %v2245
      %2262 = vmatprep.subr.mxu0 0.0
      %2263 = vmatpush1.msra.mxu0 %v2246
      %2264 = vmatprep.subr.mxu0 0.0
      %2265 = vmatpush1.msra.mxu0 %v2247
      %2266 = vmatprep.subr.mxu0 0.0
      %2267 = vmatpush1.msra.mxu0 %v2248
      %2268 = vmatprep.subr.mxu0 0.0
      %2269 = vmatpush1.msra.mxu0 %v2249
      %2270 = vmatprep.subr.mxu0 0.0
      %2271 = vmatpush1.msra.mxu0 %v2250
      %2272 = vmatprep.subr.mxu0 0.0
      %2273 = vmatpush1.msra.mxu0 %v2251
      %2274 = vmatprep.subr.mxu0 0.0
      %2275 = vmatpush1.msra.mxu0 %v2252
      %2276 = vmatprep.subr.mxu0 0.0
      %2277 = vmatpush1.msra.mxu0 %v2253
      %2278 = vmatprep.subr.mxu0 0.0
      %2279 = vmatpush1.msra.mxu0 0.0
      %2280 = vmatprep.subr.mxu0 0.0
      %2281 = vmatpush1.msra.mxu0 0.0
      %2282 = vmatprep.subr.mxu0 0.0
      %2283 = vmatpush1.msra.mxu0 0.0
      %2284 = vmatprep.subr.mxu0 0.0
      %2285 = vmatpush1.msra.mxu0 0.0
      %2286 = vmatprep.subr.mxu0 0.0
      %2287 = vmatpush1.msra.mxu0 0.0
      %2288 = vmatprep.subr.mxu0 0.0
      %2289 = vmatpush1.msra.mxu0 0.0
      %2290 = vmatprep.subr.mxu0 0.0
      %2291 = vmatpush1.msra.mxu0 0.0
      %2292 = vmatprep.subr.mxu0 0.0
      %2293 = vmatpush1.msra.mxu0 0.0
      %2294 = vmatprep.subr.mxu0 0.0
      %2295 = vmatpush1.msra.mxu0 0.0
      %2296 = vmatprep.subr.mxu0 0.0
      %2297 = vmatpush1.msra.mxu0 0.0
      %2298 = vmatprep.subr.mxu0 0.0
      %2299 = vmatpush1.msra.mxu0 0.0
      %2300 = vmatprep.subr.mxu0 0.0
      %2301 = vmatpush1.msra.mxu0 0.0
      %2302 = vmatprep.subr.mxu0 0.0
      %2303 = vmatpush1.msra.mxu0 0.0
      %2304 = vmatprep.subr.mxu0 0.0
      %2305 = vmatpush1.msra.mxu0 0.0
      %2306 = vmatprep.subr.mxu0 0.0
      %2307 = vmatpush1.msra.mxu0 0.0
      %2308 = vmatprep.subr.mxu0 0.0
      %2309 = vmatpush1.msra.mxu0 0.0
      %2310 = vmatprep.subr.mxu0 0.0
      %2311 = vmatpush1.msra.mxu0 0.0
      %2312 = vmatprep.subr.mxu0 0.0
      %2313 = vmatpush1.msra.mxu0 0.0
      %2314 = vmatprep.subr.mxu0 0.0
      %2315 = vmatpush1.msra.mxu0 0.0
      %2316 = vmatprep.subr.mxu0 0.0
      %2317 = vmatpush1.msra.mxu0 0.0
      %2318 = vmatprep.subr.mxu0 0.0
      %2319 = vmatpush1.msra.mxu0 0.0
      %2320 = vmatprep.subr.mxu0 0.0
      %2321 = vmatpush1.msra.mxu0 0.0
      %2322 = vmatprep.subr.mxu0 0.0
      %2323 = vmatpush1.msra.mxu0 0.0
      %2324 = vmatprep.mubr.f32.mxu0 0.0
      %2325 = vmatmul.mubr.f32.gmra.mrb[0].mxu0 %v2255
      %v2326 = vpop.f32.mrb[0].mxu0
      %v2327 = vadd.f32 0.0, %v2326
      %v2328 = vpop.f32.mrb[0].mxu0
      %2329 = vmatprep.mubr.f32.mxu0 0.0
      %2330 = vmatmul.mubr.f32.gmra.mrb[0].mxu0 %v2258
      %v2331 = vpop.f32.mrb[0].mxu0
      %v2332 = vadd.f32 0.0, %v2331
      %v2333 = vpop.f32.mrb[0].mxu0
      %2334 = vdwg.mxu0
      %v2335 = vadd.f32 %v2235, %v2327
      %v2336 = vadd.f32 %v2240, %v2332
      %v2337 = vld [vmem:[%s1750] sm:$0xff]
      %v2338 = vld [vmem:[%s1750 + $0x8] sm:$0xff]
      %v2339 = vld [vmem:[%s595] sm:$0xff]
      %v2340 = vld [vmem:[%s595 + $0x8] sm:$0xff]
      %v2341 = vld [vmem:[%s595 + $0x10] sm:$0xff]
      %v2342 = vld [vmem:[%s595 + $0x18] sm:$0xff]
      %v2343 = vld [vmem:[%s595 + $0x20] sm:$0xff]
      %v2344 = vld [vmem:[%s595 + $0x28] sm:$0xff]
      %v2345 = vld [vmem:[%s595 + $0x30] sm:$0xff]
      %v2346 = vld [vmem:[%s595 + $0x38] sm:$0xff]
      %v2347 = vld [vmem:[%s595 + $0x40] sm:$0xff]
      %v2349 = vsel %vm225, %v2337, 0
      %v2352 = vsel %vm225, %v2338, 0
      %2354 = vmatprep.subr.mxu0 0.0
      %2355 = vmatpush1.msra.mxu0 %v2339
      %2356 = vmatprep.subr.mxu0 0.0
      %2357 = vmatpush1.msra.mxu0 %v2340
      %2358 = vmatprep.subr.mxu0 0.0
      %2359 = vmatpush1.msra.mxu0 %v2341
      %2360 = vmatprep.subr.mxu0 0.0
      %2361 = vmatpush1.msra.mxu0 %v2342
      %2362 = vmatprep.subr.mxu0 0.0
      %2363 = vmatpush1.msra.mxu0 %v2343
      %2364 = vmatprep.subr.mxu0 0.0
      %2365 = vmatpush1.msra.mxu0 %v2344
      %2366 = vmatprep.subr.mxu0 0.0
      %2367 = vmatpush1.msra.mxu0 %v2345
      %2368 = vmatprep.subr.mxu0 0.0
      %2369 = vmatpush1.msra.mxu0 %v2346
      %2370 = vmatprep.subr.mxu0 0.0
      %2371 = vmatpush1.msra.mxu0 %v2347
      %2372 = vmatprep.subr.mxu0 0.0
      %2373 = vmatpush1.msra.mxu0 0.0
      %2374 = vmatprep.subr.mxu0 0.0
      %2375 = vmatpush1.msra.mxu0 0.0
      %2376 = vmatprep.subr.mxu0 0.0
      %2377 = vmatpush1.msra.mxu0 0.0
      %2378 = vmatprep.subr.mxu0 0.0
      %2379 = vmatpush1.msra.mxu0 0.0
      %2380 = vmatprep.subr.mxu0 0.0
      %2381 = vmatpush1.msra.mxu0 0.0
      %2382 = vmatprep.subr.mxu0 0.0
      %2383 = vmatpush1.msra.mxu0 0.0
      %2384 = vmatprep.subr.mxu0 0.0
      %2385 = vmatpush1.msra.mxu0 0.0
      %2386 = vmatprep.subr.mxu0 0.0
      %2387 = vmatpush1.msra.mxu0 0.0
      %2388 = vmatprep.subr.mxu0 0.0
      %2389 = vmatpush1.msra.mxu0 0.0
      %2390 = vmatprep.subr.mxu0 0.0
      %2391 = vmatpush1.msra.mxu0 0.0
      %2392 = vmatprep.subr.mxu0 0.0
      %2393 = vmatpush1.msra.mxu0 0.0
      %2394 = vmatprep.subr.mxu0 0.0
      %2395 = vmatpush1.msra.mxu0 0.0
      %2396 = vmatprep.subr.mxu0 0.0
      %2397 = vmatpush1.msra.mxu0 0.0
      %2398 = vmatprep.subr.mxu0 0.0
      %2399 = vmatpush1.msra.mxu0 0.0
      %2400 = vmatprep.subr.mxu0 0.0
      %2401 = vmatpush1.msra.mxu0 0.0
      %2402 = vmatprep.subr.mxu0 0.0
      %2403 = vmatpush1.msra.mxu0 0.0
      %2404 = vmatprep.subr.mxu0 0.0
      %2405 = vmatpush1.msra.mxu0 0.0
      %2406 = vmatprep.subr.mxu0 0.0
      %2407 = vmatpush1.msra.mxu0 0.0
      %2408 = vmatprep.subr.mxu0 0.0
      %2409 = vmatpush1.msra.mxu0 0.0
      %2410 = vmatprep.subr.mxu0 0.0
      %2411 = vmatpush1.msra.mxu0 0.0
      %2412 = vmatprep.subr.mxu0 0.0
      %2413 = vmatpush1.msra.mxu0 0.0
      %2414 = vmatprep.subr.mxu0 0.0
      %2415 = vmatpush1.msra.mxu0 0.0
      %2416 = vmatprep.subr.mxu0 0.0
      %2417 = vmatpush1.msra.mxu0 0.0
      %2418 = vmatprep.mubr.f32.mxu0 0.0
      %2419 = vmatmul.mubr.f32.gmra.mrb[0].mxu0 %v2349
      %v2420 = vpop.f32.mrb[0].mxu0
      %v2421 = vadd.f32 0.0, %v2420
      %v2422 = vpop.f32.mrb[0].mxu0
      %2423 = vmatprep.mubr.f32.mxu0 0.0
      %2424 = vmatmul.mubr.f32.gmra.mrb[0].mxu0 %v2352
      %v2425 = vpop.f32.mrb[0].mxu0
      %v2426 = vadd.f32 0.0, %v2425
      %v2427 = vpop.f32.mrb[0].mxu0
      %2428 = vdwg.mxu0
      %v2429 = vadd.f32 %v2335, %v2421
      %v2430 = vadd.f32 %v2336, %v2426
      %v2431 = vld [vmem:[%s1750 + $0x1] sm:$0xff]
      %v2432 = vld [vmem:[%s1750 + $0x9] sm:$0xff]
      %v2433 = vld [vmem:[%s690] sm:$0xff]
      %v2434 = vld [vmem:[%s690 + $0x8] sm:$0xff]
      %v2435 = vld [vmem:[%s690 + $0x10] sm:$0xff]
      %v2436 = vld [vmem:[%s690 + $0x18] sm:$0xff]
      %v2437 = vld [vmem:[%s690 + $0x20] sm:$0xff]
      %v2438 = vld [vmem:[%s690 + $0x28] sm:$0xff]
      %v2439 = vld [vmem:[%s690 + $0x30] sm:$0xff]
      %v2440 = vld [vmem:[%s690 + $0x38] sm:$0xff]
      %v2441 = vld [vmem:[%s690 + $0x40] sm:$0xff]
      %v2443 = vsel %vm225, %v2431, 0
      %v2446 = vsel %vm225, %v2432, 0
      %2448 = vmatprep.subr.mxu0 0.0
      %2449 = vmatpush1.msra.mxu0 %v2433
      %2450 = vmatprep.subr.mxu0 0.0
      %2451 = vmatpush1.msra.mxu0 %v2434
      %2452 = vmatprep.subr.mxu0 0.0
      %2453 = vmatpush1.msra.mxu0 %v2435
      %2454 = vmatprep.subr.mxu0 0.0
      %2455 = vmatpush1.msra.mxu0 %v2436
      %2456 = vmatprep.subr.mxu0 0.0
      %2457 = vmatpush1.msra.mxu0 %v2437
      %2458 = vmatprep.subr.mxu0 0.0
      %2459 = vmatpush1.msra.mxu0 %v2438
      %2460 = vmatprep.subr.mxu0 0.0
      %2461 = vmatpush1.msra.mxu0 %v2439
      %2462 = vmatprep.subr.mxu0 0.0
      %2463 = vmatpush1.msra.mxu0 %v2440
      %2464 = vmatprep.subr.mxu0 0.0
      %2465 = vmatpush1.msra.mxu0 %v2441
      %2466 = vmatprep.subr.mxu0 0.0
      %2467 = vmatpush1.msra.mxu0 0.0
      %2468 = vmatprep.subr.mxu0 0.0
      %2469 = vmatpush1.msra.mxu0 0.0
      %2470 = vmatprep.subr.mxu0 0.0
      %2471 = vmatpush1.msra.mxu0 0.0
      %2472 = vmatprep.subr.mxu0 0.0
      %2473 = vmatpush1.msra.mxu0 0.0
      %2474 = vmatprep.subr.mxu0 0.0
      %2475 = vmatpush1.msra.mxu0 0.0
      %2476 = vmatprep.subr.mxu0 0.0
      %2477 = vmatpush1.msra.mxu0 0.0
      %2478 = vmatprep.subr.mxu0 0.0
      %2479 = vmatpush1.msra.mxu0 0.0
      %2480 = vmatprep.subr.mxu0 0.0
      %2481 = vmatpush1.msra.mxu0 0.0
      %2482 = vmatprep.subr.mxu0 0.0
      %2483 = vmatpush1.msra.mxu0 0.0
      %2484 = vmatprep.subr.mxu0 0.0
      %2485 = vmatpush1.msra.mxu0 0.0
      %2486 = vmatprep.subr.mxu0 0.0
      %2487 = vmatpush1.msra.mxu0 0.0
      %2488 = vmatprep.subr.mxu0 0.0
      %2489 = vmatpush1.msra.mxu0 0.0
      %2490 = vmatprep.subr.mxu0 0.0
      %2491 = vmatpush1.msra.mxu0 0.0
      %2492 = vmatprep.subr.mxu0 0.0
      %2493 = vmatpush1.msra.mxu0 0.0
      %2494 = vmatprep.subr.mxu0 0.0
      %2495 = vmatpush1.msra.mxu0 0.0
      %2496 = vmatprep.subr.mxu0 0.0
      %2497 = vmatpush1.msra.mxu0 0.0
      %2498 = vmatprep.subr.mxu0 0.0
      %2499 = vmatpush1.msra.mxu0 0.0
      %2500 = vmatprep.subr.mxu0 0.0
      %2501 = vmatpush1.msra.mxu0 0.0
      %2502 = vmatprep.subr.mxu0 0.0
      %2503 = vmatpush1.msra.mxu0 0.0
      %2504 = vmatprep.subr.mxu0 0.0
      %2505 = vmatpush1.msra.mxu0 0.0
      %2506 = vmatprep.subr.mxu0 0.0
      %2507 = vmatpush1.msra.mxu0 0.0
      %2508 = vmatprep.subr.mxu0 0.0
      %2509 = vmatpush1.msra.mxu0 0.0
      %2510 = vmatprep.subr.mxu0 0.0
      %2511 = vmatpush1.msra.mxu0 0.0
      %2512 = vmatprep.mubr.f32.mxu0 0.0
      %2513 = vmatmul.mubr.f32.gmra.mrb[0].mxu0 %v2443
      %v2514 = vpop.f32.mrb[0].mxu0
      %v2515 = vadd.f32 0.0, %v2514
      %v2516 = vpop.f32.mrb[0].mxu0
      %2517 = vmatprep.mubr.f32.mxu0 0.0
      %2518 = vmatmul.mubr.f32.gmra.mrb[0].mxu0 %v2446
      %v2519 = vpop.f32.mrb[0].mxu0
      %v2520 = vadd.f32 0.0, %v2519
      %v2521 = vpop.f32.mrb[0].mxu0
      %2522 = vdwg.mxu0
      %v2523 = vadd.f32 %v2429, %v2515
      %v2524 = vadd.f32 %v2430, %v2520
      %v2525 = vld [vmem:[%s1750 + $0x2] sm:$0xff]
      %v2526 = vld [vmem:[%s1750 + $0xa] sm:$0xff]
      %v2527 = vld [vmem:[%s785] sm:$0xff]
      %v2528 = vld [vmem:[%s785 + $0x8] sm:$0xff]
      %v2529 = vld [vmem:[%s785 + $0x10] sm:$0xff]
      %v2530 = vld [vmem:[%s785 + $0x18] sm:$0xff]
      %v2531 = vld [vmem:[%s785 + $0x20] sm:$0xff]
      %v2532 = vld [vmem:[%s785 + $0x28] sm:$0xff]
      %v2533 = vld [vmem:[%s785 + $0x30] sm:$0xff]
      %v2534 = vld [vmem:[%s785 + $0x38] sm:$0xff]
      %v2535 = vld [vmem:[%s785 + $0x40] sm:$0xff]
      %v2537 = vsel %vm225, %v2525, 0
      %v2540 = vsel %vm225, %v2526, 0
      %2542 = vmatprep.subr.mxu0 0.0
      %2543 = vmatpush1.msra.mxu0 %v2527
      %2544 = vmatprep.subr.mxu0 0.0
      %2545 = vmatpush1.msra.mxu0 %v2528
      %2546 = vmatprep.subr.mxu0 0.0
      %2547 = vmatpush1.msra.mxu0 %v2529
      %2548 = vmatprep.subr.mxu0 0.0
      %2549 = vmatpush1.msra.mxu0 %v2530
      %2550 = vmatprep.subr.mxu0 0.0
      %2551 = vmatpush1.msra.mxu0 %v2531
      %2552 = vmatprep.subr.mxu0 0.0
      %2553 = vmatpush1.msra.mxu0 %v2532
      %2554 = vmatprep.subr.mxu0 0.0
      %2555 = vmatpush1.msra.mxu0 %v2533
      %2556 = vmatprep.subr.mxu0 0.0
      %2557 = vmatpush1.msra.mxu0 %v2534
      %2558 = vmatprep.subr.mxu0 0.0
      %2559 = vmatpush1.msra.mxu0 %v2535
      %2560 = vmatprep.subr.mxu0 0.0
      %2561 = vmatpush1.msra.mxu0 0.0
      %2562 = vmatprep.subr.mxu0 0.0
      %2563 = vmatpush1.msra.mxu0 0.0
      %2564 = vmatprep.subr.mxu0 0.0
      %2565 = vmatpush1.msra.mxu0 0.0
      %2566 = vmatprep.subr.mxu0 0.0
      %2567 = vmatpush1.msra.mxu0 0.0
      %2568 = vmatprep.subr.mxu0 0.0
      %2569 = vmatpush1.msra.mxu0 0.0
      %2570 = vmatprep.subr.mxu0 0.0
      %2571 = vmatpush1.msra.mxu0 0.0
      %2572 = vmatprep.subr.mxu0 0.0
      %2573 = vmatpush1.msra.mxu0 0.0
      %2574 = vmatprep.subr.mxu0 0.0
      %2575 = vmatpush1.msra.mxu0 0.0
      %2576 = vmatprep.subr.mxu0 0.0
      %2577 = vmatpush1.msra.mxu0 0.0
      %2578 = vmatprep.subr.mxu0 0.0
      %2579 = vmatpush1.msra.mxu0 0.0
      %2580 = vmatprep.subr.mxu0 0.0
      %2581 = vmatpush1.msra.mxu0 0.0
      %2582 = vmatprep.subr.mxu0 0.0
      %2583 = vmatpush1.msra.mxu0 0.0
      %2584 = vmatprep.subr.mxu0 0.0
      %2585 = vmatpush1.msra.mxu0 0.0
      %2586 = vmatprep.subr.mxu0 0.0
      %2587 = vmatpush1.msra.mxu0 0.0
      %2588 = vmatprep.subr.mxu0 0.0
      %2589 = vmatpush1.msra.mxu0 0.0
      %2590 = vmatprep.subr.mxu0 0.0
      %2591 = vmatpush1.msra.mxu0 0.0
      %2592 = vmatprep.subr.mxu0 0.0
      %2593 = vmatpush1.msra.mxu0 0.0
      %2594 = vmatprep.subr.mxu0 0.0
      %2595 = vmatpush1.msra.mxu0 0.0
      %2596 = vmatprep.subr.mxu0 0.0
      %2597 = vmatpush1.msra.mxu0 0.0
      %2598 = vmatprep.subr.mxu0 0.0
      %2599 = vmatpush1.msra.mxu0 0.0
      %2600 = vmatprep.subr.mxu0 0.0
      %2601 = vmatpush1.msra.mxu0 0.0
      %2602 = vmatprep.subr.mxu0 0.0
      %2603 = vmatpush1.msra.mxu0 0.0
      %2604 = vmatprep.subr.mxu0 0.0
      %2605 = vmatpush1.msra.mxu0 0.0
      %2606 = vmatprep.mubr.f32.mxu0 0.0
      %2607 = vmatmul.mubr.f32.gmra.mrb[0].mxu0 %v2537
      %v2608 = vpop.f32.mrb[0].mxu0
      %v2609 = vadd.f32 0.0, %v2608
      %v2610 = vpop.f32.mrb[0].mxu0
      %2611 = vmatprep.mubr.f32.mxu0 0.0
      %2612 = vmatmul.mubr.f32.gmra.mrb[0].mxu0 %v2540
      %v2613 = vpop.f32.mrb[0].mxu0
      %v2614 = vadd.f32 0.0, %v2613
      %v2615 = vpop.f32.mrb[0].mxu0
      %2616 = vdwg.mxu0
      %v2617 = vadd.f32 %v2523, %v2609
      %v2618 = vadd.f32 %v2524, %v2614
      %s2619 = scalar_lea.vmem [#allocation2], 96
      %v2620 = vld [vmem:[%s2619] sm:$0xff]
      %v2621 = vld [vmem:[%s2619 + $0x8] sm:$0xff]
      %v2622 = vld [vmem:[%s881] sm:$0xff]
      %v2623 = vld [vmem:[%s881 + $0x8] sm:$0xff]
      %v2624 = vld [vmem:[%s881 + $0x10] sm:$0xff]
      %v2625 = vld [vmem:[%s881 + $0x18] sm:$0xff]
      %v2626 = vld [vmem:[%s881 + $0x20] sm:$0xff]
      %v2627 = vld [vmem:[%s881 + $0x28] sm:$0xff]
      %v2628 = vld [vmem:[%s881 + $0x30] sm:$0xff]
      %v2629 = vld [vmem:[%s881 + $0x38] sm:$0xff]
      %v2630 = vld [vmem:[%s881 + $0x40] sm:$0xff]
      %v2632 = vsel %vm225, %v2620, 0
      %v2635 = vsel %vm225, %v2621, 0
      %2637 = vmatprep.subr.mxu0 0.0
      %2638 = vmatpush1.msra.mxu0 %v2622
      %2639 = vmatprep.subr.mxu0 0.0
      %2640 = vmatpush1.msra.mxu0 %v2623
      %2641 = vmatprep.subr.mxu0 0.0
      %2642 = vmatpush1.msra.mxu0 %v2624
      %2643 = vmatprep.subr.mxu0 0.0
      %2644 = vmatpush1.msra.mxu0 %v2625
      %2645 = vmatprep.subr.mxu0 0.0
      %2646 = vmatpush1.msra.mxu0 %v2626
      %2647 = vmatprep.subr.mxu0 0.0
      %2648 = vmatpush1.msra.mxu0 %v2627
      %2649 = vmatprep.subr.mxu0 0.0
      %2650 = vmatpush1.msra.mxu0 %v2628
      %2651 = vmatprep.subr.mxu0 0.0
      %2652 = vmatpush1.msra.mxu0 %v2629
      %2653 = vmatprep.subr.mxu0 0.0
      %2654 = vmatpush1.msra.mxu0 %v2630
      %2655 = vmatprep.subr.mxu0 0.0
      %2656 = vmatpush1.msra.mxu0 0.0
      %2657 = vmatprep.subr.mxu0 0.0
      %2658 = vmatpush1.msra.mxu0 0.0
      %2659 = vmatprep.subr.mxu0 0.0
      %2660 = vmatpush1.msra.mxu0 0.0
      %2661 = vmatprep.subr.mxu0 0.0
      %2662 = vmatpush1.msra.mxu0 0.0
      %2663 = vmatprep.subr.mxu0 0.0
      %2664 = vmatpush1.msra.mxu0 0.0
      %2665 = vmatprep.subr.mxu0 0.0
      %2666 = vmatpush1.msra.mxu0 0.0
      %2667 = vmatprep.subr.mxu0 0.0
      %2668 = vmatpush1.msra.mxu0 0.0
      %2669 = vmatprep.subr.mxu0 0.0
      %2670 = vmatpush1.msra.mxu0 0.0
      %2671 = vmatprep.subr.mxu0 0.0
      %2672 = vmatpush1.msra.mxu0 0.0
      %2673 = vmatprep.subr.mxu0 0.0
      %2674 = vmatpush1.msra.mxu0 0.0
      %2675 = vmatprep.subr.mxu0 0.0
      %2676 = vmatpush1.msra.mxu0 0.0
      %2677 = vmatprep.subr.mxu0 0.0
      %2678 = vmatpush1.msra.mxu0 0.0
      %2679 = vmatprep.subr.mxu0 0.0
      %2680 = vmatpush1.msra.mxu0 0.0
      %2681 = vmatprep.subr.mxu0 0.0
      %2682 = vmatpush1.msra.mxu0 0.0
      %2683 = vmatprep.subr.mxu0 0.0
      %2684 = vmatpush1.msra.mxu0 0.0
      %2685 = vmatprep.subr.mxu0 0.0
      %2686 = vmatpush1.msra.mxu0 0.0
      %2687 = vmatprep.subr.mxu0 0.0
      %2688 = vmatpush1.msra.mxu0 0.0
      %2689 = vmatprep.subr.mxu0 0.0
      %2690 = vmatpush1.msra.mxu0 0.0
      %2691 = vmatprep.subr.mxu0 0.0
      %2692 = vmatpush1.msra.mxu0 0.0
      %2693 = vmatprep.subr.mxu0 0.0
      %2694 = vmatpush1.msra.mxu0 0.0
      %2695 = vmatprep.subr.mxu0 0.0
      %2696 = vmatpush1.msra.mxu0 0.0
      %2697 = vmatprep.subr.mxu0 0.0
      %2698 = vmatpush1.msra.mxu0 0.0
      %2699 = vmatprep.subr.mxu0 0.0
      %2700 = vmatpush1.msra.mxu0 0.0
      %2701 = vmatprep.mubr.f32.mxu0 0.0
      %2702 = vmatmul.mubr.f32.gmra.mrb[0].mxu0 %v2632
      %v2703 = vpop.f32.mrb[0].mxu0
      %v2704 = vadd.f32 0.0, %v2703
      %v2705 = vpop.f32.mrb[0].mxu0
      %2706 = vmatprep.mubr.f32.mxu0 0.0
      %2707 = vmatmul.mubr.f32.gmra.mrb[0].mxu0 %v2635
      %v2708 = vpop.f32.mrb[0].mxu0
      %v2709 = vadd.f32 0.0, %v2708
      %v2710 = vpop.f32.mrb[0].mxu0
      %2711 = vdwg.mxu0
      %v2712 = vadd.f32 %v2617, %v2704
      %v2713 = vadd.f32 %v2618, %v2709
      %v2714 = vld [vmem:[%s2619 + $0x1] sm:$0xff]
      %v2715 = vld [vmem:[%s2619 + $0x9] sm:$0xff]
      %v2716 = vld [vmem:[%s976] sm:$0xff]
      %v2717 = vld [vmem:[%s976 + $0x8] sm:$0xff]
      %v2718 = vld [vmem:[%s976 + $0x10] sm:$0xff]
      %v2719 = vld [vmem:[%s976 + $0x18] sm:$0xff]
      %v2720 = vld [vmem:[%s976 + $0x20] sm:$0xff]
      %v2721 = vld [vmem:[%s976 + $0x28] sm:$0xff]
      %v2722 = vld [vmem:[%s976 + $0x30] sm:$0xff]
      %v2723 = vld [vmem:[%s976 + $0x38] sm:$0xff]
      %v2724 = vld [vmem:[%s976 + $0x40] sm:$0xff]
      %v2726 = vsel %vm225, %v2714, 0
      %v2729 = vsel %vm225, %v2715, 0
      %2731 = vmatprep.subr.mxu0 0.0
      %2732 = vmatpush1.msra.mxu0 %v2716
      %2733 = vmatprep.subr.mxu0 0.0
      %2734 = vmatpush1.msra.mxu0 %v2717
      %2735 = vmatprep.subr.mxu0 0.0
      %2736 = vmatpush1.msra.mxu0 %v2718
      %2737 = vmatprep.subr.mxu0 0.0
      %2738 = vmatpush1.msra.mxu0 %v2719
      %2739 = vmatprep.subr.mxu0 0.0
      %2740 = vmatpush1.msra.mxu0 %v2720
      %2741 = vmatprep.subr.mxu0 0.0
      %2742 = vmatpush1.msra.mxu0 %v2721
      %2743 = vmatprep.subr.mxu0 0.0
      %2744 = vmatpush1.msra.mxu0 %v2722
      %2745 = vmatprep.subr.mxu0 0.0
      %2746 = vmatpush1.msra.mxu0 %v2723
      %2747 = vmatprep.subr.mxu0 0.0
      %2748 = vmatpush1.msra.mxu0 %v2724
      %2749 = vmatprep.subr.mxu0 0.0
      %2750 = vmatpush1.msra.mxu0 0.0
      %2751 = vmatprep.subr.mxu0 0.0
      %2752 = vmatpush1.msra.mxu0 0.0
      %2753 = vmatprep.subr.mxu0 0.0
      %2754 = vmatpush1.msra.mxu0 0.0
      %2755 = vmatprep.subr.mxu0 0.0
      %2756 = vmatpush1.msra.mxu0 0.0
      %2757 = vmatprep.subr.mxu0 0.0
      %2758 = vmatpush1.msra.mxu0 0.0
      %2759 = vmatprep.subr.mxu0 0.0
      %2760 = vmatpush1.msra.mxu0 0.0
      %2761 = vmatprep.subr.mxu0 0.0
      %2762 = vmatpush1.msra.mxu0 0.0
      %2763 = vmatprep.subr.mxu0 0.0
      %2764 = vmatpush1.msra.mxu0 0.0
      %2765 = vmatprep.subr.mxu0 0.0
      %2766 = vmatpush1.msra.mxu0 0.0
      %2767 = vmatprep.subr.mxu0 0.0
      %2768 = vmatpush1.msra.mxu0 0.0
      %2769 = vmatprep.subr.mxu0 0.0
      %2770 = vmatpush1.msra.mxu0 0.0
      %2771 = vmatprep.subr.mxu0 0.0
      %2772 = vmatpush1.msra.mxu0 0.0
      %2773 = vmatprep.subr.mxu0 0.0
      %2774 = vmatpush1.msra.mxu0 0.0
      %2775 = vmatprep.subr.mxu0 0.0
      %2776 = vmatpush1.msra.mxu0 0.0
      %2777 = vmatprep.subr.mxu0 0.0
      %2778 = vmatpush1.msra.mxu0 0.0
      %2779 = vmatprep.subr.mxu0 0.0
      %2780 = vmatpush1.msra.mxu0 0.0
      %2781 = vmatprep.subr.mxu0 0.0
      %2782 = vmatpush1.msra.mxu0 0.0
      %2783 = vmatprep.subr.mxu0 0.0
      %2784 = vmatpush1.msra.mxu0 0.0
      %2785 = vmatprep.subr.mxu0 0.0
      %2786 = vmatpush1.msra.mxu0 0.0
      %2787 = vmatprep.subr.mxu0 0.0
      %2788 = vmatpush1.msra.mxu0 0.0
      %2789 = vmatprep.subr.mxu0 0.0
      %2790 = vmatpush1.msra.mxu0 0.0
      %2791 = vmatprep.subr.mxu0 0.0
      %2792 = vmatpush1.msra.mxu0 0.0
      %2793 = vmatprep.subr.mxu0 0.0
      %2794 = vmatpush1.msra.mxu0 0.0
      %2795 = vmatprep.mubr.f32.mxu0 0.0
      %2796 = vmatmul.mubr.f32.gmra.mrb[0].mxu0 %v2726
      %v2797 = vpop.f32.mrb[0].mxu0
      %v2798 = vadd.f32 0.0, %v2797
      %v2799 = vpop.f32.mrb[0].mxu0
      %2800 = vmatprep.mubr.f32.mxu0 0.0
      %2801 = vmatmul.mubr.f32.gmra.mrb[0].mxu0 %v2729
      %v2802 = vpop.f32.mrb[0].mxu0
      %v2803 = vadd.f32 0.0, %v2802
      %v2804 = vpop.f32.mrb[0].mxu0
      %2805 = vdwg.mxu0
      %v2806 = vadd.f32 %v2712, %v2798
      %v2807 = vadd.f32 %v2713, %v2803
      %v2808 = vld [vmem:[%s2619 + $0x2] sm:$0xff]
      %v2809 = vld [vmem:[%s2619 + $0xa] sm:$0xff]
      %v2810 = vld [vmem:[%s1071] sm:$0xff]
      %v2811 = vld [vmem:[%s1071 + $0x8] sm:$0xff]
      %v2812 = vld [vmem:[%s1071 + $0x10] sm:$0xff]
      %v2813 = vld [vmem:[%s1071 + $0x18] sm:$0xff]
      %v2814 = vld [vmem:[%s1071 + $0x20] sm:$0xff]
      %v2815 = vld [vmem:[%s1071 + $0x28] sm:$0xff]
      %v2816 = vld [vmem:[%s1071 + $0x30] sm:$0xff]
      %v2817 = vld [vmem:[%s1071 + $0x38] sm:$0xff]
      %v2818 = vld [vmem:[%s1071 + $0x40] sm:$0xff]
      %v2820 = vsel %vm225, %v2808, 0
      %v2823 = vsel %vm225, %v2809, 0
      %2825 = vmatprep.subr.mxu0 0.0
      %2826 = vmatpush1.msra.mxu0 %v2810
      %2827 = vmatprep.subr.mxu0 0.0
      %2828 = vmatpush1.msra.mxu0 %v2811
      %2829 = vmatprep.subr.mxu0 0.0
      %2830 = vmatpush1.msra.mxu0 %v2812
      %2831 = vmatprep.subr.mxu0 0.0
      %2832 = vmatpush1.msra.mxu0 %v2813
      %2833 = vmatprep.subr.mxu0 0.0
      %2834 = vmatpush1.msra.mxu0 %v2814
      %2835 = vmatprep.subr.mxu0 0.0
      %2836 = vmatpush1.msra.mxu0 %v2815
      %2837 = vmatprep.subr.mxu0 0.0
      %2838 = vmatpush1.msra.mxu0 %v2816
      %2839 = vmatprep.subr.mxu0 0.0
      %2840 = vmatpush1.msra.mxu0 %v2817
      %2841 = vmatprep.subr.mxu0 0.0
      %2842 = vmatpush1.msra.mxu0 %v2818
      %2843 = vmatprep.subr.mxu0 0.0
      %2844 = vmatpush1.msra.mxu0 0.0
      %2845 = vmatprep.subr.mxu0 0.0
      %2846 = vmatpush1.msra.mxu0 0.0
      %2847 = vmatprep.subr.mxu0 0.0
      %2848 = vmatpush1.msra.mxu0 0.0
      %2849 = vmatprep.subr.mxu0 0.0
      %2850 = vmatpush1.msra.mxu0 0.0
      %2851 = vmatprep.subr.mxu0 0.0
      %2852 = vmatpush1.msra.mxu0 0.0
      %2853 = vmatprep.subr.mxu0 0.0
      %2854 = vmatpush1.msra.mxu0 0.0
      %2855 = vmatprep.subr.mxu0 0.0
      %2856 = vmatpush1.msra.mxu0 0.0
      %2857 = vmatprep.subr.mxu0 0.0
      %2858 = vmatpush1.msra.mxu0 0.0
      %2859 = vmatprep.subr.mxu0 0.0
      %2860 = vmatpush1.msra.mxu0 0.0
      %2861 = vmatprep.subr.mxu0 0.0
      %2862 = vmatpush1.msra.mxu0 0.0
      %2863 = vmatprep.subr.mxu0 0.0
      %2864 = vmatpush1.msra.mxu0 0.0
      %2865 = vmatprep.subr.mxu0 0.0
      %2866 = vmatpush1.msra.mxu0 0.0
      %2867 = vmatprep.subr.mxu0 0.0
      %2868 = vmatpush1.msra.mxu0 0.0
      %2869 = vmatprep.subr.mxu0 0.0
      %2870 = vmatpush1.msra.mxu0 0.0
      %2871 = vmatprep.subr.mxu0 0.0
      %2872 = vmatpush1.msra.mxu0 0.0
      %2873 = vmatprep.subr.mxu0 0.0
      %2874 = vmatpush1.msra.mxu0 0.0
      %2875 = vmatprep.subr.mxu0 0.0
      %2876 = vmatpush1.msra.mxu0 0.0
      %2877 = vmatprep.subr.mxu0 0.0
      %2878 = vmatpush1.msra.mxu0 0.0
      %2879 = vmatprep.subr.mxu0 0.0
      %2880 = vmatpush1.msra.mxu0 0.0
      %2881 = vmatprep.subr.mxu0 0.0
      %2882 = vmatpush1.msra.mxu0 0.0
      %2883 = vmatprep.subr.mxu0 0.0
      %2884 = vmatpush1.msra.mxu0 0.0
      %2885 = vmatprep.subr.mxu0 0.0
      %2886 = vmatpush1.msra.mxu0 0.0
      %2887 = vmatprep.subr.mxu0 0.0
      %2888 = vmatpush1.msra.mxu0 0.0
      %2889 = vmatprep.mubr.f32.mxu0 0.0
      %2890 = vmatmul.mubr.f32.gmra.mrb[0].mxu0 %v2820
      %v2891 = vpop.f32.mrb[0].mxu0
      %v2892 = vadd.f32 0.0, %v2891
      %v2893 = vpop.f32.mrb[0].mxu0
      %2894 = vmatprep.mubr.f32.mxu0 0.0
      %2895 = vmatmul.mubr.f32.gmra.mrb[0].mxu0 %v2823
      %v2896 = vpop.f32.mrb[0].mxu0
      %v2897 = vadd.f32 0.0, %v2896
      %v2898 = vpop.f32.mrb[0].mxu0
      %2899 = vdwg.mxu0
      %v2900 = vadd.f32 %v2806, %v2892
      %v2901 = vadd.f32 %v2807, %v2897
      %v2902 = vld [vmem:[%s2] sm:$0x1]
      %v2904 = vlaneseq
      %v2905 = vshrl.u32 %v2904, 7
      %v2906 = vsub.s32 0, %v2905
      %v2907 = vrot.slane %v2902, %v2906
      %v2909 = vadd.f32 %v2900, %v2907
      %v2910 = vadd.f32 %v2901, %v2907
      %vm2911 = vcmp.gt.f32.partialorder %v2909, 0.0
      %vm2912 = vcmp.gt.f32.partialorder %v2910, 0.0
      %v2913 = vmul.f32 %v2909, 0.04
      %v2914 = vmul.f32 %v2910, 0.04
      %v2915 = vsel %vm2911, %v2909, %v2913
      %v2916 = vsel %vm2912, %v2910, %v2914
      %2919 = vrot.lane.b32.xlu0 %v2915, 4
      %v2920 = vpop.permute.xlu0 %2919
      %2921 = vrot.lane.b32.xlu0 %v2916, 4
      %v2922 = vpop.permute.xlu0 %2921
      %s2925 = scalar_lea.vmem [#allocation3], 72
      %2926 = vst.msk [vmem:[%s2925 + $0x1] sm:$0xff] %vm304, %v2920
      %2927 = vst.msk [vmem:[%s2925 + $0x9] sm:$0xff] %vm304, %v2922
      %v2928 = vld [vmem:[%s1750] sm:$0xff]
      %v2929 = vld [vmem:[%s1750 + $0x8] sm:$0xff]
      %v2930 = vld [vmem:[%s1] sm:$0xff]
      %v2931 = vld [vmem:[%s1 + $0x8] sm:$0xff]
      %v2932 = vld [vmem:[%s1 + $0x10] sm:$0xff]
      %v2933 = vld [vmem:[%s1 + $0x18] sm:$0xff]
      %v2934 = vld [vmem:[%s1 + $0x20] sm:$0xff]
      %v2935 = vld [vmem:[%s1 + $0x28] sm:$0xff]
      %v2936 = vld [vmem:[%s1 + $0x30] sm:$0xff]
      %v2937 = vld [vmem:[%s1 + $0x38] sm:$0xff]
      %v2938 = vld [vmem:[%s1 + $0x40] sm:$0xff]
      %v2939 = vld [vmem:[%s1750 + $0x1] sm:$0xff]
      %v2940 = vld [vmem:[%s1750 + $0x9] sm:$0xff]
      %v2941 = vld [vmem:[%s326] sm:$0xff]
      %v2942 = vld [vmem:[%s326 + $0x8] sm:$0xff]
      %v2943 = vld [vmem:[%s326 + $0x10] sm:$0xff]
      %v2944 = vld [vmem:[%s326 + $0x18] sm:$0xff]
      %v2945 = vld [vmem:[%s326 + $0x20] sm:$0xff]
      %v2946 = vld [vmem:[%s326 + $0x28] sm:$0xff]
      %v2947 = vld [vmem:[%s326 + $0x30] sm:$0xff]
      %v2948 = vld [vmem:[%s326 + $0x38] sm:$0xff]
      %v2949 = vld [vmem:[%s326 + $0x40] sm:$0xff]
      %v2951 = vsel %vm225, %v2939, 0
      %v2954 = vsel %vm225, %v2940, 0
      %2956 = vmatprep.subr.mxu0 0.0
      %2957 = vmatpush1.msra.mxu0 %v2941
      %2958 = vmatprep.subr.mxu0 0.0
      %2959 = vmatpush1.msra.mxu0 %v2942
      %2960 = vmatprep.subr.mxu0 0.0
      %2961 = vmatpush1.msra.mxu0 %v2943
      %2962 = vmatprep.subr.mxu0 0.0
      %2963 = vmatpush1.msra.mxu0 %v2944
      %2964 = vmatprep.subr.mxu0 0.0
      %2965 = vmatpush1.msra.mxu0 %v2945
      %2966 = vmatprep.subr.mxu0 0.0
      %2967 = vmatpush1.msra.mxu0 %v2946
      %2968 = vmatprep.subr.mxu0 0.0
      %2969 = vmatpush1.msra.mxu0 %v2947
      %2970 = vmatprep.subr.mxu0 0.0
      %2971 = vmatpush1.msra.mxu0 %v2948
      %2972 = vmatprep.subr.mxu0 0.0
      %2973 = vmatpush1.msra.mxu0 %v2949
      %2974 = vmatprep.subr.mxu0 0.0
      %2975 = vmatpush1.msra.mxu0 0.0
      %2976 = vmatprep.subr.mxu0 0.0
      %2977 = vmatpush1.msra.mxu0 0.0
      %2978 = vmatprep.subr.mxu0 0.0
      %2979 = vmatpush1.msra.mxu0 0.0
      %2980 = vmatprep.subr.mxu0 0.0
      %2981 = vmatpush1.msra.mxu0 0.0
      %2982 = vmatprep.subr.mxu0 0.0
      %2983 = vmatpush1.msra.mxu0 0.0
      %2984 = vmatprep.subr.mxu0 0.0
      %2985 = vmatpush1.msra.mxu0 0.0
      %2986 = vmatprep.subr.mxu0 0.0
      %2987 = vmatpush1.msra.mxu0 0.0
      %2988 = vmatprep.subr.mxu0 0.0
      %2989 = vmatpush1.msra.mxu0 0.0
      %2990 = vmatprep.subr.mxu0 0.0
      %2991 = vmatpush1.msra.mxu0 0.0
      %2992 = vmatprep.subr.mxu0 0.0
      %2993 = vmatpush1.msra.mxu0 0.0
      %2994 = vmatprep.subr.mxu0 0.0
      %2995 = vmatpush1.msra.mxu0 0.0
      %2996 = vmatprep.subr.mxu0 0.0
      %2997 = vmatpush1.msra.mxu0 0.0
      %2998 = vmatprep.subr.mxu0 0.0
      %2999 = vmatpush1.msra.mxu0 0.0
      %3000 = vmatprep.subr.mxu0 0.0
      %3001 = vmatpush1.msra.mxu0 0.0
      %3002 = vmatprep.subr.mxu0 0.0
      %3003 = vmatpush1.msra.mxu0 0.0
      %3004 = vmatprep.subr.mxu0 0.0
      %3005 = vmatpush1.msra.mxu0 0.0
      %3006 = vmatprep.subr.mxu0 0.0
      %3007 = vmatpush1.msra.mxu0 0.0
      %3008 = vmatprep.subr.mxu0 0.0
      %3009 = vmatpush1.msra.mxu0 0.0
      %3010 = vmatprep.subr.mxu0 0.0
      %3011 = vmatpush1.msra.mxu0 0.0
      %3012 = vmatprep.subr.mxu0 0.0
      %3013 = vmatpush1.msra.mxu0 0.0
      %3014 = vmatprep.subr.mxu0 0.0
      %3015 = vmatpush1.msra.mxu0 0.0
      %3016 = vmatprep.subr.mxu0 0.0
      %3017 = vmatpush1.msra.mxu0 0.0
      %3018 = vmatprep.subr.mxu0 0.0
      %3019 = vmatpush1.msra.mxu0 0.0
      %3020 = vmatprep.mubr.f32.mxu0 0.0
      %3021 = vmatmul.mubr.f32.gmra.mrb[0].mxu0 %v2951
      %v3022 = vpop.f32.mrb[0].mxu0
      %v3023 = vadd.f32 0.0, %v3022
      %v3024 = vpop.f32.mrb[0].mxu0
      %3025 = vmatprep.mubr.f32.mxu0 0.0
      %3026 = vmatmul.mubr.f32.gmra.mrb[0].mxu0 %v2954
      %v3027 = vpop.f32.mrb[0].mxu0
      %v3028 = vadd.f32 0.0, %v3027
      %v3029 = vpop.f32.mrb[0].mxu0
      %3030 = vdwg.mxu0
      %v3032 = vsel %vm225, %v2928, 0
      %v3035 = vsel %vm225, %v2929, 0
      %3037 = vmatprep.subr.mxu0 0.0
      %3038 = vmatpush1.msra.mxu0 %v2930
      %3039 = vmatprep.subr.mxu0 0.0
      %3040 = vmatpush1.msra.mxu0 %v2931
      %3041 = vmatprep.subr.mxu0 0.0
      %3042 = vmatpush1.msra.mxu0 %v2932
      %3043 = vmatprep.subr.mxu0 0.0
      %3044 = vmatpush1.msra.mxu0 %v2933
      %3045 = vmatprep.subr.mxu0 0.0
      %3046 = vmatpush1.msra.mxu0 %v2934
      %3047 = vmatprep.subr.mxu0 0.0
      %3048 = vmatpush1.msra.mxu0 %v2935
      %3049 = vmatprep.subr.mxu0 0.0
      %3050 = vmatpush1.msra.mxu0 %v2936
      %3051 = vmatprep.subr.mxu0 0.0
      %3052 = vmatpush1.msra.mxu0 %v2937
      %3053 = vmatprep.subr.mxu0 0.0
      %3054 = vmatpush1.msra.mxu0 %v2938
      %3055 = vmatprep.subr.mxu0 0.0
      %3056 = vmatpush1.msra.mxu0 0.0
      %3057 = vmatprep.subr.mxu0 0.0
      %3058 = vmatpush1.msra.mxu0 0.0
      %3059 = vmatprep.subr.mxu0 0.0
      %3060 = vmatpush1.msra.mxu0 0.0
      %3061 = vmatprep.subr.mxu0 0.0
      %3062 = vmatpush1.msra.mxu0 0.0
      %3063 = vmatprep.subr.mxu0 0.0
      %3064 = vmatpush1.msra.mxu0 0.0
      %3065 = vmatprep.subr.mxu0 0.0
      %3066 = vmatpush1.msra.mxu0 0.0
      %3067 = vmatprep.subr.mxu0 0.0
      %3068 = vmatpush1.msra.mxu0 0.0
      %3069 = vmatprep.subr.mxu0 0.0
      %3070 = vmatpush1.msra.mxu0 0.0
      %3071 = vmatprep.subr.mxu0 0.0
      %3072 = vmatpush1.msra.mxu0 0.0
      %3073 = vmatprep.subr.mxu0 0.0
      %3074 = vmatpush1.msra.mxu0 0.0
      %3075 = vmatprep.subr.mxu0 0.0
      %3076 = vmatpush1.msra.mxu0 0.0
      %3077 = vmatprep.subr.mxu0 0.0
      %3078 = vmatpush1.msra.mxu0 0.0
      %3079 = vmatprep.subr.mxu0 0.0
      %3080 = vmatpush1.msra.mxu0 0.0
      %3081 = vmatprep.subr.mxu0 0.0
      %3082 = vmatpush1.msra.mxu0 0.0
      %3083 = vmatprep.subr.mxu0 0.0
      %3084 = vmatpush1.msra.mxu0 0.0
      %3085 = vmatprep.subr.mxu0 0.0
      %3086 = vmatpush1.msra.mxu0 0.0
      %3087 = vmatprep.subr.mxu0 0.0
      %3088 = vmatpush1.msra.mxu0 0.0
      %3089 = vmatprep.subr.mxu0 0.0
      %3090 = vmatpush1.msra.mxu0 0.0
      %3091 = vmatprep.subr.mxu0 0.0
      %3092 = vmatpush1.msra.mxu0 0.0
      %3093 = vmatprep.subr.mxu0 0.0
      %3094 = vmatpush1.msra.mxu0 0.0
      %3095 = vmatprep.subr.mxu0 0.0
      %3096 = vmatpush1.msra.mxu0 0.0
      %3097 = vmatprep.subr.mxu0 0.0
      %3098 = vmatpush1.msra.mxu0 0.0
      %3099 = vmatprep.subr.mxu0 0.0
      %3100 = vmatpush1.msra.mxu0 0.0
      %3101 = vmatprep.mubr.f32.mxu0 0.0
      %3102 = vmatmul.mubr.f32.gmra.mrb[0].mxu0 %v3032
      %v3103 = vpop.f32.mrb[0].mxu0
      %v3104 = vadd.f32 %v3023, %v3103
      %v3105 = vpop.f32.mrb[0].mxu0
      %3106 = vmatprep.mubr.f32.mxu0 0.0
      %3107 = vmatmul.mubr.f32.gmra.mrb[0].mxu0 %v3035
      %v3108 = vpop.f32.mrb[0].mxu0
      %v3109 = vadd.f32 %v3028, %v3108
      %v3110 = vpop.f32.mrb[0].mxu0
      %3111 = vdwg.mxu0
      %v3112 = vld [vmem:[%s1750 + $0x2] sm:$0xff]
      %v3113 = vld [vmem:[%s1750 + $0xa] sm:$0xff]
      %v3114 = vld [vmem:[%s500] sm:$0xff]
      %v3115 = vld [vmem:[%s500 + $0x8] sm:$0xff]
      %v3116 = vld [vmem:[%s500 + $0x10] sm:$0xff]
      %v3117 = vld [vmem:[%s500 + $0x18] sm:$0xff]
      %v3118 = vld [vmem:[%s500 + $0x20] sm:$0xff]
      %v3119 = vld [vmem:[%s500 + $0x28] sm:$0xff]
      %v3120 = vld [vmem:[%s500 + $0x30] sm:$0xff]
      %v3121 = vld [vmem:[%s500 + $0x38] sm:$0xff]
      %v3122 = vld [vmem:[%s500 + $0x40] sm:$0xff]
      %v3124 = vsel %vm225, %v3112, 0
      %v3127 = vsel %vm225, %v3113, 0
      %3129 = vmatprep.subr.mxu0 0.0
      %3130 = vmatpush1.msra.mxu0 %v3114
      %3131 = vmatprep.subr.mxu0 0.0
      %3132 = vmatpush1.msra.mxu0 %v3115
      %3133 = vmatprep.subr.mxu0 0.0
      %3134 = vmatpush1.msra.mxu0 %v3116
      %3135 = vmatprep.subr.mxu0 0.0
      %3136 = vmatpush1.msra.mxu0 %v3117
      %3137 = vmatprep.subr.mxu0 0.0
      %3138 = vmatpush1.msra.mxu0 %v3118
      %3139 = vmatprep.subr.mxu0 0.0
      %3140 = vmatpush1.msra.mxu0 %v3119
      %3141 = vmatprep.subr.mxu0 0.0
      %3142 = vmatpush1.msra.mxu0 %v3120
      %3143 = vmatprep.subr.mxu0 0.0
      %3144 = vmatpush1.msra.mxu0 %v3121
      %3145 = vmatprep.subr.mxu0 0.0
      %3146 = vmatpush1.msra.mxu0 %v3122
      %3147 = vmatprep.subr.mxu0 0.0
      %3148 = vmatpush1.msra.mxu0 0.0
      %3149 = vmatprep.subr.mxu0 0.0
      %3150 = vmatpush1.msra.mxu0 0.0
      %3151 = vmatprep.subr.mxu0 0.0
      %3152 = vmatpush1.msra.mxu0 0.0
      %3153 = vmatprep.subr.mxu0 0.0
      %3154 = vmatpush1.msra.mxu0 0.0
      %3155 = vmatprep.subr.mxu0 0.0
      %3156 = vmatpush1.msra.mxu0 0.0
      %3157 = vmatprep.subr.mxu0 0.0
      %3158 = vmatpush1.msra.mxu0 0.0
      %3159 = vmatprep.subr.mxu0 0.0
      %3160 = vmatpush1.msra.mxu0 0.0
      %3161 = vmatprep.subr.mxu0 0.0
      %3162 = vmatpush1.msra.mxu0 0.0
      %3163 = vmatprep.subr.mxu0 0.0
      %3164 = vmatpush1.msra.mxu0 0.0
      %3165 = vmatprep.subr.mxu0 0.0
      %3166 = vmatpush1.msra.mxu0 0.0
      %3167 = vmatprep.subr.mxu0 0.0
      %3168 = vmatpush1.msra.mxu0 0.0
      %3169 = vmatprep.subr.mxu0 0.0
      %3170 = vmatpush1.msra.mxu0 0.0
      %3171 = vmatprep.subr.mxu0 0.0
      %3172 = vmatpush1.msra.mxu0 0.0
      %3173 = vmatprep.subr.mxu0 0.0
      %3174 = vmatpush1.msra.mxu0 0.0
      %3175 = vmatprep.subr.mxu0 0.0
      %3176 = vmatpush1.msra.mxu0 0.0
      %3177 = vmatprep.subr.mxu0 0.0
      %3178 = vmatpush1.msra.mxu0 0.0
      %3179 = vmatprep.subr.mxu0 0.0
      %3180 = vmatpush1.msra.mxu0 0.0
      %3181 = vmatprep.subr.mxu0 0.0
      %3182 = vmatpush1.msra.mxu0 0.0
      %3183 = vmatprep.subr.mxu0 0.0
      %3184 = vmatpush1.msra.mxu0 0.0
      %3185 = vmatprep.subr.mxu0 0.0
      %3186 = vmatpush1.msra.mxu0 0.0
      %3187 = vmatprep.subr.mxu0 0.0
      %3188 = vmatpush1.msra.mxu0 0.0
      %3189 = vmatprep.subr.mxu0 0.0
      %3190 = vmatpush1.msra.mxu0 0.0
      %3191 = vmatprep.subr.mxu0 0.0
      %3192 = vmatpush1.msra.mxu0 0.0
      %3193 = vmatprep.mubr.f32.mxu0 0.0
      %3194 = vmatmul.mubr.f32.gmra.mrb[0].mxu0 %v3124
      %v3195 = vpop.f32.mrb[0].mxu0
      %v3196 = vadd.f32 0.0, %v3195
      %v3197 = vpop.f32.mrb[0].mxu0
      %3198 = vmatprep.mubr.f32.mxu0 0.0
      %3199 = vmatmul.mubr.f32.gmra.mrb[0].mxu0 %v3127
      %v3200 = vpop.f32.mrb[0].mxu0
      %v3201 = vadd.f32 0.0, %v3200
      %v3202 = vpop.f32.mrb[0].mxu0
      %3203 = vdwg.mxu0
      %v3204 = vadd.f32 %v3104, %v3196
      %v3205 = vadd.f32 %v3109, %v3201
      %v3206 = vld [vmem:[%s2619] sm:$0xff]
      %v3207 = vld [vmem:[%s2619 + $0x8] sm:$0xff]
      %v3208 = vld [vmem:[%s595] sm:$0xff]
      %v3209 = vld [vmem:[%s595 + $0x8] sm:$0xff]
      %v3210 = vld [vmem:[%s595 + $0x10] sm:$0xff]
      %v3211 = vld [vmem:[%s595 + $0x18] sm:$0xff]
      %v3212 = vld [vmem:[%s595 + $0x20] sm:$0xff]
      %v3213 = vld [vmem:[%s595 + $0x28] sm:$0xff]
      %v3214 = vld [vmem:[%s595 + $0x30] sm:$0xff]
      %v3215 = vld [vmem:[%s595 + $0x38] sm:$0xff]
      %v3216 = vld [vmem:[%s595 + $0x40] sm:$0xff]
      %v3218 = vsel %vm225, %v3206, 0
      %v3221 = vsel %vm225, %v3207, 0
      %3223 = vmatprep.subr.mxu0 0.0
      %3224 = vmatpush1.msra.mxu0 %v3208
      %3225 = vmatprep.subr.mxu0 0.0
      %3226 = vmatpush1.msra.mxu0 %v3209
      %3227 = vmatprep.subr.mxu0 0.0
      %3228 = vmatpush1.msra.mxu0 %v3210
      %3229 = vmatprep.subr.mxu0 0.0
      %3230 = vmatpush1.msra.mxu0 %v3211
      %3231 = vmatprep.subr.mxu0 0.0
      %3232 = vmatpush1.msra.mxu0 %v3212
      %3233 = vmatprep.subr.mxu0 0.0
      %3234 = vmatpush1.msra.mxu0 %v3213
      %3235 = vmatprep.subr.mxu0 0.0
      %3236 = vmatpush1.msra.mxu0 %v3214
      %3237 = vmatprep.subr.mxu0 0.0
      %3238 = vmatpush1.msra.mxu0 %v3215
      %3239 = vmatprep.subr.mxu0 0.0
      %3240 = vmatpush1.msra.mxu0 %v3216
      %3241 = vmatprep.subr.mxu0 0.0
      %3242 = vmatpush1.msra.mxu0 0.0
      %3243 = vmatprep.subr.mxu0 0.0
      %3244 = vmatpush1.msra.mxu0 0.0
      %3245 = vmatprep.subr.mxu0 0.0
      %3246 = vmatpush1.msra.mxu0 0.0
      %3247 = vmatprep.subr.mxu0 0.0
      %3248 = vmatpush1.msra.mxu0 0.0
      %3249 = vmatprep.subr.mxu0 0.0
      %3250 = vmatpush1.msra.mxu0 0.0
      %3251 = vmatprep.subr.mxu0 0.0
      %3252 = vmatpush1.msra.mxu0 0.0
      %3253 = vmatprep.subr.mxu0 0.0
      %3254 = vmatpush1.msra.mxu0 0.0
      %3255 = vmatprep.subr.mxu0 0.0
      %3256 = vmatpush1.msra.mxu0 0.0
      %3257 = vmatprep.subr.mxu0 0.0
      %3258 = vmatpush1.msra.mxu0 0.0
      %3259 = vmatprep.subr.mxu0 0.0
      %3260 = vmatpush1.msra.mxu0 0.0
      %3261 = vmatprep.subr.mxu0 0.0
      %3262 = vmatpush1.msra.mxu0 0.0
      %3263 = vmatprep.subr.mxu0 0.0
      %3264 = vmatpush1.msra.mxu0 0.0
      %3265 = vmatprep.subr.mxu0 0.0
      %3266 = vmatpush1.msra.mxu0 0.0
      %3267 = vmatprep.subr.mxu0 0.0
      %3268 = vmatpush1.msra.mxu0 0.0
      %3269 = vmatprep.subr.mxu0 0.0
      %3270 = vmatpush1.msra.mxu0 0.0
      %3271 = vmatprep.subr.mxu0 0.0
      %3272 = vmatpush1.msra.mxu0 0.0
      %3273 = vmatprep.subr.mxu0 0.0
      %3274 = vmatpush1.msra.mxu0 0.0
      %3275 = vmatprep.subr.mxu0 0.0
      %3276 = vmatpush1.msra.mxu0 0.0
      %3277 = vmatprep.subr.mxu0 0.0
      %3278 = vmatpush1.msra.mxu0 0.0
      %3279 = vmatprep.subr.mxu0 0.0
      %3280 = vmatpush1.msra.mxu0 0.0
      %3281 = vmatprep.subr.mxu0 0.0
      %3282 = vmatpush1.msra.mxu0 0.0
      %3283 = vmatprep.subr.mxu0 0.0
      %3284 = vmatpush1.msra.mxu0 0.0
      %3285 = vmatprep.subr.mxu0 0.0
      %3286 = vmatpush1.msra.mxu0 0.0
      %3287 = vmatprep.mubr.f32.mxu0 0.0
      %3288 = vmatmul.mubr.f32.gmra.mrb[0].mxu0 %v3218
      %v3289 = vpop.f32.mrb[0].mxu0
      %v3290 = vadd.f32 0.0, %v3289
      %v3291 = vpop.f32.mrb[0].mxu0
      %3292 = vmatprep.mubr.f32.mxu0 0.0
      %3293 = vmatmul.mubr.f32.gmra.mrb[0].mxu0 %v3221
      %v3294 = vpop.f32.mrb[0].mxu0
      %v3295 = vadd.f32 0.0, %v3294
      %v3296 = vpop.f32.mrb[0].mxu0
      %3297 = vdwg.mxu0
      %v3298 = vadd.f32 %v3204, %v3290
      %v3299 = vadd.f32 %v3205, %v3295
      %v3300 = vld [vmem:[%s2619 + $0x1] sm:$0xff]
      %v3301 = vld [vmem:[%s2619 + $0x9] sm:$0xff]
      %v3302 = vld [vmem:[%s690] sm:$0xff]
      %v3303 = vld [vmem:[%s690 + $0x8] sm:$0xff]
      %v3304 = vld [vmem:[%s690 + $0x10] sm:$0xff]
      %v3305 = vld [vmem:[%s690 + $0x18] sm:$0xff]
      %v3306 = vld [vmem:[%s690 + $0x20] sm:$0xff]
      %v3307 = vld [vmem:[%s690 + $0x28] sm:$0xff]
      %v3308 = vld [vmem:[%s690 + $0x30] sm:$0xff]
      %v3309 = vld [vmem:[%s690 + $0x38] sm:$0xff]
      %v3310 = vld [vmem:[%s690 + $0x40] sm:$0xff]
      %v3312 = vsel %vm225, %v3300, 0
      %v3315 = vsel %vm225, %v3301, 0
      %3317 = vmatprep.subr.mxu0 0.0
      %3318 = vmatpush1.msra.mxu0 %v3302
      %3319 = vmatprep.subr.mxu0 0.0
      %3320 = vmatpush1.msra.mxu0 %v3303
      %3321 = vmatprep.subr.mxu0 0.0
      %3322 = vmatpush1.msra.mxu0 %v3304
      %3323 = vmatprep.subr.mxu0 0.0
      %3324 = vmatpush1.msra.mxu0 %v3305
      %3325 = vmatprep.subr.mxu0 0.0
      %3326 = vmatpush1.msra.mxu0 %v3306
      %3327 = vmatprep.subr.mxu0 0.0
      %3328 = vmatpush1.msra.mxu0 %v3307
      %3329 = vmatprep.subr.mxu0 0.0
      %3330 = vmatpush1.msra.mxu0 %v3308
      %3331 = vmatprep.subr.mxu0 0.0
      %3332 = vmatpush1.msra.mxu0 %v3309
      %3333 = vmatprep.subr.mxu0 0.0
      %3334 = vmatpush1.msra.mxu0 %v3310
      %3335 = vmatprep.subr.mxu0 0.0
      %3336 = vmatpush1.msra.mxu0 0.0
      %3337 = vmatprep.subr.mxu0 0.0
      %3338 = vmatpush1.msra.mxu0 0.0
      %3339 = vmatprep.subr.mxu0 0.0
      %3340 = vmatpush1.msra.mxu0 0.0
      %3341 = vmatprep.subr.mxu0 0.0
      %3342 = vmatpush1.msra.mxu0 0.0
      %3343 = vmatprep.subr.mxu0 0.0
      %3344 = vmatpush1.msra.mxu0 0.0
      %3345 = vmatprep.subr.mxu0 0.0
      %3346 = vmatpush1.msra.mxu0 0.0
      %3347 = vmatprep.subr.mxu0 0.0
      %3348 = vmatpush1.msra.mxu0 0.0
      %3349 = vmatprep.subr.mxu0 0.0
      %3350 = vmatpush1.msra.mxu0 0.0
      %3351 = vmatprep.subr.mxu0 0.0
      %3352 = vmatpush1.msra.mxu0 0.0
      %3353 = vmatprep.subr.mxu0 0.0
      %3354 = vmatpush1.msra.mxu0 0.0
      %3355 = vmatprep.subr.mxu0 0.0
      %3356 = vmatpush1.msra.mxu0 0.0
      %3357 = vmatprep.subr.mxu0 0.0
      %3358 = vmatpush1.msra.mxu0 0.0
      %3359 = vmatprep.subr.mxu0 0.0
      %3360 = vmatpush1.msra.mxu0 0.0
      %3361 = vmatprep.subr.mxu0 0.0
      %3362 = vmatpush1.msra.mxu0 0.0
      %3363 = vmatprep.subr.mxu0 0.0
      %3364 = vmatpush1.msra.mxu0 0.0
      %3365 = vmatprep.subr.mxu0 0.0
      %3366 = vmatpush1.msra.mxu0 0.0
      %3367 = vmatprep.subr.mxu0 0.0
      %3368 = vmatpush1.msra.mxu0 0.0
      %3369 = vmatprep.subr.mxu0 0.0
      %3370 = vmatpush1.msra.mxu0 0.0
      %3371 = vmatprep.subr.mxu0 0.0
      %3372 = vmatpush1.msra.mxu0 0.0
      %3373 = vmatprep.subr.mxu0 0.0
      %3374 = vmatpush1.msra.mxu0 0.0
      %3375 = vmatprep.subr.mxu0 0.0
      %3376 = vmatpush1.msra.mxu0 0.0
      %3377 = vmatprep.subr.mxu0 0.0
      %3378 = vmatpush1.msra.mxu0 0.0
      %3379 = vmatprep.subr.mxu0 0.0
      %3380 = vmatpush1.msra.mxu0 0.0
      %3381 = vmatprep.mubr.f32.mxu0 0.0
      %3382 = vmatmul.mubr.f32.gmra.mrb[0].mxu0 %v3312
      %v3383 = vpop.f32.mrb[0].mxu0
      %v3384 = vadd.f32 0.0, %v3383
      %v3385 = vpop.f32.mrb[0].mxu0
      %3386 = vmatprep.mubr.f32.mxu0 0.0
      %3387 = vmatmul.mubr.f32.gmra.mrb[0].mxu0 %v3315
      %v3388 = vpop.f32.mrb[0].mxu0
      %v3389 = vadd.f32 0.0, %v3388
      %v3390 = vpop.f32.mrb[0].mxu0
      %3391 = vdwg.mxu0
      %v3392 = vadd.f32 %v3298, %v3384
      %v3393 = vadd.f32 %v3299, %v3389
      %v3394 = vld [vmem:[%s2619 + $0x2] sm:$0xff]
      %v3395 = vld [vmem:[%s2619 + $0xa] sm:$0xff]
      %v3396 = vld [vmem:[%s785] sm:$0xff]
      %v3397 = vld [vmem:[%s785 + $0x8] sm:$0xff]
      %v3398 = vld [vmem:[%s785 + $0x10] sm:$0xff]
      %v3399 = vld [vmem:[%s785 + $0x18] sm:$0xff]
      %v3400 = vld [vmem:[%s785 + $0x20] sm:$0xff]
      %v3401 = vld [vmem:[%s785 + $0x28] sm:$0xff]
      %v3402 = vld [vmem:[%s785 + $0x30] sm:$0xff]
      %v3403 = vld [vmem:[%s785 + $0x38] sm:$0xff]
      %v3404 = vld [vmem:[%s785 + $0x40] sm:$0xff]
      %v3406 = vsel %vm225, %v3394, 0
      %v3409 = vsel %vm225, %v3395, 0
      %3411 = vmatprep.subr.mxu0 0.0
      %3412 = vmatpush1.msra.mxu0 %v3396
      %3413 = vmatprep.subr.mxu0 0.0
      %3414 = vmatpush1.msra.mxu0 %v3397
      %3415 = vmatprep.subr.mxu0 0.0
      %3416 = vmatpush1.msra.mxu0 %v3398
      %3417 = vmatprep.subr.mxu0 0.0
      %3418 = vmatpush1.msra.mxu0 %v3399
      %3419 = vmatprep.subr.mxu0 0.0
      %3420 = vmatpush1.msra.mxu0 %v3400
      %3421 = vmatprep.subr.mxu0 0.0
      %3422 = vmatpush1.msra.mxu0 %v3401
      %3423 = vmatprep.subr.mxu0 0.0
      %3424 = vmatpush1.msra.mxu0 %v3402
      %3425 = vmatprep.subr.mxu0 0.0
      %3426 = vmatpush1.msra.mxu0 %v3403
      %3427 = vmatprep.subr.mxu0 0.0
      %3428 = vmatpush1.msra.mxu0 %v3404
      %3429 = vmatprep.subr.mxu0 0.0
      %3430 = vmatpush1.msra.mxu0 0.0
      %3431 = vmatprep.subr.mxu0 0.0
      %3432 = vmatpush1.msra.mxu0 0.0
      %3433 = vmatprep.subr.mxu0 0.0
      %3434 = vmatpush1.msra.mxu0 0.0
      %3435 = vmatprep.subr.mxu0 0.0
      %3436 = vmatpush1.msra.mxu0 0.0
      %3437 = vmatprep.subr.mxu0 0.0
      %3438 = vmatpush1.msra.mxu0 0.0
      %3439 = vmatprep.subr.mxu0 0.0
      %3440 = vmatpush1.msra.mxu0 0.0
      %3441 = vmatprep.subr.mxu0 0.0
      %3442 = vmatpush1.msra.mxu0 0.0
      %3443 = vmatprep.subr.mxu0 0.0
      %3444 = vmatpush1.msra.mxu0 0.0
      %3445 = vmatprep.subr.mxu0 0.0
      %3446 = vmatpush1.msra.mxu0 0.0
      %3447 = vmatprep.subr.mxu0 0.0
      %3448 = vmatpush1.msra.mxu0 0.0
      %3449 = vmatprep.subr.mxu0 0.0
      %3450 = vmatpush1.msra.mxu0 0.0
      %3451 = vmatprep.subr.mxu0 0.0
      %3452 = vmatpush1.msra.mxu0 0.0
      %3453 = vmatprep.subr.mxu0 0.0
      %3454 = vmatpush1.msra.mxu0 0.0
      %3455 = vmatprep.subr.mxu0 0.0
      %3456 = vmatpush1.msra.mxu0 0.0
      %3457 = vmatprep.subr.mxu0 0.0
      %3458 = vmatpush1.msra.mxu0 0.0
      %3459 = vmatprep.subr.mxu0 0.0
      %3460 = vmatpush1.msra.mxu0 0.0
      %3461 = vmatprep.subr.mxu0 0.0
      %3462 = vmatpush1.msra.mxu0 0.0
      %3463 = vmatprep.subr.mxu0 0.0
      %3464 = vmatpush1.msra.mxu0 0.0
      %3465 = vmatprep.subr.mxu0 0.0
      %3466 = vmatpush1.msra.mxu0 0.0
      %3467 = vmatprep.subr.mxu0 0.0
      %3468 = vmatpush1.msra.mxu0 0.0
      %3469 = vmatprep.subr.mxu0 0.0
      %3470 = vmatpush1.msra.mxu0 0.0
      %3471 = vmatprep.subr.mxu0 0.0
      %3472 = vmatpush1.msra.mxu0 0.0
      %3473 = vmatprep.subr.mxu0 0.0
      %3474 = vmatpush1.msra.mxu0 0.0
      %3475 = vmatprep.mubr.f32.mxu0 0.0
      %3476 = vmatmul.mubr.f32.gmra.mrb[0].mxu0 %v3406
      %v3477 = vpop.f32.mrb[0].mxu0
      %v3478 = vadd.f32 0.0, %v3477
      %v3479 = vpop.f32.mrb[0].mxu0
      %3480 = vmatprep.mubr.f32.mxu0 0.0
      %3481 = vmatmul.mubr.f32.gmra.mrb[0].mxu0 %v3409
      %v3482 = vpop.f32.mrb[0].mxu0
      %v3483 = vadd.f32 0.0, %v3482
      %v3484 = vpop.f32.mrb[0].mxu0
      %3485 = vdwg.mxu0
      %v3486 = vadd.f32 %v3392, %v3478
      %v3487 = vadd.f32 %v3393, %v3483
      %s3488 = scalar_lea.vmem [#allocation2], 120
      %v3489 = vld [vmem:[%s3488] sm:$0xff]
      %v3490 = vld [vmem:[%s3488 + $0x8] sm:$0xff]
      %v3491 = vld [vmem:[%s881] sm:$0xff]
      %v3492 = vld [vmem:[%s881 + $0x8] sm:$0xff]
      %v3493 = vld [vmem:[%s881 + $0x10] sm:$0xff]
      %v3494 = vld [vmem:[%s881 + $0x18] sm:$0xff]
      %v3495 = vld [vmem:[%s881 + $0x20] sm:$0xff]
      %v3496 = vld [vmem:[%s881 + $0x28] sm:$0xff]
      %v3497 = vld [vmem:[%s881 + $0x30] sm:$0xff]
      %v3498 = vld [vmem:[%s881 + $0x38] sm:$0xff]
      %v3499 = vld [vmem:[%s881 + $0x40] sm:$0xff]
      %v3501 = vsel %vm225, %v3489, 0
      %v3504 = vsel %vm225, %v3490, 0
      %3506 = vmatprep.subr.mxu0 0.0
      %3507 = vmatpush1.msra.mxu0 %v3491
      %3508 = vmatprep.subr.mxu0 0.0
      %3509 = vmatpush1.msra.mxu0 %v3492
      %3510 = vmatprep.subr.mxu0 0.0
      %3511 = vmatpush1.msra.mxu0 %v3493
      %3512 = vmatprep.subr.mxu0 0.0
      %3513 = vmatpush1.msra.mxu0 %v3494
      %3514 = vmatprep.subr.mxu0 0.0
      %3515 = vmatpush1.msra.mxu0 %v3495
      %3516 = vmatprep.subr.mxu0 0.0
      %3517 = vmatpush1.msra.mxu0 %v3496
      %3518 = vmatprep.subr.mxu0 0.0
      %3519 = vmatpush1.msra.mxu0 %v3497
      %3520 = vmatprep.subr.mxu0 0.0
      %3521 = vmatpush1.msra.mxu0 %v3498
      %3522 = vmatprep.subr.mxu0 0.0
      %3523 = vmatpush1.msra.mxu0 %v3499
      %3524 = vmatprep.subr.mxu0 0.0
      %3525 = vmatpush1.msra.mxu0 0.0
      %3526 = vmatprep.subr.mxu0 0.0
      %3527 = vmatpush1.msra.mxu0 0.0
      %3528 = vmatprep.subr.mxu0 0.0
      %3529 = vmatpush1.msra.mxu0 0.0
      %3530 = vmatprep.subr.mxu0 0.0
      %3531 = vmatpush1.msra.mxu0 0.0
      %3532 = vmatprep.subr.mxu0 0.0
      %3533 = vmatpush1.msra.mxu0 0.0
      %3534 = vmatprep.subr.mxu0 0.0
      %3535 = vmatpush1.msra.mxu0 0.0
      %3536 = vmatprep.subr.mxu0 0.0
      %3537 = vmatpush1.msra.mxu0 0.0
      %3538 = vmatprep.subr.mxu0 0.0
      %3539 = vmatpush1.msra.mxu0 0.0
      %3540 = vmatprep.subr.mxu0 0.0
      %3541 = vmatpush1.msra.mxu0 0.0
      %3542 = vmatprep.subr.mxu0 0.0
      %3543 = vmatpush1.msra.mxu0 0.0
      %3544 = vmatprep.subr.mxu0 0.0
      %3545 = vmatpush1.msra.mxu0 0.0
      %3546 = vmatprep.subr.mxu0 0.0
      %3547 = vmatpush1.msra.mxu0 0.0
      %3548 = vmatprep.subr.mxu0 0.0
      %3549 = vmatpush1.msra.mxu0 0.0
      %3550 = vmatprep.subr.mxu0 0.0
      %3551 = vmatpush1.msra.mxu0 0.0
      %3552 = vmatprep.subr.mxu0 0.0
      %3553 = vmatpush1.msra.mxu0 0.0
      %3554 = vmatprep.subr.mxu0 0.0
      %3555 = vmatpush1.msra.mxu0 0.0
      %3556 = vmatprep.subr.mxu0 0.0
      %3557 = vmatpush1.msra.mxu0 0.0
      %3558 = vmatprep.subr.mxu0 0.0
      %3559 = vmatpush1.msra.mxu0 0.0
      %3560 = vmatprep.subr.mxu0 0.0
      %3561 = vmatpush1.msra.mxu0 0.0
      %3562 = vmatprep.subr.mxu0 0.0
      %3563 = vmatpush1.msra.mxu0 0.0
      %3564 = vmatprep.subr.mxu0 0.0
      %3565 = vmatpush1.msra.mxu0 0.0
      %3566 = vmatprep.subr.mxu0 0.0
      %3567 = vmatpush1.msra.mxu0 0.0
      %3568 = vmatprep.subr.mxu0 0.0
      %3569 = vmatpush1.msra.mxu0 0.0
      %3570 = vmatprep.mubr.f32.mxu0 0.0
      %3571 = vmatmul.mubr.f32.gmra.mrb[0].mxu0 %v3501
      %v3572 = vpop.f32.mrb[0].mxu0
      %v3573 = vadd.f32 0.0, %v3572
      %v3574 = vpop.f32.mrb[0].mxu0
      %3575 = vmatprep.mubr.f32.mxu0 0.0
      %3576 = vmatmul.mubr.f32.gmra.mrb[0].mxu0 %v3504
      %v3577 = vpop.f32.mrb[0].mxu0
      %v3578 = vadd.f32 0.0, %v3577
      %v3579 = vpop.f32.mrb[0].mxu0
      %3580 = vdwg.mxu0
      %v3581 = vadd.f32 %v3486, %v3573
      %v3582 = vadd.f32 %v3487, %v3578
      %v3583 = vld [vmem:[%s3488 + $0x1] sm:$0xff]
      %v3584 = vld [vmem:[%s3488 + $0x9] sm:$0xff]
      %v3585 = vld [vmem:[%s976] sm:$0xff]
      %v3586 = vld [vmem:[%s976 + $0x8] sm:$0xff]
      %v3587 = vld [vmem:[%s976 + $0x10] sm:$0xff]
      %v3588 = vld [vmem:[%s976 + $0x18] sm:$0xff]
      %v3589 = vld [vmem:[%s976 + $0x20] sm:$0xff]
      %v3590 = vld [vmem:[%s976 + $0x28] sm:$0xff]
      %v3591 = vld [vmem:[%s976 + $0x30] sm:$0xff]
      %v3592 = vld [vmem:[%s976 + $0x38] sm:$0xff]
      %v3593 = vld [vmem:[%s976 + $0x40] sm:$0xff]
      %v3595 = vsel %vm225, %v3583, 0
      %v3598 = vsel %vm225, %v3584, 0
      %3600 = vmatprep.subr.mxu0 0.0
      %3601 = vmatpush1.msra.mxu0 %v3585
      %3602 = vmatprep.subr.mxu0 0.0
      %3603 = vmatpush1.msra.mxu0 %v3586
      %3604 = vmatprep.subr.mxu0 0.0
      %3605 = vmatpush1.msra.mxu0 %v3587
      %3606 = vmatprep.subr.mxu0 0.0
      %3607 = vmatpush1.msra.mxu0 %v3588
      %3608 = vmatprep.subr.mxu0 0.0
      %3609 = vmatpush1.msra.mxu0 %v3589
      %3610 = vmatprep.subr.mxu0 0.0
      %3611 = vmatpush1.msra.mxu0 %v3590
      %3612 = vmatprep.subr.mxu0 0.0
      %3613 = vmatpush1.msra.mxu0 %v3591
      %3614 = vmatprep.subr.mxu0 0.0
      %3615 = vmatpush1.msra.mxu0 %v3592
      %3616 = vmatprep.subr.mxu0 0.0
      %3617 = vmatpush1.msra.mxu0 %v3593
      %3618 = vmatprep.subr.mxu0 0.0
      %3619 = vmatpush1.msra.mxu0 0.0
      %3620 = vmatprep.subr.mxu0 0.0
      %3621 = vmatpush1.msra.mxu0 0.0
      %3622 = vmatprep.subr.mxu0 0.0
      %3623 = vmatpush1.msra.mxu0 0.0
      %3624 = vmatprep.subr.mxu0 0.0
      %3625 = vmatpush1.msra.mxu0 0.0
      %3626 = vmatprep.subr.mxu0 0.0
      %3627 = vmatpush1.msra.mxu0 0.0
      %3628 = vmatprep.subr.mxu0 0.0
      %3629 = vmatpush1.msra.mxu0 0.0
      %3630 = vmatprep.subr.mxu0 0.0
      %3631 = vmatpush1.msra.mxu0 0.0
      %3632 = vmatprep.subr.mxu0 0.0
      %3633 = vmatpush1.msra.mxu0 0.0
      %3634 = vmatprep.subr.mxu0 0.0
      %3635 = vmatpush1.msra.mxu0 0.0
      %3636 = vmatprep.subr.mxu0 0.0
      %3637 = vmatpush1.msra.mxu0 0.0
      %3638 = vmatprep.subr.mxu0 0.0
      %3639 = vmatpush1.msra.mxu0 0.0
      %3640 = vmatprep.subr.mxu0 0.0
      %3641 = vmatpush1.msra.mxu0 0.0
      %3642 = vmatprep.subr.mxu0 0.0
      %3643 = vmatpush1.msra.mxu0 0.0
      %3644 = vmatprep.subr.mxu0 0.0
      %3645 = vmatpush1.msra.mxu0 0.0
      %3646 = vmatprep.subr.mxu0 0.0
      %3647 = vmatpush1.msra.mxu0 0.0
      %3648 = vmatprep.subr.mxu0 0.0
      %3649 = vmatpush1.msra.mxu0 0.0
      %3650 = vmatprep.subr.mxu0 0.0
      %3651 = vmatpush1.msra.mxu0 0.0
      %3652 = vmatprep.subr.mxu0 0.0
      %3653 = vmatpush1.msra.mxu0 0.0
      %3654 = vmatprep.subr.mxu0 0.0
      %3655 = vmatpush1.msra.mxu0 0.0
      %3656 = vmatprep.subr.mxu0 0.0
      %3657 = vmatpush1.msra.mxu0 0.0
      %3658 = vmatprep.subr.mxu0 0.0
      %3659 = vmatpush1.msra.mxu0 0.0
      %3660 = vmatprep.subr.mxu0 0.0
      %3661 = vmatpush1.msra.mxu0 0.0
      %3662 = vmatprep.subr.mxu0 0.0
      %3663 = vmatpush1.msra.mxu0 0.0
      %3664 = vmatprep.mubr.f32.mxu0 0.0
      %3665 = vmatmul.mubr.f32.gmra.mrb[0].mxu0 %v3595
      %v3666 = vpop.f32.mrb[0].mxu0
      %v3667 = vadd.f32 0.0, %v3666
      %v3668 = vpop.f32.mrb[0].mxu0
      %3669 = vmatprep.mubr.f32.mxu0 0.0
      %3670 = vmatmul.mubr.f32.gmra.mrb[0].mxu0 %v3598
      %v3671 = vpop.f32.mrb[0].mxu0
      %v3672 = vadd.f32 0.0, %v3671
      %v3673 = vpop.f32.mrb[0].mxu0
      %3674 = vdwg.mxu0
      %v3675 = vadd.f32 %v3581, %v3667
      %v3676 = vadd.f32 %v3582, %v3672
      %v3677 = vld [vmem:[%s3488 + $0x2] sm:$0xff]
      %v3678 = vld [vmem:[%s3488 + $0xa] sm:$0xff]
      %v3679 = vld [vmem:[%s1071] sm:$0xff]
      %v3680 = vld [vmem:[%s1071 + $0x8] sm:$0xff]
      %v3681 = vld [vmem:[%s1071 + $0x10] sm:$0xff]
      %v3682 = vld [vmem:[%s1071 + $0x18] sm:$0xff]
      %v3683 = vld [vmem:[%s1071 + $0x20] sm:$0xff]
      %v3684 = vld [vmem:[%s1071 + $0x28] sm:$0xff]
      %v3685 = vld [vmem:[%s1071 + $0x30] sm:$0xff]
      %v3686 = vld [vmem:[%s1071 + $0x38] sm:$0xff]
      %v3687 = vld [vmem:[%s1071 + $0x40] sm:$0xff]
      %v3689 = vsel %vm225, %v3677, 0
      %v3692 = vsel %vm225, %v3678, 0
      %3694 = vmatprep.subr.mxu0 0.0
      %3695 = vmatpush1.msra.mxu0 %v3679
      %3696 = vmatprep.subr.mxu0 0.0
      %3697 = vmatpush1.msra.mxu0 %v3680
      %3698 = vmatprep.subr.mxu0 0.0
      %3699 = vmatpush1.msra.mxu0 %v3681
      %3700 = vmatprep.subr.mxu0 0.0
      %3701 = vmatpush1.msra.mxu0 %v3682
      %3702 = vmatprep.subr.mxu0 0.0
      %3703 = vmatpush1.msra.mxu0 %v3683
      %3704 = vmatprep.subr.mxu0 0.0
      %3705 = vmatpush1.msra.mxu0 %v3684
      %3706 = vmatprep.subr.mxu0 0.0
      %3707 = vmatpush1.msra.mxu0 %v3685
      %3708 = vmatprep.subr.mxu0 0.0
      %3709 = vmatpush1.msra.mxu0 %v3686
      %3710 = vmatprep.subr.mxu0 0.0
      %3711 = vmatpush1.msra.mxu0 %v3687
      %3712 = vmatprep.subr.mxu0 0.0
      %3713 = vmatpush1.msra.mxu0 0.0
      %3714 = vmatprep.subr.mxu0 0.0
      %3715 = vmatpush1.msra.mxu0 0.0
      %3716 = vmatprep.subr.mxu0 0.0
      %3717 = vmatpush1.msra.mxu0 0.0
      %3718 = vmatprep.subr.mxu0 0.0
      %3719 = vmatpush1.msra.mxu0 0.0
      %3720 = vmatprep.subr.mxu0 0.0
      %3721 = vmatpush1.msra.mxu0 0.0
      %3722 = vmatprep.subr.mxu0 0.0
      %3723 = vmatpush1.msra.mxu0 0.0
      %3724 = vmatprep.subr.mxu0 0.0
      %3725 = vmatpush1.msra.mxu0 0.0
      %3726 = vmatprep.subr.mxu0 0.0
      %3727 = vmatpush1.msra.mxu0 0.0
      %3728 = vmatprep.subr.mxu0 0.0
      %3729 = vmatpush1.msra.mxu0 0.0
      %3730 = vmatprep.subr.mxu0 0.0
      %3731 = vmatpush1.msra.mxu0 0.0
      %3732 = vmatprep.subr.mxu0 0.0
      %3733 = vmatpush1.msra.mxu0 0.0
      %3734 = vmatprep.subr.mxu0 0.0
      %3735 = vmatpush1.msra.mxu0 0.0
      %3736 = vmatprep.subr.mxu0 0.0
      %3737 = vmatpush1.msra.mxu0 0.0
      %3738 = vmatprep.subr.mxu0 0.0
      %3739 = vmatpush1.msra.mxu0 0.0
      %3740 = vmatprep.subr.mxu0 0.0
      %3741 = vmatpush1.msra.mxu0 0.0
      %3742 = vmatprep.subr.mxu0 0.0
      %3743 = vmatpush1.msra.mxu0 0.0
      %3744 = vmatprep.subr.mxu0 0.0
      %3745 = vmatpush1.msra.mxu0 0.0
      %3746 = vmatprep.subr.mxu0 0.0
      %3747 = vmatpush1.msra.mxu0 0.0
      %3748 = vmatprep.subr.mxu0 0.0
      %3749 = vmatpush1.msra.mxu0 0.0
      %3750 = vmatprep.subr.mxu0 0.0
      %3751 = vmatpush1.msra.mxu0 0.0
      %3752 = vmatprep.subr.mxu0 0.0
      %3753 = vmatpush1.msra.mxu0 0.0
      %3754 = vmatprep.subr.mxu0 0.0
      %3755 = vmatpush1.msra.mxu0 0.0
      %3756 = vmatprep.subr.mxu0 0.0
      %3757 = vmatpush1.msra.mxu0 0.0
      %3758 = vmatprep.mubr.f32.mxu0 0.0
      %3759 = vmatmul.mubr.f32.gmra.mrb[0].mxu0 %v3689
      %v3760 = vpop.f32.mrb[0].mxu0
      %v3761 = vadd.f32 0.0, %v3760
      %v3762 = vpop.f32.mrb[0].mxu0
      %3763 = vmatprep.mubr.f32.mxu0 0.0
      %3764 = vmatmul.mubr.f32.gmra.mrb[0].mxu0 %v3692
      %v3765 = vpop.f32.mrb[0].mxu0
      %v3766 = vadd.f32 0.0, %v3765
      %v3767 = vpop.f32.mrb[0].mxu0
      %3768 = vdwg.mxu0
      %v3769 = vadd.f32 %v3675, %v3761
      %v3770 = vadd.f32 %v3676, %v3766
      %v3771 = vld [vmem:[%s2] sm:$0x1]
      %v3773 = vlaneseq
      %v3774 = vshrl.u32 %v3773, 7
      %v3775 = vsub.s32 0, %v3774
      %v3776 = vrot.slane %v3771, %v3775
      %v3778 = vadd.f32 %v3769, %v3776
      %v3779 = vadd.f32 %v3770, %v3776
      %vm3780 = vcmp.gt.f32.partialorder %v3778, 0.0
      %vm3781 = vcmp.gt.f32.partialorder %v3779, 0.0
      %v3782 = vmul.f32 %v3778, 0.04
      %v3783 = vmul.f32 %v3779, 0.04
      %v3784 = vsel %vm3780, %v3778, %v3782
      %v3785 = vsel %vm3781, %v3779, %v3783
      %3788 = vrot.lane.b32.xlu0 %v3784, 4
      %v3789 = vpop.permute.xlu0 %3788
      %3790 = vrot.lane.b32.xlu0 %v3785, 4
      %v3791 = vpop.permute.xlu0 %3790
      %s3794 = scalar_lea.vmem [#allocation3], 96
      %3795 = vst.msk [vmem:[%s3794 + $0x1] sm:$0xff] %vm304, %v3789
      %3796 = vst.msk [vmem:[%s3794 + $0x9] sm:$0xff] %vm304, %v3791
      %v3797 = vld [vmem:[#allocation3] sm:$0xff]
      %v3798 = vld [vmem:[#allocation3 + $0x8] sm:$0xff]
      %v3799 = vld [vmem:[%s3] sm:$0xff]
      %v3800 = vld [vmem:[%s3 + $0x8] sm:$0xff]
      %v3801 = vld [vmem:[%s3 + $0x10] sm:$0xff]
      %v3802 = vld [vmem:[%s3 + $0x18] sm:$0xff]
      %v3803 = vld [vmem:[%s3 + $0x20] sm:$0xff]
      %v3804 = vld [vmem:[%s3 + $0x28] sm:$0xff]
      %v3805 = vld [vmem:[%s3 + $0x30] sm:$0xff]
      %v3806 = vld [vmem:[%s3 + $0x38] sm:$0xff]
      %v3807 = vld [vmem:[%s3 + $0x40] sm:$0xff]
      %v3808 = vld [vmem:[#allocation3 + $0x1] sm:$0xff]
      %v3809 = vld [vmem:[#allocation3 + $0x9] sm:$0xff]
      %s3810 = scalar_lea.vmem %s3, 72
      %v3811 = vld [vmem:[%s3810] sm:$0xff]
      %v3812 = vld [vmem:[%s3810 + $0x8] sm:$0xff]
      %v3813 = vld [vmem:[%s3810 + $0x10] sm:$0xff]
      %v3814 = vld [vmem:[%s3810 + $0x18] sm:$0xff]
      %v3815 = vld [vmem:[%s3810 + $0x20] sm:$0xff]
      %v3816 = vld [vmem:[%s3810 + $0x28] sm:$0xff]
      %v3817 = vld [vmem:[%s3810 + $0x30] sm:$0xff]
      %v3818 = vld [vmem:[%s3810 + $0x38] sm:$0xff]
      %v3819 = vld [vmem:[%s3810 + $0x40] sm:$0xff]
      %v3821 = vsel %vm225, %v3808, 0
      %v3824 = vsel %vm225, %v3809, 0
      %3826 = vmatprep.subr.mxu0 0.0
      %3827 = vmatpush1.msra.mxu0 %v3811
      %3828 = vmatprep.subr.mxu0 0.0
      %3829 = vmatpush1.msra.mxu0 %v3812
      %3830 = vmatprep.subr.mxu0 0.0
      %3831 = vmatpush1.msra.mxu0 %v3813
      %3832 = vmatprep.subr.mxu0 0.0
      %3833 = vmatpush1.msra.mxu0 %v3814
      %3834 = vmatprep.subr.mxu0 0.0
      %3835 = vmatpush1.msra.mxu0 %v3815
      %3836 = vmatprep.subr.mxu0 0.0
      %3837 = vmatpush1.msra.mxu0 %v3816
      %3838 = vmatprep.subr.mxu0 0.0
      %3839 = vmatpush1.msra.mxu0 %v3817
      %3840 = vmatprep.subr.mxu0 0.0
      %3841 = vmatpush1.msra.mxu0 %v3818
      %3842 = vmatprep.subr.mxu0 0.0
      %3843 = vmatpush1.msra.mxu0 %v3819
      %3844 = vmatprep.subr.mxu0 0.0
      %3845 = vmatpush1.msra.mxu0 0.0
      %3846 = vmatprep.subr.mxu0 0.0
      %3847 = vmatpush1.msra.mxu0 0.0
      %3848 = vmatprep.subr.mxu0 0.0
      %3849 = vmatpush1.msra.mxu0 0.0
      %3850 = vmatprep.subr.mxu0 0.0
      %3851 = vmatpush1.msra.mxu0 0.0
      %3852 = vmatprep.subr.mxu0 0.0
      %3853 = vmatpush1.msra.mxu0 0.0
      %3854 = vmatprep.subr.mxu0 0.0
      %3855 = vmatpush1.msra.mxu0 0.0
      %3856 = vmatprep.subr.mxu0 0.0
      %3857 = vmatpush1.msra.mxu0 0.0
      %3858 = vmatprep.subr.mxu0 0.0
      %3859 = vmatpush1.msra.mxu0 0.0
      %3860 = vmatprep.subr.mxu0 0.0
      %3861 = vmatpush1.msra.mxu0 0.0
      %3862 = vmatprep.subr.mxu0 0.0
      %3863 = vmatpush1.msra.mxu0 0.0
      %3864 = vmatprep.subr.mxu0 0.0
      %3865 = vmatpush1.msra.mxu0 0.0
      %3866 = vmatprep.subr.mxu0 0.0
      %3867 = vmatpush1.msra.mxu0 0.0
      %3868 = vmatprep.subr.mxu0 0.0
      %3869 = vmatpush1.msra.mxu0 0.0
      %3870 = vmatprep.subr.mxu0 0.0
      %3871 = vmatpush1.msra.mxu0 0.0
      %3872 = vmatprep.subr.mxu0 0.0
      %3873 = vmatpush1.msra.mxu0 0.0
      %3874 = vmatprep.subr.mxu0 0.0
      %3875 = vmatpush1.msra.mxu0 0.0
      %3876 = vmatprep.subr.mxu0 0.0
      %3877 = vmatpush1.msra.mxu0 0.0
      %3878 = vmatprep.subr.mxu0 0.0
      %3879 = vmatpush1.msra.mxu0 0.0
      %3880 = vmatprep.subr.mxu0 0.0
      %3881 = vmatpush1.msra.mxu0 0.0
      %3882 = vmatprep.subr.mxu0 0.0
      %3883 = vmatpush1.msra.mxu0 0.0
      %3884 = vmatprep.subr.mxu0 0.0
      %3885 = vmatpush1.msra.mxu0 0.0
      %3886 = vmatprep.subr.mxu0 0.0
      %3887 = vmatpush1.msra.mxu0 0.0
      %3888 = vmatprep.subr.mxu0 0.0
      %3889 = vmatpush1.msra.mxu0 0.0
      %3890 = vmatprep.mubr.f32.mxu0 0.0
      %3891 = vmatmul.mubr.f32.gmra.mrb[0].mxu0 %v3821
      %v3892 = vpop.f32.mrb[0].mxu0
      %v3893 = vadd.f32 0.0, %v3892
      %v3894 = vpop.f32.mrb[0].mxu0
      %3895 = vmatprep.mubr.f32.mxu0 0.0
      %3896 = vmatmul.mubr.f32.gmra.mrb[0].mxu0 %v3824
      %v3897 = vpop.f32.mrb[0].mxu0
      %v3898 = vadd.f32 0.0, %v3897
      %v3899 = vpop.f32.mrb[0].mxu0
      %3900 = vdwg.mxu0
      %v3902 = vsel %vm225, %v3797, 0
      %v3905 = vsel %vm225, %v3798, 0
      %3907 = vmatprep.subr.mxu0 0.0
      %3908 = vmatpush1.msra.mxu0 %v3799
      %3909 = vmatprep.subr.mxu0 0.0
      %3910 = vmatpush1.msra.mxu0 %v3800
      %3911 = vmatprep.subr.mxu0 0.0
      %3912 = vmatpush1.msra.mxu0 %v3801
      %3913 = vmatprep.subr.mxu0 0.0
      %3914 = vmatpush1.msra.mxu0 %v3802
      %3915 = vmatprep.subr.mxu0 0.0
      %3916 = vmatpush1.msra.mxu0 %v3803
      %3917 = vmatprep.subr.mxu0 0.0
      %3918 = vmatpush1.msra.mxu0 %v3804
      %3919 = vmatprep.subr.mxu0 0.0
      %3920 = vmatpush1.msra.mxu0 %v3805
      %3921 = vmatprep.subr.mxu0 0.0
      %3922 = vmatpush1.msra.mxu0 %v3806
      %3923 = vmatprep.subr.mxu0 0.0
      %3924 = vmatpush1.msra.mxu0 %v3807
      %3925 = vmatprep.subr.mxu0 0.0
      %3926 = vmatpush1.msra.mxu0 0.0
      %3927 = vmatprep.subr.mxu0 0.0
      %3928 = vmatpush1.msra.mxu0 0.0
      %3929 = vmatprep.subr.mxu0 0.0
      %3930 = vmatpush1.msra.mxu0 0.0
      %3931 = vmatprep.subr.mxu0 0.0
      %3932 = vmatpush1.msra.mxu0 0.0
      %3933 = vmatprep.subr.mxu0 0.0
      %3934 = vmatpush1.msra.mxu0 0.0
      %3935 = vmatprep.subr.mxu0 0.0
      %3936 = vmatpush1.msra.mxu0 0.0
      %3937 = vmatprep.subr.mxu0 0.0
      %3938 = vmatpush1.msra.mxu0 0.0
      %3939 = vmatprep.subr.mxu0 0.0
      %3940 = vmatpush1.msra.mxu0 0.0
      %3941 = vmatprep.subr.mxu0 0.0
      %3942 = vmatpush1.msra.mxu0 0.0
      %3943 = vmatprep.subr.mxu0 0.0
      %3944 = vmatpush1.msra.mxu0 0.0
      %3945 = vmatprep.subr.mxu0 0.0
      %3946 = vmatpush1.msra.mxu0 0.0
      %3947 = vmatprep.subr.mxu0 0.0
      %3948 = vmatpush1.msra.mxu0 0.0
      %3949 = vmatprep.subr.mxu0 0.0
      %3950 = vmatpush1.msra.mxu0 0.0
      %3951 = vmatprep.subr.mxu0 0.0
      %3952 = vmatpush1.msra.mxu0 0.0
      %3953 = vmatprep.subr.mxu0 0.0
      %3954 = vmatpush1.msra.mxu0 0.0
      %3955 = vmatprep.subr.mxu0 0.0
      %3956 = vmatpush1.msra.mxu0 0.0
      %3957 = vmatprep.subr.mxu0 0.0
      %3958 = vmatpush1.msra.mxu0 0.0
      %3959 = vmatprep.subr.mxu0 0.0
      %3960 = vmatpush1.msra.mxu0 0.0
      %3961 = vmatprep.subr.mxu0 0.0
      %3962 = vmatpush1.msra.mxu0 0.0
      %3963 = vmatprep.subr.mxu0 0.0
      %3964 = vmatpush1.msra.mxu0 0.0
      %3965 = vmatprep.subr.mxu0 0.0
      %3966 = vmatpush1.msra.mxu0 0.0
      %3967 = vmatprep.subr.mxu0 0.0
      %3968 = vmatpush1.msra.mxu0 0.0
      %3969 = vmatprep.subr.mxu0 0.0
      %3970 = vmatpush1.msra.mxu0 0.0
      %3971 = vmatprep.mubr.f32.mxu0 0.0
      %3972 = vmatmul.mubr.f32.gmra.mrb[0].mxu0 %v3902
      %v3973 = vpop.f32.mrb[0].mxu0
      %v3974 = vadd.f32 %v3893, %v3973
      %v3975 = vpop.f32.mrb[0].mxu0
      %3976 = vmatprep.mubr.f32.mxu0 0.0
      %3977 = vmatmul.mubr.f32.gmra.mrb[0].mxu0 %v3905
      %v3978 = vpop.f32.mrb[0].mxu0
      %v3979 = vadd.f32 %v3898, %v3978
      %v3980 = vpop.f32.mrb[0].mxu0
      %3981 = vdwg.mxu0
      %v3982 = vld [vmem:[#allocation3 + $0x2] sm:$0xff]
      %v3983 = vld [vmem:[#allocation3 + $0xa] sm:$0xff]
      %s3984 = scalar_lea.vmem %s3, 144
      %v3985 = vld [vmem:[%s3984] sm:$0xff]
      %v3986 = vld [vmem:[%s3984 + $0x8] sm:$0xff]
      %v3987 = vld [vmem:[%s3984 + $0x10] sm:$0xff]
      %v3988 = vld [vmem:[%s3984 + $0x18] sm:$0xff]
      %v3989 = vld [vmem:[%s3984 + $0x20] sm:$0xff]
      %v3990 = vld [vmem:[%s3984 + $0x28] sm:$0xff]
      %v3991 = vld [vmem:[%s3984 + $0x30] sm:$0xff]
      %v3992 = vld [vmem:[%s3984 + $0x38] sm:$0xff]
      %v3993 = vld [vmem:[%s3984 + $0x40] sm:$0xff]
      %v3995 = vsel %vm225, %v3982, 0
      %v3998 = vsel %vm225, %v3983, 0
      %4000 = vmatprep.subr.mxu0 0.0
      %4001 = vmatpush1.msra.mxu0 %v3985
      %4002 = vmatprep.subr.mxu0 0.0
      %4003 = vmatpush1.msra.mxu0 %v3986
      %4004 = vmatprep.subr.mxu0 0.0
      %4005 = vmatpush1.msra.mxu0 %v3987
      %4006 = vmatprep.subr.mxu0 0.0
      %4007 = vmatpush1.msra.mxu0 %v3988
      %4008 = vmatprep.subr.mxu0 0.0
      %4009 = vmatpush1.msra.mxu0 %v3989
      %4010 = vmatprep.subr.mxu0 0.0
      %4011 = vmatpush1.msra.mxu0 %v3990
      %4012 = vmatprep.subr.mxu0 0.0
      %4013 = vmatpush1.msra.mxu0 %v3991
      %4014 = vmatprep.subr.mxu0 0.0
      %4015 = vmatpush1.msra.mxu0 %v3992
      %4016 = vmatprep.subr.mxu0 0.0
      %4017 = vmatpush1.msra.mxu0 %v3993
      %4018 = vmatprep.subr.mxu0 0.0
      %4019 = vmatpush1.msra.mxu0 0.0
      %4020 = vmatprep.subr.mxu0 0.0
      %4021 = vmatpush1.msra.mxu0 0.0
      %4022 = vmatprep.subr.mxu0 0.0
      %4023 = vmatpush1.msra.mxu0 0.0
      %4024 = vmatprep.subr.mxu0 0.0
      %4025 = vmatpush1.msra.mxu0 0.0
      %4026 = vmatprep.subr.mxu0 0.0
      %4027 = vmatpush1.msra.mxu0 0.0
      %4028 = vmatprep.subr.mxu0 0.0
      %4029 = vmatpush1.msra.mxu0 0.0
      %4030 = vmatprep.subr.mxu0 0.0
      %4031 = vmatpush1.msra.mxu0 0.0
      %4032 = vmatprep.subr.mxu0 0.0
      %4033 = vmatpush1.msra.mxu0 0.0
      %4034 = vmatprep.subr.mxu0 0.0
      %4035 = vmatpush1.msra.mxu0 0.0
      %4036 = vmatprep.subr.mxu0 0.0
      %4037 = vmatpush1.msra.mxu0 0.0
      %4038 = vmatprep.subr.mxu0 0.0
      %4039 = vmatpush1.msra.mxu0 0.0
      %4040 = vmatprep.subr.mxu0 0.0
      %4041 = vmatpush1.msra.mxu0 0.0
      %4042 = vmatprep.subr.mxu0 0.0
      %4043 = vmatpush1.msra.mxu0 0.0
      %4044 = vmatprep.subr.mxu0 0.0
      %4045 = vmatpush1.msra.mxu0 0.0
      %4046 = vmatprep.subr.mxu0 0.0
      %4047 = vmatpush1.msra.mxu0 0.0
      %4048 = vmatprep.subr.mxu0 0.0
      %4049 = vmatpush1.msra.mxu0 0.0
      %4050 = vmatprep.subr.mxu0 0.0
      %4051 = vmatpush1.msra.mxu0 0.0
      %4052 = vmatprep.subr.mxu0 0.0
      %4053 = vmatpush1.msra.mxu0 0.0
      %4054 = vmatprep.subr.mxu0 0.0
      %4055 = vmatpush1.msra.mxu0 0.0
      %4056 = vmatprep.subr.mxu0 0.0
      %4057 = vmatpush1.msra.mxu0 0.0
      %4058 = vmatprep.subr.mxu0 0.0
      %4059 = vmatpush1.msra.mxu0 0.0
      %4060 = vmatprep.subr.mxu0 0.0
      %4061 = vmatpush1.msra.mxu0 0.0
      %4062 = vmatprep.subr.mxu0 0.0
      %4063 = vmatpush1.msra.mxu0 0.0
      %4064 = vmatprep.mubr.f32.mxu0 0.0
      %4065 = vmatmul.mubr.f32.gmra.mrb[0].mxu0 %v3995
      %v4066 = vpop.f32.mrb[0].mxu0
      %v4067 = vadd.f32 0.0, %v4066
      %v4068 = vpop.f32.mrb[0].mxu0
      %4069 = vmatprep.mubr.f32.mxu0 0.0
      %4070 = vmatmul.mubr.f32.gmra.mrb[0].mxu0 %v3998
      %v4071 = vpop.f32.mrb[0].mxu0
      %v4072 = vadd.f32 0.0, %v4071
      %v4073 = vpop.f32.mrb[0].mxu0
      %4074 = vdwg.mxu0
      %v4075 = vadd.f32 %v3974, %v4067
      %v4076 = vadd.f32 %v3979, %v4072
      %v4077 = vld [vmem:[%s1187] sm:$0xff]
      %v4078 = vld [vmem:[%s1187 + $0x8] sm:$0xff]
      %s4079 = scalar_lea.vmem %s3, 216
      %v4080 = vld [vmem:[%s4079] sm:$0xff]
      %v4081 = vld [vmem:[%s4079 + $0x8] sm:$0xff]
      %v4082 = vld [vmem:[%s4079 + $0x10] sm:$0xff]
      %v4083 = vld [vmem:[%s4079 + $0x18] sm:$0xff]
      %v4084 = vld [vmem:[%s4079 + $0x20] sm:$0xff]
      %v4085 = vld [vmem:[%s4079 + $0x28] sm:$0xff]
      %v4086 = vld [vmem:[%s4079 + $0x30] sm:$0xff]
      %v4087 = vld [vmem:[%s4079 + $0x38] sm:$0xff]
      %v4088 = vld [vmem:[%s4079 + $0x40] sm:$0xff]
      %v4090 = vsel %vm225, %v4077, 0
      %v4093 = vsel %vm225, %v4078, 0
      %4095 = vmatprep.subr.mxu0 0.0
      %4096 = vmatpush1.msra.mxu0 %v4080
      %4097 = vmatprep.subr.mxu0 0.0
      %4098 = vmatpush1.msra.mxu0 %v4081
      %4099 = vmatprep.subr.mxu0 0.0
      %4100 = vmatpush1.msra.mxu0 %v4082
      %4101 = vmatprep.subr.mxu0 0.0
      %4102 = vmatpush1.msra.mxu0 %v4083
      %4103 = vmatprep.subr.mxu0 0.0
      %4104 = vmatpush1.msra.mxu0 %v4084
      %4105 = vmatprep.subr.mxu0 0.0
      %4106 = vmatpush1.msra.mxu0 %v4085
      %4107 = vmatprep.subr.mxu0 0.0
      %4108 = vmatpush1.msra.mxu0 %v4086
      %4109 = vmatprep.subr.mxu0 0.0
      %4110 = vmatpush1.msra.mxu0 %v4087
      %4111 = vmatprep.subr.mxu0 0.0
      %4112 = vmatpush1.msra.mxu0 %v4088
      %4113 = vmatprep.subr.mxu0 0.0
      %4114 = vmatpush1.msra.mxu0 0.0
      %4115 = vmatprep.subr.mxu0 0.0
      %4116 = vmatpush1.msra.mxu0 0.0
      %4117 = vmatprep.subr.mxu0 0.0
      %4118 = vmatpush1.msra.mxu0 0.0
      %4119 = vmatprep.subr.mxu0 0.0
      %4120 = vmatpush1.msra.mxu0 0.0
      %4121 = vmatprep.subr.mxu0 0.0
      %4122 = vmatpush1.msra.mxu0 0.0
      %4123 = vmatprep.subr.mxu0 0.0
      %4124 = vmatpush1.msra.mxu0 0.0
      %4125 = vmatprep.subr.mxu0 0.0
      %4126 = vmatpush1.msra.mxu0 0.0
      %4127 = vmatprep.subr.mxu0 0.0
      %4128 = vmatpush1.msra.mxu0 0.0
      %4129 = vmatprep.subr.mxu0 0.0
      %4130 = vmatpush1.msra.mxu0 0.0
      %4131 = vmatprep.subr.mxu0 0.0
      %4132 = vmatpush1.msra.mxu0 0.0
      %4133 = vmatprep.subr.mxu0 0.0
      %4134 = vmatpush1.msra.mxu0 0.0
      %4135 = vmatprep.subr.mxu0 0.0
      %4136 = vmatpush1.msra.mxu0 0.0
      %4137 = vmatprep.subr.mxu0 0.0
      %4138 = vmatpush1.msra.mxu0 0.0
      %4139 = vmatprep.subr.mxu0 0.0
      %4140 = vmatpush1.msra.mxu0 0.0
      %4141 = vmatprep.subr.mxu0 0.0
      %4142 = vmatpush1.msra.mxu0 0.0
      %4143 = vmatprep.subr.mxu0 0.0
      %4144 = vmatpush1.msra.mxu0 0.0
      %4145 = vmatprep.subr.mxu0 0.0
      %4146 = vmatpush1.msra.mxu0 0.0
      %4147 = vmatprep.subr.mxu0 0.0
      %4148 = vmatpush1.msra.mxu0 0.0
      %4149 = vmatprep.subr.mxu0 0.0
      %4150 = vmatpush1.msra.mxu0 0.0
      %4151 = vmatprep.subr.mxu0 0.0
      %4152 = vmatpush1.msra.mxu0 0.0
      %4153 = vmatprep.subr.mxu0 0.0
      %4154 = vmatpush1.msra.mxu0 0.0
      %4155 = vmatprep.subr.mxu0 0.0
      %4156 = vmatpush1.msra.mxu0 0.0
      %4157 = vmatprep.subr.mxu0 0.0
      %4158 = vmatpush1.msra.mxu0 0.0
      %4159 = vmatprep.mubr.f32.mxu0 0.0
      %4160 = vmatmul.mubr.f32.gmra.mrb[0].mxu0 %v4090
      %v4161 = vpop.f32.mrb[0].mxu0
      %v4162 = vadd.f32 0.0, %v4161
      %v4163 = vpop.f32.mrb[0].mxu0
      %4164 = vmatprep.mubr.f32.mxu0 0.0
      %4165 = vmatmul.mubr.f32.gmra.mrb[0].mxu0 %v4093
      %v4166 = vpop.f32.mrb[0].mxu0
      %v4167 = vadd.f32 0.0, %v4166
      %v4168 = vpop.f32.mrb[0].mxu0
      %4169 = vdwg.mxu0
      %v4170 = vadd.f32 %v4075, %v4162
      %v4171 = vadd.f32 %v4076, %v4167
      %v4172 = vld [vmem:[%s1187 + $0x1] sm:$0xff]
      %v4173 = vld [vmem:[%s1187 + $0x9] sm:$0xff]
      %s4174 = scalar_lea.vmem %s3, 288
      %v4175 = vld [vmem:[%s4174] sm:$0xff]
      %v4176 = vld [vmem:[%s4174 + $0x8] sm:$0xff]
      %v4177 = vld [vmem:[%s4174 + $0x10] sm:$0xff]
      %v4178 = vld [vmem:[%s4174 + $0x18] sm:$0xff]
      %v4179 = vld [vmem:[%s4174 + $0x20] sm:$0xff]
      %v4180 = vld [vmem:[%s4174 + $0x28] sm:$0xff]
      %v4181 = vld [vmem:[%s4174 + $0x30] sm:$0xff]
      %v4182 = vld [vmem:[%s4174 + $0x38] sm:$0xff]
      %v4183 = vld [vmem:[%s4174 + $0x40] sm:$0xff]
      %v4185 = vsel %vm225, %v4172, 0
      %v4188 = vsel %vm225, %v4173, 0
      %4190 = vmatprep.subr.mxu0 0.0
      %4191 = vmatpush1.msra.mxu0 %v4175
      %4192 = vmatprep.subr.mxu0 0.0
      %4193 = vmatpush1.msra.mxu0 %v4176
      %4194 = vmatprep.subr.mxu0 0.0
      %4195 = vmatpush1.msra.mxu0 %v4177
      %4196 = vmatprep.subr.mxu0 0.0
      %4197 = vmatpush1.msra.mxu0 %v4178
      %4198 = vmatprep.subr.mxu0 0.0
      %4199 = vmatpush1.msra.mxu0 %v4179
      %4200 = vmatprep.subr.mxu0 0.0
      %4201 = vmatpush1.msra.mxu0 %v4180
      %4202 = vmatprep.subr.mxu0 0.0
      %4203 = vmatpush1.msra.mxu0 %v4181
      %4204 = vmatprep.subr.mxu0 0.0
      %4205 = vmatpush1.msra.mxu0 %v4182
      %4206 = vmatprep.subr.mxu0 0.0
      %4207 = vmatpush1.msra.mxu0 %v4183
      %4208 = vmatprep.subr.mxu0 0.0
      %4209 = vmatpush1.msra.mxu0 0.0
      %4210 = vmatprep.subr.mxu0 0.0
      %4211 = vmatpush1.msra.mxu0 0.0
      %4212 = vmatprep.subr.mxu0 0.0
      %4213 = vmatpush1.msra.mxu0 0.0
      %4214 = vmatprep.subr.mxu0 0.0
      %4215 = vmatpush1.msra.mxu0 0.0
      %4216 = vmatprep.subr.mxu0 0.0
      %4217 = vmatpush1.msra.mxu0 0.0
      %4218 = vmatprep.subr.mxu0 0.0
      %4219 = vmatpush1.msra.mxu0 0.0
      %4220 = vmatprep.subr.mxu0 0.0
      %4221 = vmatpush1.msra.mxu0 0.0
      %4222 = vmatprep.subr.mxu0 0.0
      %4223 = vmatpush1.msra.mxu0 0.0
      %4224 = vmatprep.subr.mxu0 0.0
      %4225 = vmatpush1.msra.mxu0 0.0
      %4226 = vmatprep.subr.mxu0 0.0
      %4227 = vmatpush1.msra.mxu0 0.0
      %4228 = vmatprep.subr.mxu0 0.0
      %4229 = vmatpush1.msra.mxu0 0.0
      %4230 = vmatprep.subr.mxu0 0.0
      %4231 = vmatpush1.msra.mxu0 0.0
      %4232 = vmatprep.subr.mxu0 0.0
      %4233 = vmatpush1.msra.mxu0 0.0
      %4234 = vmatprep.subr.mxu0 0.0
      %4235 = vmatpush1.msra.mxu0 0.0
      %4236 = vmatprep.subr.mxu0 0.0
      %4237 = vmatpush1.msra.mxu0 0.0
      %4238 = vmatprep.subr.mxu0 0.0
      %4239 = vmatpush1.msra.mxu0 0.0
      %4240 = vmatprep.subr.mxu0 0.0
      %4241 = vmatpush1.msra.mxu0 0.0
      %4242 = vmatprep.subr.mxu0 0.0
      %4243 = vmatpush1.msra.mxu0 0.0
      %4244 = vmatprep.subr.mxu0 0.0
      %4245 = vmatpush1.msra.mxu0 0.0
      %4246 = vmatprep.subr.mxu0 0.0
      %4247 = vmatpush1.msra.mxu0 0.0
      %4248 = vmatprep.subr.mxu0 0.0
      %4249 = vmatpush1.msra.mxu0 0.0
      %4250 = vmatprep.subr.mxu0 0.0
      %4251 = vmatpush1.msra.mxu0 0.0
      %4252 = vmatprep.subr.mxu0 0.0
      %4253 = vmatpush1.msra.mxu0 0.0
      %4254 = vmatprep.mubr.f32.mxu0 0.0
      %4255 = vmatmul.mubr.f32.gmra.mrb[0].mxu0 %v4185
      %v4256 = vpop.f32.mrb[0].mxu0
      %v4257 = vadd.f32 0.0, %v4256
      %v4258 = vpop.f32.mrb[0].mxu0
      %4259 = vmatprep.mubr.f32.mxu0 0.0
      %4260 = vmatmul.mubr.f32.gmra.mrb[0].mxu0 %v4188
      %v4261 = vpop.f32.mrb[0].mxu0
      %v4262 = vadd.f32 0.0, %v4261
      %v4263 = vpop.f32.mrb[0].mxu0
      %4264 = vdwg.mxu0
      %v4265 = vadd.f32 %v4170, %v4257
      %v4266 = vadd.f32 %v4171, %v4262
      %v4267 = vld [vmem:[%s1187 + $0x2] sm:$0xff]
      %v4268 = vld [vmem:[%s1187 + $0xa] sm:$0xff]
      %s4269 = scalar_lea.vmem %s3, 360
      %v4270 = vld [vmem:[%s4269] sm:$0xff]
      %v4271 = vld [vmem:[%s4269 + $0x8] sm:$0xff]
      %v4272 = vld [vmem:[%s4269 + $0x10] sm:$0xff]
      %v4273 = vld [vmem:[%s4269 + $0x18] sm:$0xff]
      %v4274 = vld [vmem:[%s4269 + $0x20] sm:$0xff]
      %v4275 = vld [vmem:[%s4269 + $0x28] sm:$0xff]
      %v4276 = vld [vmem:[%s4269 + $0x30] sm:$0xff]
      %v4277 = vld [vmem:[%s4269 + $0x38] sm:$0xff]
      %v4278 = vld [vmem:[%s4269 + $0x40] sm:$0xff]
      %v4280 = vsel %vm225, %v4267, 0
      %v4283 = vsel %vm225, %v4268, 0
      %4285 = vmatprep.subr.mxu0 0.0
      %4286 = vmatpush1.msra.mxu0 %v4270
      %4287 = vmatprep.subr.mxu0 0.0
      %4288 = vmatpush1.msra.mxu0 %v4271
      %4289 = vmatprep.subr.mxu0 0.0
      %4290 = vmatpush1.msra.mxu0 %v4272
      %4291 = vmatprep.subr.mxu0 0.0
      %4292 = vmatpush1.msra.mxu0 %v4273
      %4293 = vmatprep.subr.mxu0 0.0
      %4294 = vmatpush1.msra.mxu0 %v4274
      %4295 = vmatprep.subr.mxu0 0.0
      %4296 = vmatpush1.msra.mxu0 %v4275
      %4297 = vmatprep.subr.mxu0 0.0
      %4298 = vmatpush1.msra.mxu0 %v4276
      %4299 = vmatprep.subr.mxu0 0.0
      %4300 = vmatpush1.msra.mxu0 %v4277
      %4301 = vmatprep.subr.mxu0 0.0
      %4302 = vmatpush1.msra.mxu0 %v4278
      %4303 = vmatprep.subr.mxu0 0.0
      %4304 = vmatpush1.msra.mxu0 0.0
      %4305 = vmatprep.subr.mxu0 0.0
      %4306 = vmatpush1.msra.mxu0 0.0
      %4307 = vmatprep.subr.mxu0 0.0
      %4308 = vmatpush1.msra.mxu0 0.0
      %4309 = vmatprep.subr.mxu0 0.0
      %4310 = vmatpush1.msra.mxu0 0.0
      %4311 = vmatprep.subr.mxu0 0.0
      %4312 = vmatpush1.msra.mxu0 0.0
      %4313 = vmatprep.subr.mxu0 0.0
      %4314 = vmatpush1.msra.mxu0 0.0
      %4315 = vmatprep.subr.mxu0 0.0
      %4316 = vmatpush1.msra.mxu0 0.0
      %4317 = vmatprep.subr.mxu0 0.0
      %4318 = vmatpush1.msra.mxu0 0.0
      %4319 = vmatprep.subr.mxu0 0.0
      %4320 = vmatpush1.msra.mxu0 0.0
      %4321 = vmatprep.subr.mxu0 0.0
      %4322 = vmatpush1.msra.mxu0 0.0
      %4323 = vmatprep.subr.mxu0 0.0
      %4324 = vmatpush1.msra.mxu0 0.0
      %4325 = vmatprep.subr.mxu0 0.0
      %4326 = vmatpush1.msra.mxu0 0.0
      %4327 = vmatprep.subr.mxu0 0.0
      %4328 = vmatpush1.msra.mxu0 0.0
      %4329 = vmatprep.subr.mxu0 0.0
      %4330 = vmatpush1.msra.mxu0 0.0
      %4331 = vmatprep.subr.mxu0 0.0
      %4332 = vmatpush1.msra.mxu0 0.0
      %4333 = vmatprep.subr.mxu0 0.0
      %4334 = vmatpush1.msra.mxu0 0.0
      %4335 = vmatprep.subr.mxu0 0.0
      %4336 = vmatpush1.msra.mxu0 0.0
      %4337 = vmatprep.subr.mxu0 0.0
      %4338 = vmatpush1.msra.mxu0 0.0
      %4339 = vmatprep.subr.mxu0 0.0
      %4340 = vmatpush1.msra.mxu0 0.0
      %4341 = vmatprep.subr.mxu0 0.0
      %4342 = vmatpush1.msra.mxu0 0.0
      %4343 = vmatprep.subr.mxu0 0.0
      %4344 = vmatpush1.msra.mxu0 0.0
      %4345 = vmatprep.subr.mxu0 0.0
      %4346 = vmatpush1.msra.mxu0 0.0
      %4347 = vmatprep.subr.mxu0 0.0
      %4348 = vmatpush1.msra.mxu0 0.0
      %4349 = vmatprep.mubr.f32.mxu0 0.0
      %4350 = vmatmul.mubr.f32.gmra.mrb[0].mxu0 %v4280
      %v4351 = vpop.f32.mrb[0].mxu0
      %v4352 = vadd.f32 0.0, %v4351
      %v4353 = vpop.f32.mrb[0].mxu0
      %4354 = vmatprep.mubr.f32.mxu0 0.0
      %4355 = vmatmul.mubr.f32.gmra.mrb[0].mxu0 %v4283
      %v4356 = vpop.f32.mrb[0].mxu0
      %v4357 = vadd.f32 0.0, %v4356
      %v4358 = vpop.f32.mrb[0].mxu0
      %4359 = vdwg.mxu0
      %v4360 = vadd.f32 %v4265, %v4352
      %v4361 = vadd.f32 %v4266, %v4357
      %v4362 = vld [vmem:[%s2056] sm:$0xff]
      %v4363 = vld [vmem:[%s2056 + $0x8] sm:$0xff]
      %s4364 = scalar_lea.vmem %s3, 432
      %v4365 = vld [vmem:[%s4364] sm:$0xff]
      %v4366 = vld [vmem:[%s4364 + $0x8] sm:$0xff]
      %v4367 = vld [vmem:[%s4364 + $0x10] sm:$0xff]
      %v4368 = vld [vmem:[%s4364 + $0x18] sm:$0xff]
      %v4369 = vld [vmem:[%s4364 + $0x20] sm:$0xff]
      %v4370 = vld [vmem:[%s4364 + $0x28] sm:$0xff]
      %v4371 = vld [vmem:[%s4364 + $0x30] sm:$0xff]
      %v4372 = vld [vmem:[%s4364 + $0x38] sm:$0xff]
      %v4373 = vld [vmem:[%s4364 + $0x40] sm:$0xff]
      %v4375 = vsel %vm225, %v4362, 0
      %v4378 = vsel %vm225, %v4363, 0
      %4380 = vmatprep.subr.mxu0 0.0
      %4381 = vmatpush1.msra.mxu0 %v4365
      %4382 = vmatprep.subr.mxu0 0.0
      %4383 = vmatpush1.msra.mxu0 %v4366
      %4384 = vmatprep.subr.mxu0 0.0
      %4385 = vmatpush1.msra.mxu0 %v4367
      %4386 = vmatprep.subr.mxu0 0.0
      %4387 = vmatpush1.msra.mxu0 %v4368
      %4388 = vmatprep.subr.mxu0 0.0
      %4389 = vmatpush1.msra.mxu0 %v4369
      %4390 = vmatprep.subr.mxu0 0.0
      %4391 = vmatpush1.msra.mxu0 %v4370
      %4392 = vmatprep.subr.mxu0 0.0
      %4393 = vmatpush1.msra.mxu0 %v4371
      %4394 = vmatprep.subr.mxu0 0.0
      %4395 = vmatpush1.msra.mxu0 %v4372
      %4396 = vmatprep.subr.mxu0 0.0
      %4397 = vmatpush1.msra.mxu0 %v4373
      %4398 = vmatprep.subr.mxu0 0.0
      %4399 = vmatpush1.msra.mxu0 0.0
      %4400 = vmatprep.subr.mxu0 0.0
      %4401 = vmatpush1.msra.mxu0 0.0
      %4402 = vmatprep.subr.mxu0 0.0
      %4403 = vmatpush1.msra.mxu0 0.0
      %4404 = vmatprep.subr.mxu0 0.0
      %4405 = vmatpush1.msra.mxu0 0.0
      %4406 = vmatprep.subr.mxu0 0.0
      %4407 = vmatpush1.msra.mxu0 0.0
      %4408 = vmatprep.subr.mxu0 0.0
      %4409 = vmatpush1.msra.mxu0 0.0
      %4410 = vmatprep.subr.mxu0 0.0
      %4411 = vmatpush1.msra.mxu0 0.0
      %4412 = vmatprep.subr.mxu0 0.0
      %4413 = vmatpush1.msra.mxu0 0.0
      %4414 = vmatprep.subr.mxu0 0.0
      %4415 = vmatpush1.msra.mxu0 0.0
      %4416 = vmatprep.subr.mxu0 0.0
      %4417 = vmatpush1.msra.mxu0 0.0
      %4418 = vmatprep.subr.mxu0 0.0
      %4419 = vmatpush1.msra.mxu0 0.0
      %4420 = vmatprep.subr.mxu0 0.0
      %4421 = vmatpush1.msra.mxu0 0.0
      %4422 = vmatprep.subr.mxu0 0.0
      %4423 = vmatpush1.msra.mxu0 0.0
      %4424 = vmatprep.subr.mxu0 0.0
      %4425 = vmatpush1.msra.mxu0 0.0
      %4426 = vmatprep.subr.mxu0 0.0
      %4427 = vmatpush1.msra.mxu0 0.0
      %4428 = vmatprep.subr.mxu0 0.0
      %4429 = vmatpush1.msra.mxu0 0.0
      %4430 = vmatprep.subr.mxu0 0.0
      %4431 = vmatpush1.msra.mxu0 0.0
      %4432 = vmatprep.subr.mxu0 0.0
      %4433 = vmatpush1.msra.mxu0 0.0
      %4434 = vmatprep.subr.mxu0 0.0
      %4435 = vmatpush1.msra.mxu0 0.0
      %4436 = vmatprep.subr.mxu0 0.0
      %4437 = vmatpush1.msra.mxu0 0.0
      %4438 = vmatprep.subr.mxu0 0.0
      %4439 = vmatpush1.msra.mxu0 0.0
      %4440 = vmatprep.subr.mxu0 0.0
      %4441 = vmatpush1.msra.mxu0 0.0
      %4442 = vmatprep.subr.mxu0 0.0
      %4443 = vmatpush1.msra.mxu0 0.0
      %4444 = vmatprep.mubr.f32.mxu0 0.0
      %4445 = vmatmul.mubr.f32.gmra.mrb[0].mxu0 %v4375
      %v4446 = vpop.f32.mrb[0].mxu0
      %v4447 = vadd.f32 0.0, %v4446
      %v4448 = vpop.f32.mrb[0].mxu0
      %4449 = vmatprep.mubr.f32.mxu0 0.0
      %4450 = vmatmul.mubr.f32.gmra.mrb[0].mxu0 %v4378
      %v4451 = vpop.f32.mrb[0].mxu0
      %v4452 = vadd.f32 0.0, %v4451
      %v4453 = vpop.f32.mrb[0].mxu0
      %4454 = vdwg.mxu0
      %v4455 = vadd.f32 %v4360, %v4447
      %v4456 = vadd.f32 %v4361, %v4452
      %v4457 = vld [vmem:[%s2056 + $0x1] sm:$0xff]
      %v4458 = vld [vmem:[%s2056 + $0x9] sm:$0xff]
      %s4459 = scalar_lea.vmem %s3, 504
      %v4460 = vld [vmem:[%s4459] sm:$0xff]
      %v4461 = vld [vmem:[%s4459 + $0x8] sm:$0xff]
      %v4462 = vld [vmem:[%s4459 + $0x10] sm:$0xff]
      %v4463 = vld [vmem:[%s4459 + $0x18] sm:$0xff]
      %v4464 = vld [vmem:[%s4459 + $0x20] sm:$0xff]
      %v4465 = vld [vmem:[%s4459 + $0x28] sm:$0xff]
      %v4466 = vld [vmem:[%s4459 + $0x30] sm:$0xff]
      %v4467 = vld [vmem:[%s4459 + $0x38] sm:$0xff]
      %v4468 = vld [vmem:[%s4459 + $0x40] sm:$0xff]
      %v4470 = vsel %vm225, %v4457, 0
      %v4473 = vsel %vm225, %v4458, 0
      %4475 = vmatprep.subr.mxu0 0.0
      %4476 = vmatpush1.msra.mxu0 %v4460
      %4477 = vmatprep.subr.mxu0 0.0
      %4478 = vmatpush1.msra.mxu0 %v4461
      %4479 = vmatprep.subr.mxu0 0.0
      %4480 = vmatpush1.msra.mxu0 %v4462
      %4481 = vmatprep.subr.mxu0 0.0
      %4482 = vmatpush1.msra.mxu0 %v4463
      %4483 = vmatprep.subr.mxu0 0.0
      %4484 = vmatpush1.msra.mxu0 %v4464
      %4485 = vmatprep.subr.mxu0 0.0
      %4486 = vmatpush1.msra.mxu0 %v4465
      %4487 = vmatprep.subr.mxu0 0.0
      %4488 = vmatpush1.msra.mxu0 %v4466
      %4489 = vmatprep.subr.mxu0 0.0
      %4490 = vmatpush1.msra.mxu0 %v4467
      %4491 = vmatprep.subr.mxu0 0.0
      %4492 = vmatpush1.msra.mxu0 %v4468
      %4493 = vmatprep.subr.mxu0 0.0
      %4494 = vmatpush1.msra.mxu0 0.0
      %4495 = vmatprep.subr.mxu0 0.0
      %4496 = vmatpush1.msra.mxu0 0.0
      %4497 = vmatprep.subr.mxu0 0.0
      %4498 = vmatpush1.msra.mxu0 0.0
      %4499 = vmatprep.subr.mxu0 0.0
      %4500 = vmatpush1.msra.mxu0 0.0
      %4501 = vmatprep.subr.mxu0 0.0
      %4502 = vmatpush1.msra.mxu0 0.0
      %4503 = vmatprep.subr.mxu0 0.0
      %4504 = vmatpush1.msra.mxu0 0.0
      %4505 = vmatprep.subr.mxu0 0.0
      %4506 = vmatpush1.msra.mxu0 0.0
      %4507 = vmatprep.subr.mxu0 0.0
      %4508 = vmatpush1.msra.mxu0 0.0
      %4509 = vmatprep.subr.mxu0 0.0
      %4510 = vmatpush1.msra.mxu0 0.0
      %4511 = vmatprep.subr.mxu0 0.0
      %4512 = vmatpush1.msra.mxu0 0.0
      %4513 = vmatprep.subr.mxu0 0.0
      %4514 = vmatpush1.msra.mxu0 0.0
      %4515 = vmatprep.subr.mxu0 0.0
      %4516 = vmatpush1.msra.mxu0 0.0
      %4517 = vmatprep.subr.mxu0 0.0
      %4518 = vmatpush1.msra.mxu0 0.0
      %4519 = vmatprep.subr.mxu0 0.0
      %4520 = vmatpush1.msra.mxu0 0.0
      %4521 = vmatprep.subr.mxu0 0.0
      %4522 = vmatpush1.msra.mxu0 0.0
      %4523 = vmatprep.subr.mxu0 0.0
      %4524 = vmatpush1.msra.mxu0 0.0
      %4525 = vmatprep.subr.mxu0 0.0
      %4526 = vmatpush1.msra.mxu0 0.0
      %4527 = vmatprep.subr.mxu0 0.0
      %4528 = vmatpush1.msra.mxu0 0.0
      %4529 = vmatprep.subr.mxu0 0.0
      %4530 = vmatpush1.msra.mxu0 0.0
      %4531 = vmatprep.subr.mxu0 0.0
      %4532 = vmatpush1.msra.mxu0 0.0
      %4533 = vmatprep.subr.mxu0 0.0
      %4534 = vmatpush1.msra.mxu0 0.0
      %4535 = vmatprep.subr.mxu0 0.0
      %4536 = vmatpush1.msra.mxu0 0.0
      %4537 = vmatprep.subr.mxu0 0.0
      %4538 = vmatpush1.msra.mxu0 0.0
      %4539 = vmatprep.mubr.f32.mxu0 0.0
      %4540 = vmatmul.mubr.f32.gmra.mrb[0].mxu0 %v4470
      %v4541 = vpop.f32.mrb[0].mxu0
      %v4542 = vadd.f32 0.0, %v4541
      %v4543 = vpop.f32.mrb[0].mxu0
      %4544 = vmatprep.mubr.f32.mxu0 0.0
      %4545 = vmatmul.mubr.f32.gmra.mrb[0].mxu0 %v4473
      %v4546 = vpop.f32.mrb[0].mxu0
      %v4547 = vadd.f32 0.0, %v4546
      %v4548 = vpop.f32.mrb[0].mxu0
      %4549 = vdwg.mxu0
      %v4550 = vadd.f32 %v4455, %v4542
      %v4551 = vadd.f32 %v4456, %v4547
      %v4552 = vld [vmem:[%s2056 + $0x2] sm:$0xff]
      %v4553 = vld [vmem:[%s2056 + $0xa] sm:$0xff]
      %s4554 = scalar_lea.vmem %s3, 576
      %v4555 = vld [vmem:[%s4554] sm:$0xff]
      %v4556 = vld [vmem:[%s4554 + $0x8] sm:$0xff]
      %v4557 = vld [vmem:[%s4554 + $0x10] sm:$0xff]
      %v4558 = vld [vmem:[%s4554 + $0x18] sm:$0xff]
      %v4559 = vld [vmem:[%s4554 + $0x20] sm:$0xff]
      %v4560 = vld [vmem:[%s4554 + $0x28] sm:$0xff]
      %v4561 = vld [vmem:[%s4554 + $0x30] sm:$0xff]
      %v4562 = vld [vmem:[%s4554 + $0x38] sm:$0xff]
      %v4563 = vld [vmem:[%s4554 + $0x40] sm:$0xff]
      %v4565 = vsel %vm225, %v4552, 0
      %v4568 = vsel %vm225, %v4553, 0
      %4570 = vmatprep.subr.mxu0 0.0
      %4571 = vmatpush1.msra.mxu0 %v4555
      %4572 = vmatprep.subr.mxu0 0.0
      %4573 = vmatpush1.msra.mxu0 %v4556
      %4574 = vmatprep.subr.mxu0 0.0
      %4575 = vmatpush1.msra.mxu0 %v4557
      %4576 = vmatprep.subr.mxu0 0.0
      %4577 = vmatpush1.msra.mxu0 %v4558
      %4578 = vmatprep.subr.mxu0 0.0
      %4579 = vmatpush1.msra.mxu0 %v4559
      %4580 = vmatprep.subr.mxu0 0.0
      %4581 = vmatpush1.msra.mxu0 %v4560
      %4582 = vmatprep.subr.mxu0 0.0
      %4583 = vmatpush1.msra.mxu0 %v4561
      %4584 = vmatprep.subr.mxu0 0.0
      %4585 = vmatpush1.msra.mxu0 %v4562
      %4586 = vmatprep.subr.mxu0 0.0
      %4587 = vmatpush1.msra.mxu0 %v4563
      %4588 = vmatprep.subr.mxu0 0.0
      %4589 = vmatpush1.msra.mxu0 0.0
      %4590 = vmatprep.subr.mxu0 0.0
      %4591 = vmatpush1.msra.mxu0 0.0
      %4592 = vmatprep.subr.mxu0 0.0
      %4593 = vmatpush1.msra.mxu0 0.0
      %4594 = vmatprep.subr.mxu0 0.0
      %4595 = vmatpush1.msra.mxu0 0.0
      %4596 = vmatprep.subr.mxu0 0.0
      %4597 = vmatpush1.msra.mxu0 0.0
      %4598 = vmatprep.subr.mxu0 0.0
      %4599 = vmatpush1.msra.mxu0 0.0
      %4600 = vmatprep.subr.mxu0 0.0
      %4601 = vmatpush1.msra.mxu0 0.0
      %4602 = vmatprep.subr.mxu0 0.0
      %4603 = vmatpush1.msra.mxu0 0.0
      %4604 = vmatprep.subr.mxu0 0.0
      %4605 = vmatpush1.msra.mxu0 0.0
      %4606 = vmatprep.subr.mxu0 0.0
      %4607 = vmatpush1.msra.mxu0 0.0
      %4608 = vmatprep.subr.mxu0 0.0
      %4609 = vmatpush1.msra.mxu0 0.0
      %4610 = vmatprep.subr.mxu0 0.0
      %4611 = vmatpush1.msra.mxu0 0.0
      %4612 = vmatprep.subr.mxu0 0.0
      %4613 = vmatpush1.msra.mxu0 0.0
      %4614 = vmatprep.subr.mxu0 0.0
      %4615 = vmatpush1.msra.mxu0 0.0
      %4616 = vmatprep.subr.mxu0 0.0
      %4617 = vmatpush1.msra.mxu0 0.0
      %4618 = vmatprep.subr.mxu0 0.0
      %4619 = vmatpush1.msra.mxu0 0.0
      %4620 = vmatprep.subr.mxu0 0.0
      %4621 = vmatpush1.msra.mxu0 0.0
      %4622 = vmatprep.subr.mxu0 0.0
      %4623 = vmatpush1.msra.mxu0 0.0
      %4624 = vmatprep.subr.mxu0 0.0
      %4625 = vmatpush1.msra.mxu0 0.0
      %4626 = vmatprep.subr.mxu0 0.0
      %4627 = vmatpush1.msra.mxu0 0.0
      %4628 = vmatprep.subr.mxu0 0.0
      %4629 = vmatpush1.msra.mxu0 0.0
      %4630 = vmatprep.subr.mxu0 0.0
      %4631 = vmatpush1.msra.mxu0 0.0
      %4632 = vmatprep.subr.mxu0 0.0
      %4633 = vmatpush1.msra.mxu0 0.0
      %4634 = vmatprep.mubr.f32.mxu0 0.0
      %4635 = vmatmul.mubr.f32.gmra.mrb[0].mxu0 %v4565
      %v4636 = vpop.f32.mrb[0].mxu0
      %v4637 = vadd.f32 0.0, %v4636
      %v4638 = vpop.f32.mrb[0].mxu0
      %4639 = vmatprep.mubr.f32.mxu0 0.0
      %4640 = vmatmul.mubr.f32.gmra.mrb[0].mxu0 %v4568
      %v4641 = vpop.f32.mrb[0].mxu0
      %v4642 = vadd.f32 0.0, %v4641
      %v4643 = vpop.f32.mrb[0].mxu0
      %4644 = vdwg.mxu0
      %v4645 = vadd.f32 %v4550, %v4637
      %v4646 = vadd.f32 %v4551, %v4642
      %v4647 = vld [vmem:[%s4] sm:$0x1]
      %v4649 = vlaneseq
      %v4650 = vshrl.u32 %v4649, 7
      %v4651 = vsub.s32 0, %v4650
      %v4652 = vrot.slane %v4647, %v4651
      %v4654 = vadd.f32 %v4645, %v4652
      %v4655 = vadd.f32 %v4646, %v4652
      %vm4656 = vcmp.gt.f32.partialorder %v4654, 0.0
      %vm4657 = vcmp.gt.f32.partialorder %v4655, 0.0
      %v4658 = vmul.f32 %v4654, 0.04
      %v4659 = vmul.f32 %v4655, 0.04
      %v4660 = vsel %vm4656, %v4654, %v4658
      %v4661 = vsel %vm4657, %v4655, %v4659
      %4664 = vrot.lane.b32.xlu0 %v4660, 4
      %v4665 = vpop.permute.xlu0 %4664
      %4666 = vrot.lane.b32.xlu0 %v4661, 4
      %v4667 = vpop.permute.xlu0 %4666
      %v4670 = vadd.f32 %v4172, %v4665
      %v4671 = vadd.f32 %v4173, %v4667
      %4674 = vrot.lane.b32.xlu0 %v4670, 124
      %v4675 = vpop.permute.xlu0 %4674
      %4676 = vrot.lane.b32.xlu0 %v4671, 124
      %v4677 = vpop.permute.xlu0 %4676
      %vm4680 = vcmask 523264
      %4681 = vst.msk [vmem:[%s224] sm:$0xff] %vm4680, %v4675
      %4682 = vst.msk [vmem:[%s224 + $0x8] sm:$0xff] %vm4680, %v4677
      %v4683 = vld [vmem:[%s1187] sm:$0xff]
      %v4684 = vld [vmem:[%s1187 + $0x8] sm:$0xff]
      %v4685 = vld [vmem:[%s3] sm:$0xff]
      %v4686 = vld [vmem:[%s3 + $0x8] sm:$0xff]
      %v4687 = vld [vmem:[%s3 + $0x10] sm:$0xff]
      %v4688 = vld [vmem:[%s3 + $0x18] sm:$0xff]
      %v4689 = vld [vmem:[%s3 + $0x20] sm:$0xff]
      %v4690 = vld [vmem:[%s3 + $0x28] sm:$0xff]
      %v4691 = vld [vmem:[%s3 + $0x30] sm:$0xff]
      %v4692 = vld [vmem:[%s3 + $0x38] sm:$0xff]
      %v4693 = vld [vmem:[%s3 + $0x40] sm:$0xff]
      %v4694 = vld [vmem:[%s1187 + $0x1] sm:$0xff]
      %v4695 = vld [vmem:[%s1187 + $0x9] sm:$0xff]
      %v4696 = vld [vmem:[%s3810] sm:$0xff]
      %v4697 = vld [vmem:[%s3810 + $0x8] sm:$0xff]
      %v4698 = vld [vmem:[%s3810 + $0x10] sm:$0xff]
      %v4699 = vld [vmem:[%s3810 + $0x18] sm:$0xff]
      %v4700 = vld [vmem:[%s3810 + $0x20] sm:$0xff]
      %v4701 = vld [vmem:[%s3810 + $0x28] sm:$0xff]
      %v4702 = vld [vmem:[%s3810 + $0x30] sm:$0xff]
      %v4703 = vld [vmem:[%s3810 + $0x38] sm:$0xff]
      %v4704 = vld [vmem:[%s3810 + $0x40] sm:$0xff]
      %v4706 = vsel %vm225, %v4694, 0
      %v4709 = vsel %vm225, %v4695, 0
      %4711 = vmatprep.subr.mxu0 0.0
      %4712 = vmatpush1.msra.mxu0 %v4696
      %4713 = vmatprep.subr.mxu0 0.0
      %4714 = vmatpush1.msra.mxu0 %v4697
      %4715 = vmatprep.subr.mxu0 0.0
      %4716 = vmatpush1.msra.mxu0 %v4698
      %4717 = vmatprep.subr.mxu0 0.0
      %4718 = vmatpush1.msra.mxu0 %v4699
      %4719 = vmatprep.subr.mxu0 0.0
      %4720 = vmatpush1.msra.mxu0 %v4700
      %4721 = vmatprep.subr.mxu0 0.0
      %4722 = vmatpush1.msra.mxu0 %v4701
      %4723 = vmatprep.subr.mxu0 0.0
      %4724 = vmatpush1.msra.mxu0 %v4702
      %4725 = vmatprep.subr.mxu0 0.0
      %4726 = vmatpush1.msra.mxu0 %v4703
      %4727 = vmatprep.subr.mxu0 0.0
      %4728 = vmatpush1.msra.mxu0 %v4704
      %4729 = vmatprep.subr.mxu0 0.0
      %4730 = vmatpush1.msra.mxu0 0.0
      %4731 = vmatprep.subr.mxu0 0.0
      %4732 = vmatpush1.msra.mxu0 0.0
      %4733 = vmatprep.subr.mxu0 0.0
      %4734 = vmatpush1.msra.mxu0 0.0
      %4735 = vmatprep.subr.mxu0 0.0
      %4736 = vmatpush1.msra.mxu0 0.0
      %4737 = vmatprep.subr.mxu0 0.0
      %4738 = vmatpush1.msra.mxu0 0.0
      %4739 = vmatprep.subr.mxu0 0.0
      %4740 = vmatpush1.msra.mxu0 0.0
      %4741 = vmatprep.subr.mxu0 0.0
      %4742 = vmatpush1.msra.mxu0 0.0
      %4743 = vmatprep.subr.mxu0 0.0
      %4744 = vmatpush1.msra.mxu0 0.0
      %4745 = vmatprep.subr.mxu0 0.0
      %4746 = vmatpush1.msra.mxu0 0.0
      %4747 = vmatprep.subr.mxu0 0.0
      %4748 = vmatpush1.msra.mxu0 0.0
      %4749 = vmatprep.subr.mxu0 0.0
      %4750 = vmatpush1.msra.mxu0 0.0
      %4751 = vmatprep.subr.mxu0 0.0
      %4752 = vmatpush1.msra.mxu0 0.0
      %4753 = vmatprep.subr.mxu0 0.0
      %4754 = vmatpush1.msra.mxu0 0.0
      %4755 = vmatprep.subr.mxu0 0.0
      %4756 = vmatpush1.msra.mxu0 0.0
      %4757 = vmatprep.subr.mxu0 0.0
      %4758 = vmatpush1.msra.mxu0 0.0
      %4759 = vmatprep.subr.mxu0 0.0
      %4760 = vmatpush1.msra.mxu0 0.0
      %4761 = vmatprep.subr.mxu0 0.0
      %4762 = vmatpush1.msra.mxu0 0.0
      %4763 = vmatprep.subr.mxu0 0.0
      %4764 = vmatpush1.msra.mxu0 0.0
      %4765 = vmatprep.subr.mxu0 0.0
      %4766 = vmatpush1.msra.mxu0 0.0
      %4767 = vmatprep.subr.mxu0 0.0
      %4768 = vmatpush1.msra.mxu0 0.0
      %4769 = vmatprep.subr.mxu0 0.0
      %4770 = vmatpush1.msra.mxu0 0.0
      %4771 = vmatprep.subr.mxu0 0.0
      %4772 = vmatpush1.msra.mxu0 0.0
      %4773 = vmatprep.subr.mxu0 0.0
      %4774 = vmatpush1.msra.mxu0 0.0
      %4775 = vmatprep.mubr.f32.mxu0 0.0
      %4776 = vmatmul.mubr.f32.gmra.mrb[0].mxu0 %v4706
      %v4777 = vpop.f32.mrb[0].mxu0
      %v4778 = vadd.f32 0.0, %v4777
      %v4779 = vpop.f32.mrb[0].mxu0
      %4780 = vmatprep.mubr.f32.mxu0 0.0
      %4781 = vmatmul.mubr.f32.gmra.mrb[0].mxu0 %v4709
      %v4782 = vpop.f32.mrb[0].mxu0
      %v4783 = vadd.f32 0.0, %v4782
      %v4784 = vpop.f32.mrb[0].mxu0
      %4785 = vdwg.mxu0
      %v4787 = vsel %vm225, %v4683, 0
      %v4790 = vsel %vm225, %v4684, 0
      %4792 = vmatprep.subr.mxu0 0.0
      %4793 = vmatpush1.msra.mxu0 %v4685
      %4794 = vmatprep.subr.mxu0 0.0
      %4795 = vmatpush1.msra.mxu0 %v4686
      %4796 = vmatprep.subr.mxu0 0.0
      %4797 = vmatpush1.msra.mxu0 %v4687
      %4798 = vmatprep.subr.mxu0 0.0
      %4799 = vmatpush1.msra.mxu0 %v4688
      %4800 = vmatprep.subr.mxu0 0.0
      %4801 = vmatpush1.msra.mxu0 %v4689
      %4802 = vmatprep.subr.mxu0 0.0
      %4803 = vmatpush1.msra.mxu0 %v4690
      %4804 = vmatprep.subr.mxu0 0.0
      %4805 = vmatpush1.msra.mxu0 %v4691
      %4806 = vmatprep.subr.mxu0 0.0
      %4807 = vmatpush1.msra.mxu0 %v4692
      %4808 = vmatprep.subr.mxu0 0.0
      %4809 = vmatpush1.msra.mxu0 %v4693
      %4810 = vmatprep.subr.mxu0 0.0
      %4811 = vmatpush1.msra.mxu0 0.0
      %4812 = vmatprep.subr.mxu0 0.0
      %4813 = vmatpush1.msra.mxu0 0.0
      %4814 = vmatprep.subr.mxu0 0.0
      %4815 = vmatpush1.msra.mxu0 0.0
      %4816 = vmatprep.subr.mxu0 0.0
      %4817 = vmatpush1.msra.mxu0 0.0
      %4818 = vmatprep.subr.mxu0 0.0
      %4819 = vmatpush1.msra.mxu0 0.0
      %4820 = vmatprep.subr.mxu0 0.0
      %4821 = vmatpush1.msra.mxu0 0.0
      %4822 = vmatprep.subr.mxu0 0.0
      %4823 = vmatpush1.msra.mxu0 0.0
      %4824 = vmatprep.subr.mxu0 0.0
      %4825 = vmatpush1.msra.mxu0 0.0
      %4826 = vmatprep.subr.mxu0 0.0
      %4827 = vmatpush1.msra.mxu0 0.0
      %4828 = vmatprep.subr.mxu0 0.0
      %4829 = vmatpush1.msra.mxu0 0.0
      %4830 = vmatprep.subr.mxu0 0.0
      %4831 = vmatpush1.msra.mxu0 0.0
      %4832 = vmatprep.subr.mxu0 0.0
      %4833 = vmatpush1.msra.mxu0 0.0
      %4834 = vmatprep.subr.mxu0 0.0
      %4835 = vmatpush1.msra.mxu0 0.0
      %4836 = vmatprep.subr.mxu0 0.0
      %4837 = vmatpush1.msra.mxu0 0.0
      %4838 = vmatprep.subr.mxu0 0.0
      %4839 = vmatpush1.msra.mxu0 0.0
      %4840 = vmatprep.subr.mxu0 0.0
      %4841 = vmatpush1.msra.mxu0 0.0
      %4842 = vmatprep.subr.mxu0 0.0
      %4843 = vmatpush1.msra.mxu0 0.0
      %4844 = vmatprep.subr.mxu0 0.0
      %4845 = vmatpush1.msra.mxu0 0.0
      %4846 = vmatprep.subr.mxu0 0.0
      %4847 = vmatpush1.msra.mxu0 0.0
      %4848 = vmatprep.subr.mxu0 0.0
      %4849 = vmatpush1.msra.mxu0 0.0
      %4850 = vmatprep.subr.mxu0 0.0
      %4851 = vmatpush1.msra.mxu0 0.0
      %4852 = vmatprep.subr.mxu0 0.0
      %4853 = vmatpush1.msra.mxu0 0.0
      %4854 = vmatprep.subr.mxu0 0.0
      %4855 = vmatpush1.msra.mxu0 0.0
      %4856 = vmatprep.mubr.f32.mxu0 0.0
      %4857 = vmatmul.mubr.f32.gmra.mrb[0].mxu0 %v4787
      %v4858 = vpop.f32.mrb[0].mxu0
      %v4859 = vadd.f32 %v4778, %v4858
      %v4860 = vpop.f32.mrb[0].mxu0
      %4861 = vmatprep.mubr.f32.mxu0 0.0
      %4862 = vmatmul.mubr.f32.gmra.mrb[0].mxu0 %v4790
      %v4863 = vpop.f32.mrb[0].mxu0
      %v4864 = vadd.f32 %v4783, %v4863
      %v4865 = vpop.f32.mrb[0].mxu0
      %4866 = vdwg.mxu0
      %v4867 = vld [vmem:[%s1187 + $0x2] sm:$0xff]
      %v4868 = vld [vmem:[%s1187 + $0xa] sm:$0xff]
      %v4869 = vld [vmem:[%s3984] sm:$0xff]
      %v4870 = vld [vmem:[%s3984 + $0x8] sm:$0xff]
      %v4871 = vld [vmem:[%s3984 + $0x10] sm:$0xff]
      %v4872 = vld [vmem:[%s3984 + $0x18] sm:$0xff]
      %v4873 = vld [vmem:[%s3984 + $0x20] sm:$0xff]
      %v4874 = vld [vmem:[%s3984 + $0x28] sm:$0xff]
      %v4875 = vld [vmem:[%s3984 + $0x30] sm:$0xff]
      %v4876 = vld [vmem:[%s3984 + $0x38] sm:$0xff]
      %v4877 = vld [vmem:[%s3984 + $0x40] sm:$0xff]
      %v4879 = vsel %vm225, %v4867, 0
      %v4882 = vsel %vm225, %v4868, 0
      %4884 = vmatprep.subr.mxu0 0.0
      %4885 = vmatpush1.msra.mxu0 %v4869
      %4886 = vmatprep.subr.mxu0 0.0
      %4887 = vmatpush1.msra.mxu0 %v4870
      %4888 = vmatprep.subr.mxu0 0.0
      %4889 = vmatpush1.msra.mxu0 %v4871
      %4890 = vmatprep.subr.mxu0 0.0
      %4891 = vmatpush1.msra.mxu0 %v4872
      %4892 = vmatprep.subr.mxu0 0.0
      %4893 = vmatpush1.msra.mxu0 %v4873
      %4894 = vmatprep.subr.mxu0 0.0
      %4895 = vmatpush1.msra.mxu0 %v4874
      %4896 = vmatprep.subr.mxu0 0.0
      %4897 = vmatpush1.msra.mxu0 %v4875
      %4898 = vmatprep.subr.mxu0 0.0
      %4899 = vmatpush1.msra.mxu0 %v4876
      %4900 = vmatprep.subr.mxu0 0.0
      %4901 = vmatpush1.msra.mxu0 %v4877
      %4902 = vmatprep.subr.mxu0 0.0
      %4903 = vmatpush1.msra.mxu0 0.0
      %4904 = vmatprep.subr.mxu0 0.0
      %4905 = vmatpush1.msra.mxu0 0.0
      %4906 = vmatprep.subr.mxu0 0.0
      %4907 = vmatpush1.msra.mxu0 0.0
      %4908 = vmatprep.subr.mxu0 0.0
      %4909 = vmatpush1.msra.mxu0 0.0
      %4910 = vmatprep.subr.mxu0 0.0
      %4911 = vmatpush1.msra.mxu0 0.0
      %4912 = vmatprep.subr.mxu0 0.0
      %4913 = vmatpush1.msra.mxu0 0.0
      %4914 = vmatprep.subr.mxu0 0.0
      %4915 = vmatpush1.msra.mxu0 0.0
      %4916 = vmatprep.subr.mxu0 0.0
      %4917 = vmatpush1.msra.mxu0 0.0
      %4918 = vmatprep.subr.mxu0 0.0
      %4919 = vmatpush1.msra.mxu0 0.0
      %4920 = vmatprep.subr.mxu0 0.0
      %4921 = vmatpush1.msra.mxu0 0.0
      %4922 = vmatprep.subr.mxu0 0.0
      %4923 = vmatpush1.msra.mxu0 0.0
      %4924 = vmatprep.subr.mxu0 0.0
      %4925 = vmatpush1.msra.mxu0 0.0
      %4926 = vmatprep.subr.mxu0 0.0
      %4927 = vmatpush1.msra.mxu0 0.0
      %4928 = vmatprep.subr.mxu0 0.0
      %4929 = vmatpush1.msra.mxu0 0.0
      %4930 = vmatprep.subr.mxu0 0.0
      %4931 = vmatpush1.msra.mxu0 0.0
      %4932 = vmatprep.subr.mxu0 0.0
      %4933 = vmatpush1.msra.mxu0 0.0
      %4934 = vmatprep.subr.mxu0 0.0
      %4935 = vmatpush1.msra.mxu0 0.0
      %4936 = vmatprep.subr.mxu0 0.0
      %4937 = vmatpush1.msra.mxu0 0.0
      %4938 = vmatprep.subr.mxu0 0.0
      %4939 = vmatpush1.msra.mxu0 0.0
      %4940 = vmatprep.subr.mxu0 0.0
      %4941 = vmatpush1.msra.mxu0 0.0
      %4942 = vmatprep.subr.mxu0 0.0
      %4943 = vmatpush1.msra.mxu0 0.0
      %4944 = vmatprep.subr.mxu0 0.0
      %4945 = vmatpush1.msra.mxu0 0.0
      %4946 = vmatprep.subr.mxu0 0.0
      %4947 = vmatpush1.msra.mxu0 0.0
      %4948 = vmatprep.mubr.f32.mxu0 0.0
      %4949 = vmatmul.mubr.f32.gmra.mrb[0].mxu0 %v4879
      %v4950 = vpop.f32.mrb[0].mxu0
      %v4951 = vadd.f32 0.0, %v4950
      %v4952 = vpop.f32.mrb[0].mxu0
      %4953 = vmatprep.mubr.f32.mxu0 0.0
      %4954 = vmatmul.mubr.f32.gmra.mrb[0].mxu0 %v4882
      %v4955 = vpop.f32.mrb[0].mxu0
      %v4956 = vadd.f32 0.0, %v4955
      %v4957 = vpop.f32.mrb[0].mxu0
      %4958 = vdwg.mxu0
      %v4959 = vadd.f32 %v4859, %v4951
      %v4960 = vadd.f32 %v4864, %v4956
      %v4961 = vld [vmem:[%s2056] sm:$0xff]
      %v4962 = vld [vmem:[%s2056 + $0x8] sm:$0xff]
      %v4963 = vld [vmem:[%s4079] sm:$0xff]
      %v4964 = vld [vmem:[%s4079 + $0x8] sm:$0xff]
      %v4965 = vld [vmem:[%s4079 + $0x10] sm:$0xff]
      %v4966 = vld [vmem:[%s4079 + $0x18] sm:$0xff]
      %v4967 = vld [vmem:[%s4079 + $0x20] sm:$0xff]
      %v4968 = vld [vmem:[%s4079 + $0x28] sm:$0xff]
      %v4969 = vld [vmem:[%s4079 + $0x30] sm:$0xff]
      %v4970 = vld [vmem:[%s4079 + $0x38] sm:$0xff]
      %v4971 = vld [vmem:[%s4079 + $0x40] sm:$0xff]
      %v4973 = vsel %vm225, %v4961, 0
      %v4976 = vsel %vm225, %v4962, 0
      %4978 = vmatprep.subr.mxu0 0.0
      %4979 = vmatpush1.msra.mxu0 %v4963
      %4980 = vmatprep.subr.mxu0 0.0
      %4981 = vmatpush1.msra.mxu0 %v4964
      %4982 = vmatprep.subr.mxu0 0.0
      %4983 = vmatpush1.msra.mxu0 %v4965
      %4984 = vmatprep.subr.mxu0 0.0
      %4985 = vmatpush1.msra.mxu0 %v4966
      %4986 = vmatprep.subr.mxu0 0.0
      %4987 = vmatpush1.msra.mxu0 %v4967
      %4988 = vmatprep.subr.mxu0 0.0
      %4989 = vmatpush1.msra.mxu0 %v4968
      %4990 = vmatprep.subr.mxu0 0.0
      %4991 = vmatpush1.msra.mxu0 %v4969
      %4992 = vmatprep.subr.mxu0 0.0
      %4993 = vmatpush1.msra.mxu0 %v4970
      %4994 = vmatprep.subr.mxu0 0.0
      %4995 = vmatpush1.msra.mxu0 %v4971
      %4996 = vmatprep.subr.mxu0 0.0
      %4997 = vmatpush1.msra.mxu0 0.0
      %4998 = vmatprep.subr.mxu0 0.0
      %4999 = vmatpush1.msra.mxu0 0.0
      %5000 = vmatprep.subr.mxu0 0.0
      %5001 = vmatpush1.msra.mxu0 0.0
      %5002 = vmatprep.subr.mxu0 0.0
      %5003 = vmatpush1.msra.mxu0 0.0
      %5004 = vmatprep.subr.mxu0 0.0
      %5005 = vmatpush1.msra.mxu0 0.0
      %5006 = vmatprep.subr.mxu0 0.0
      %5007 = vmatpush1.msra.mxu0 0.0
      %5008 = vmatprep.subr.mxu0 0.0
      %5009 = vmatpush1.msra.mxu0 0.0
      %5010 = vmatprep.subr.mxu0 0.0
      %5011 = vmatpush1.msra.mxu0 0.0
      %5012 = vmatprep.subr.mxu0 0.0
      %5013 = vmatpush1.msra.mxu0 0.0
      %5014 = vmatprep.subr.mxu0 0.0
      %5015 = vmatpush1.msra.mxu0 0.0
      %5016 = vmatprep.subr.mxu0 0.0
      %5017 = vmatpush1.msra.mxu0 0.0
      %5018 = vmatprep.subr.mxu0 0.0
      %5019 = vmatpush1.msra.mxu0 0.0
      %5020 = vmatprep.subr.mxu0 0.0
      %5021 = vmatpush1.msra.mxu0 0.0
      %5022 = vmatprep.subr.mxu0 0.0
      %5023 = vmatpush1.msra.mxu0 0.0
      %5024 = vmatprep.subr.mxu0 0.0
      %5025 = vmatpush1.msra.mxu0 0.0
      %5026 = vmatprep.subr.mxu0 0.0
      %5027 = vmatpush1.msra.mxu0 0.0
      %5028 = vmatprep.subr.mxu0 0.0
      %5029 = vmatpush1.msra.mxu0 0.0
      %5030 = vmatprep.subr.mxu0 0.0
      %5031 = vmatpush1.msra.mxu0 0.0
      %5032 = vmatprep.subr.mxu0 0.0
      %5033 = vmatpush1.msra.mxu0 0.0
      %5034 = vmatprep.subr.mxu0 0.0
      %5035 = vmatpush1.msra.mxu0 0.0
      %5036 = vmatprep.subr.mxu0 0.0
      %5037 = vmatpush1.msra.mxu0 0.0
      %5038 = vmatprep.subr.mxu0 0.0
      %5039 = vmatpush1.msra.mxu0 0.0
      %5040 = vmatprep.subr.mxu0 0.0
      %5041 = vmatpush1.msra.mxu0 0.0
      %5042 = vmatprep.mubr.f32.mxu0 0.0
      %5043 = vmatmul.mubr.f32.gmra.mrb[0].mxu0 %v4973
      %v5044 = vpop.f32.mrb[0].mxu0
      %v5045 = vadd.f32 0.0, %v5044
      %v5046 = vpop.f32.mrb[0].mxu0
      %5047 = vmatprep.mubr.f32.mxu0 0.0
      %5048 = vmatmul.mubr.f32.gmra.mrb[0].mxu0 %v4976
      %v5049 = vpop.f32.mrb[0].mxu0
      %v5050 = vadd.f32 0.0, %v5049
      %v5051 = vpop.f32.mrb[0].mxu0
      %5052 = vdwg.mxu0
      %v5053 = vadd.f32 %v4959, %v5045
      %v5054 = vadd.f32 %v4960, %v5050
      %v5055 = vld [vmem:[%s2056 + $0x1] sm:$0xff]
      %v5056 = vld [vmem:[%s2056 + $0x9] sm:$0xff]
      %v5057 = vld [vmem:[%s4174] sm:$0xff]
      %v5058 = vld [vmem:[%s4174 + $0x8] sm:$0xff]
      %v5059 = vld [vmem:[%s4174 + $0x10] sm:$0xff]
      %v5060 = vld [vmem:[%s4174 + $0x18] sm:$0xff]
      %v5061 = vld [vmem:[%s4174 + $0x20] sm:$0xff]
      %v5062 = vld [vmem:[%s4174 + $0x28] sm:$0xff]
      %v5063 = vld [vmem:[%s4174 + $0x30] sm:$0xff]
      %v5064 = vld [vmem:[%s4174 + $0x38] sm:$0xff]
      %v5065 = vld [vmem:[%s4174 + $0x40] sm:$0xff]
      %v5067 = vsel %vm225, %v5055, 0
      %v5070 = vsel %vm225, %v5056, 0
      %5072 = vmatprep.subr.mxu0 0.0
      %5073 = vmatpush1.msra.mxu0 %v5057
      %5074 = vmatprep.subr.mxu0 0.0
      %5075 = vmatpush1.msra.mxu0 %v5058
      %5076 = vmatprep.subr.mxu0 0.0
      %5077 = vmatpush1.msra.mxu0 %v5059
      %5078 = vmatprep.subr.mxu0 0.0
      %5079 = vmatpush1.msra.mxu0 %v5060
      %5080 = vmatprep.subr.mxu0 0.0
      %5081 = vmatpush1.msra.mxu0 %v5061
      %5082 = vmatprep.subr.mxu0 0.0
      %5083 = vmatpush1.msra.mxu0 %v5062
      %5084 = vmatprep.subr.mxu0 0.0
      %5085 = vmatpush1.msra.mxu0 %v5063
      %5086 = vmatprep.subr.mxu0 0.0
      %5087 = vmatpush1.msra.mxu0 %v5064
      %5088 = vmatprep.subr.mxu0 0.0
      %5089 = vmatpush1.msra.mxu0 %v5065
      %5090 = vmatprep.subr.mxu0 0.0
      %5091 = vmatpush1.msra.mxu0 0.0
      %5092 = vmatprep.subr.mxu0 0.0
      %5093 = vmatpush1.msra.mxu0 0.0
      %5094 = vmatprep.subr.mxu0 0.0
      %5095 = vmatpush1.msra.mxu0 0.0
      %5096 = vmatprep.subr.mxu0 0.0
      %5097 = vmatpush1.msra.mxu0 0.0
      %5098 = vmatprep.subr.mxu0 0.0
      %5099 = vmatpush1.msra.mxu0 0.0
      %5100 = vmatprep.subr.mxu0 0.0
      %5101 = vmatpush1.msra.mxu0 0.0
      %5102 = vmatprep.subr.mxu0 0.0
      %5103 = vmatpush1.msra.mxu0 0.0
      %5104 = vmatprep.subr.mxu0 0.0
      %5105 = vmatpush1.msra.mxu0 0.0
      %5106 = vmatprep.subr.mxu0 0.0
      %5107 = vmatpush1.msra.mxu0 0.0
      %5108 = vmatprep.subr.mxu0 0.0
      %5109 = vmatpush1.msra.mxu0 0.0
      %5110 = vmatprep.subr.mxu0 0.0
      %5111 = vmatpush1.msra.mxu0 0.0
      %5112 = vmatprep.subr.mxu0 0.0
      %5113 = vmatpush1.msra.mxu0 0.0
      %5114 = vmatprep.subr.mxu0 0.0
      %5115 = vmatpush1.msra.mxu0 0.0
      %5116 = vmatprep.subr.mxu0 0.0
      %5117 = vmatpush1.msra.mxu0 0.0
      %5118 = vmatprep.subr.mxu0 0.0
      %5119 = vmatpush1.msra.mxu0 0.0
      %5120 = vmatprep.subr.mxu0 0.0
      %5121 = vmatpush1.msra.mxu0 0.0
      %5122 = vmatprep.subr.mxu0 0.0
      %5123 = vmatpush1.msra.mxu0 0.0
      %5124 = vmatprep.subr.mxu0 0.0
      %5125 = vmatpush1.msra.mxu0 0.0
      %5126 = vmatprep.subr.mxu0 0.0
      %5127 = vmatpush1.msra.mxu0 0.0
      %5128 = vmatprep.subr.mxu0 0.0
      %5129 = vmatpush1.msra.mxu0 0.0
      %5130 = vmatprep.subr.mxu0 0.0
      %5131 = vmatpush1.msra.mxu0 0.0
      %5132 = vmatprep.subr.mxu0 0.0
      %5133 = vmatpush1.msra.mxu0 0.0
      %5134 = vmatprep.subr.mxu0 0.0
      %5135 = vmatpush1.msra.mxu0 0.0
      %5136 = vmatprep.mubr.f32.mxu0 0.0
      %5137 = vmatmul.mubr.f32.gmra.mrb[0].mxu0 %v5067
      %v5138 = vpop.f32.mrb[0].mxu0
      %v5139 = vadd.f32 0.0, %v5138
      %v5140 = vpop.f32.mrb[0].mxu0
      %5141 = vmatprep.mubr.f32.mxu0 0.0
      %5142 = vmatmul.mubr.f32.gmra.mrb[0].mxu0 %v5070
      %v5143 = vpop.f32.mrb[0].mxu0
      %v5144 = vadd.f32 0.0, %v5143
      %v5145 = vpop.f32.mrb[0].mxu0
      %5146 = vdwg.mxu0
      %v5147 = vadd.f32 %v5053, %v5139
      %v5148 = vadd.f32 %v5054, %v5144
      %v5149 = vld [vmem:[%s2056 + $0x2] sm:$0xff]
      %v5150 = vld [vmem:[%s2056 + $0xa] sm:$0xff]
      %v5151 = vld [vmem:[%s4269] sm:$0xff]
      %v5152 = vld [vmem:[%s4269 + $0x8] sm:$0xff]
      %v5153 = vld [vmem:[%s4269 + $0x10] sm:$0xff]
      %v5154 = vld [vmem:[%s4269 + $0x18] sm:$0xff]
      %v5155 = vld [vmem:[%s4269 + $0x20] sm:$0xff]
      %v5156 = vld [vmem:[%s4269 + $0x28] sm:$0xff]
      %v5157 = vld [vmem:[%s4269 + $0x30] sm:$0xff]
      %v5158 = vld [vmem:[%s4269 + $0x38] sm:$0xff]
      %v5159 = vld [vmem:[%s4269 + $0x40] sm:$0xff]
      %v5161 = vsel %vm225, %v5149, 0
      %v5164 = vsel %vm225, %v5150, 0
      %5166 = vmatprep.subr.mxu0 0.0
      %5167 = vmatpush1.msra.mxu0 %v5151
      %5168 = vmatprep.subr.mxu0 0.0
      %5169 = vmatpush1.msra.mxu0 %v5152
      %5170 = vmatprep.subr.mxu0 0.0
      %5171 = vmatpush1.msra.mxu0 %v5153
      %5172 = vmatprep.subr.mxu0 0.0
      %5173 = vmatpush1.msra.mxu0 %v5154
      %5174 = vmatprep.subr.mxu0 0.0
      %5175 = vmatpush1.msra.mxu0 %v5155
      %5176 = vmatprep.subr.mxu0 0.0
      %5177 = vmatpush1.msra.mxu0 %v5156
      %5178 = vmatprep.subr.mxu0 0.0
      %5179 = vmatpush1.msra.mxu0 %v5157
      %5180 = vmatprep.subr.mxu0 0.0
      %5181 = vmatpush1.msra.mxu0 %v5158
      %5182 = vmatprep.subr.mxu0 0.0
      %5183 = vmatpush1.msra.mxu0 %v5159
      %5184 = vmatprep.subr.mxu0 0.0
      %5185 = vmatpush1.msra.mxu0 0.0
      %5186 = vmatprep.subr.mxu0 0.0
      %5187 = vmatpush1.msra.mxu0 0.0
      %5188 = vmatprep.subr.mxu0 0.0
      %5189 = vmatpush1.msra.mxu0 0.0
      %5190 = vmatprep.subr.mxu0 0.0
      %5191 = vmatpush1.msra.mxu0 0.0
      %5192 = vmatprep.subr.mxu0 0.0
      %5193 = vmatpush1.msra.mxu0 0.0
      %5194 = vmatprep.subr.mxu0 0.0
      %5195 = vmatpush1.msra.mxu0 0.0
      %5196 = vmatprep.subr.mxu0 0.0
      %5197 = vmatpush1.msra.mxu0 0.0
      %5198 = vmatprep.subr.mxu0 0.0
      %5199 = vmatpush1.msra.mxu0 0.0
      %5200 = vmatprep.subr.mxu0 0.0
      %5201 = vmatpush1.msra.mxu0 0.0
      %5202 = vmatprep.subr.mxu0 0.0
      %5203 = vmatpush1.msra.mxu0 0.0
      %5204 = vmatprep.subr.mxu0 0.0
      %5205 = vmatpush1.msra.mxu0 0.0
      %5206 = vmatprep.subr.mxu0 0.0
      %5207 = vmatpush1.msra.mxu0 0.0
      %5208 = vmatprep.subr.mxu0 0.0
      %5209 = vmatpush1.msra.mxu0 0.0
      %5210 = vmatprep.subr.mxu0 0.0
      %5211 = vmatpush1.msra.mxu0 0.0
      %5212 = vmatprep.subr.mxu0 0.0
      %5213 = vmatpush1.msra.mxu0 0.0
      %5214 = vmatprep.subr.mxu0 0.0
      %5215 = vmatpush1.msra.mxu0 0.0
      %5216 = vmatprep.subr.mxu0 0.0
      %5217 = vmatpush1.msra.mxu0 0.0
      %5218 = vmatprep.subr.mxu0 0.0
      %5219 = vmatpush1.msra.mxu0 0.0
      %5220 = vmatprep.subr.mxu0 0.0
      %5221 = vmatpush1.msra.mxu0 0.0
      %5222 = vmatprep.subr.mxu0 0.0
      %5223 = vmatpush1.msra.mxu0 0.0
      %5224 = vmatprep.subr.mxu0 0.0
      %5225 = vmatpush1.msra.mxu0 0.0
      %5226 = vmatprep.subr.mxu0 0.0
      %5227 = vmatpush1.msra.mxu0 0.0
      %5228 = vmatprep.subr.mxu0 0.0
      %5229 = vmatpush1.msra.mxu0 0.0
      %5230 = vmatprep.mubr.f32.mxu0 0.0
      %5231 = vmatmul.mubr.f32.gmra.mrb[0].mxu0 %v5161
      %v5232 = vpop.f32.mrb[0].mxu0
      %v5233 = vadd.f32 0.0, %v5232
      %v5234 = vpop.f32.mrb[0].mxu0
      %5235 = vmatprep.mubr.f32.mxu0 0.0
      %5236 = vmatmul.mubr.f32.gmra.mrb[0].mxu0 %v5164
      %v5237 = vpop.f32.mrb[0].mxu0
      %v5238 = vadd.f32 0.0, %v5237
      %v5239 = vpop.f32.mrb[0].mxu0
      %5240 = vdwg.mxu0
      %v5241 = vadd.f32 %v5147, %v5233
      %v5242 = vadd.f32 %v5148, %v5238
      %v5243 = vld [vmem:[%s2925] sm:$0xff]
      %v5244 = vld [vmem:[%s2925 + $0x8] sm:$0xff]
      %v5245 = vld [vmem:[%s4364] sm:$0xff]
      %v5246 = vld [vmem:[%s4364 + $0x8] sm:$0xff]
      %v5247 = vld [vmem:[%s4364 + $0x10] sm:$0xff]
      %v5248 = vld [vmem:[%s4364 + $0x18] sm:$0xff]
      %v5249 = vld [vmem:[%s4364 + $0x20] sm:$0xff]
      %v5250 = vld [vmem:[%s4364 + $0x28] sm:$0xff]
      %v5251 = vld [vmem:[%s4364 + $0x30] sm:$0xff]
      %v5252 = vld [vmem:[%s4364 + $0x38] sm:$0xff]
      %v5253 = vld [vmem:[%s4364 + $0x40] sm:$0xff]
      %v5255 = vsel %vm225, %v5243, 0
      %v5258 = vsel %vm225, %v5244, 0
      %5260 = vmatprep.subr.mxu0 0.0
      %5261 = vmatpush1.msra.mxu0 %v5245
      %5262 = vmatprep.subr.mxu0 0.0
      %5263 = vmatpush1.msra.mxu0 %v5246
      %5264 = vmatprep.subr.mxu0 0.0
      %5265 = vmatpush1.msra.mxu0 %v5247
      %5266 = vmatprep.subr.mxu0 0.0
      %5267 = vmatpush1.msra.mxu0 %v5248
      %5268 = vmatprep.subr.mxu0 0.0
      %5269 = vmatpush1.msra.mxu0 %v5249
      %5270 = vmatprep.subr.mxu0 0.0
      %5271 = vmatpush1.msra.mxu0 %v5250
      %5272 = vmatprep.subr.mxu0 0.0
      %5273 = vmatpush1.msra.mxu0 %v5251
      %5274 = vmatprep.subr.mxu0 0.0
      %5275 = vmatpush1.msra.mxu0 %v5252
      %5276 = vmatprep.subr.mxu0 0.0
      %5277 = vmatpush1.msra.mxu0 %v5253
      %5278 = vmatprep.subr.mxu0 0.0
      %5279 = vmatpush1.msra.mxu0 0.0
      %5280 = vmatprep.subr.mxu0 0.0
      %5281 = vmatpush1.msra.mxu0 0.0
      %5282 = vmatprep.subr.mxu0 0.0
      %5283 = vmatpush1.msra.mxu0 0.0
      %5284 = vmatprep.subr.mxu0 0.0
      %5285 = vmatpush1.msra.mxu0 0.0
      %5286 = vmatprep.subr.mxu0 0.0
      %5287 = vmatpush1.msra.mxu0 0.0
      %5288 = vmatprep.subr.mxu0 0.0
      %5289 = vmatpush1.msra.mxu0 0.0
      %5290 = vmatprep.subr.mxu0 0.0
      %5291 = vmatpush1.msra.mxu0 0.0
      %5292 = vmatprep.subr.mxu0 0.0
      %5293 = vmatpush1.msra.mxu0 0.0
      %5294 = vmatprep.subr.mxu0 0.0
      %5295 = vmatpush1.msra.mxu0 0.0
      %5296 = vmatprep.subr.mxu0 0.0
      %5297 = vmatpush1.msra.mxu0 0.0
      %5298 = vmatprep.subr.mxu0 0.0
      %5299 = vmatpush1.msra.mxu0 0.0
      %5300 = vmatprep.subr.mxu0 0.0
      %5301 = vmatpush1.msra.mxu0 0.0
      %5302 = vmatprep.subr.mxu0 0.0
      %5303 = vmatpush1.msra.mxu0 0.0
      %5304 = vmatprep.subr.mxu0 0.0
      %5305 = vmatpush1.msra.mxu0 0.0
      %5306 = vmatprep.subr.mxu0 0.0
      %5307 = vmatpush1.msra.mxu0 0.0
      %5308 = vmatprep.subr.mxu0 0.0
      %5309 = vmatpush1.msra.mxu0 0.0
      %5310 = vmatprep.subr.mxu0 0.0
      %5311 = vmatpush1.msra.mxu0 0.0
      %5312 = vmatprep.subr.mxu0 0.0
      %5313 = vmatpush1.msra.mxu0 0.0
      %5314 = vmatprep.subr.mxu0 0.0
      %5315 = vmatpush1.msra.mxu0 0.0
      %5316 = vmatprep.subr.mxu0 0.0
      %5317 = vmatpush1.msra.mxu0 0.0
      %5318 = vmatprep.subr.mxu0 0.0
      %5319 = vmatpush1.msra.mxu0 0.0
      %5320 = vmatprep.subr.mxu0 0.0
      %5321 = vmatpush1.msra.mxu0 0.0
      %5322 = vmatprep.subr.mxu0 0.0
      %5323 = vmatpush1.msra.mxu0 0.0
      %5324 = vmatprep.mubr.f32.mxu0 0.0
      %5325 = vmatmul.mubr.f32.gmra.mrb[0].mxu0 %v5255
      %v5326 = vpop.f32.mrb[0].mxu0
      %v5327 = vadd.f32 0.0, %v5326
      %v5328 = vpop.f32.mrb[0].mxu0
      %5329 = vmatprep.mubr.f32.mxu0 0.0
      %5330 = vmatmul.mubr.f32.gmra.mrb[0].mxu0 %v5258
      %v5331 = vpop.f32.mrb[0].mxu0
      %v5332 = vadd.f32 0.0, %v5331
      %v5333 = vpop.f32.mrb[0].mxu0
      %5334 = vdwg.mxu0
      %v5335 = vadd.f32 %v5241, %v5327
      %v5336 = vadd.f32 %v5242, %v5332
      %v5337 = vld [vmem:[%s2925 + $0x1] sm:$0xff]
      %v5338 = vld [vmem:[%s2925 + $0x9] sm:$0xff]
      %v5339 = vld [vmem:[%s4459] sm:$0xff]
      %v5340 = vld [vmem:[%s4459 + $0x8] sm:$0xff]
      %v5341 = vld [vmem:[%s4459 + $0x10] sm:$0xff]
      %v5342 = vld [vmem:[%s4459 + $0x18] sm:$0xff]
      %v5343 = vld [vmem:[%s4459 + $0x20] sm:$0xff]
      %v5344 = vld [vmem:[%s4459 + $0x28] sm:$0xff]
      %v5345 = vld [vmem:[%s4459 + $0x30] sm:$0xff]
      %v5346 = vld [vmem:[%s4459 + $0x38] sm:$0xff]
      %v5347 = vld [vmem:[%s4459 + $0x40] sm:$0xff]
      %v5349 = vsel %vm225, %v5337, 0
      %v5352 = vsel %vm225, %v5338, 0
      %5354 = vmatprep.subr.mxu0 0.0
      %5355 = vmatpush1.msra.mxu0 %v5339
      %5356 = vmatprep.subr.mxu0 0.0
      %5357 = vmatpush1.msra.mxu0 %v5340
      %5358 = vmatprep.subr.mxu0 0.0
      %5359 = vmatpush1.msra.mxu0 %v5341
      %5360 = vmatprep.subr.mxu0 0.0
      %5361 = vmatpush1.msra.mxu0 %v5342
      %5362 = vmatprep.subr.mxu0 0.0
      %5363 = vmatpush1.msra.mxu0 %v5343
      %5364 = vmatprep.subr.mxu0 0.0
      %5365 = vmatpush1.msra.mxu0 %v5344
      %5366 = vmatprep.subr.mxu0 0.0
      %5367 = vmatpush1.msra.mxu0 %v5345
      %5368 = vmatprep.subr.mxu0 0.0
      %5369 = vmatpush1.msra.mxu0 %v5346
      %5370 = vmatprep.subr.mxu0 0.0
      %5371 = vmatpush1.msra.mxu0 %v5347
      %5372 = vmatprep.subr.mxu0 0.0
      %5373 = vmatpush1.msra.mxu0 0.0
      %5374 = vmatprep.subr.mxu0 0.0
      %5375 = vmatpush1.msra.mxu0 0.0
      %5376 = vmatprep.subr.mxu0 0.0
      %5377 = vmatpush1.msra.mxu0 0.0
      %5378 = vmatprep.subr.mxu0 0.0
      %5379 = vmatpush1.msra.mxu0 0.0
      %5380 = vmatprep.subr.mxu0 0.0
      %5381 = vmatpush1.msra.mxu0 0.0
      %5382 = vmatprep.subr.mxu0 0.0
      %5383 = vmatpush1.msra.mxu0 0.0
      %5384 = vmatprep.subr.mxu0 0.0
      %5385 = vmatpush1.msra.mxu0 0.0
      %5386 = vmatprep.subr.mxu0 0.0
      %5387 = vmatpush1.msra.mxu0 0.0
      %5388 = vmatprep.subr.mxu0 0.0
      %5389 = vmatpush1.msra.mxu0 0.0
      %5390 = vmatprep.subr.mxu0 0.0
      %5391 = vmatpush1.msra.mxu0 0.0
      %5392 = vmatprep.subr.mxu0 0.0
      %5393 = vmatpush1.msra.mxu0 0.0
      %5394 = vmatprep.subr.mxu0 0.0
      %5395 = vmatpush1.msra.mxu0 0.0
      %5396 = vmatprep.subr.mxu0 0.0
      %5397 = vmatpush1.msra.mxu0 0.0
      %5398 = vmatprep.subr.mxu0 0.0
      %5399 = vmatpush1.msra.mxu0 0.0
      %5400 = vmatprep.subr.mxu0 0.0
      %5401 = vmatpush1.msra.mxu0 0.0
      %5402 = vmatprep.subr.mxu0 0.0
      %5403 = vmatpush1.msra.mxu0 0.0
      %5404 = vmatprep.subr.mxu0 0.0
      %5405 = vmatpush1.msra.mxu0 0.0
      %5406 = vmatprep.subr.mxu0 0.0
      %5407 = vmatpush1.msra.mxu0 0.0
      %5408 = vmatprep.subr.mxu0 0.0
      %5409 = vmatpush1.msra.mxu0 0.0
      %5410 = vmatprep.subr.mxu0 0.0
      %5411 = vmatpush1.msra.mxu0 0.0
      %5412 = vmatprep.subr.mxu0 0.0
      %5413 = vmatpush1.msra.mxu0 0.0
      %5414 = vmatprep.subr.mxu0 0.0
      %5415 = vmatpush1.msra.mxu0 0.0
      %5416 = vmatprep.subr.mxu0 0.0
      %5417 = vmatpush1.msra.mxu0 0.0
      %5418 = vmatprep.mubr.f32.mxu0 0.0
      %5419 = vmatmul.mubr.f32.gmra.mrb[0].mxu0 %v5349
      %v5420 = vpop.f32.mrb[0].mxu0
      %v5421 = vadd.f32 0.0, %v5420
      %v5422 = vpop.f32.mrb[0].mxu0
      %5423 = vmatprep.mubr.f32.mxu0 0.0
      %5424 = vmatmul.mubr.f32.gmra.mrb[0].mxu0 %v5352
      %v5425 = vpop.f32.mrb[0].mxu0
      %v5426 = vadd.f32 0.0, %v5425
      %v5427 = vpop.f32.mrb[0].mxu0
      %5428 = vdwg.mxu0
      %v5429 = vadd.f32 %v5335, %v5421
      %v5430 = vadd.f32 %v5336, %v5426
      %v5431 = vld [vmem:[%s2925 + $0x2] sm:$0xff]
      %v5432 = vld [vmem:[%s2925 + $0xa] sm:$0xff]
      %v5433 = vld [vmem:[%s4554] sm:$0xff]
      %v5434 = vld [vmem:[%s4554 + $0x8] sm:$0xff]
      %v5435 = vld [vmem:[%s4554 + $0x10] sm:$0xff]
      %v5436 = vld [vmem:[%s4554 + $0x18] sm:$0xff]
      %v5437 = vld [vmem:[%s4554 + $0x20] sm:$0xff]
      %v5438 = vld [vmem:[%s4554 + $0x28] sm:$0xff]
      %v5439 = vld [vmem:[%s4554 + $0x30] sm:$0xff]
      %v5440 = vld [vmem:[%s4554 + $0x38] sm:$0xff]
      %v5441 = vld [vmem:[%s4554 + $0x40] sm:$0xff]
      %v5443 = vsel %vm225, %v5431, 0
      %v5446 = vsel %vm225, %v5432, 0
      %5448 = vmatprep.subr.mxu0 0.0
      %5449 = vmatpush1.msra.mxu0 %v5433
      %5450 = vmatprep.subr.mxu0 0.0
      %5451 = vmatpush1.msra.mxu0 %v5434
      %5452 = vmatprep.subr.mxu0 0.0
      %5453 = vmatpush1.msra.mxu0 %v5435
      %5454 = vmatprep.subr.mxu0 0.0
      %5455 = vmatpush1.msra.mxu0 %v5436
      %5456 = vmatprep.subr.mxu0 0.0
      %5457 = vmatpush1.msra.mxu0 %v5437
      %5458 = vmatprep.subr.mxu0 0.0
      %5459 = vmatpush1.msra.mxu0 %v5438
      %5460 = vmatprep.subr.mxu0 0.0
      %5461 = vmatpush1.msra.mxu0 %v5439
      %5462 = vmatprep.subr.mxu0 0.0
      %5463 = vmatpush1.msra.mxu0 %v5440
      %5464 = vmatprep.subr.mxu0 0.0
      %5465 = vmatpush1.msra.mxu0 %v5441
      %5466 = vmatprep.subr.mxu0 0.0
      %5467 = vmatpush1.msra.mxu0 0.0
      %5468 = vmatprep.subr.mxu0 0.0
      %5469 = vmatpush1.msra.mxu0 0.0
      %5470 = vmatprep.subr.mxu0 0.0
      %5471 = vmatpush1.msra.mxu0 0.0
      %5472 = vmatprep.subr.mxu0 0.0
      %5473 = vmatpush1.msra.mxu0 0.0
      %5474 = vmatprep.subr.mxu0 0.0
      %5475 = vmatpush1.msra.mxu0 0.0
      %5476 = vmatprep.subr.mxu0 0.0
      %5477 = vmatpush1.msra.mxu0 0.0
      %5478 = vmatprep.subr.mxu0 0.0
      %5479 = vmatpush1.msra.mxu0 0.0
      %5480 = vmatprep.subr.mxu0 0.0
      %5481 = vmatpush1.msra.mxu0 0.0
      %5482 = vmatprep.subr.mxu0 0.0
      %5483 = vmatpush1.msra.mxu0 0.0
      %5484 = vmatprep.subr.mxu0 0.0
      %5485 = vmatpush1.msra.mxu0 0.0
      %5486 = vmatprep.subr.mxu0 0.0
      %5487 = vmatpush1.msra.mxu0 0.0
      %5488 = vmatprep.subr.mxu0 0.0
      %5489 = vmatpush1.msra.mxu0 0.0
      %5490 = vmatprep.subr.mxu0 0.0
      %5491 = vmatpush1.msra.mxu0 0.0
      %5492 = vmatprep.subr.mxu0 0.0
      %5493 = vmatpush1.msra.mxu0 0.0
      %5494 = vmatprep.subr.mxu0 0.0
      %5495 = vmatpush1.msra.mxu0 0.0
      %5496 = vmatprep.subr.mxu0 0.0
      %5497 = vmatpush1.msra.mxu0 0.0
      %5498 = vmatprep.subr.mxu0 0.0
      %5499 = vmatpush1.msra.mxu0 0.0
      %5500 = vmatprep.subr.mxu0 0.0
      %5501 = vmatpush1.msra.mxu0 0.0
      %5502 = vmatprep.subr.mxu0 0.0
      %5503 = vmatpush1.msra.mxu0 0.0
      %5504 = vmatprep.subr.mxu0 0.0
      %5505 = vmatpush1.msra.mxu0 0.0
      %5506 = vmatprep.subr.mxu0 0.0
      %5507 = vmatpush1.msra.mxu0 0.0
      %5508 = vmatprep.subr.mxu0 0.0
      %5509 = vmatpush1.msra.mxu0 0.0
      %5510 = vmatprep.subr.mxu0 0.0
      %5511 = vmatpush1.msra.mxu0 0.0
      %5512 = vmatprep.mubr.f32.mxu0 0.0
      %5513 = vmatmul.mubr.f32.gmra.mrb[0].mxu0 %v5443
      %v5514 = vpop.f32.mrb[0].mxu0
      %v5515 = vadd.f32 0.0, %v5514
      %v5516 = vpop.f32.mrb[0].mxu0
      %5517 = vmatprep.mubr.f32.mxu0 0.0
      %5518 = vmatmul.mubr.f32.gmra.mrb[0].mxu0 %v5446
      %v5519 = vpop.f32.mrb[0].mxu0
      %v5520 = vadd.f32 0.0, %v5519
      %v5521 = vpop.f32.mrb[0].mxu0
      %5522 = vdwg.mxu0
      %v5523 = vadd.f32 %v5429, %v5515
      %v5524 = vadd.f32 %v5430, %v5520
      %v5525 = vld [vmem:[%s4] sm:$0x1]
      %v5527 = vlaneseq
      %v5528 = vshrl.u32 %v5527, 7
      %v5529 = vsub.s32 0, %v5528
      %v5530 = vrot.slane %v5525, %v5529
      %v5532 = vadd.f32 %v5523, %v5530
      %v5533 = vadd.f32 %v5524, %v5530
      %vm5534 = vcmp.gt.f32.partialorder %v5532, 0.0
      %vm5535 = vcmp.gt.f32.partialorder %v5533, 0.0
      %v5536 = vmul.f32 %v5532, 0.04
      %v5537 = vmul.f32 %v5533, 0.04
      %v5538 = vsel %vm5534, %v5532, %v5536
      %v5539 = vsel %vm5535, %v5533, %v5537
      %5542 = vrot.lane.b32.xlu0 %v5538, 4
      %v5543 = vpop.permute.xlu0 %5542
      %5544 = vrot.lane.b32.xlu0 %v5539, 4
      %v5545 = vpop.permute.xlu0 %5544
      %v5548 = vadd.f32 %v5055, %v5543
      %v5549 = vadd.f32 %v5056, %v5545
      %5552 = vrot.lane.b32.xlu0 %v5548, 124
      %v5553 = vpop.permute.xlu0 %5552
      %5554 = vrot.lane.b32.xlu0 %v5549, 124
      %v5555 = vpop.permute.xlu0 %5554
      %s5558 = scalar_lea.vmem %s224, 16
      %5559 = vst.msk [vmem:[%s5558] sm:$0xff] %vm4680, %v5553
      %5560 = vst.msk [vmem:[%s5558 + $0x8] sm:$0xff] %vm4680, %v5555
      %v5561 = vld [vmem:[%s2056] sm:$0xff]
      %v5562 = vld [vmem:[%s2056 + $0x8] sm:$0xff]
      %v5563 = vld [vmem:[%s3] sm:$0xff]
      %v5564 = vld [vmem:[%s3 + $0x8] sm:$0xff]
      %v5565 = vld [vmem:[%s3 + $0x10] sm:$0xff]
      %v5566 = vld [vmem:[%s3 + $0x18] sm:$0xff]
      %v5567 = vld [vmem:[%s3 + $0x20] sm:$0xff]
      %v5568 = vld [vmem:[%s3 + $0x28] sm:$0xff]
      %v5569 = vld [vmem:[%s3 + $0x30] sm:$0xff]
      %v5570 = vld [vmem:[%s3 + $0x38] sm:$0xff]
      %v5571 = vld [vmem:[%s3 + $0x40] sm:$0xff]
      %v5572 = vld [vmem:[%s2056 + $0x1] sm:$0xff]
      %v5573 = vld [vmem:[%s2056 + $0x9] sm:$0xff]
      %v5574 = vld [vmem:[%s3810] sm:$0xff]
      %v5575 = vld [vmem:[%s3810 + $0x8] sm:$0xff]
      %v5576 = vld [vmem:[%s3810 + $0x10] sm:$0xff]
      %v5577 = vld [vmem:[%s3810 + $0x18] sm:$0xff]
      %v5578 = vld [vmem:[%s3810 + $0x20] sm:$0xff]
      %v5579 = vld [vmem:[%s3810 + $0x28] sm:$0xff]
      %v5580 = vld [vmem:[%s3810 + $0x30] sm:$0xff]
      %v5581 = vld [vmem:[%s3810 + $0x38] sm:$0xff]
      %v5582 = vld [vmem:[%s3810 + $0x40] sm:$0xff]
      %v5584 = vsel %vm225, %v5572, 0
      %v5587 = vsel %vm225, %v5573, 0
      %5589 = vmatprep.subr.mxu0 0.0
      %5590 = vmatpush1.msra.mxu0 %v5574
      %5591 = vmatprep.subr.mxu0 0.0
      %5592 = vmatpush1.msra.mxu0 %v5575
      %5593 = vmatprep.subr.mxu0 0.0
      %5594 = vmatpush1.msra.mxu0 %v5576
      %5595 = vmatprep.subr.mxu0 0.0
      %5596 = vmatpush1.msra.mxu0 %v5577
      %5597 = vmatprep.subr.mxu0 0.0
      %5598 = vmatpush1.msra.mxu0 %v5578
      %5599 = vmatprep.subr.mxu0 0.0
      %5600 = vmatpush1.msra.mxu0 %v5579
      %5601 = vmatprep.subr.mxu0 0.0
      %5602 = vmatpush1.msra.mxu0 %v5580
      %5603 = vmatprep.subr.mxu0 0.0
      %5604 = vmatpush1.msra.mxu0 %v5581
      %5605 = vmatprep.subr.mxu0 0.0
      %5606 = vmatpush1.msra.mxu0 %v5582
      %5607 = vmatprep.subr.mxu0 0.0
      %5608 = vmatpush1.msra.mxu0 0.0
      %5609 = vmatprep.subr.mxu0 0.0
      %5610 = vmatpush1.msra.mxu0 0.0
      %5611 = vmatprep.subr.mxu0 0.0
      %5612 = vmatpush1.msra.mxu0 0.0
      %5613 = vmatprep.subr.mxu0 0.0
      %5614 = vmatpush1.msra.mxu0 0.0
      %5615 = vmatprep.subr.mxu0 0.0
      %5616 = vmatpush1.msra.mxu0 0.0
      %5617 = vmatprep.subr.mxu0 0.0
      %5618 = vmatpush1.msra.mxu0 0.0
      %5619 = vmatprep.subr.mxu0 0.0
      %5620 = vmatpush1.msra.mxu0 0.0
      %5621 = vmatprep.subr.mxu0 0.0
      %5622 = vmatpush1.msra.mxu0 0.0
      %5623 = vmatprep.subr.mxu0 0.0
      %5624 = vmatpush1.msra.mxu0 0.0
      %5625 = vmatprep.subr.mxu0 0.0
      %5626 = vmatpush1.msra.mxu0 0.0
      %5627 = vmatprep.subr.mxu0 0.0
      %5628 = vmatpush1.msra.mxu0 0.0
      %5629 = vmatprep.subr.mxu0 0.0
      %5630 = vmatpush1.msra.mxu0 0.0
      %5631 = vmatprep.subr.mxu0 0.0
      %5632 = vmatpush1.msra.mxu0 0.0
      %5633 = vmatprep.subr.mxu0 0.0
      %5634 = vmatpush1.msra.mxu0 0.0
      %5635 = vmatprep.subr.mxu0 0.0
      %5636 = vmatpush1.msra.mxu0 0.0
      %5637 = vmatprep.subr.mxu0 0.0
      %5638 = vmatpush1.msra.mxu0 0.0
      %5639 = vmatprep.subr.mxu0 0.0
      %5640 = vmatpush1.msra.mxu0 0.0
      %5641 = vmatprep.subr.mxu0 0.0
      %5642 = vmatpush1.msra.mxu0 0.0
      %5643 = vmatprep.subr.mxu0 0.0
      %5644 = vmatpush1.msra.mxu0 0.0
      %5645 = vmatprep.subr.mxu0 0.0
      %5646 = vmatpush1.msra.mxu0 0.0
      %5647 = vmatprep.subr.mxu0 0.0
      %5648 = vmatpush1.msra.mxu0 0.0
      %5649 = vmatprep.subr.mxu0 0.0
      %5650 = vmatpush1.msra.mxu0 0.0
      %5651 = vmatprep.subr.mxu0 0.0
      %5652 = vmatpush1.msra.mxu0 0.0
      %5653 = vmatprep.mubr.f32.mxu0 0.0
      %5654 = vmatmul.mubr.f32.gmra.mrb[0].mxu0 %v5584
      %v5655 = vpop.f32.mrb[0].mxu0
      %v5656 = vadd.f32 0.0, %v5655
      %v5657 = vpop.f32.mrb[0].mxu0
      %5658 = vmatprep.mubr.f32.mxu0 0.0
      %5659 = vmatmul.mubr.f32.gmra.mrb[0].mxu0 %v5587
      %v5660 = vpop.f32.mrb[0].mxu0
      %v5661 = vadd.f32 0.0, %v5660
      %v5662 = vpop.f32.mrb[0].mxu0
      %5663 = vdwg.mxu0
      %v5665 = vsel %vm225, %v5561, 0
      %v5668 = vsel %vm225, %v5562, 0
      %5670 = vmatprep.subr.mxu0 0.0
      %5671 = vmatpush1.msra.mxu0 %v5563
      %5672 = vmatprep.subr.mxu0 0.0
      %5673 = vmatpush1.msra.mxu0 %v5564
      %5674 = vmatprep.subr.mxu0 0.0
      %5675 = vmatpush1.msra.mxu0 %v5565
      %5676 = vmatprep.subr.mxu0 0.0
      %5677 = vmatpush1.msra.mxu0 %v5566
      %5678 = vmatprep.subr.mxu0 0.0
      %5679 = vmatpush1.msra.mxu0 %v5567
      %5680 = vmatprep.subr.mxu0 0.0
      %5681 = vmatpush1.msra.mxu0 %v5568
      %5682 = vmatprep.subr.mxu0 0.0
      %5683 = vmatpush1.msra.mxu0 %v5569
      %5684 = vmatprep.subr.mxu0 0.0
      %5685 = vmatpush1.msra.mxu0 %v5570
      %5686 = vmatprep.subr.mxu0 0.0
      %5687 = vmatpush1.msra.mxu0 %v5571
      %5688 = vmatprep.subr.mxu0 0.0
      %5689 = vmatpush1.msra.mxu0 0.0
      %5690 = vmatprep.subr.mxu0 0.0
      %5691 = vmatpush1.msra.mxu0 0.0
      %5692 = vmatprep.subr.mxu0 0.0
      %5693 = vmatpush1.msra.mxu0 0.0
      %5694 = vmatprep.subr.mxu0 0.0
      %5695 = vmatpush1.msra.mxu0 0.0
      %5696 = vmatprep.subr.mxu0 0.0
      %5697 = vmatpush1.msra.mxu0 0.0
      %5698 = vmatprep.subr.mxu0 0.0
      %5699 = vmatpush1.msra.mxu0 0.0
      %5700 = vmatprep.subr.mxu0 0.0
      %5701 = vmatpush1.msra.mxu0 0.0
      %5702 = vmatprep.subr.mxu0 0.0
      %5703 = vmatpush1.msra.mxu0 0.0
      %5704 = vmatprep.subr.mxu0 0.0
      %5705 = vmatpush1.msra.mxu0 0.0
      %5706 = vmatprep.subr.mxu0 0.0
      %5707 = vmatpush1.msra.mxu0 0.0
      %5708 = vmatprep.subr.mxu0 0.0
      %5709 = vmatpush1.msra.mxu0 0.0
      %5710 = vmatprep.subr.mxu0 0.0
      %5711 = vmatpush1.msra.mxu0 0.0
      %5712 = vmatprep.subr.mxu0 0.0
      %5713 = vmatpush1.msra.mxu0 0.0
      %5714 = vmatprep.subr.mxu0 0.0
      %5715 = vmatpush1.msra.mxu0 0.0
      %5716 = vmatprep.subr.mxu0 0.0
      %5717 = vmatpush1.msra.mxu0 0.0
      %5718 = vmatprep.subr.mxu0 0.0
      %5719 = vmatpush1.msra.mxu0 0.0
      %5720 = vmatprep.subr.mxu0 0.0
      %5721 = vmatpush1.msra.mxu0 0.0
      %5722 = vmatprep.subr.mxu0 0.0
      %5723 = vmatpush1.msra.mxu0 0.0
      %5724 = vmatprep.subr.mxu0 0.0
      %5725 = vmatpush1.msra.mxu0 0.0
      %5726 = vmatprep.subr.mxu0 0.0
      %5727 = vmatpush1.msra.mxu0 0.0
      %5728 = vmatprep.subr.mxu0 0.0
      %5729 = vmatpush1.msra.mxu0 0.0
      %5730 = vmatprep.subr.mxu0 0.0
      %5731 = vmatpush1.msra.mxu0 0.0
      %5732 = vmatprep.subr.mxu0 0.0
      %5733 = vmatpush1.msra.mxu0 0.0
      %5734 = vmatprep.mubr.f32.mxu0 0.0
      %5735 = vmatmul.mubr.f32.gmra.mrb[0].mxu0 %v5665
      %v5736 = vpop.f32.mrb[0].mxu0
      %v5737 = vadd.f32 %v5656, %v5736
      %v5738 = vpop.f32.mrb[0].mxu0
      %5739 = vmatprep.mubr.f32.mxu0 0.0
      %5740 = vmatmul.mubr.f32.gmra.mrb[0].mxu0 %v5668
      %v5741 = vpop.f32.mrb[0].mxu0
      %v5742 = vadd.f32 %v5661, %v5741
      %v5743 = vpop.f32.mrb[0].mxu0
      %5744 = vdwg.mxu0
      %v5745 = vld [vmem:[%s2056 + $0x2] sm:$0xff]
      %v5746 = vld [vmem:[%s2056 + $0xa] sm:$0xff]
      %v5747 = vld [vmem:[%s3984] sm:$0xff]
      %v5748 = vld [vmem:[%s3984 + $0x8] sm:$0xff]
      %v5749 = vld [vmem:[%s3984 + $0x10] sm:$0xff]
      %v5750 = vld [vmem:[%s3984 + $0x18] sm:$0xff]
      %v5751 = vld [vmem:[%s3984 + $0x20] sm:$0xff]
      %v5752 = vld [vmem:[%s3984 + $0x28] sm:$0xff]
      %v5753 = vld [vmem:[%s3984 + $0x30] sm:$0xff]
      %v5754 = vld [vmem:[%s3984 + $0x38] sm:$0xff]
      %v5755 = vld [vmem:[%s3984 + $0x40] sm:$0xff]
      %v5757 = vsel %vm225, %v5745, 0
      %v5760 = vsel %vm225, %v5746, 0
      %5762 = vmatprep.subr.mxu0 0.0
      %5763 = vmatpush1.msra.mxu0 %v5747
      %5764 = vmatprep.subr.mxu0 0.0
      %5765 = vmatpush1.msra.mxu0 %v5748
      %5766 = vmatprep.subr.mxu0 0.0
      %5767 = vmatpush1.msra.mxu0 %v5749
      %5768 = vmatprep.subr.mxu0 0.0
      %5769 = vmatpush1.msra.mxu0 %v5750
      %5770 = vmatprep.subr.mxu0 0.0
      %5771 = vmatpush1.msra.mxu0 %v5751
      %5772 = vmatprep.subr.mxu0 0.0
      %5773 = vmatpush1.msra.mxu0 %v5752
      %5774 = vmatprep.subr.mxu0 0.0
      %5775 = vmatpush1.msra.mxu0 %v5753
      %5776 = vmatprep.subr.mxu0 0.0
      %5777 = vmatpush1.msra.mxu0 %v5754
      %5778 = vmatprep.subr.mxu0 0.0
      %5779 = vmatpush1.msra.mxu0 %v5755
      %5780 = vmatprep.subr.mxu0 0.0
      %5781 = vmatpush1.msra.mxu0 0.0
      %5782 = vmatprep.subr.mxu0 0.0
      %5783 = vmatpush1.msra.mxu0 0.0
      %5784 = vmatprep.subr.mxu0 0.0
      %5785 = vmatpush1.msra.mxu0 0.0
      %5786 = vmatprep.subr.mxu0 0.0
      %5787 = vmatpush1.msra.mxu0 0.0
      %5788 = vmatprep.subr.mxu0 0.0
      %5789 = vmatpush1.msra.mxu0 0.0
      %5790 = vmatprep.subr.mxu0 0.0
      %5791 = vmatpush1.msra.mxu0 0.0
      %5792 = vmatprep.subr.mxu0 0.0
      %5793 = vmatpush1.msra.mxu0 0.0
      %5794 = vmatprep.subr.mxu0 0.0
      %5795 = vmatpush1.msra.mxu0 0.0
      %5796 = vmatprep.subr.mxu0 0.0
      %5797 = vmatpush1.msra.mxu0 0.0
      %5798 = vmatprep.subr.mxu0 0.0
      %5799 = vmatpush1.msra.mxu0 0.0
      %5800 = vmatprep.subr.mxu0 0.0
      %5801 = vmatpush1.msra.mxu0 0.0
      %5802 = vmatprep.subr.mxu0 0.0
      %5803 = vmatpush1.msra.mxu0 0.0
      %5804 = vmatprep.subr.mxu0 0.0
      %5805 = vmatpush1.msra.mxu0 0.0
      %5806 = vmatprep.subr.mxu0 0.0
      %5807 = vmatpush1.msra.mxu0 0.0
      %5808 = vmatprep.subr.mxu0 0.0
      %5809 = vmatpush1.msra.mxu0 0.0
      %5810 = vmatprep.subr.mxu0 0.0
      %5811 = vmatpush1.msra.mxu0 0.0
      %5812 = vmatprep.subr.mxu0 0.0
      %5813 = vmatpush1.msra.mxu0 0.0
      %5814 = vmatprep.subr.mxu0 0.0
      %5815 = vmatpush1.msra.mxu0 0.0
      %5816 = vmatprep.subr.mxu0 0.0
      %5817 = vmatpush1.msra.mxu0 0.0
      %5818 = vmatprep.subr.mxu0 0.0
      %5819 = vmatpush1.msra.mxu0 0.0
      %5820 = vmatprep.subr.mxu0 0.0
      %5821 = vmatpush1.msra.mxu0 0.0
      %5822 = vmatprep.subr.mxu0 0.0
      %5823 = vmatpush1.msra.mxu0 0.0
      %5824 = vmatprep.subr.mxu0 0.0
      %5825 = vmatpush1.msra.mxu0 0.0
      %5826 = vmatprep.mubr.f32.mxu0 0.0
      %5827 = vmatmul.mubr.f32.gmra.mrb[0].mxu0 %v5757
      %v5828 = vpop.f32.mrb[0].mxu0
      %v5829 = vadd.f32 0.0, %v5828
      %v5830 = vpop.f32.mrb[0].mxu0
      %5831 = vmatprep.mubr.f32.mxu0 0.0
      %5832 = vmatmul.mubr.f32.gmra.mrb[0].mxu0 %v5760
      %v5833 = vpop.f32.mrb[0].mxu0
      %v5834 = vadd.f32 0.0, %v5833
      %v5835 = vpop.f32.mrb[0].mxu0
      %5836 = vdwg.mxu0
      %v5837 = vadd.f32 %v5737, %v5829
      %v5838 = vadd.f32 %v5742, %v5834
      %v5839 = vld [vmem:[%s2925] sm:$0xff]
      %v5840 = vld [vmem:[%s2925 + $0x8] sm:$0xff]
      %v5841 = vld [vmem:[%s4079] sm:$0xff]
      %v5842 = vld [vmem:[%s4079 + $0x8] sm:$0xff]
      %v5843 = vld [vmem:[%s4079 + $0x10] sm:$0xff]
      %v5844 = vld [vmem:[%s4079 + $0x18] sm:$0xff]
      %v5845 = vld [vmem:[%s4079 + $0x20] sm:$0xff]
      %v5846 = vld [vmem:[%s4079 + $0x28] sm:$0xff]
      %v5847 = vld [vmem:[%s4079 + $0x30] sm:$0xff]
      %v5848 = vld [vmem:[%s4079 + $0x38] sm:$0xff]
      %v5849 = vld [vmem:[%s4079 + $0x40] sm:$0xff]
      %v5851 = vsel %vm225, %v5839, 0
      %v5854 = vsel %vm225, %v5840, 0
      %5856 = vmatprep.subr.mxu0 0.0
      %5857 = vmatpush1.msra.mxu0 %v5841
      %5858 = vmatprep.subr.mxu0 0.0
      %5859 = vmatpush1.msra.mxu0 %v5842
      %5860 = vmatprep.subr.mxu0 0.0
      %5861 = vmatpush1.msra.mxu0 %v5843
      %5862 = vmatprep.subr.mxu0 0.0
      %5863 = vmatpush1.msra.mxu0 %v5844
      %5864 = vmatprep.subr.mxu0 0.0
      %5865 = vmatpush1.msra.mxu0 %v5845
      %5866 = vmatprep.subr.mxu0 0.0
      %5867 = vmatpush1.msra.mxu0 %v5846
      %5868 = vmatprep.subr.mxu0 0.0
      %5869 = vmatpush1.msra.mxu0 %v5847
      %5870 = vmatprep.subr.mxu0 0.0
      %5871 = vmatpush1.msra.mxu0 %v5848
      %5872 = vmatprep.subr.mxu0 0.0
      %5873 = vmatpush1.msra.mxu0 %v5849
      %5874 = vmatprep.subr.mxu0 0.0
      %5875 = vmatpush1.msra.mxu0 0.0
      %5876 = vmatprep.subr.mxu0 0.0
      %5877 = vmatpush1.msra.mxu0 0.0
      %5878 = vmatprep.subr.mxu0 0.0
      %5879 = vmatpush1.msra.mxu0 0.0
      %5880 = vmatprep.subr.mxu0 0.0
      %5881 = vmatpush1.msra.mxu0 0.0
      %5882 = vmatprep.subr.mxu0 0.0
      %5883 = vmatpush1.msra.mxu0 0.0
      %5884 = vmatprep.subr.mxu0 0.0
      %5885 = vmatpush1.msra.mxu0 0.0
      %5886 = vmatprep.subr.mxu0 0.0
      %5887 = vmatpush1.msra.mxu0 0.0
      %5888 = vmatprep.subr.mxu0 0.0
      %5889 = vmatpush1.msra.mxu0 0.0
      %5890 = vmatprep.subr.mxu0 0.0
      %5891 = vmatpush1.msra.mxu0 0.0
      %5892 = vmatprep.subr.mxu0 0.0
      %5893 = vmatpush1.msra.mxu0 0.0
      %5894 = vmatprep.subr.mxu0 0.0
      %5895 = vmatpush1.msra.mxu0 0.0
      %5896 = vmatprep.subr.mxu0 0.0
      %5897 = vmatpush1.msra.mxu0 0.0
      %5898 = vmatprep.subr.mxu0 0.0
      %5899 = vmatpush1.msra.mxu0 0.0
      %5900 = vmatprep.subr.mxu0 0.0
      %5901 = vmatpush1.msra.mxu0 0.0
      %5902 = vmatprep.subr.mxu0 0.0
      %5903 = vmatpush1.msra.mxu0 0.0
      %5904 = vmatprep.subr.mxu0 0.0
      %5905 = vmatpush1.msra.mxu0 0.0
      %5906 = vmatprep.subr.mxu0 0.0
      %5907 = vmatpush1.msra.mxu0 0.0
      %5908 = vmatprep.subr.mxu0 0.0
      %5909 = vmatpush1.msra.mxu0 0.0
      %5910 = vmatprep.subr.mxu0 0.0
      %5911 = vmatpush1.msra.mxu0 0.0
      %5912 = vmatprep.subr.mxu0 0.0
      %5913 = vmatpush1.msra.mxu0 0.0
      %5914 = vmatprep.subr.mxu0 0.0
      %5915 = vmatpush1.msra.mxu0 0.0
      %5916 = vmatprep.subr.mxu0 0.0
      %5917 = vmatpush1.msra.mxu0 0.0
      %5918 = vmatprep.subr.mxu0 0.0
      %5919 = vmatpush1.msra.mxu0 0.0
      %5920 = vmatprep.mubr.f32.mxu0 0.0
      %5921 = vmatmul.mubr.f32.gmra.mrb[0].mxu0 %v5851
      %v5922 = vpop.f32.mrb[0].mxu0
      %v5923 = vadd.f32 0.0, %v5922
      %v5924 = vpop.f32.mrb[0].mxu0
      %5925 = vmatprep.mubr.f32.mxu0 0.0
      %5926 = vmatmul.mubr.f32.gmra.mrb[0].mxu0 %v5854
      %v5927 = vpop.f32.mrb[0].mxu0
      %v5928 = vadd.f32 0.0, %v5927
      %v5929 = vpop.f32.mrb[0].mxu0
      %5930 = vdwg.mxu0
      %v5931 = vadd.f32 %v5837, %v5923
      %v5932 = vadd.f32 %v5838, %v5928
      %v5933 = vld [vmem:[%s2925 + $0x1] sm:$0xff]
      %v5934 = vld [vmem:[%s2925 + $0x9] sm:$0xff]
      %v5935 = vld [vmem:[%s4174] sm:$0xff]
      %v5936 = vld [vmem:[%s4174 + $0x8] sm:$0xff]
      %v5937 = vld [vmem:[%s4174 + $0x10] sm:$0xff]
      %v5938 = vld [vmem:[%s4174 + $0x18] sm:$0xff]
      %v5939 = vld [vmem:[%s4174 + $0x20] sm:$0xff]
      %v5940 = vld [vmem:[%s4174 + $0x28] sm:$0xff]
      %v5941 = vld [vmem:[%s4174 + $0x30] sm:$0xff]
      %v5942 = vld [vmem:[%s4174 + $0x38] sm:$0xff]
      %v5943 = vld [vmem:[%s4174 + $0x40] sm:$0xff]
      %v5945 = vsel %vm225, %v5933, 0
      %v5948 = vsel %vm225, %v5934, 0
      %5950 = vmatprep.subr.mxu0 0.0
      %5951 = vmatpush1.msra.mxu0 %v5935
      %5952 = vmatprep.subr.mxu0 0.0
      %5953 = vmatpush1.msra.mxu0 %v5936
      %5954 = vmatprep.subr.mxu0 0.0
      %5955 = vmatpush1.msra.mxu0 %v5937
      %5956 = vmatprep.subr.mxu0 0.0
      %5957 = vmatpush1.msra.mxu0 %v5938
      %5958 = vmatprep.subr.mxu0 0.0
      %5959 = vmatpush1.msra.mxu0 %v5939
      %5960 = vmatprep.subr.mxu0 0.0
      %5961 = vmatpush1.msra.mxu0 %v5940
      %5962 = vmatprep.subr.mxu0 0.0
      %5963 = vmatpush1.msra.mxu0 %v5941
      %5964 = vmatprep.subr.mxu0 0.0
      %5965 = vmatpush1.msra.mxu0 %v5942
      %5966 = vmatprep.subr.mxu0 0.0
      %5967 = vmatpush1.msra.mxu0 %v5943
      %5968 = vmatprep.subr.mxu0 0.0
      %5969 = vmatpush1.msra.mxu0 0.0
      %5970 = vmatprep.subr.mxu0 0.0
      %5971 = vmatpush1.msra.mxu0 0.0
      %5972 = vmatprep.subr.mxu0 0.0
      %5973 = vmatpush1.msra.mxu0 0.0
      %5974 = vmatprep.subr.mxu0 0.0
      %5975 = vmatpush1.msra.mxu0 0.0
      %5976 = vmatprep.subr.mxu0 0.0
      %5977 = vmatpush1.msra.mxu0 0.0
      %5978 = vmatprep.subr.mxu0 0.0
      %5979 = vmatpush1.msra.mxu0 0.0
      %5980 = vmatprep.subr.mxu0 0.0
      %5981 = vmatpush1.msra.mxu0 0.0
      %5982 = vmatprep.subr.mxu0 0.0
      %5983 = vmatpush1.msra.mxu0 0.0
      %5984 = vmatprep.subr.mxu0 0.0
      %5985 = vmatpush1.msra.mxu0 0.0
      %5986 = vmatprep.subr.mxu0 0.0
      %5987 = vmatpush1.msra.mxu0 0.0
      %5988 = vmatprep.subr.mxu0 0.0
      %5989 = vmatpush1.msra.mxu0 0.0
      %5990 = vmatprep.subr.mxu0 0.0
      %5991 = vmatpush1.msra.mxu0 0.0
      %5992 = vmatprep.subr.mxu0 0.0
      %5993 = vmatpush1.msra.mxu0 0.0
      %5994 = vmatprep.subr.mxu0 0.0
      %5995 = vmatpush1.msra.mxu0 0.0
      %5996 = vmatprep.subr.mxu0 0.0
      %5997 = vmatpush1.msra.mxu0 0.0
      %5998 = vmatprep.subr.mxu0 0.0
      %5999 = vmatpush1.msra.mxu0 0.0
      %6000 = vmatprep.subr.mxu0 0.0
      %6001 = vmatpush1.msra.mxu0 0.0
      %6002 = vmatprep.subr.mxu0 0.0
      %6003 = vmatpush1.msra.mxu0 0.0
      %6004 = vmatprep.subr.mxu0 0.0
      %6005 = vmatpush1.msra.mxu0 0.0
      %6006 = vmatprep.subr.mxu0 0.0
      %6007 = vmatpush1.msra.mxu0 0.0
      %6008 = vmatprep.subr.mxu0 0.0
      %6009 = vmatpush1.msra.mxu0 0.0
      %6010 = vmatprep.subr.mxu0 0.0
      %6011 = vmatpush1.msra.mxu0 0.0
      %6012 = vmatprep.subr.mxu0 0.0
      %6013 = vmatpush1.msra.mxu0 0.0
      %6014 = vmatprep.mubr.f32.mxu0 0.0
      %6015 = vmatmul.mubr.f32.gmra.mrb[0].mxu0 %v5945
      %v6016 = vpop.f32.mrb[0].mxu0
      %v6017 = vadd.f32 0.0, %v6016
      %v6018 = vpop.f32.mrb[0].mxu0
      %6019 = vmatprep.mubr.f32.mxu0 0.0
      %6020 = vmatmul.mubr.f32.gmra.mrb[0].mxu0 %v5948
      %v6021 = vpop.f32.mrb[0].mxu0
      %v6022 = vadd.f32 0.0, %v6021
      %v6023 = vpop.f32.mrb[0].mxu0
      %6024 = vdwg.mxu0
      %v6025 = vadd.f32 %v5931, %v6017
      %v6026 = vadd.f32 %v5932, %v6022
      %v6027 = vld [vmem:[%s2925 + $0x2] sm:$0xff]
      %v6028 = vld [vmem:[%s2925 + $0xa] sm:$0xff]
      %v6029 = vld [vmem:[%s4269] sm:$0xff]
      %v6030 = vld [vmem:[%s4269 + $0x8] sm:$0xff]
      %v6031 = vld [vmem:[%s4269 + $0x10] sm:$0xff]
      %v6032 = vld [vmem:[%s4269 + $0x18] sm:$0xff]
      %v6033 = vld [vmem:[%s4269 + $0x20] sm:$0xff]
      %v6034 = vld [vmem:[%s4269 + $0x28] sm:$0xff]
      %v6035 = vld [vmem:[%s4269 + $0x30] sm:$0xff]
      %v6036 = vld [vmem:[%s4269 + $0x38] sm:$0xff]
      %v6037 = vld [vmem:[%s4269 + $0x40] sm:$0xff]
      %v6039 = vsel %vm225, %v6027, 0
      %v6042 = vsel %vm225, %v6028, 0
      %6044 = vmatprep.subr.mxu0 0.0
      %6045 = vmatpush1.msra.mxu0 %v6029
      %6046 = vmatprep.subr.mxu0 0.0
      %6047 = vmatpush1.msra.mxu0 %v6030
      %6048 = vmatprep.subr.mxu0 0.0
      %6049 = vmatpush1.msra.mxu0 %v6031
      %6050 = vmatprep.subr.mxu0 0.0
      %6051 = vmatpush1.msra.mxu0 %v6032
      %6052 = vmatprep.subr.mxu0 0.0
      %6053 = vmatpush1.msra.mxu0 %v6033
      %6054 = vmatprep.subr.mxu0 0.0
      %6055 = vmatpush1.msra.mxu0 %v6034
      %6056 = vmatprep.subr.mxu0 0.0
      %6057 = vmatpush1.msra.mxu0 %v6035
      %6058 = vmatprep.subr.mxu0 0.0
      %6059 = vmatpush1.msra.mxu0 %v6036
      %6060 = vmatprep.subr.mxu0 0.0
      %6061 = vmatpush1.msra.mxu0 %v6037
      %6062 = vmatprep.subr.mxu0 0.0
      %6063 = vmatpush1.msra.mxu0 0.0
      %6064 = vmatprep.subr.mxu0 0.0
      %6065 = vmatpush1.msra.mxu0 0.0
      %6066 = vmatprep.subr.mxu0 0.0
      %6067 = vmatpush1.msra.mxu0 0.0
      %6068 = vmatprep.subr.mxu0 0.0
      %6069 = vmatpush1.msra.mxu0 0.0
      %6070 = vmatprep.subr.mxu0 0.0
      %6071 = vmatpush1.msra.mxu0 0.0
      %6072 = vmatprep.subr.mxu0 0.0
      %6073 = vmatpush1.msra.mxu0 0.0
      %6074 = vmatprep.subr.mxu0 0.0
      %6075 = vmatpush1.msra.mxu0 0.0
      %6076 = vmatprep.subr.mxu0 0.0
      %6077 = vmatpush1.msra.mxu0 0.0
      %6078 = vmatprep.subr.mxu0 0.0
      %6079 = vmatpush1.msra.mxu0 0.0
      %6080 = vmatprep.subr.mxu0 0.0
      %6081 = vmatpush1.msra.mxu0 0.0
      %6082 = vmatprep.subr.mxu0 0.0
      %6083 = vmatpush1.msra.mxu0 0.0
      %6084 = vmatprep.subr.mxu0 0.0
      %6085 = vmatpush1.msra.mxu0 0.0
      %6086 = vmatprep.subr.mxu0 0.0
      %6087 = vmatpush1.msra.mxu0 0.0
      %6088 = vmatprep.subr.mxu0 0.0
      %6089 = vmatpush1.msra.mxu0 0.0
      %6090 = vmatprep.subr.mxu0 0.0
      %6091 = vmatpush1.msra.mxu0 0.0
      %6092 = vmatprep.subr.mxu0 0.0
      %6093 = vmatpush1.msra.mxu0 0.0
      %6094 = vmatprep.subr.mxu0 0.0
      %6095 = vmatpush1.msra.mxu0 0.0
      %6096 = vmatprep.subr.mxu0 0.0
      %6097 = vmatpush1.msra.mxu0 0.0
      %6098 = vmatprep.subr.mxu0 0.0
      %6099 = vmatpush1.msra.mxu0 0.0
      %6100 = vmatprep.subr.mxu0 0.0
      %6101 = vmatpush1.msra.mxu0 0.0
      %6102 = vmatprep.subr.mxu0 0.0
      %6103 = vmatpush1.msra.mxu0 0.0
      %6104 = vmatprep.subr.mxu0 0.0
      %6105 = vmatpush1.msra.mxu0 0.0
      %6106 = vmatprep.subr.mxu0 0.0
      %6107 = vmatpush1.msra.mxu0 0.0
      %6108 = vmatprep.mubr.f32.mxu0 0.0
      %6109 = vmatmul.mubr.f32.gmra.mrb[0].mxu0 %v6039
      %v6110 = vpop.f32.mrb[0].mxu0
      %v6111 = vadd.f32 0.0, %v6110
      %v6112 = vpop.f32.mrb[0].mxu0
      %6113 = vmatprep.mubr.f32.mxu0 0.0
      %6114 = vmatmul.mubr.f32.gmra.mrb[0].mxu0 %v6042
      %v6115 = vpop.f32.mrb[0].mxu0
      %v6116 = vadd.f32 0.0, %v6115
      %v6117 = vpop.f32.mrb[0].mxu0
      %6118 = vdwg.mxu0
      %v6119 = vadd.f32 %v6025, %v6111
      %v6120 = vadd.f32 %v6026, %v6116
      %v6121 = vld [vmem:[%s3794] sm:$0xff]
      %v6122 = vld [vmem:[%s3794 + $0x8] sm:$0xff]
      %v6123 = vld [vmem:[%s4364] sm:$0xff]
      %v6124 = vld [vmem:[%s4364 + $0x8] sm:$0xff]
      %v6125 = vld [vmem:[%s4364 + $0x10] sm:$0xff]
      %v6126 = vld [vmem:[%s4364 + $0x18] sm:$0xff]
      %v6127 = vld [vmem:[%s4364 + $0x20] sm:$0xff]
      %v6128 = vld [vmem:[%s4364 + $0x28] sm:$0xff]
      %v6129 = vld [vmem:[%s4364 + $0x30] sm:$0xff]
      %v6130 = vld [vmem:[%s4364 + $0x38] sm:$0xff]
      %v6131 = vld [vmem:[%s4364 + $0x40] sm:$0xff]
      %v6133 = vsel %vm225, %v6121, 0
      %v6136 = vsel %vm225, %v6122, 0
      %6138 = vmatprep.subr.mxu0 0.0
      %6139 = vmatpush1.msra.mxu0 %v6123
      %6140 = vmatprep.subr.mxu0 0.0
      %6141 = vmatpush1.msra.mxu0 %v6124
      %6142 = vmatprep.subr.mxu0 0.0
      %6143 = vmatpush1.msra.mxu0 %v6125
      %6144 = vmatprep.subr.mxu0 0.0
      %6145 = vmatpush1.msra.mxu0 %v6126
      %6146 = vmatprep.subr.mxu0 0.0
      %6147 = vmatpush1.msra.mxu0 %v6127
      %6148 = vmatprep.subr.mxu0 0.0
      %6149 = vmatpush1.msra.mxu0 %v6128
      %6150 = vmatprep.subr.mxu0 0.0
      %6151 = vmatpush1.msra.mxu0 %v6129
      %6152 = vmatprep.subr.mxu0 0.0
      %6153 = vmatpush1.msra.mxu0 %v6130
      %6154 = vmatprep.subr.mxu0 0.0
      %6155 = vmatpush1.msra.mxu0 %v6131
      %6156 = vmatprep.subr.mxu0 0.0
      %6157 = vmatpush1.msra.mxu0 0.0
      %6158 = vmatprep.subr.mxu0 0.0
      %6159 = vmatpush1.msra.mxu0 0.0
      %6160 = vmatprep.subr.mxu0 0.0
      %6161 = vmatpush1.msra.mxu0 0.0
      %6162 = vmatprep.subr.mxu0 0.0
      %6163 = vmatpush1.msra.mxu0 0.0
      %6164 = vmatprep.subr.mxu0 0.0
      %6165 = vmatpush1.msra.mxu0 0.0
      %6166 = vmatprep.subr.mxu0 0.0
      %6167 = vmatpush1.msra.mxu0 0.0
      %6168 = vmatprep.subr.mxu0 0.0
      %6169 = vmatpush1.msra.mxu0 0.0
      %6170 = vmatprep.subr.mxu0 0.0
      %6171 = vmatpush1.msra.mxu0 0.0
      %6172 = vmatprep.subr.mxu0 0.0
      %6173 = vmatpush1.msra.mxu0 0.0
      %6174 = vmatprep.subr.mxu0 0.0
      %6175 = vmatpush1.msra.mxu0 0.0
      %6176 = vmatprep.subr.mxu0 0.0
      %6177 = vmatpush1.msra.mxu0 0.0
      %6178 = vmatprep.subr.mxu0 0.0
      %6179 = vmatpush1.msra.mxu0 0.0
      %6180 = vmatprep.subr.mxu0 0.0
      %6181 = vmatpush1.msra.mxu0 0.0
      %6182 = vmatprep.subr.mxu0 0.0
      %6183 = vmatpush1.msra.mxu0 0.0
      %6184 = vmatprep.subr.mxu0 0.0
      %6185 = vmatpush1.msra.mxu0 0.0
      %6186 = vmatprep.subr.mxu0 0.0
      %6187 = vmatpush1.msra.mxu0 0.0
      %6188 = vmatprep.subr.mxu0 0.0
      %6189 = vmatpush1.msra.mxu0 0.0
      %6190 = vmatprep.subr.mxu0 0.0
      %6191 = vmatpush1.msra.mxu0 0.0
      %6192 = vmatprep.subr.mxu0 0.0
      %6193 = vmatpush1.msra.mxu0 0.0
      %6194 = vmatprep.subr.mxu0 0.0
      %6195 = vmatpush1.msra.mxu0 0.0
      %6196 = vmatprep.subr.mxu0 0.0
      %6197 = vmatpush1.msra.mxu0 0.0
      %6198 = vmatprep.subr.mxu0 0.0
      %6199 = vmatpush1.msra.mxu0 0.0
      %6200 = vmatprep.subr.mxu0 0.0
      %6201 = vmatpush1.msra.mxu0 0.0
      %6202 = vmatprep.mubr.f32.mxu0 0.0
      %6203 = vmatmul.mubr.f32.gmra.mrb[0].mxu0 %v6133
      %v6204 = vpop.f32.mrb[0].mxu0
      %v6205 = vadd.f32 0.0, %v6204
      %v6206 = vpop.f32.mrb[0].mxu0
      %6207 = vmatprep.mubr.f32.mxu0 0.0
      %6208 = vmatmul.mubr.f32.gmra.mrb[0].mxu0 %v6136
      %v6209 = vpop.f32.mrb[0].mxu0
      %v6210 = vadd.f32 0.0, %v6209
      %v6211 = vpop.f32.mrb[0].mxu0
      %6212 = vdwg.mxu0
      %v6213 = vadd.f32 %v6119, %v6205
      %v6214 = vadd.f32 %v6120, %v6210
      %v6215 = vld [vmem:[%s3794 + $0x1] sm:$0xff]
      %v6216 = vld [vmem:[%s3794 + $0x9] sm:$0xff]
      %v6217 = vld [vmem:[%s4459] sm:$0xff]
      %v6218 = vld [vmem:[%s4459 + $0x8] sm:$0xff]
      %v6219 = vld [vmem:[%s4459 + $0x10] sm:$0xff]
      %v6220 = vld [vmem:[%s4459 + $0x18] sm:$0xff]
      %v6221 = vld [vmem:[%s4459 + $0x20] sm:$0xff]
      %v6222 = vld [vmem:[%s4459 + $0x28] sm:$0xff]
      %v6223 = vld [vmem:[%s4459 + $0x30] sm:$0xff]
      %v6224 = vld [vmem:[%s4459 + $0x38] sm:$0xff]
      %v6225 = vld [vmem:[%s4459 + $0x40] sm:$0xff]
      %v6227 = vsel %vm225, %v6215, 0
      %v6230 = vsel %vm225, %v6216, 0
      %6232 = vmatprep.subr.mxu0 0.0
      %6233 = vmatpush1.msra.mxu0 %v6217
      %6234 = vmatprep.subr.mxu0 0.0
      %6235 = vmatpush1.msra.mxu0 %v6218
      %6236 = vmatprep.subr.mxu0 0.0
      %6237 = vmatpush1.msra.mxu0 %v6219
      %6238 = vmatprep.subr.mxu0 0.0
      %6239 = vmatpush1.msra.mxu0 %v6220
      %6240 = vmatprep.subr.mxu0 0.0
      %6241 = vmatpush1.msra.mxu0 %v6221
      %6242 = vmatprep.subr.mxu0 0.0
      %6243 = vmatpush1.msra.mxu0 %v6222
      %6244 = vmatprep.subr.mxu0 0.0
      %6245 = vmatpush1.msra.mxu0 %v6223
      %6246 = vmatprep.subr.mxu0 0.0
      %6247 = vmatpush1.msra.mxu0 %v6224
      %6248 = vmatprep.subr.mxu0 0.0
      %6249 = vmatpush1.msra.mxu0 %v6225
      %6250 = vmatprep.subr.mxu0 0.0
      %6251 = vmatpush1.msra.mxu0 0.0
      %6252 = vmatprep.subr.mxu0 0.0
      %6253 = vmatpush1.msra.mxu0 0.0
      %6254 = vmatprep.subr.mxu0 0.0
      %6255 = vmatpush1.msra.mxu0 0.0
      %6256 = vmatprep.subr.mxu0 0.0
      %6257 = vmatpush1.msra.mxu0 0.0
      %6258 = vmatprep.subr.mxu0 0.0
      %6259 = vmatpush1.msra.mxu0 0.0
      %6260 = vmatprep.subr.mxu0 0.0
      %6261 = vmatpush1.msra.mxu0 0.0
      %6262 = vmatprep.subr.mxu0 0.0
      %6263 = vmatpush1.msra.mxu0 0.0
      %6264 = vmatprep.subr.mxu0 0.0
      %6265 = vmatpush1.msra.mxu0 0.0
      %6266 = vmatprep.subr.mxu0 0.0
      %6267 = vmatpush1.msra.mxu0 0.0
      %6268 = vmatprep.subr.mxu0 0.0
      %6269 = vmatpush1.msra.mxu0 0.0
      %6270 = vmatprep.subr.mxu0 0.0
      %6271 = vmatpush1.msra.mxu0 0.0
      %6272 = vmatprep.subr.mxu0 0.0
      %6273 = vmatpush1.msra.mxu0 0.0
      %6274 = vmatprep.subr.mxu0 0.0
      %6275 = vmatpush1.msra.mxu0 0.0
      %6276 = vmatprep.subr.mxu0 0.0
      %6277 = vmatpush1.msra.mxu0 0.0
      %6278 = vmatprep.subr.mxu0 0.0
      %6279 = vmatpush1.msra.mxu0 0.0
      %6280 = vmatprep.subr.mxu0 0.0
      %6281 = vmatpush1.msra.mxu0 0.0
      %6282 = vmatprep.subr.mxu0 0.0
      %6283 = vmatpush1.msra.mxu0 0.0
      %6284 = vmatprep.subr.mxu0 0.0
      %6285 = vmatpush1.msra.mxu0 0.0
      %6286 = vmatprep.subr.mxu0 0.0
      %6287 = vmatpush1.msra.mxu0 0.0
      %6288 = vmatprep.subr.mxu0 0.0
      %6289 = vmatpush1.msra.mxu0 0.0
      %6290 = vmatprep.subr.mxu0 0.0
      %6291 = vmatpush1.msra.mxu0 0.0
      %6292 = vmatprep.subr.mxu0 0.0
      %6293 = vmatpush1.msra.mxu0 0.0
      %6294 = vmatprep.subr.mxu0 0.0
      %6295 = vmatpush1.msra.mxu0 0.0
      %6296 = vmatprep.mubr.f32.mxu0 0.0
      %6297 = vmatmul.mubr.f32.gmra.mrb[0].mxu0 %v6227
      %v6298 = vpop.f32.mrb[0].mxu0
      %v6299 = vadd.f32 0.0, %v6298
      %v6300 = vpop.f32.mrb[0].mxu0
      %6301 = vmatprep.mubr.f32.mxu0 0.0
      %6302 = vmatmul.mubr.f32.gmra.mrb[0].mxu0 %v6230
      %v6303 = vpop.f32.mrb[0].mxu0
      %v6304 = vadd.f32 0.0, %v6303
      %v6305 = vpop.f32.mrb[0].mxu0
      %6306 = vdwg.mxu0
      %v6307 = vadd.f32 %v6213, %v6299
      %v6308 = vadd.f32 %v6214, %v6304
      %v6309 = vld [vmem:[%s3794 + $0x2] sm:$0xff]
      %v6310 = vld [vmem:[%s3794 + $0xa] sm:$0xff]
      %v6311 = vld [vmem:[%s4554] sm:$0xff]
      %v6312 = vld [vmem:[%s4554 + $0x8] sm:$0xff]
      %v6313 = vld [vmem:[%s4554 + $0x10] sm:$0xff]
      %v6314 = vld [vmem:[%s4554 + $0x18] sm:$0xff]
      %v6315 = vld [vmem:[%s4554 + $0x20] sm:$0xff]
      %v6316 = vld [vmem:[%s4554 + $0x28] sm:$0xff]
      %v6317 = vld [vmem:[%s4554 + $0x30] sm:$0xff]
      %v6318 = vld [vmem:[%s4554 + $0x38] sm:$0xff]
      %v6319 = vld [vmem:[%s4554 + $0x40] sm:$0xff]
      %v6321 = vsel %vm225, %v6309, 0
      %v6324 = vsel %vm225, %v6310, 0
      %6326 = vmatprep.subr.mxu0 0.0
      %6327 = vmatpush1.msra.mxu0 %v6311
      %6328 = vmatprep.subr.mxu0 0.0
      %6329 = vmatpush1.msra.mxu0 %v6312
      %6330 = vmatprep.subr.mxu0 0.0
      %6331 = vmatpush1.msra.mxu0 %v6313
      %6332 = vmatprep.subr.mxu0 0.0
      %6333 = vmatpush1.msra.mxu0 %v6314
      %6334 = vmatprep.subr.mxu0 0.0
      %6335 = vmatpush1.msra.mxu0 %v6315
      %6336 = vmatprep.subr.mxu0 0.0
      %6337 = vmatpush1.msra.mxu0 %v6316
      %6338 = vmatprep.subr.mxu0 0.0
      %6339 = vmatpush1.msra.mxu0 %v6317
      %6340 = vmatprep.subr.mxu0 0.0
      %6341 = vmatpush1.msra.mxu0 %v6318
      %6342 = vmatprep.subr.mxu0 0.0
      %6343 = vmatpush1.msra.mxu0 %v6319
      %6344 = vmatprep.subr.mxu0 0.0
      %6345 = vmatpush1.msra.mxu0 0.0
      %6346 = vmatprep.subr.mxu0 0.0
      %6347 = vmatpush1.msra.mxu0 0.0
      %6348 = vmatprep.subr.mxu0 0.0
      %6349 = vmatpush1.msra.mxu0 0.0
      %6350 = vmatprep.subr.mxu0 0.0
      %6351 = vmatpush1.msra.mxu0 0.0
      %6352 = vmatprep.subr.mxu0 0.0
      %6353 = vmatpush1.msra.mxu0 0.0
      %6354 = vmatprep.subr.mxu0 0.0
      %6355 = vmatpush1.msra.mxu0 0.0
      %6356 = vmatprep.subr.mxu0 0.0
      %6357 = vmatpush1.msra.mxu0 0.0
      %6358 = vmatprep.subr.mxu0 0.0
      %6359 = vmatpush1.msra.mxu0 0.0
      %6360 = vmatprep.subr.mxu0 0.0
      %6361 = vmatpush1.msra.mxu0 0.0
      %6362 = vmatprep.subr.mxu0 0.0
      %6363 = vmatpush1.msra.mxu0 0.0
      %6364 = vmatprep.subr.mxu0 0.0
      %6365 = vmatpush1.msra.mxu0 0.0
      %6366 = vmatprep.subr.mxu0 0.0
      %6367 = vmatpush1.msra.mxu0 0.0
      %6368 = vmatprep.subr.mxu0 0.0
      %6369 = vmatpush1.msra.mxu0 0.0
      %6370 = vmatprep.subr.mxu0 0.0
      %6371 = vmatpush1.msra.mxu0 0.0
      %6372 = vmatprep.subr.mxu0 0.0
      %6373 = vmatpush1.msra.mxu0 0.0
      %6374 = vmatprep.subr.mxu0 0.0
      %6375 = vmatpush1.msra.mxu0 0.0
      %6376 = vmatprep.subr.mxu0 0.0
      %6377 = vmatpush1.msra.mxu0 0.0
      %6378 = vmatprep.subr.mxu0 0.0
      %6379 = vmatpush1.msra.mxu0 0.0
      %6380 = vmatprep.subr.mxu0 0.0
      %6381 = vmatpush1.msra.mxu0 0.0
      %6382 = vmatprep.subr.mxu0 0.0
      %6383 = vmatpush1.msra.mxu0 0.0
      %6384 = vmatprep.subr.mxu0 0.0
      %6385 = vmatpush1.msra.mxu0 0.0
      %6386 = vmatprep.subr.mxu0 0.0
      %6387 = vmatpush1.msra.mxu0 0.0
      %6388 = vmatprep.subr.mxu0 0.0
      %6389 = vmatpush1.msra.mxu0 0.0
      %6390 = vmatprep.mubr.f32.mxu0 0.0
      %6391 = vmatmul.mubr.f32.gmra.mrb[0].mxu0 %v6321
      %v6392 = vpop.f32.mrb[0].mxu0
      %v6393 = vadd.f32 0.0, %v6392
      %v6394 = vpop.f32.mrb[0].mxu0
      %6395 = vmatprep.mubr.f32.mxu0 0.0
      %6396 = vmatmul.mubr.f32.gmra.mrb[0].mxu0 %v6324
      %v6397 = vpop.f32.mrb[0].mxu0
      %v6398 = vadd.f32 0.0, %v6397
      %v6399 = vpop.f32.mrb[0].mxu0
      %6400 = vdwg.mxu0
      %v6401 = vadd.f32 %v6307, %v6393
      %v6402 = vadd.f32 %v6308, %v6398
      %v6403 = vld [vmem:[%s4] sm:$0x1]
      %v6405 = vlaneseq
      %v6406 = vshrl.u32 %v6405, 7
      %v6407 = vsub.s32 0, %v6406
      %v6408 = vrot.slane %v6403, %v6407
      %v6410 = vadd.f32 %v6401, %v6408
      %v6411 = vadd.f32 %v6402, %v6408
      %vm6412 = vcmp.gt.f32.partialorder %v6410, 0.0
      %vm6413 = vcmp.gt.f32.partialorder %v6411, 0.0
      %v6414 = vmul.f32 %v6410, 0.04
      %v6415 = vmul.f32 %v6411, 0.04
      %v6416 = vsel %vm6412, %v6410, %v6414
      %v6417 = vsel %vm6413, %v6411, %v6415
      %6420 = vrot.lane.b32.xlu0 %v6416, 4
      %v6421 = vpop.permute.xlu0 %6420
      %6422 = vrot.lane.b32.xlu0 %v6417, 4
      %v6423 = vpop.permute.xlu0 %6422
      %v6426 = vadd.f32 %v5933, %v6421
      %v6427 = vadd.f32 %v5934, %v6423
      %6430 = vrot.lane.b32.xlu0 %v6426, 124
      %v6431 = vpop.permute.xlu0 %6430
      %6432 = vrot.lane.b32.xlu0 %v6427, 124
      %v6433 = vpop.permute.xlu0 %6432
      %s6436 = scalar_lea.vmem %s224, 32
      %6437 = vst.msk [vmem:[%s6436] sm:$0xff] %vm4680, %v6431
      %6438 = vst.msk [vmem:[%s6436 + $0x8] sm:$0xff] %vm4680, %v6433
      %v6439 = vld [vmem:[%s2925] sm:$0xff]
      %v6440 = vld [vmem:[%s2925 + $0x8] sm:$0xff]
      %v6441 = vld [vmem:[%s3] sm:$0xff]
      %v6442 = vld [vmem:[%s3 + $0x8] sm:$0xff]
      %v6443 = vld [vmem:[%s3 + $0x10] sm:$0xff]
      %v6444 = vld [vmem:[%s3 + $0x18] sm:$0xff]
      %v6445 = vld [vmem:[%s3 + $0x20] sm:$0xff]
      %v6446 = vld [vmem:[%s3 + $0x28] sm:$0xff]
      %v6447 = vld [vmem:[%s3 + $0x30] sm:$0xff]
      %v6448 = vld [vmem:[%s3 + $0x38] sm:$0xff]
      %v6449 = vld [vmem:[%s3 + $0x40] sm:$0xff]
      %v6450 = vld [vmem:[%s2925 + $0x1] sm:$0xff]
      %v6451 = vld [vmem:[%s2925 + $0x9] sm:$0xff]
      %v6452 = vld [vmem:[%s3810] sm:$0xff]
      %v6453 = vld [vmem:[%s3810 + $0x8] sm:$0xff]
      %v6454 = vld [vmem:[%s3810 + $0x10] sm:$0xff]
      %v6455 = vld [vmem:[%s3810 + $0x18] sm:$0xff]
      %v6456 = vld [vmem:[%s3810 + $0x20] sm:$0xff]
      %v6457 = vld [vmem:[%s3810 + $0x28] sm:$0xff]
      %v6458 = vld [vmem:[%s3810 + $0x30] sm:$0xff]
      %v6459 = vld [vmem:[%s3810 + $0x38] sm:$0xff]
      %v6460 = vld [vmem:[%s3810 + $0x40] sm:$0xff]
      %v6462 = vsel %vm225, %v6450, 0
      %v6465 = vsel %vm225, %v6451, 0
      %6467 = vmatprep.subr.mxu0 0.0
      %6468 = vmatpush1.msra.mxu0 %v6452
      %6469 = vmatprep.subr.mxu0 0.0
      %6470 = vmatpush1.msra.mxu0 %v6453
      %6471 = vmatprep.subr.mxu0 0.0
      %6472 = vmatpush1.msra.mxu0 %v6454
      %6473 = vmatprep.subr.mxu0 0.0
      %6474 = vmatpush1.msra.mxu0 %v6455
      %6475 = vmatprep.subr.mxu0 0.0
      %6476 = vmatpush1.msra.mxu0 %v6456
      %6477 = vmatprep.subr.mxu0 0.0
      %6478 = vmatpush1.msra.mxu0 %v6457
      %6479 = vmatprep.subr.mxu0 0.0
      %6480 = vmatpush1.msra.mxu0 %v6458
      %6481 = vmatprep.subr.mxu0 0.0
      %6482 = vmatpush1.msra.mxu0 %v6459
      %6483 = vmatprep.subr.mxu0 0.0
      %6484 = vmatpush1.msra.mxu0 %v6460
      %6485 = vmatprep.subr.mxu0 0.0
      %6486 = vmatpush1.msra.mxu0 0.0
      %6487 = vmatprep.subr.mxu0 0.0
      %6488 = vmatpush1.msra.mxu0 0.0
      %6489 = vmatprep.subr.mxu0 0.0
      %6490 = vmatpush1.msra.mxu0 0.0
      %6491 = vmatprep.subr.mxu0 0.0
      %6492 = vmatpush1.msra.mxu0 0.0
      %6493 = vmatprep.subr.mxu0 0.0
      %6494 = vmatpush1.msra.mxu0 0.0
      %6495 = vmatprep.subr.mxu0 0.0
      %6496 = vmatpush1.msra.mxu0 0.0
      %6497 = vmatprep.subr.mxu0 0.0
      %6498 = vmatpush1.msra.mxu0 0.0
      %6499 = vmatprep.subr.mxu0 0.0
      %6500 = vmatpush1.msra.mxu0 0.0
      %6501 = vmatprep.subr.mxu0 0.0
      %6502 = vmatpush1.msra.mxu0 0.0
      %6503 = vmatprep.subr.mxu0 0.0
      %6504 = vmatpush1.msra.mxu0 0.0
      %6505 = vmatprep.subr.mxu0 0.0
      %6506 = vmatpush1.msra.mxu0 0.0
      %6507 = vmatprep.subr.mxu0 0.0
      %6508 = vmatpush1.msra.mxu0 0.0
      %6509 = vmatprep.subr.mxu0 0.0
      %6510 = vmatpush1.msra.mxu0 0.0
      %6511 = vmatprep.subr.mxu0 0.0
      %6512 = vmatpush1.msra.mxu0 0.0
      %6513 = vmatprep.subr.mxu0 0.0
      %6514 = vmatpush1.msra.mxu0 0.0
      %6515 = vmatprep.subr.mxu0 0.0
      %6516 = vmatpush1.msra.mxu0 0.0
      %6517 = vmatprep.subr.mxu0 0.0
      %6518 = vmatpush1.msra.mxu0 0.0
      %6519 = vmatprep.subr.mxu0 0.0
      %6520 = vmatpush1.msra.mxu0 0.0
      %6521 = vmatprep.subr.mxu0 0.0
      %6522 = vmatpush1.msra.mxu0 0.0
      %6523 = vmatprep.subr.mxu0 0.0
      %6524 = vmatpush1.msra.mxu0 0.0
      %6525 = vmatprep.subr.mxu0 0.0
      %6526 = vmatpush1.msra.mxu0 0.0
      %6527 = vmatprep.subr.mxu0 0.0
      %6528 = vmatpush1.msra.mxu0 0.0
      %6529 = vmatprep.subr.mxu0 0.0
      %6530 = vmatpush1.msra.mxu0 0.0
      %6531 = vmatprep.mubr.f32.mxu0 0.0
      %6532 = vmatmul.mubr.f32.gmra.mrb[0].mxu0 %v6462
      %v6533 = vpop.f32.mrb[0].mxu0
      %v6534 = vadd.f32 0.0, %v6533
      %v6535 = vpop.f32.mrb[0].mxu0
      %6536 = vmatprep.mubr.f32.mxu0 0.0
      %6537 = vmatmul.mubr.f32.gmra.mrb[0].mxu0 %v6465
      %v6538 = vpop.f32.mrb[0].mxu0
      %v6539 = vadd.f32 0.0, %v6538
      %v6540 = vpop.f32.mrb[0].mxu0
      %6541 = vdwg.mxu0
      %v6543 = vsel %vm225, %v6439, 0
      %v6546 = vsel %vm225, %v6440, 0
      %6548 = vmatprep.subr.mxu0 0.0
      %6549 = vmatpush1.msra.mxu0 %v6441
      %6550 = vmatprep.subr.mxu0 0.0
      %6551 = vmatpush1.msra.mxu0 %v6442
      %6552 = vmatprep.subr.mxu0 0.0
      %6553 = vmatpush1.msra.mxu0 %v6443
      %6554 = vmatprep.subr.mxu0 0.0
      %6555 = vmatpush1.msra.mxu0 %v6444
      %6556 = vmatprep.subr.mxu0 0.0
      %6557 = vmatpush1.msra.mxu0 %v6445
      %6558 = vmatprep.subr.mxu0 0.0
      %6559 = vmatpush1.msra.mxu0 %v6446
      %6560 = vmatprep.subr.mxu0 0.0
      %6561 = vmatpush1.msra.mxu0 %v6447
      %6562 = vmatprep.subr.mxu0 0.0
      %6563 = vmatpush1.msra.mxu0 %v6448
      %6564 = vmatprep.subr.mxu0 0.0
      %6565 = vmatpush1.msra.mxu0 %v6449
      %6566 = vmatprep.subr.mxu0 0.0
      %6567 = vmatpush1.msra.mxu0 0.0
      %6568 = vmatprep.subr.mxu0 0.0
      %6569 = vmatpush1.msra.mxu0 0.0
      %6570 = vmatprep.subr.mxu0 0.0
      %6571 = vmatpush1.msra.mxu0 0.0
      %6572 = vmatprep.subr.mxu0 0.0
      %6573 = vmatpush1.msra.mxu0 0.0
      %6574 = vmatprep.subr.mxu0 0.0
      %6575 = vmatpush1.msra.mxu0 0.0
      %6576 = vmatprep.subr.mxu0 0.0
      %6577 = vmatpush1.msra.mxu0 0.0
      %6578 = vmatprep.subr.mxu0 0.0
      %6579 = vmatpush1.msra.mxu0 0.0
      %6580 = vmatprep.subr.mxu0 0.0
      %6581 = vmatpush1.msra.mxu0 0.0
      %6582 = vmatprep.subr.mxu0 0.0
      %6583 = vmatpush1.msra.mxu0 0.0
      %6584 = vmatprep.subr.mxu0 0.0
      %6585 = vmatpush1.msra.mxu0 0.0
      %6586 = vmatprep.subr.mxu0 0.0
      %6587 = vmatpush1.msra.mxu0 0.0
      %6588 = vmatprep.subr.mxu0 0.0
      %6589 = vmatpush1.msra.mxu0 0.0
      %6590 = vmatprep.subr.mxu0 0.0
      %6591 = vmatpush1.msra.mxu0 0.0
      %6592 = vmatprep.subr.mxu0 0.0
      %6593 = vmatpush1.msra.mxu0 0.0
      %6594 = vmatprep.subr.mxu0 0.0
      %6595 = vmatpush1.msra.mxu0 0.0
      %6596 = vmatprep.subr.mxu0 0.0
      %6597 = vmatpush1.msra.mxu0 0.0
      %6598 = vmatprep.subr.mxu0 0.0
      %6599 = vmatpush1.msra.mxu0 0.0
      %6600 = vmatprep.subr.mxu0 0.0
      %6601 = vmatpush1.msra.mxu0 0.0
      %6602 = vmatprep.subr.mxu0 0.0
      %6603 = vmatpush1.msra.mxu0 0.0
      %6604 = vmatprep.subr.mxu0 0.0
      %6605 = vmatpush1.msra.mxu0 0.0
      %6606 = vmatprep.subr.mxu0 0.0
      %6607 = vmatpush1.msra.mxu0 0.0
      %6608 = vmatprep.subr.mxu0 0.0
      %6609 = vmatpush1.msra.mxu0 0.0
      %6610 = vmatprep.subr.mxu0 0.0
      %6611 = vmatpush1.msra.mxu0 0.0
      %6612 = vmatprep.mubr.f32.mxu0 0.0
      %6613 = vmatmul.mubr.f32.gmra.mrb[0].mxu0 %v6543
      %v6614 = vpop.f32.mrb[0].mxu0
      %v6615 = vadd.f32 %v6534, %v6614
      %v6616 = vpop.f32.mrb[0].mxu0
      %6617 = vmatprep.mubr.f32.mxu0 0.0
      %6618 = vmatmul.mubr.f32.gmra.mrb[0].mxu0 %v6546
      %v6619 = vpop.f32.mrb[0].mxu0
      %v6620 = vadd.f32 %v6539, %v6619
      %v6621 = vpop.f32.mrb[0].mxu0
      %6622 = vdwg.mxu0
      %v6623 = vld [vmem:[%s2925 + $0x2] sm:$0xff]
      %v6624 = vld [vmem:[%s2925 + $0xa] sm:$0xff]
      %v6625 = vld [vmem:[%s3984] sm:$0xff]
      %v6626 = vld [vmem:[%s3984 + $0x8] sm:$0xff]
      %v6627 = vld [vmem:[%s3984 + $0x10] sm:$0xff]
      %v6628 = vld [vmem:[%s3984 + $0x18] sm:$0xff]
      %v6629 = vld [vmem:[%s3984 + $0x20] sm:$0xff]
      %v6630 = vld [vmem:[%s3984 + $0x28] sm:$0xff]
      %v6631 = vld [vmem:[%s3984 + $0x30] sm:$0xff]
      %v6632 = vld [vmem:[%s3984 + $0x38] sm:$0xff]
      %v6633 = vld [vmem:[%s3984 + $0x40] sm:$0xff]
      %v6635 = vsel %vm225, %v6623, 0
      %v6638 = vsel %vm225, %v6624, 0
      %6640 = vmatprep.subr.mxu0 0.0
      %6641 = vmatpush1.msra.mxu0 %v6625
      %6642 = vmatprep.subr.mxu0 0.0
      %6643 = vmatpush1.msra.mxu0 %v6626
      %6644 = vmatprep.subr.mxu0 0.0
      %6645 = vmatpush1.msra.mxu0 %v6627
      %6646 = vmatprep.subr.mxu0 0.0
      %6647 = vmatpush1.msra.mxu0 %v6628
      %6648 = vmatprep.subr.mxu0 0.0
      %6649 = vmatpush1.msra.mxu0 %v6629
      %6650 = vmatprep.subr.mxu0 0.0
      %6651 = vmatpush1.msra.mxu0 %v6630
      %6652 = vmatprep.subr.mxu0 0.0
      %6653 = vmatpush1.msra.mxu0 %v6631
      %6654 = vmatprep.subr.mxu0 0.0
      %6655 = vmatpush1.msra.mxu0 %v6632
      %6656 = vmatprep.subr.mxu0 0.0
      %6657 = vmatpush1.msra.mxu0 %v6633
      %6658 = vmatprep.subr.mxu0 0.0
      %6659 = vmatpush1.msra.mxu0 0.0
      %6660 = vmatprep.subr.mxu0 0.0
      %6661 = vmatpush1.msra.mxu0 0.0
      %6662 = vmatprep.subr.mxu0 0.0
      %6663 = vmatpush1.msra.mxu0 0.0
      %6664 = vmatprep.subr.mxu0 0.0
      %6665 = vmatpush1.msra.mxu0 0.0
      %6666 = vmatprep.subr.mxu0 0.0
      %6667 = vmatpush1.msra.mxu0 0.0
      %6668 = vmatprep.subr.mxu0 0.0
      %6669 = vmatpush1.msra.mxu0 0.0
      %6670 = vmatprep.subr.mxu0 0.0
      %6671 = vmatpush1.msra.mxu0 0.0
      %6672 = vmatprep.subr.mxu0 0.0
      %6673 = vmatpush1.msra.mxu0 0.0
      %6674 = vmatprep.subr.mxu0 0.0
      %6675 = vmatpush1.msra.mxu0 0.0
      %6676 = vmatprep.subr.mxu0 0.0
      %6677 = vmatpush1.msra.mxu0 0.0
      %6678 = vmatprep.subr.mxu0 0.0
      %6679 = vmatpush1.msra.mxu0 0.0
      %6680 = vmatprep.subr.mxu0 0.0
      %6681 = vmatpush1.msra.mxu0 0.0
      %6682 = vmatprep.subr.mxu0 0.0
      %6683 = vmatpush1.msra.mxu0 0.0
      %6684 = vmatprep.subr.mxu0 0.0
      %6685 = vmatpush1.msra.mxu0 0.0
      %6686 = vmatprep.subr.mxu0 0.0
      %6687 = vmatpush1.msra.mxu0 0.0
      %6688 = vmatprep.subr.mxu0 0.0
      %6689 = vmatpush1.msra.mxu0 0.0
      %6690 = vmatprep.subr.mxu0 0.0
      %6691 = vmatpush1.msra.mxu0 0.0
      %6692 = vmatprep.subr.mxu0 0.0
      %6693 = vmatpush1.msra.mxu0 0.0
      %6694 = vmatprep.subr.mxu0 0.0
      %6695 = vmatpush1.msra.mxu0 0.0
      %6696 = vmatprep.subr.mxu0 0.0
      %6697 = vmatpush1.msra.mxu0 0.0
      %6698 = vmatprep.subr.mxu0 0.0
      %6699 = vmatpush1.msra.mxu0 0.0
      %6700 = vmatprep.subr.mxu0 0.0
      %6701 = vmatpush1.msra.mxu0 0.0
      %6702 = vmatprep.subr.mxu0 0.0
      %6703 = vmatpush1.msra.mxu0 0.0
      %6704 = vmatprep.mubr.f32.mxu0 0.0
      %6705 = vmatmul.mubr.f32.gmra.mrb[0].mxu0 %v6635
      %v6706 = vpop.f32.mrb[0].mxu0
      %v6707 = vadd.f32 0.0, %v6706
      %v6708 = vpop.f32.mrb[0].mxu0
      %6709 = vmatprep.mubr.f32.mxu0 0.0
      %6710 = vmatmul.mubr.f32.gmra.mrb[0].mxu0 %v6638
      %v6711 = vpop.f32.mrb[0].mxu0
      %v6712 = vadd.f32 0.0, %v6711
      %v6713 = vpop.f32.mrb[0].mxu0
      %6714 = vdwg.mxu0
      %v6715 = vadd.f32 %v6615, %v6707
      %v6716 = vadd.f32 %v6620, %v6712
      %v6717 = vld [vmem:[%s3794] sm:$0xff]
      %v6718 = vld [vmem:[%s3794 + $0x8] sm:$0xff]
      %v6719 = vld [vmem:[%s4079] sm:$0xff]
      %v6720 = vld [vmem:[%s4079 + $0x8] sm:$0xff]
      %v6721 = vld [vmem:[%s4079 + $0x10] sm:$0xff]
      %v6722 = vld [vmem:[%s4079 + $0x18] sm:$0xff]
      %v6723 = vld [vmem:[%s4079 + $0x20] sm:$0xff]
      %v6724 = vld [vmem:[%s4079 + $0x28] sm:$0xff]
      %v6725 = vld [vmem:[%s4079 + $0x30] sm:$0xff]
      %v6726 = vld [vmem:[%s4079 + $0x38] sm:$0xff]
      %v6727 = vld [vmem:[%s4079 + $0x40] sm:$0xff]
      %v6729 = vsel %vm225, %v6717, 0
      %v6732 = vsel %vm225, %v6718, 0
      %6734 = vmatprep.subr.mxu0 0.0
      %6735 = vmatpush1.msra.mxu0 %v6719
      %6736 = vmatprep.subr.mxu0 0.0
      %6737 = vmatpush1.msra.mxu0 %v6720
      %6738 = vmatprep.subr.mxu0 0.0
      %6739 = vmatpush1.msra.mxu0 %v6721
      %6740 = vmatprep.subr.mxu0 0.0
      %6741 = vmatpush1.msra.mxu0 %v6722
      %6742 = vmatprep.subr.mxu0 0.0
      %6743 = vmatpush1.msra.mxu0 %v6723
      %6744 = vmatprep.subr.mxu0 0.0
      %6745 = vmatpush1.msra.mxu0 %v6724
      %6746 = vmatprep.subr.mxu0 0.0
      %6747 = vmatpush1.msra.mxu0 %v6725
      %6748 = vmatprep.subr.mxu0 0.0
      %6749 = vmatpush1.msra.mxu0 %v6726
      %6750 = vmatprep.subr.mxu0 0.0
      %6751 = vmatpush1.msra.mxu0 %v6727
      %6752 = vmatprep.subr.mxu0 0.0
      %6753 = vmatpush1.msra.mxu0 0.0
      %6754 = vmatprep.subr.mxu0 0.0
      %6755 = vmatpush1.msra.mxu0 0.0
      %6756 = vmatprep.subr.mxu0 0.0
      %6757 = vmatpush1.msra.mxu0 0.0
      %6758 = vmatprep.subr.mxu0 0.0
      %6759 = vmatpush1.msra.mxu0 0.0
      %6760 = vmatprep.subr.mxu0 0.0
      %6761 = vmatpush1.msra.mxu0 0.0
      %6762 = vmatprep.subr.mxu0 0.0
      %6763 = vmatpush1.msra.mxu0 0.0
      %6764 = vmatprep.subr.mxu0 0.0
      %6765 = vmatpush1.msra.mxu0 0.0
      %6766 = vmatprep.subr.mxu0 0.0
      %6767 = vmatpush1.msra.mxu0 0.0
      %6768 = vmatprep.subr.mxu0 0.0
      %6769 = vmatpush1.msra.mxu0 0.0
      %6770 = vmatprep.subr.mxu0 0.0
      %6771 = vmatpush1.msra.mxu0 0.0
      %6772 = vmatprep.subr.mxu0 0.0
      %6773 = vmatpush1.msra.mxu0 0.0
      %6774 = vmatprep.subr.mxu0 0.0
      %6775 = vmatpush1.msra.mxu0 0.0
      %6776 = vmatprep.subr.mxu0 0.0
      %6777 = vmatpush1.msra.mxu0 0.0
      %6778 = vmatprep.subr.mxu0 0.0
      %6779 = vmatpush1.msra.mxu0 0.0
      %6780 = vmatprep.subr.mxu0 0.0
      %6781 = vmatpush1.msra.mxu0 0.0
      %6782 = vmatprep.subr.mxu0 0.0
      %6783 = vmatpush1.msra.mxu0 0.0
      %6784 = vmatprep.subr.mxu0 0.0
      %6785 = vmatpush1.msra.mxu0 0.0
      %6786 = vmatprep.subr.mxu0 0.0
      %6787 = vmatpush1.msra.mxu0 0.0
      %6788 = vmatprep.subr.mxu0 0.0
      %6789 = vmatpush1.msra.mxu0 0.0
      %6790 = vmatprep.subr.mxu0 0.0
      %6791 = vmatpush1.msra.mxu0 0.0
      %6792 = vmatprep.subr.mxu0 0.0
      %6793 = vmatpush1.msra.mxu0 0.0
      %6794 = vmatprep.subr.mxu0 0.0
      %6795 = vmatpush1.msra.mxu0 0.0
      %6796 = vmatprep.subr.mxu0 0.0
      %6797 = vmatpush1.msra.mxu0 0.0
      %6798 = vmatprep.mubr.f32.mxu0 0.0
      %6799 = vmatmul.mubr.f32.gmra.mrb[0].mxu0 %v6729
      %v6800 = vpop.f32.mrb[0].mxu0
      %v6801 = vadd.f32 0.0, %v6800
      %v6802 = vpop.f32.mrb[0].mxu0
      %6803 = vmatprep.mubr.f32.mxu0 0.0
      %6804 = vmatmul.mubr.f32.gmra.mrb[0].mxu0 %v6732
      %v6805 = vpop.f32.mrb[0].mxu0
      %v6806 = vadd.f32 0.0, %v6805
      %v6807 = vpop.f32.mrb[0].mxu0
      %6808 = vdwg.mxu0
      %v6809 = vadd.f32 %v6715, %v6801
      %v6810 = vadd.f32 %v6716, %v6806
      %v6811 = vld [vmem:[%s3794 + $0x1] sm:$0xff]
      %v6812 = vld [vmem:[%s3794 + $0x9] sm:$0xff]
      %v6813 = vld [vmem:[%s4174] sm:$0xff]
      %v6814 = vld [vmem:[%s4174 + $0x8] sm:$0xff]
      %v6815 = vld [vmem:[%s4174 + $0x10] sm:$0xff]
      %v6816 = vld [vmem:[%s4174 + $0x18] sm:$0xff]
      %v6817 = vld [vmem:[%s4174 + $0x20] sm:$0xff]
      %v6818 = vld [vmem:[%s4174 + $0x28] sm:$0xff]
      %v6819 = vld [vmem:[%s4174 + $0x30] sm:$0xff]
      %v6820 = vld [vmem:[%s4174 + $0x38] sm:$0xff]
      %v6821 = vld [vmem:[%s4174 + $0x40] sm:$0xff]
      %v6823 = vsel %vm225, %v6811, 0
      %v6826 = vsel %vm225, %v6812, 0
      %6828 = vmatprep.subr.mxu0 0.0
      %6829 = vmatpush1.msra.mxu0 %v6813
      %6830 = vmatprep.subr.mxu0 0.0
      %6831 = vmatpush1.msra.mxu0 %v6814
      %6832 = vmatprep.subr.mxu0 0.0
      %6833 = vmatpush1.msra.mxu0 %v6815
      %6834 = vmatprep.subr.mxu0 0.0
      %6835 = vmatpush1.msra.mxu0 %v6816
      %6836 = vmatprep.subr.mxu0 0.0
      %6837 = vmatpush1.msra.mxu0 %v6817
      %6838 = vmatprep.subr.mxu0 0.0
      %6839 = vmatpush1.msra.mxu0 %v6818
      %6840 = vmatprep.subr.mxu0 0.0
      %6841 = vmatpush1.msra.mxu0 %v6819
      %6842 = vmatprep.subr.mxu0 0.0
      %6843 = vmatpush1.msra.mxu0 %v6820
      %6844 = vmatprep.subr.mxu0 0.0
      %6845 = vmatpush1.msra.mxu0 %v6821
      %6846 = vmatprep.subr.mxu0 0.0
      %6847 = vmatpush1.msra.mxu0 0.0
      %6848 = vmatprep.subr.mxu0 0.0
      %6849 = vmatpush1.msra.mxu0 0.0
      %6850 = vmatprep.subr.mxu0 0.0
      %6851 = vmatpush1.msra.mxu0 0.0
      %6852 = vmatprep.subr.mxu0 0.0
      %6853 = vmatpush1.msra.mxu0 0.0
      %6854 = vmatprep.subr.mxu0 0.0
      %6855 = vmatpush1.msra.mxu0 0.0
      %6856 = vmatprep.subr.mxu0 0.0
      %6857 = vmatpush1.msra.mxu0 0.0
      %6858 = vmatprep.subr.mxu0 0.0
      %6859 = vmatpush1.msra.mxu0 0.0
      %6860 = vmatprep.subr.mxu0 0.0
      %6861 = vmatpush1.msra.mxu0 0.0
      %6862 = vmatprep.subr.mxu0 0.0
      %6863 = vmatpush1.msra.mxu0 0.0
      %6864 = vmatprep.subr.mxu0 0.0
      %6865 = vmatpush1.msra.mxu0 0.0
      %6866 = vmatprep.subr.mxu0 0.0
      %6867 = vmatpush1.msra.mxu0 0.0
      %6868 = vmatprep.subr.mxu0 0.0
      %6869 = vmatpush1.msra.mxu0 0.0
      %6870 = vmatprep.subr.mxu0 0.0
      %6871 = vmatpush1.msra.mxu0 0.0
      %6872 = vmatprep.subr.mxu0 0.0
      %6873 = vmatpush1.msra.mxu0 0.0
      %6874 = vmatprep.subr.mxu0 0.0
      %6875 = vmatpush1.msra.mxu0 0.0
      %6876 = vmatprep.subr.mxu0 0.0
      %6877 = vmatpush1.msra.mxu0 0.0
      %6878 = vmatprep.subr.mxu0 0.0
      %6879 = vmatpush1.msra.mxu0 0.0
      %6880 = vmatprep.subr.mxu0 0.0
      %6881 = vmatpush1.msra.mxu0 0.0
      %6882 = vmatprep.subr.mxu0 0.0
      %6883 = vmatpush1.msra.mxu0 0.0
      %6884 = vmatprep.subr.mxu0 0.0
      %6885 = vmatpush1.msra.mxu0 0.0
      %6886 = vmatprep.subr.mxu0 0.0
      %6887 = vmatpush1.msra.mxu0 0.0
      %6888 = vmatprep.subr.mxu0 0.0
      %6889 = vmatpush1.msra.mxu0 0.0
      %6890 = vmatprep.subr.mxu0 0.0
      %6891 = vmatpush1.msra.mxu0 0.0
      %6892 = vmatprep.mubr.f32.mxu0 0.0
      %6893 = vmatmul.mubr.f32.gmra.mrb[0].mxu0 %v6823
      %v6894 = vpop.f32.mrb[0].mxu0
      %v6895 = vadd.f32 0.0, %v6894
      %v6896 = vpop.f32.mrb[0].mxu0
      %6897 = vmatprep.mubr.f32.mxu0 0.0
      %6898 = vmatmul.mubr.f32.gmra.mrb[0].mxu0 %v6826
      %v6899 = vpop.f32.mrb[0].mxu0
      %v6900 = vadd.f32 0.0, %v6899
      %v6901 = vpop.f32.mrb[0].mxu0
      %6902 = vdwg.mxu0
      %v6903 = vadd.f32 %v6809, %v6895
      %v6904 = vadd.f32 %v6810, %v6900
      %v6905 = vld [vmem:[%s3794 + $0x2] sm:$0xff]
      %v6906 = vld [vmem:[%s3794 + $0xa] sm:$0xff]
      %v6907 = vld [vmem:[%s4269] sm:$0xff]
      %v6908 = vld [vmem:[%s4269 + $0x8] sm:$0xff]
      %v6909 = vld [vmem:[%s4269 + $0x10] sm:$0xff]
      %v6910 = vld [vmem:[%s4269 + $0x18] sm:$0xff]
      %v6911 = vld [vmem:[%s4269 + $0x20] sm:$0xff]
      %v6912 = vld [vmem:[%s4269 + $0x28] sm:$0xff]
      %v6913 = vld [vmem:[%s4269 + $0x30] sm:$0xff]
      %v6914 = vld [vmem:[%s4269 + $0x38] sm:$0xff]
      %v6915 = vld [vmem:[%s4269 + $0x40] sm:$0xff]
      %v6917 = vsel %vm225, %v6905, 0
      %v6920 = vsel %vm225, %v6906, 0
      %6922 = vmatprep.subr.mxu0 0.0
      %6923 = vmatpush1.msra.mxu0 %v6907
      %6924 = vmatprep.subr.mxu0 0.0
      %6925 = vmatpush1.msra.mxu0 %v6908
      %6926 = vmatprep.subr.mxu0 0.0
      %6927 = vmatpush1.msra.mxu0 %v6909
      %6928 = vmatprep.subr.mxu0 0.0
      %6929 = vmatpush1.msra.mxu0 %v6910
      %6930 = vmatprep.subr.mxu0 0.0
      %6931 = vmatpush1.msra.mxu0 %v6911
      %6932 = vmatprep.subr.mxu0 0.0
      %6933 = vmatpush1.msra.mxu0 %v6912
      %6934 = vmatprep.subr.mxu0 0.0
      %6935 = vmatpush1.msra.mxu0 %v6913
      %6936 = vmatprep.subr.mxu0 0.0
      %6937 = vmatpush1.msra.mxu0 %v6914
      %6938 = vmatprep.subr.mxu0 0.0
      %6939 = vmatpush1.msra.mxu0 %v6915
      %6940 = vmatprep.subr.mxu0 0.0
      %6941 = vmatpush1.msra.mxu0 0.0
      %6942 = vmatprep.subr.mxu0 0.0
      %6943 = vmatpush1.msra.mxu0 0.0
      %6944 = vmatprep.subr.mxu0 0.0
      %6945 = vmatpush1.msra.mxu0 0.0
      %6946 = vmatprep.subr.mxu0 0.0
      %6947 = vmatpush1.msra.mxu0 0.0
      %6948 = vmatprep.subr.mxu0 0.0
      %6949 = vmatpush1.msra.mxu0 0.0
      %6950 = vmatprep.subr.mxu0 0.0
      %6951 = vmatpush1.msra.mxu0 0.0
      %6952 = vmatprep.subr.mxu0 0.0
      %6953 = vmatpush1.msra.mxu0 0.0
      %6954 = vmatprep.subr.mxu0 0.0
      %6955 = vmatpush1.msra.mxu0 0.0
      %6956 = vmatprep.subr.mxu0 0.0
      %6957 = vmatpush1.msra.mxu0 0.0
      %6958 = vmatprep.subr.mxu0 0.0
      %6959 = vmatpush1.msra.mxu0 0.0
      %6960 = vmatprep.subr.mxu0 0.0
      %6961 = vmatpush1.msra.mxu0 0.0
      %6962 = vmatprep.subr.mxu0 0.0
      %6963 = vmatpush1.msra.mxu0 0.0
      %6964 = vmatprep.subr.mxu0 0.0
      %6965 = vmatpush1.msra.mxu0 0.0
      %6966 = vmatprep.subr.mxu0 0.0
      %6967 = vmatpush1.msra.mxu0 0.0
      %6968 = vmatprep.subr.mxu0 0.0
      %6969 = vmatpush1.msra.mxu0 0.0
      %6970 = vmatprep.subr.mxu0 0.0
      %6971 = vmatpush1.msra.mxu0 0.0
      %6972 = vmatprep.subr.mxu0 0.0
      %6973 = vmatpush1.msra.mxu0 0.0
      %6974 = vmatprep.subr.mxu0 0.0
      %6975 = vmatpush1.msra.mxu0 0.0
      %6976 = vmatprep.subr.mxu0 0.0
      %6977 = vmatpush1.msra.mxu0 0.0
      %6978 = vmatprep.subr.mxu0 0.0
      %6979 = vmatpush1.msra.mxu0 0.0
      %6980 = vmatprep.subr.mxu0 0.0
      %6981 = vmatpush1.msra.mxu0 0.0
      %6982 = vmatprep.subr.mxu0 0.0
      %6983 = vmatpush1.msra.mxu0 0.0
      %6984 = vmatprep.subr.mxu0 0.0
      %6985 = vmatpush1.msra.mxu0 0.0
      %6986 = vmatprep.mubr.f32.mxu0 0.0
      %6987 = vmatmul.mubr.f32.gmra.mrb[0].mxu0 %v6917
      %v6988 = vpop.f32.mrb[0].mxu0
      %v6989 = vadd.f32 0.0, %v6988
      %v6990 = vpop.f32.mrb[0].mxu0
      %6991 = vmatprep.mubr.f32.mxu0 0.0
      %6992 = vmatmul.mubr.f32.gmra.mrb[0].mxu0 %v6920
      %v6993 = vpop.f32.mrb[0].mxu0
      %v6994 = vadd.f32 0.0, %v6993
      %v6995 = vpop.f32.mrb[0].mxu0
      %6996 = vdwg.mxu0
      %v6997 = vadd.f32 %v6903, %v6989
      %v6998 = vadd.f32 %v6904, %v6994
      %s6999 = scalar_lea.vmem [#allocation3], 120
      %v7000 = vld [vmem:[%s6999] sm:$0xff]
      %v7001 = vld [vmem:[%s6999 + $0x8] sm:$0xff]
      %v7002 = vld [vmem:[%s4364] sm:$0xff]
      %v7003 = vld [vmem:[%s4364 + $0x8] sm:$0xff]
      %v7004 = vld [vmem:[%s4364 + $0x10] sm:$0xff]
      %v7005 = vld [vmem:[%s4364 + $0x18] sm:$0xff]
      %v7006 = vld [vmem:[%s4364 + $0x20] sm:$0xff]
      %v7007 = vld [vmem:[%s4364 + $0x28] sm:$0xff]
      %v7008 = vld [vmem:[%s4364 + $0x30] sm:$0xff]
      %v7009 = vld [vmem:[%s4364 + $0x38] sm:$0xff]
      %v7010 = vld [vmem:[%s4364 + $0x40] sm:$0xff]
      %v7012 = vsel %vm225, %v7000, 0
      %v7015 = vsel %vm225, %v7001, 0
      %7017 = vmatprep.subr.mxu0 0.0
      %7018 = vmatpush1.msra.mxu0 %v7002
      %7019 = vmatprep.subr.mxu0 0.0
      %7020 = vmatpush1.msra.mxu0 %v7003
      %7021 = vmatprep.subr.mxu0 0.0
      %7022 = vmatpush1.msra.mxu0 %v7004
      %7023 = vmatprep.subr.mxu0 0.0
      %7024 = vmatpush1.msra.mxu0 %v7005
      %7025 = vmatprep.subr.mxu0 0.0
      %7026 = vmatpush1.msra.mxu0 %v7006
      %7027 = vmatprep.subr.mxu0 0.0
      %7028 = vmatpush1.msra.mxu0 %v7007
      %7029 = vmatprep.subr.mxu0 0.0
      %7030 = vmatpush1.msra.mxu0 %v7008
      %7031 = vmatprep.subr.mxu0 0.0
      %7032 = vmatpush1.msra.mxu0 %v7009
      %7033 = vmatprep.subr.mxu0 0.0
      %7034 = vmatpush1.msra.mxu0 %v7010
      %7035 = vmatprep.subr.mxu0 0.0
      %7036 = vmatpush1.msra.mxu0 0.0
      %7037 = vmatprep.subr.mxu0 0.0
      %7038 = vmatpush1.msra.mxu0 0.0
      %7039 = vmatprep.subr.mxu0 0.0
      %7040 = vmatpush1.msra.mxu0 0.0
      %7041 = vmatprep.subr.mxu0 0.0
      %7042 = vmatpush1.msra.mxu0 0.0
      %7043 = vmatprep.subr.mxu0 0.0
      %7044 = vmatpush1.msra.mxu0 0.0
      %7045 = vmatprep.subr.mxu0 0.0
      %7046 = vmatpush1.msra.mxu0 0.0
      %7047 = vmatprep.subr.mxu0 0.0
      %7048 = vmatpush1.msra.mxu0 0.0
      %7049 = vmatprep.subr.mxu0 0.0
      %7050 = vmatpush1.msra.mxu0 0.0
      %7051 = vmatprep.subr.mxu0 0.0
      %7052 = vmatpush1.msra.mxu0 0.0
      %7053 = vmatprep.subr.mxu0 0.0
      %7054 = vmatpush1.msra.mxu0 0.0
      %7055 = vmatprep.subr.mxu0 0.0
      %7056 = vmatpush1.msra.mxu0 0.0
      %7057 = vmatprep.subr.mxu0 0.0
      %7058 = vmatpush1.msra.mxu0 0.0
      %7059 = vmatprep.subr.mxu0 0.0
      %7060 = vmatpush1.msra.mxu0 0.0
      %7061 = vmatprep.subr.mxu0 0.0
      %7062 = vmatpush1.msra.mxu0 0.0
      %7063 = vmatprep.subr.mxu0 0.0
      %7064 = vmatpush1.msra.mxu0 0.0
      %7065 = vmatprep.subr.mxu0 0.0
      %7066 = vmatpush1.msra.mxu0 0.0
      %7067 = vmatprep.subr.mxu0 0.0
      %7068 = vmatpush1.msra.mxu0 0.0
      %7069 = vmatprep.subr.mxu0 0.0
      %7070 = vmatpush1.msra.mxu0 0.0
      %7071 = vmatprep.subr.mxu0 0.0
      %7072 = vmatpush1.msra.mxu0 0.0
      %7073 = vmatprep.subr.mxu0 0.0
      %7074 = vmatpush1.msra.mxu0 0.0
      %7075 = vmatprep.subr.mxu0 0.0
      %7076 = vmatpush1.msra.mxu0 0.0
      %7077 = vmatprep.subr.mxu0 0.0
      %7078 = vmatpush1.msra.mxu0 0.0
      %7079 = vmatprep.subr.mxu0 0.0
      %7080 = vmatpush1.msra.mxu0 0.0
      %7081 = vmatprep.mubr.f32.mxu0 0.0
      %7082 = vmatmul.mubr.f32.gmra.mrb[0].mxu0 %v7012
      %v7083 = vpop.f32.mrb[0].mxu0
      %v7084 = vadd.f32 0.0, %v7083
      %v7085 = vpop.f32.mrb[0].mxu0
      %7086 = vmatprep.mubr.f32.mxu0 0.0
      %7087 = vmatmul.mubr.f32.gmra.mrb[0].mxu0 %v7015
      %v7088 = vpop.f32.mrb[0].mxu0
      %v7089 = vadd.f32 0.0, %v7088
      %v7090 = vpop.f32.mrb[0].mxu0
      %7091 = vdwg.mxu0
      %v7092 = vadd.f32 %v6997, %v7084
      %v7093 = vadd.f32 %v6998, %v7089
      %v7094 = vld [vmem:[%s6999 + $0x1] sm:$0xff]
      %v7095 = vld [vmem:[%s6999 + $0x9] sm:$0xff]
      %v7096 = vld [vmem:[%s4459] sm:$0xff]
      %v7097 = vld [vmem:[%s4459 + $0x8] sm:$0xff]
      %v7098 = vld [vmem:[%s4459 + $0x10] sm:$0xff]
      %v7099 = vld [vmem:[%s4459 + $0x18] sm:$0xff]
      %v7100 = vld [vmem:[%s4459 + $0x20] sm:$0xff]
      %v7101 = vld [vmem:[%s4459 + $0x28] sm:$0xff]
      %v7102 = vld [vmem:[%s4459 + $0x30] sm:$0xff]
      %v7103 = vld [vmem:[%s4459 + $0x38] sm:$0xff]
      %v7104 = vld [vmem:[%s4459 + $0x40] sm:$0xff]
      %v7106 = vsel %vm225, %v7094, 0
      %v7109 = vsel %vm225, %v7095, 0
      %7111 = vmatprep.subr.mxu0 0.0
      %7112 = vmatpush1.msra.mxu0 %v7096
      %7113 = vmatprep.subr.mxu0 0.0
      %7114 = vmatpush1.msra.mxu0 %v7097
      %7115 = vmatprep.subr.mxu0 0.0
      %7116 = vmatpush1.msra.mxu0 %v7098
      %7117 = vmatprep.subr.mxu0 0.0
      %7118 = vmatpush1.msra.mxu0 %v7099
      %7119 = vmatprep.subr.mxu0 0.0
      %7120 = vmatpush1.msra.mxu0 %v7100
      %7121 = vmatprep.subr.mxu0 0.0
      %7122 = vmatpush1.msra.mxu0 %v7101
      %7123 = vmatprep.subr.mxu0 0.0
      %7124 = vmatpush1.msra.mxu0 %v7102
      %7125 = vmatprep.subr.mxu0 0.0
      %7126 = vmatpush1.msra.mxu0 %v7103
      %7127 = vmatprep.subr.mxu0 0.0
      %7128 = vmatpush1.msra.mxu0 %v7104
      %7129 = vmatprep.subr.mxu0 0.0
      %7130 = vmatpush1.msra.mxu0 0.0
      %7131 = vmatprep.subr.mxu0 0.0
      %7132 = vmatpush1.msra.mxu0 0.0
      %7133 = vmatprep.subr.mxu0 0.0
      %7134 = vmatpush1.msra.mxu0 0.0
      %7135 = vmatprep.subr.mxu0 0.0
      %7136 = vmatpush1.msra.mxu0 0.0
      %7137 = vmatprep.subr.mxu0 0.0
      %7138 = vmatpush1.msra.mxu0 0.0
      %7139 = vmatprep.subr.mxu0 0.0
      %7140 = vmatpush1.msra.mxu0 0.0
      %7141 = vmatprep.subr.mxu0 0.0
      %7142 = vmatpush1.msra.mxu0 0.0
      %7143 = vmatprep.subr.mxu0 0.0
      %7144 = vmatpush1.msra.mxu0 0.0
      %7145 = vmatprep.subr.mxu0 0.0
      %7146 = vmatpush1.msra.mxu0 0.0
      %7147 = vmatprep.subr.mxu0 0.0
      %7148 = vmatpush1.msra.mxu0 0.0
      %7149 = vmatprep.subr.mxu0 0.0
      %7150 = vmatpush1.msra.mxu0 0.0
      %7151 = vmatprep.subr.mxu0 0.0
      %7152 = vmatpush1.msra.mxu0 0.0
      %7153 = vmatprep.subr.mxu0 0.0
      %7154 = vmatpush1.msra.mxu0 0.0
      %7155 = vmatprep.subr.mxu0 0.0
      %7156 = vmatpush1.msra.mxu0 0.0
      %7157 = vmatprep.subr.mxu0 0.0
      %7158 = vmatpush1.msra.mxu0 0.0
      %7159 = vmatprep.subr.mxu0 0.0
      %7160 = vmatpush1.msra.mxu0 0.0
      %7161 = vmatprep.subr.mxu0 0.0
      %7162 = vmatpush1.msra.mxu0 0.0
      %7163 = vmatprep.subr.mxu0 0.0
      %7164 = vmatpush1.msra.mxu0 0.0
      %7165 = vmatprep.subr.mxu0 0.0
      %7166 = vmatpush1.msra.mxu0 0.0
      %7167 = vmatprep.subr.mxu0 0.0
      %7168 = vmatpush1.msra.mxu0 0.0
      %7169 = vmatprep.subr.mxu0 0.0
      %7170 = vmatpush1.msra.mxu0 0.0
      %7171 = vmatprep.subr.mxu0 0.0
      %7172 = vmatpush1.msra.mxu0 0.0
      %7173 = vmatprep.subr.mxu0 0.0
      %7174 = vmatpush1.msra.mxu0 0.0
      %7175 = vmatprep.mubr.f32.mxu0 0.0
      %7176 = vmatmul.mubr.f32.gmra.mrb[0].mxu0 %v7106
      %v7177 = vpop.f32.mrb[0].mxu0
      %v7178 = vadd.f32 0.0, %v7177
      %v7179 = vpop.f32.mrb[0].mxu0
      %7180 = vmatprep.mubr.f32.mxu0 0.0
      %7181 = vmatmul.mubr.f32.gmra.mrb[0].mxu0 %v7109
      %v7182 = vpop.f32.mrb[0].mxu0
      %v7183 = vadd.f32 0.0, %v7182
      %v7184 = vpop.f32.mrb[0].mxu0
      %7185 = vdwg.mxu0
      %v7186 = vadd.f32 %v7092, %v7178
      %v7187 = vadd.f32 %v7093, %v7183
      %v7188 = vld [vmem:[%s6999 + $0x2] sm:$0xff]
      %v7189 = vld [vmem:[%s6999 + $0xa] sm:$0xff]
      %v7190 = vld [vmem:[%s4554] sm:$0xff]
      %v7191 = vld [vmem:[%s4554 + $0x8] sm:$0xff]
      %v7192 = vld [vmem:[%s4554 + $0x10] sm:$0xff]
      %v7193 = vld [vmem:[%s4554 + $0x18] sm:$0xff]
      %v7194 = vld [vmem:[%s4554 + $0x20] sm:$0xff]
      %v7195 = vld [vmem:[%s4554 + $0x28] sm:$0xff]
      %v7196 = vld [vmem:[%s4554 + $0x30] sm:$0xff]
      %v7197 = vld [vmem:[%s4554 + $0x38] sm:$0xff]
      %v7198 = vld [vmem:[%s4554 + $0x40] sm:$0xff]
      %v7200 = vsel %vm225, %v7188, 0
      %v7203 = vsel %vm225, %v7189, 0
      %7205 = vmatprep.subr.mxu0 0.0
      %7206 = vmatpush1.msra.mxu0 %v7190
      %7207 = vmatprep.subr.mxu0 0.0
      %7208 = vmatpush1.msra.mxu0 %v7191
      %7209 = vmatprep.subr.mxu0 0.0
      %7210 = vmatpush1.msra.mxu0 %v7192
      %7211 = vmatprep.subr.mxu0 0.0
      %7212 = vmatpush1.msra.mxu0 %v7193
      %7213 = vmatprep.subr.mxu0 0.0
      %7214 = vmatpush1.msra.mxu0 %v7194
      %7215 = vmatprep.subr.mxu0 0.0
      %7216 = vmatpush1.msra.mxu0 %v7195
      %7217 = vmatprep.subr.mxu0 0.0
      %7218 = vmatpush1.msra.mxu0 %v7196
      %7219 = vmatprep.subr.mxu0 0.0
      %7220 = vmatpush1.msra.mxu0 %v7197
      %7221 = vmatprep.subr.mxu0 0.0
      %7222 = vmatpush1.msra.mxu0 %v7198
      %7223 = vmatprep.subr.mxu0 0.0
      %7224 = vmatpush1.msra.mxu0 0.0
      %7225 = vmatprep.subr.mxu0 0.0
      %7226 = vmatpush1.msra.mxu0 0.0
      %7227 = vmatprep.subr.mxu0 0.0
      %7228 = vmatpush1.msra.mxu0 0.0
      %7229 = vmatprep.subr.mxu0 0.0
      %7230 = vmatpush1.msra.mxu0 0.0
      %7231 = vmatprep.subr.mxu0 0.0
      %7232 = vmatpush1.msra.mxu0 0.0
      %7233 = vmatprep.subr.mxu0 0.0
      %7234 = vmatpush1.msra.mxu0 0.0
      %7235 = vmatprep.subr.mxu0 0.0
      %7236 = vmatpush1.msra.mxu0 0.0
      %7237 = vmatprep.subr.mxu0 0.0
      %7238 = vmatpush1.msra.mxu0 0.0
      %7239 = vmatprep.subr.mxu0 0.0
      %7240 = vmatpush1.msra.mxu0 0.0
      %7241 = vmatprep.subr.mxu0 0.0
      %7242 = vmatpush1.msra.mxu0 0.0
      %7243 = vmatprep.subr.mxu0 0.0
      %7244 = vmatpush1.msra.mxu0 0.0
      %7245 = vmatprep.subr.mxu0 0.0
      %7246 = vmatpush1.msra.mxu0 0.0
      %7247 = vmatprep.subr.mxu0 0.0
      %7248 = vmatpush1.msra.mxu0 0.0
      %7249 = vmatprep.subr.mxu0 0.0
      %7250 = vmatpush1.msra.mxu0 0.0
      %7251 = vmatprep.subr.mxu0 0.0
      %7252 = vmatpush1.msra.mxu0 0.0
      %7253 = vmatprep.subr.mxu0 0.0
      %7254 = vmatpush1.msra.mxu0 0.0
      %7255 = vmatprep.subr.mxu0 0.0
      %7256 = vmatpush1.msra.mxu0 0.0
      %7257 = vmatprep.subr.mxu0 0.0
      %7258 = vmatpush1.msra.mxu0 0.0
      %7259 = vmatprep.subr.mxu0 0.0
      %7260 = vmatpush1.msra.mxu0 0.0
      %7261 = vmatprep.subr.mxu0 0.0
      %7262 = vmatpush1.msra.mxu0 0.0
      %7263 = vmatprep.subr.mxu0 0.0
      %7264 = vmatpush1.msra.mxu0 0.0
      %7265 = vmatprep.subr.mxu0 0.0
      %7266 = vmatpush1.msra.mxu0 0.0
      %7267 = vmatprep.subr.mxu0 0.0
      %7268 = vmatpush1.msra.mxu0 0.0
      %7269 = vmatprep.mubr.f32.mxu0 0.0
      %7270 = vmatmul.mubr.f32.gmra.mrb[0].mxu0 %v7200
      %v7271 = vpop.f32.mrb[0].mxu0
      %v7272 = vadd.f32 0.0, %v7271
      %v7273 = vpop.f32.mrb[0].mxu0
      %7274 = vmatprep.mubr.f32.mxu0 0.0
      %7275 = vmatmul.mubr.f32.gmra.mrb[0].mxu0 %v7203
      %v7276 = vpop.f32.mrb[0].mxu0
      %v7277 = vadd.f32 0.0, %v7276
      %v7278 = vpop.f32.mrb[0].mxu0
      %7279 = vdwg.mxu0
      %v7280 = vadd.f32 %v7186, %v7272
      %v7281 = vadd.f32 %v7187, %v7277
      %v7282 = vld [vmem:[%s4] sm:$0x1]
      %v7284 = vlaneseq
      %v7285 = vshrl.u32 %v7284, 7
      %v7286 = vsub.s32 0, %v7285
      %v7287 = vrot.slane %v7282, %v7286
      %v7289 = vadd.f32 %v7280, %v7287
      %v7290 = vadd.f32 %v7281, %v7287
      %vm7291 = vcmp.gt.f32.partialorder %v7289, 0.0
      %vm7292 = vcmp.gt.f32.partialorder %v7290, 0.0
      %v7293 = vmul.f32 %v7289, 0.04
      %v7294 = vmul.f32 %v7290, 0.04
      %v7295 = vsel %vm7291, %v7289, %v7293
      %v7296 = vsel %vm7292, %v7290, %v7294
      %7299 = vrot.lane.b32.xlu0 %v7295, 4
      %v7300 = vpop.permute.xlu0 %7299
      %7301 = vrot.lane.b32.xlu0 %v7296, 4
      %v7302 = vpop.permute.xlu0 %7301
      %v7305 = vadd.f32 %v6811, %v7300
      %v7306 = vadd.f32 %v6812, %v7302
      %7309 = vrot.lane.b32.xlu0 %v7305, 124
      %v7310 = vpop.permute.xlu0 %7309
      %7311 = vrot.lane.b32.xlu0 %v7306, 124
      %v7312 = vpop.permute.xlu0 %7311
      %s7315 = scalar_lea.vmem %s224, 48
      %7316 = vst.msk [vmem:[%s7315] sm:$0xff] %vm4680, %v7310
      %7317 = vst.msk [vmem:[%s7315 + $0x8] sm:$0xff] %vm4680, %v7312
      %p7318 = scmp.lt.s32.totalorder %s16, 1
      %s7319 = scalar_select %p7318, %s16, 1
      %s7320 = smul.addr %s7319, 8
      %s7321 = smul.addr %s7320, 8
      %s7322 = scalar_lea.vmem %s5, %s7321
      // Predicated region
      $region41: #{_lambda_.1} parent=39 // pred_check
        %p7323 = pneg %p144
      $region42: #{_lambda_.1} parent=39 // pred_check_branch
        %7325 = sbr.rel (%p7323) target = $region44
      $region43: #{_lambda_.1} parent=39 // pred_region
        _
      $region44: #{_lambda_.1} parent=39 // pred_fallthru
        _
    $region40: #{_lambda_.1} parent=5 // pred_fallthru
      _
    %p7326 = scmp.le.s32.totalorder 2, %s11
    // Predicated region
    $region45: #{_lambda_.1} parent=5 // pred_check
      %p7327 = pneg %p7326
    $region46: #{_lambda_.1} parent=5 // pred_check_branch
      %7329 = sbr.rel (%p7327) target = $region48
    $region47: #{_lambda_.1} parent=5 // pred_region
      %s7330 = ssub.s32 %s11, 2
      // Predicated region
      $region49: #{_lambda_.1} parent=47 // pred_check
        %p7331 = pneg %p150
      $region50: #{_lambda_.1} parent=47 // pred_check_branch
        %7333 = sbr.rel (%p7331) target = $region52
      $region51: #{_lambda_.1} parent=47 // pred_region
        %p7334 = scmp.lt.s32.totalorder %s17, 1
        %s7335 = scalar_select %p7334, %s17, 1
        %s7336 = smul.addr %s7335, 8
        %s7337 = smul.addr %s7336, 8
        %s7338 = scalar_lea.vmem %s5, %s7337
      $region52: #{_lambda_.1} parent=47 // pred_fallthru
        _
    $region48: #{_lambda_.1} parent=5 // pred_fallthru
      _
  $region6: #{_lambda_.1} parent=0 // loop_footer
    %s15 = sadd.s32 1, %s11
  $region7: #{_lambda_.1} parent=0 // loop_footer_branch
    %10 = sbr.rel target = $region3
  $region8: #{_lambda_.1} parent=0 // loop_exit
    _

</llo_original>
